<compile_context>
chip_gen: v6e
topology: v6e:2x2x1
jax: 0.10.0
libtpu: 0.0.40
codegen_flags: <defaults>
</compile_context>

<pallas_src>
import functools
import math

import jax
import jax.numpy as jnp
from jax import lax
from jax.experimental import pallas as pl
from jax.experimental.pallas import tpu as pltpu


def _pick_chunk_rows(h, w):
    """Largest even divisor of h whose chunk has <= ~128 matmul rows."""
    target = max(2, min(h, max(2, 128 // max(w, 1))))
    r = target - (target % 2)
    while r >= 2 and h % r != 0:
        r -= 2
    return max(r, 2)


# ------------------------------ Pallas kernel ------------------------------ #

def _middle_part_kernel(p1_ref, w1_ref, b1_ref, w2_ref, b2_ref, w3_ref, b3_ref,
                        o_ref, pad_ref, *, h, w, rows_per_chunk):
    # Per-image block (grid axis 0 = batch, marked "parallel"):
    #   p1_ref : (H*W, 9*Cin)      bf16   im2col patches for conv1
    #   w1_ref : (9*Cin, C)        bf16
    #   w2_ref : (9, C, C)         bf16   conv2 weights, one (C, C) per tap
    #   w3_ref : (C, C)            bf16   1x1 conv weights (shared conv3)
    #   b*_ref : (1, C)            f32
    #   o_ref  : (H4*W4, C)        f32    lane/sublane-dense output slab
    #   pad_ref: (H2+2, W2+2, C)   bf16   zero-padded conv2 input (scratch)
    f32, bf16 = jnp.float32, jnp.bfloat16
    hw4, c = o_ref.shape
    h2, w2 = h // 2, w // 2
    h4, w4 = h // 4, w // 4
    n_chunks = h // rows_per_chunk
    m_chunk = rows_per_chunk * w
    pr_chunk = rows_per_chunk // 2          # pooled rows produced per chunk

    w1 = w1_ref[...]
    w3 = w3_ref[...]
    b1 = b1_ref[...]                        # (1, C)
    b3 = b3_ref[...].reshape(1, 1, c)       # hoisted broadcast shape

    # Zero only the 1-px border of the conv2 padded buffer; the interior is
    # fully overwritten by the stage-1/2 chunk loop below.  Re-zeroed every
    # grid step so per-core scratch on v7x needs no cross-step init.
    pad_ref[0:1, :, :] = jnp.zeros((1, w2 + 2, c), bf16)
    pad_ref[h2 + 1:h2 + 2, :, :] = jnp.zeros((1, w2 + 2, c), bf16)
    pad_ref[:, 0:1, :] = jnp.zeros((h2 + 2, 1, c), bf16)
    pad_ref[:, w2 + 1:w2 + 2, :] = jnp.zeros((h2 + 2, 1, c), bf16)

    # ---- Stages 1+2: conv1(3x3)+ReLU -> conv3(1x1) -> 2x2 maxpool -> +b3,ReLU
    # Chunked over image rows; pooled chunk lands directly in pad_ref interior.
    def chunk_body(j, carry):
        m0 = pl.multiple_of(j * m_chunk, m_chunk)
        p_chunk = p1_ref[pl.ds(m0, m_chunk), :]                     # bf16
        y1 = jnp.dot(p_chunk, w1, preferred_element_type=f32)
        y1 = jnp.maximum(y1 + b1, 0.0)                              # conv1+ReLU
        z = jnp.dot(y1.astype(bf16), w3, preferred_element_type=f32)
        z = z.reshape(pr_chunk, 2, w2, 2, c)                        # pool 2x2/2
        z = jnp.max(jnp.max(z, axis=3), axis=1)                     # (pr,W2,C)
        a = jnp.maximum(z + b3, 0.0).astype(bf16)
        pad_ref[pl.ds(1 + j * pr_chunk, pr_chunk), 1:w2 + 1, :] = a
        return carry

    lax.fori_loop(0, n_chunks, chunk_body, 0, unroll=True)

    # ---- Stage 3: conv2 (3x3, SAME) as 9 accumulating tap matmuls + bias+ReLU.
    acc = jnp.zeros((h2 * w2, c), f32)
    for t in range(9):
        kh, kw = t // 3, t % 3
        lhs = pad_ref[kh:kh + h2, kw:kw + w2, :].reshape(h2 * w2, c)
        acc = acc + jnp.dot(lhs, w2_ref[t], preferred_element_type=f32)
    y2 = jnp.maximum(acc + b2_ref[...], 0.0)                        # (H2*W2, C)

    # ---- Stage 4: conv3 (1x1, shared) -> 2x2 maxpool -> bias + ReLU.
    z2 = jnp.dot(y2.astype(bf16), w3, preferred_element_type=f32)
    z2 = z2.reshape(h4, 2, w4, 2, c)
    z2 = jnp.max(jnp.max(z2, axis=3), axis=1)                       # (H4,W4,C)
    o_ref[...] = jnp.maximum(z2 + b3, 0.0).reshape(hw4, c)


# ------------------------------ Pallas wrapper ------------------------------ #

def _fused_middle_part(p1, w1m, b1, w2m, b2, w3m, b3, *, n, h, w, c):
    h2, w2 = h // 2, w // 2
    h4, w4 = h // 4, w // 4
    rows_per_chunk = _pick_chunk_rows(h, w)

    kernel = functools.partial(_middle_part_kernel, h=h, w=w,
                               rows_per_chunk=rows_per_chunk)

    def const_spec(shape):
        return pl.BlockSpec(shape, lambda b, _nd=len(shape): (0,) * _nd)

    out2d = pl.pallas_call(
        kernel,
        out_shape=jax.ShapeDtypeStruct((n * h4 * w4, c), jnp.float32),
        grid=(n,),
        in_specs=[
            pl.BlockSpec((h * w, p1.shape[1]), lambda b: (b, 0)),   # per-image
            const_spec(w1m.shape), const_spec(b1.shape),
            const_spec(w2m.shape), const_spec(b2.shape),
            const_spec(w3m.shape), const_spec(b3.shape),
        ],
        out_specs=pl.BlockSpec((h4 * w4, c), lambda b: (b, 0)),
        scratch_shapes=[pltpu.VMEM((h2 + 2, w2 + 2, c), jnp.bfloat16)],
        compiler_params=pltpu.CompilerParams(
            dimension_semantics=("parallel",)),
    )(p1, w1m, b1, w2m, b2, w3m, b3)
    return out2d.reshape(n, h4, w4, c)


# ------------------------------- Forward pass ------------------------------- #

def middle_part_forward(x_nchw, params):
    """Reproduces MiddlePart.forward (eval mode: dropout == identity)."""
    x = jnp.transpose(x_nchw, (0, 2, 3, 1)).astype(jnp.float32)  # NCHW -> NHWC
    n, h, w, cin = x.shape
    c = params["w1"].shape[-1]
    assert h % 4 == 0 and w % 4 == 0, "two 2x2/stride-2 pools need H,W % 4 == 0"

    # Layer-1 im2col in the wrapper (Cin is tiny); kernel sees a lane-friendly
    # (N*H*W, 9*Cin) operand instead of a 4-lane-wide tensor.
    xp = jnp.pad(x, ((0, 0), (1, 1), (1, 1), (0, 0)))
    patches = [xp[:, kh:kh + h, kw:kw + w, :]
               for kh in range(3) for kw in range(3)]
    p1 = jnp.concatenate(patches, axis=-1).reshape(n * h * w, 9 * cin)

    bf16 = jnp.bfloat16
    p1 = p1.astype(bf16)
    w1m = params["w1"].reshape(9 * cin, c).astype(bf16)
    w2m = params["w2"].astype(bf16)                      # (9, C, C) tap-major
    w3m = params["w3"].astype(bf16)
    b1 = params["b1"].astype(jnp.float32)
    b2 = params["b2"].astype(jnp.float32)
    b3 = params["b3"].astype(jnp.float32)

    out = _fused_middle_part(p1, w1m, b1, w2m, b2, w3m, b3, n=n, h=h, w=w, c=c)
    return jnp.transpose(out, (0, 3, 1, 2))  # NHWC -> NCHW


# --------------------------- Pure-JAX reference ----------------------------- #

def ref_forward(x_nchw, params):
    dn = ("NHWC", "HWIO", "NHWC")
    x = jnp.transpose(x_nchw, (0, 2, 3, 1)).astype(jnp.float32)

    def conv3(x, w9, b):
        cin, cout = w9.shape[1], w9.shape[2]
        w = w9.reshape(3, 3, cin, cout)
        y = jax.lax.conv_general_dilated(x, w, (1, 1), "SAME",
                                         dimension_numbers=dn)
        return jax.nn.relu(y + b.reshape(1, 1, 1, -1))

    def conv1(x, wmat, b):
        w = wmat.reshape(1, 1, *wmat.shape)
        y = jax.lax.conv_general_dilated(x, w, (1, 1), "SAME",
                                         dimension_numbers=dn)
        return jax.nn.relu(y + b.reshape(1, 1, 1, -1))

    def pool(x):
        return jax.lax.reduce_window(x, -jnp.inf, jax.lax.max,
                                     (1, 2, 2, 1), (1, 2, 2, 1), "VALID")

    x = conv3(x, params["w1"], params["b1"])
    x = pool(conv1(x, params["w3"], params["b3"]))
    x = conv3(x, params["w2"], params["b2"])
    x = pool(conv1(x, params["w3"], params["b3"]))
    return jnp.transpose(x, (0, 3, 1, 2))


# ----------------------------------- Main ----------------------------------- #

if __name__ == "__main__":
    key = jax.random.PRNGKey(0)
    k = jax.random.split(key, 8)

    N, INC, H, W = 2, 4, 16, 16
    OUTC = 256  # MiddlePart hard-codes outc = 256

    x = jax.random.normal(k[0], (N, INC, H, W), jnp.float32)

    # Deterministic parameter init (synthetic; ~PyTorch fan-in scaling).
    #   3x3 conv: (9, Cin, Cout)  (tap-major, cin-minor)
    #   1x1 conv: (Cin, Cout)
    s1 = 1.0 / math.sqrt(INC * 9)
    s2 = 1.0 / math.sqrt(OUTC * 9)
    s3 = 1.0 / math.sqrt(OUTC * 1)
    params = {
        "w1": jax.random.normal(k[1], (9, INC, OUTC), jnp.float32) * s1,
        "b1": jax.random.normal(k[2], (1, OUTC), jnp.float32) * s1,
        "w2": jax.random.normal(k[3], (9, OUTC, OUTC), jnp.float32) * s2,
        "b2": jax.random.normal(k[4], (1, OUTC), jnp.float32) * s2,
        "w3": jax.random.normal(k[5], (OUTC, OUTC), jnp.float32) * s3,
        "b3": jax.random.normal(k[6], (1, OUTC), jnp.float32) * s3,
    }

    out = jax.jit(middle_part_forward)(x, params)
    out = jax.block_until_ready(out)
    assert out.shape == (N, OUTC, H // 4, W // 4), out.shape

    # Sanity check vs pure-f32 JAX reference (loose tol: bf16 MXU inputs with
    # f32 accumulation + bf16 inter-stage activations).
    ref = jax.block_until_ready(jax.jit(ref_forward)(x, params))
    if not jnp.allclose(out, ref, rtol=5e-2, atol=5e-2):
        raise AssertionError("Pallas output mismatch vs JAX reference")

    # TODO(synk): training-mode Dropout(p=0.5) is stochastic; eval-mode
    # (identity) semantics are implemented here.
    print("KERNEL_OK")
</pallas_src>

<mosaic_0001>
module attributes {stable_mosaic.version = 11 : i64} {
  func.func @_middle_part_kernel(%arg0: i32, %arg1: memref<256x36xbf16, #tpu.memory_space<vmem>>, %arg2: memref<36x256xbf16, #tpu.memory_space<vmem>>, %arg3: memref<1x256xf32, #tpu.memory_space<vmem>>, %arg4: memref<9x256x256xbf16, #tpu.memory_space<vmem>>, %arg5: memref<1x256xf32, #tpu.memory_space<vmem>>, %arg6: memref<256x256xbf16, #tpu.memory_space<vmem>>, %arg7: memref<1x256xf32, #tpu.memory_space<vmem>>, %arg8: memref<16x256xf32, #tpu.memory_space<vmem>>, %arg9: memref<10x10x256xbf16, #tpu.memory_space<vmem>>) attributes {dimension_semantics = [#tpu.dimension_semantics<parallel>], iteration_bounds = array<i64: 2>, scalar_prefetch = 0 : i64, scratch_operands = 1 : i64, tpu.core_type = #tpu.core_type<tc>, window_params = [{transform_indices = @transform_0, window_bounds = array<i64: 256, 36>}, {pipeline_mode = #tpu.pipeline_mode<synchronous>, transform_indices = @transform_1, window_bounds = array<i64: 36, 256>}, {pipeline_mode = #tpu.pipeline_mode<synchronous>, transform_indices = @transform_2, window_bounds = array<i64: 1, 256>}, {pipeline_mode = #tpu.pipeline_mode<synchronous>, transform_indices = @transform_3, window_bounds = array<i64: 9, 256, 256>}, {pipeline_mode = #tpu.pipeline_mode<synchronous>, transform_indices = @transform_4, window_bounds = array<i64: 1, 256>}, {pipeline_mode = #tpu.pipeline_mode<synchronous>, transform_indices = @transform_5, window_bounds = array<i64: 256, 256>}, {pipeline_mode = #tpu.pipeline_mode<synchronous>, transform_indices = @transform_6, window_bounds = array<i64: 1, 256>}, {transform_indices = @transform_7, window_bounds = array<i64: 16, 256>}]} {
    %c0 = arith.constant 0 : index
    %c0_0 = arith.constant 0 : index
    %0 = vector.load %arg2[%c0, %c0_0] : memref<36x256xbf16, #tpu.memory_space<vmem>>, vector<36x256xbf16>
    %c0_1 = arith.constant 0 : index
    %c0_2 = arith.constant 0 : index
    %1 = vector.load %arg6[%c0_1, %c0_2] : memref<256x256xbf16, #tpu.memory_space<vmem>>, vector<256x256xbf16>
    %c0_3 = arith.constant 0 : index
    %c0_4 = arith.constant 0 : index
    %2 = vector.load %arg3[%c0_3, %c0_4] : memref<1x256xf32, #tpu.memory_space<vmem>>, vector<1x256xf32>
    %c0_5 = arith.constant 0 : index
    %c0_6 = arith.constant 0 : index
    %3 = vector.load %arg7[%c0_5, %c0_6] : memref<1x256xf32, #tpu.memory_space<vmem>>, vector<1x256xf32>
    %4 = vector.shape_cast %3 : vector<1x256xf32> to vector<1x1x256xf32>
    %cst = arith.constant 0.000000e+00 : bf16
    %5 = vector.broadcast %cst : bf16 to vector<1x10x256xbf16>
    %c0_7 = arith.constant 0 : index
    %c0_8 = arith.constant 0 : index
    %c0_9 = arith.constant 0 : index
    %6 = vector.load %arg9[%c0_7, %c0_8, %c0_9] : memref<10x10x256xbf16, #tpu.memory_space<vmem>>, vector<1x10x256xbf16>
    tpu.vector_store %arg9[%c0_7, %c0_8, %c0_9], %5 {strides = array<i32>} : memref<10x10x256xbf16, #tpu.memory_space<vmem>>, vector<1x10x256xbf16>,
    %cst_10 = arith.constant 0.000000e+00 : bf16
    %7 = vector.broadcast %cst_10 : bf16 to vector<1x10x256xbf16>
    %c9 = arith.constant 9 : index
    %c0_11 = arith.constant 0 : index
    %c0_12 = arith.constant 0 : index
    %8 = vector.load %arg9[%c9, %c0_11, %c0_12] : memref<10x10x256xbf16, #tpu.memory_space<vmem>>, vector<1x10x256xbf16>
    tpu.vector_store %arg9[%c9, %c0_11, %c0_12], %7 {strides = array<i32>} : memref<10x10x256xbf16, #tpu.memory_space<vmem>>, vector<1x10x256xbf16>,
    %cst_13 = arith.constant 0.000000e+00 : bf16
    %9 = vector.broadcast %cst_13 : bf16 to vector<10x1x256xbf16>
    %c0_14 = arith.constant 0 : index
    %c0_15 = arith.constant 0 : index
    %c0_16 = arith.constant 0 : index
    %10 = vector.load %arg9[%c0_14, %c0_15, %c0_16] : memref<10x10x256xbf16, #tpu.memory_space<vmem>>, vector<10x1x256xbf16>
    tpu.vector_store %arg9[%c0_14, %c0_15, %c0_16], %9 {strides = array<i32>} : memref<10x10x256xbf16, #tpu.memory_space<vmem>>, vector<10x1x256xbf16>,
    %cst_17 = arith.constant 0.000000e+00 : bf16
    %11 = vector.broadcast %cst_17 : bf16 to vector<10x1x256xbf16>
    %c0_18 = arith.constant 0 : index
    %c9_19 = arith.constant 9 : index
    %c0_20 = arith.constant 0 : index
    %12 = vector.load %arg9[%c0_18, %c9_19, %c0_20] : memref<10x10x256xbf16, #tpu.memory_space<vmem>>, vector<10x1x256xbf16>
    tpu.vector_store %arg9[%c0_18, %c9_19, %c0_20], %11 {strides = array<i32>} : memref<10x10x256xbf16, #tpu.memory_space<vmem>>, vector<10x1x256xbf16>,
    %c0_i32 = arith.constant 0 : i32
    %c128_i32 = arith.constant 128 : i32
    %13 = arith.muli %c0_i32, %c128_i32 : i32
    %14 = tpu.assume_multiple %13, 128 : i32
    %15 = arith.index_cast %14 : i32 to index
    %c0_21 = arith.constant 0 : index
    %16 = vector.load %arg1[%15, %c0_21] : memref<256x36xbf16, #tpu.memory_space<vmem>>, vector<128x36xbf16>
    %cst_22 = arith.constant dense<0.000000e+00> : vector<128x256xf32>
    %17 = tpu.matmul %16, %0, %cst_22 {dimension_numbers = #tpu.dot_dimension_numbers<[1], [0], [0], [1], [0, 0, 1, 1], [], []>} : vector<128x36xbf16>, vector<36x256xbf16>, vector<128x256xf32> -> vector<128x256xf32>
    %18 = vector.broadcast %2 : vector<1x256xf32> to vector<128x256xf32>
    %19 = arith.addf %17, %18 : vector<128x256xf32>
    %cst_23 = arith.constant 0.000000e+00 : f32
    %20 = vector.broadcast %cst_23 : f32 to vector<128x256xf32>
    %21 = arith.maximumf %19, %20 : vector<128x256xf32>
    %22 = arith.truncf %21 : vector<128x256xf32> to vector<128x256xbf16>
    %cst_24 = arith.constant dense<0.000000e+00> : vector<128x256xf32>
    %23 = tpu.matmul %22, %1, %cst_24 {dimension_numbers = #tpu.dot_dimension_numbers<[1], [0], [0], [1], [0, 0, 1, 1], [], []>} : vector<128x256xbf16>, vector<256x256xbf16>, vector<128x256xf32> -> vector<128x256xf32>
    %24 = vector.shape_cast %23 : vector<128x256xf32> to vector<4x2x8x2x256xf32>
    %cst_25 = arith.constant dense<0xFF800000> : vector<4x2x8x256xf32>
    %25 = vector.multi_reduction <maximumf>, %24, %cst_25 [3] : vector<4x2x8x2x256xf32> to vector<4x2x8x256xf32>
    %cst_26 = arith.constant dense<0xFF800000> : vector<4x8x256xf32>
    %26 = vector.multi_reduction <maximumf>, %25, %cst_26 [1] : vector<4x2x8x256xf32> to vector<4x8x256xf32>
    %27 = vector.broadcast %4 : vector<1x1x256xf32> to vector<4x8x256xf32>
    %28 = arith.addf %26, %27 : vector<4x8x256xf32>
    %cst_27 = arith.constant 0.000000e+00 : f32
    %29 = vector.broadcast %cst_27 : f32 to vector<4x8x256xf32>
    %30 = arith.maximumf %28, %29 : vector<4x8x256xf32>
    %31 = arith.truncf %30 : vector<4x8x256xf32> to vector<4x8x256xbf16>
    %c4_i32 = arith.constant 4 : i32
    %32 = arith.muli %c0_i32, %c4_i32 : i32
    %c1_i32 = arith.constant 1 : i32
    %33 = arith.addi %c1_i32, %32 : i32
    %34 = arith.index_cast %33 : i32 to index
    %c1 = arith.constant 1 : index
    %c0_28 = arith.constant 0 : index
    %35 = vector.load %arg9[%34, %c1, %c0_28] : memref<10x10x256xbf16, #tpu.memory_space<vmem>>, vector<4x8x256xbf16>
    tpu.vector_store %arg9[%34, %c1, %c0_28], %31 {strides = array<i32>} : memref<10x10x256xbf16, #tpu.memory_space<vmem>>, vector<4x8x256xbf16>,
    %c1_i32_29 = arith.constant 1 : i32
    %c128_i32_30 = arith.constant 128 : i32
    %36 = arith.muli %c1_i32_29, %c128_i32_30 : i32
    %37 = tpu.assume_multiple %36, 128 : i32
    %38 = arith.index_cast %37 : i32 to index
    %c0_31 = arith.constant 0 : index
    %39 = vector.load %arg1[%38, %c0_31] : memref<256x36xbf16, #tpu.memory_space<vmem>>, vector<128x36xbf16>
    %cst_32 = arith.constant dense<0.000000e+00> : vector<128x256xf32>
    %40 = tpu.matmul %39, %0, %cst_32 {dimension_numbers = #tpu.dot_dimension_numbers<[1], [0], [0], [1], [0, 0, 1, 1], [], []>} : vector<128x36xbf16>, vector<36x256xbf16>, vector<128x256xf32> -> vector<128x256xf32>
    %41 = vector.broadcast %2 : vector<1x256xf32> to vector<128x256xf32>
    %42 = arith.addf %40, %41 : vector<128x256xf32>
    %cst_33 = arith.constant 0.000000e+00 : f32
    %43 = vector.broadcast %cst_33 : f32 to vector<128x256xf32>
    %44 = arith.maximumf %42, %43 : vector<128x256xf32>
    %45 = arith.truncf %44 : vector<128x256xf32> to vector<128x256xbf16>
    %cst_34 = arith.constant dense<0.000000e+00> : vector<128x256xf32>
    %46 = tpu.matmul %45, %1, %cst_34 {dimension_numbers = #tpu.dot_dimension_numbers<[1], [0], [0], [1], [0, 0, 1, 1], [], []>} : vector<128x256xbf16>, vector<256x256xbf16>, vector<128x256xf32> -> vector<128x256xf32>
    %47 = vector.shape_cast %46 : vector<128x256xf32> to vector<4x2x8x2x256xf32>
    %cst_35 = arith.constant dense<0xFF800000> : vector<4x2x8x256xf32>
    %48 = vector.multi_reduction <maximumf>, %47, %cst_35 [3] : vector<4x2x8x2x256xf32> to vector<4x2x8x256xf32>
    %cst_36 = arith.constant dense<0xFF800000> : vector<4x8x256xf32>
    %49 = vector.multi_reduction <maximumf>, %48, %cst_36 [1] : vector<4x2x8x256xf32> to vector<4x8x256xf32>
    %50 = vector.broadcast %4 : vector<1x1x256xf32> to vector<4x8x256xf32>
    %51 = arith.addf %49, %50 : vector<4x8x256xf32>
    %cst_37 = arith.constant 0.000000e+00 : f32
    %52 = vector.broadcast %cst_37 : f32 to vector<4x8x256xf32>
    %53 = arith.maximumf %51, %52 : vector<4x8x256xf32>
    %54 = arith.truncf %53 : vector<4x8x256xf32> to vector<4x8x256xbf16>
    %c4_i32_38 = arith.constant 4 : i32
    %55 = arith.muli %c1_i32_29, %c4_i32_38 : i32
    %c1_i32_39 = arith.constant 1 : i32
    %56 = arith.addi %c1_i32_39, %55 : i32
    %57 = arith.index_cast %56 : i32 to index
    %c1_40 = arith.constant 1 : index
    %c0_41 = arith.constant 0 : index
    %58 = vector.load %arg9[%57, %c1_40, %c0_41] : memref<10x10x256xbf16, #tpu.memory_space<vmem>>, vector<4x8x256xbf16>
    tpu.vector_store %arg9[%57, %c1_40, %c0_41], %54 {strides = array<i32>} : memref<10x10x256xbf16, #tpu.memory_space<vmem>>, vector<4x8x256xbf16>,
    %c2_i32 = arith.constant 2 : i32
    %cst_42 = arith.constant 0.000000e+00 : f32
    %59 = vector.broadcast %cst_42 : f32 to vector<64x256xf32>
    %c0_43 = arith.constant 0 : index
    %c0_44 = arith.constant 0 : index
    %c0_45 = arith.constant 0 : index
    %60 = vector.load %arg9[%c0_43, %c0_44, %c0_45] : memref<10x10x256xbf16, #tpu.memory_space<vmem>>, vector<8x8x256xbf16>
    %61 = vector.shape_cast %60 : vector<8x8x256xbf16> to vector<64x256xbf16>
    %c0_46 = arith.constant 0 : index
    %c0_47 = arith.constant 0 : index
    %c0_48 = arith.constant 0 : index
    %62 = vector.load %arg4[%c0_46, %c0_47, %c0_48] : memref<9x256x256xbf16, #tpu.memory_space<vmem>>, vector<1x256x256xbf16>
    %63 = vector.shape_cast %62 : vector<1x256x256xbf16> to vector<256x256xbf16>
    %cst_49 = arith.constant dense<0.000000e+00> : vector<64x256xf32>
    %64 = tpu.matmul %61, %63, %cst_49 {dimension_numbers = #tpu.dot_dimension_numbers<[1], [0], [0], [1], [0, 0, 1, 1], [], []>} : vector<64x256xbf16>, vector<256x256xbf16>, vector<64x256xf32> -> vector<64x256xf32>
    %65 = arith.addf %59, %64 : vector<64x256xf32>
    %c0_50 = arith.constant 0 : index
    %c1_51 = arith.constant 1 : index
    %c0_52 = arith.constant 0 : index
    %66 = vector.load %arg9[%c0_50, %c1_51, %c0_52] : memref<10x10x256xbf16, #tpu.memory_space<vmem>>, vector<8x8x256xbf16>
    %67 = vector.shape_cast %66 : vector<8x8x256xbf16> to vector<64x256xbf16>
    %c1_53 = arith.constant 1 : index
    %c0_54 = arith.constant 0 : index
    %c0_55 = arith.constant 0 : index
    %68 = vector.load %arg4[%c1_53, %c0_54, %c0_55] : memref<9x256x256xbf16, #tpu.memory_space<vmem>>, vector<1x256x256xbf16>
    %69 = vector.shape_cast %68 : vector<1x256x256xbf16> to vector<256x256xbf16>
    %cst_56 = arith.constant dense<0.000000e+00> : vector<64x256xf32>
    %70 = tpu.matmul %67, %69, %cst_56 {dimension_numbers = #tpu.dot_dimension_numbers<[1], [0], [0], [1], [0, 0, 1, 1], [], []>} : vector<64x256xbf16>, vector<256x256xbf16>, vector<64x256xf32> -> vector<64x256xf32>
    %71 = arith.addf %65, %70 : vector<64x256xf32>
    %c0_57 = arith.constant 0 : index
    %c2 = arith.constant 2 : index
    %c0_58 = arith.constant 0 : index
    %72 = vector.load %arg9[%c0_57, %c2, %c0_58] : memref<10x10x256xbf16, #tpu.memory_space<vmem>>, vector<8x8x256xbf16>
    %73 = vector.shape_cast %72 : vector<8x8x256xbf16> to vector<64x256xbf16>
    %c2_59 = arith.constant 2 : index
    %c0_60 = arith.constant 0 : index
    %c0_61 = arith.constant 0 : index
    %74 = vector.load %arg4[%c2_59, %c0_60, %c0_61] : memref<9x256x256xbf16, #tpu.memory_space<vmem>>, vector<1x256x256xbf16>
    %75 = vector.shape_cast %74 : vector<1x256x256xbf16> to vector<256x256xbf16>
    %cst_62 = arith.constant dense<0.000000e+00> : vector<64x256xf32>
    %76 = tpu.matmul %73, %75, %cst_62 {dimension_numbers = #tpu.dot_dimension_numbers<[1], [0], [0], [1], [0, 0, 1, 1], [], []>} : vector<64x256xbf16>, vector<256x256xbf16>, vector<64x256xf32> -> vector<64x256xf32>
    %77 = arith.addf %71, %76 : vector<64x256xf32>
    %c1_63 = arith.constant 1 : index
    %c0_64 = arith.constant 0 : index
    %c0_65 = arith.constant 0 : index
    %78 = vector.load %arg9[%c1_63, %c0_64, %c0_65] : memref<10x10x256xbf16, #tpu.memory_space<vmem>>, vector<8x8x256xbf16>
    %79 = vector.shape_cast %78 : vector<8x8x256xbf16> to vector<64x256xbf16>
    %c3 = arith.constant 3 : index
    %c0_66 = arith.constant 0 : index
    %c0_67 = arith.constant 0 : index
    %80 = vector.load %arg4[%c3, %c0_66, %c0_67] : memref<9x256x256xbf16, #tpu.memory_space<vmem>>, vector<1x256x256xbf16>
    %81 = vector.shape_cast %80 : vector<1x256x256xbf16> to vector<256x256xbf16>
    %cst_68 = arith.constant dense<0.000000e+00> : vector<64x256xf32>
    %82 = tpu.matmul %79, %81, %cst_68 {dimension_numbers = #tpu.dot_dimension_numbers<[1], [0], [0], [1], [0, 0, 1, 1], [], []>} : vector<64x256xbf16>, vector<256x256xbf16>, vector<64x256xf32> -> vector<64x256xf32>
    %83 = arith.addf %77, %82 : vector<64x256xf32>
    %c1_69 = arith.constant 1 : index
    %c1_70 = arith.constant 1 : index
    %c0_71 = arith.constant 0 : index
    %84 = vector.load %arg9[%c1_69, %c1_70, %c0_71] : memref<10x10x256xbf16, #tpu.memory_space<vmem>>, vector<8x8x256xbf16>
    %85 = vector.shape_cast %84 : vector<8x8x256xbf16> to vector<64x256xbf16>
    %c4 = arith.constant 4 : index
    %c0_72 = arith.constant 0 : index
    %c0_73 = arith.constant 0 : index
    %86 = vector.load %arg4[%c4, %c0_72, %c0_73] : memref<9x256x256xbf16, #tpu.memory_space<vmem>>, vector<1x256x256xbf16>
    %87 = vector.shape_cast %86 : vector<1x256x256xbf16> to vector<256x256xbf16>
    %cst_74 = arith.constant dense<0.000000e+00> : vector<64x256xf32>
    %88 = tpu.matmul %85, %87, %cst_74 {dimension_numbers = #tpu.dot_dimension_numbers<[1], [0], [0], [1], [0, 0, 1, 1], [], []>} : vector<64x256xbf16>, vector<256x256xbf16>, vector<64x256xf32> -> vector<64x256xf32>
    %89 = arith.addf %83, %88 : vector<64x256xf32>
    %c1_75 = arith.constant 1 : index
    %c2_76 = arith.constant 2 : index
    %c0_77 = arith.constant 0 : index
    %90 = vector.load %arg9[%c1_75, %c2_76, %c0_77] : memref<10x10x256xbf16, #tpu.memory_space<vmem>>, vector<8x8x256xbf16>
    %91 = vector.shape_cast %90 : vector<8x8x256xbf16> to vector<64x256xbf16>
    %c5 = arith.constant 5 : index
    %c0_78 = arith.constant 0 : index
    %c0_79 = arith.constant 0 : index
    %92 = vector.load %arg4[%c5, %c0_78, %c0_79] : memref<9x256x256xbf16, #tpu.memory_space<vmem>>, vector<1x256x256xbf16>
    %93 = vector.shape_cast %92 : vector<1x256x256xbf16> to vector<256x256xbf16>
    %cst_80 = arith.constant dense<0.000000e+00> : vector<64x256xf32>
    %94 = tpu.matmul %91, %93, %cst_80 {dimension_numbers = #tpu.dot_dimension_numbers<[1], [0], [0], [1], [0, 0, 1, 1], [], []>} : vector<64x256xbf16>, vector<256x256xbf16>, vector<64x256xf32> -> vector<64x256xf32>
    %95 = arith.addf %89, %94 : vector<64x256xf32>
    %c2_81 = arith.constant 2 : index
    %c0_82 = arith.constant 0 : index
    %c0_83 = arith.constant 0 : index
    %96 = vector.load %arg9[%c2_81, %c0_82, %c0_83] : memref<10x10x256xbf16, #tpu.memory_space<vmem>>, vector<8x8x256xbf16>
    %97 = vector.shape_cast %96 : vector<8x8x256xbf16> to vector<64x256xbf16>
    %c6 = arith.constant 6 : index
    %c0_84 = arith.constant 0 : index
    %c0_85 = arith.constant 0 : index
    %98 = vector.load %arg4[%c6, %c0_84, %c0_85] : memref<9x256x256xbf16, #tpu.memory_space<vmem>>, vector<1x256x256xbf16>
    %99 = vector.shape_cast %98 : vector<1x256x256xbf16> to vector<256x256xbf16>
    %cst_86 = arith.constant dense<0.000000e+00> : vector<64x256xf32>
    %100 = tpu.matmul %97, %99, %cst_86 {dimension_numbers = #tpu.dot_dimension_numbers<[1], [0], [0], [1], [0, 0, 1, 1], [], []>} : vector<64x256xbf16>, vector<256x256xbf16>, vector<64x256xf32> -> vector<64x256xf32>
    %101 = arith.addf %95, %100 : vector<64x256xf32>
    %c2_87 = arith.constant 2 : index
    %c1_88 = arith.constant 1 : index
    %c0_89 = arith.constant 0 : index
    %102 = vector.load %arg9[%c2_87, %c1_88, %c0_89] : memref<10x10x256xbf16, #tpu.memory_space<vmem>>, vector<8x8x256xbf16>
    %103 = vector.shape_cast %102 : vector<8x8x256xbf16> to vector<64x256xbf16>
    %c7 = arith.constant 7 : index
    %c0_90 = arith.constant 0 : index
    %c0_91 = arith.constant 0 : index
    %104 = vector.load %arg4[%c7, %c0_90, %c0_91] : memref<9x256x256xbf16, #tpu.memory_space<vmem>>, vector<1x256x256xbf16>
    %105 = vector.shape_cast %104 : vector<1x256x256xbf16> to vector<256x256xbf16>
    %cst_92 = arith.constant dense<0.000000e+00> : vector<64x256xf32>
    %106 = tpu.matmul %103, %105, %cst_92 {dimension_numbers = #tpu.dot_dimension_numbers<[1], [0], [0], [1], [0, 0, 1, 1], [], []>} : vector<64x256xbf16>, vector<256x256xbf16>, vector<64x256xf32> -> vector<64x256xf32>
    %107 = arith.addf %101, %106 : vector<64x256xf32>
    %c2_93 = arith.constant 2 : index
    %c2_94 = arith.constant 2 : index
    %c0_95 = arith.constant 0 : index
    %108 = vector.load %arg9[%c2_93, %c2_94, %c0_95] : memref<10x10x256xbf16, #tpu.memory_space<vmem>>, vector<8x8x256xbf16>
    %109 = vector.shape_cast %108 : vector<8x8x256xbf16> to vector<64x256xbf16>
    %c8 = arith.constant 8 : index
    %c0_96 = arith.constant 0 : index
    %c0_97 = arith.constant 0 : index
    %110 = vector.load %arg4[%c8, %c0_96, %c0_97] : memref<9x256x256xbf16, #tpu.memory_space<vmem>>, vector<1x256x256xbf16>
    %111 = vector.shape_cast %110 : vector<1x256x256xbf16> to vector<256x256xbf16>
    %cst_98 = arith.constant dense<0.000000e+00> : vector<64x256xf32>
    %112 = tpu.matmul %109, %111, %cst_98 {dimension_numbers = #tpu.dot_dimension_numbers<[1], [0], [0], [1], [0, 0, 1, 1], [], []>} : vector<64x256xbf16>, vector<256x256xbf16>, vector<64x256xf32> -> vector<64x256xf32>
    %113 = arith.addf %107, %112 : vector<64x256xf32>
    %c0_99 = arith.constant 0 : index
    %c0_100 = arith.constant 0 : index
    %114 = vector.load %arg5[%c0_99, %c0_100] : memref<1x256xf32, #tpu.memory_space<vmem>>, vector<1x256xf32>
    %115 = vector.broadcast %114 : vector<1x256xf32> to vector<64x256xf32>
    %116 = arith.addf %113, %115 : vector<64x256xf32>
    %cst_101 = arith.constant 0.000000e+00 : f32
    %117 = vector.broadcast %cst_101 : f32 to vector<64x256xf32>
    %118 = arith.maximumf %116, %117 : vector<64x256xf32>
    %119 = arith.truncf %118 : vector<64x256xf32> to vector<64x256xbf16>
    %cst_102 = arith.constant dense<0.000000e+00> : vector<64x256xf32>
    %120 = tpu.matmul %119, %1, %cst_102 {dimension_numbers = #tpu.dot_dimension_numbers<[1], [0], [0], [1], [0, 0, 1, 1], [], []>} : vector<64x256xbf16>, vector<256x256xbf16>, vector<64x256xf32> -> vector<64x256xf32>
    %121 = vector.shape_cast %120 : vector<64x256xf32> to vector<4x2x4x2x256xf32>
    %cst_103 = arith.constant dense<0xFF800000> : vector<4x2x4x256xf32>
    %122 = vector.multi_reduction <maximumf>, %121, %cst_103 [3] : vector<4x2x4x2x256xf32> to vector<4x2x4x256xf32>
    %cst_104 = arith.constant dense<0xFF800000> : vector<4x4x256xf32>
    %123 = vector.multi_reduction <maximumf>, %122, %cst_104 [1] : vector<4x2x4x256xf32> to vector<4x4x256xf32>
    %124 = vector.broadcast %4 : vector<1x1x256xf32> to vector<4x4x256xf32>
    %125 = arith.addf %123, %124 : vector<4x4x256xf32>
    %cst_105 = arith.constant 0.000000e+00 : f32
    %126 = vector.broadcast %cst_105 : f32 to vector<4x4x256xf32>
    %127 = arith.maximumf %125, %126 : vector<4x4x256xf32>
    %128 = vector.shape_cast %127 : vector<4x4x256xf32> to vector<16x256xf32>
    %c0_106 = arith.constant 0 : index
    %c0_107 = arith.constant 0 : index
    %129 = vector.load %arg8[%c0_106, %c0_107] : memref<16x256xf32, #tpu.memory_space<vmem>>, vector<16x256xf32>
    tpu.vector_store %arg8[%c0_106, %c0_107], %128 {strides = array<i32>} : memref<16x256xf32, #tpu.memory_space<vmem>>, vector<16x256xf32>,
    return
  }
  func.func @transform_0(%arg0: i32) -> (i32, i32) {
    %c0_i32 = arith.constant 0 : i32
    %c0_i32_0 = arith.constant 0 : i32
    return %arg0, %c0_i32 : i32, i32
  }
  func.func @transform_1(%arg0: i32) -> (i32, i32) {
    %c0_i32 = arith.constant 0 : i32
    %c0_i32_0 = arith.constant 0 : i32
    %c0_i32_1 = arith.constant 0 : i32
    return %c0_i32, %c0_i32_0 : i32, i32
  }
  func.func @transform_2(%arg0: i32) -> (i32, i32) {
    %c0_i32 = arith.constant 0 : i32
    %c0_i32_0 = arith.constant 0 : i32
    %c0_i32_1 = arith.constant 0 : i32
    return %c0_i32, %c0_i32_0 : i32, i32
  }
  func.func @transform_3(%arg0: i32) -> (i32, i32, i32) {
    %c0_i32 = arith.constant 0 : i32
    %c0_i32_0 = arith.constant 0 : i32
    %c0_i32_1 = arith.constant 0 : i32
    %c0_i32_2 = arith.constant 0 : i32
    return %c0_i32, %c0_i32_0, %c0_i32_1 : i32, i32, i32
  }
  func.func @transform_4(%arg0: i32) -> (i32, i32) {
    %c0_i32 = arith.constant 0 : i32
    %c0_i32_0 = arith.constant 0 : i32
    %c0_i32_1 = arith.constant 0 : i32
    return %c0_i32, %c0_i32_0 : i32, i32
  }
  func.func @transform_5(%arg0: i32) -> (i32, i32) {
    %c0_i32 = arith.constant 0 : i32
    %c0_i32_0 = arith.constant 0 : i32
    %c0_i32_1 = arith.constant 0 : i32
    return %c0_i32, %c0_i32_0 : i32, i32
  }
  func.func @transform_6(%arg0: i32) -> (i32, i32) {
    %c0_i32 = arith.constant 0 : i32
    %c0_i32_0 = arith.constant 0 : i32
    %c0_i32_1 = arith.constant 0 : i32
    return %c0_i32, %c0_i32_0 : i32, i32
  }
  func.func @transform_7(%arg0: i32) -> (i32, i32) {
    %c0_i32 = arith.constant 0 : i32
    %c0_i32_0 = arith.constant 0 : i32
    return %arg0, %c0_i32 : i32, i32
  }
}

</mosaic_0001>

<llo_original>
// kernel: middle_part_forward.1
$region0: #{middle_part_forward.1}
  #allocation0 [shape = 'u32[]', space=smem, size = 0x4, offset = 0x4, fixed_abs, tag = 'smem constant byte address 0x4 - core index']
  #allocation1 [shape = 'u32[144,128]{1,0:T(1,128)}', space=vmem, size = 0x12000, scoped, tag = 'internal scratch']
  #allocation2 [shape = 'bf16[10,10,256]{2,1,0:T(8,128)(2,1)}', space=vmem, size = 0x14000, scoped, tag = 'scratch operand']
  %s0 = inlined_call_operand.vmem [shape: bf16[512,36], index: 0, kind: input, shape index: {}]
  %s1 = inlined_call_operand.vmem [shape: bf16[36,256], index: 1, kind: input, shape index: {}]
  %s2 = inlined_call_operand.vmem [shape: f32[1,256], index: 2, kind: input, shape index: {}]
  %s3 = inlined_call_operand.vmem [shape: bf16[9,256,256], index: 3, kind: input, shape index: {}]
  %s4 = inlined_call_operand.vmem [shape: f32[1,256], index: 4, kind: input, shape index: {}]
  %s5 = inlined_call_operand.vmem [shape: bf16[256,256], index: 5, kind: input, shape index: {}]
  %s6 = inlined_call_operand.vmem [shape: f32[1,256], index: 6, kind: input, shape index: {}]
  %s7 = inlined_call_operand.vmem [shape: f32[32,256], index: 7, kind: output, shape index: {}]
  %s8 = sld [smem:[#allocation0]]
  $region61: #{middle_part_forward.1} parent=0
    _
  %s10 = ssub.s32 1, %s8
  %s11 = scalar_select 0, %s10, %s8
  loop: start=0, step=1, limit=4
  $region2: #{middle_part_forward.1} parent=0 // loop_pre_header
    _
  $region3: #{middle_part_forward.1} parent=0 // loop_header
    %s13 = sphi 0, %s17
    %p14 = scmp.ge.s32.totalorder %s13, 4
    %s23 = sphi 0, %s25
    %s26 = sphi 0, %s23
    %s27 = sphi 0, %s26
    %s43 = sphi 0, %s27
    %s47 = sphi 0, %s47
    %s49 = sphi 0, %s47
    %s50 = sphi 0, %s49
    %s64 = sphi 0, %s50
    %s68 = sphi 0, %s68
    %s70 = sphi 0, %s68
    %s71 = sphi 0, %s70
    %s85 = sphi 0, %s71
    %s89 = sphi 0, %s89
    %s91 = sphi 0, %s89
    %s92 = sphi 0, %s91
    %s106 = sphi 0, %s92
    %s110 = sphi 0, %s110
    %s112 = sphi 0, %s110
    %s113 = sphi 0, %s112
    %s127 = sphi 0, %s113
    %s131 = sphi 0, %s131
    %s133 = sphi 0, %s131
    %s134 = sphi 0, %s133
    %s148 = sphi 0, %s134
    %s152 = sphi 0, %s152
    %s154 = sphi 0, %s152
    %s155 = sphi 0, %s154
    %s169 = sphi 0, %s155
    %s175 = sphi 0, %s177
    %s178 = sphi 0, %s175
    %s179 = sphi 0, %s178
    %s195 = sphi 0, %s179
  $region4: #{middle_part_forward.1} parent=0 // loop_header_branch
    %16 = sbr.rel (%p14) target = $region8
  $region5: #{middle_part_forward.1} parent=0 // loop_body
    %s18 = ssub.s32 %s13, 1
    %s19 = ssub.s32 %s13, 2
    %s20 = sadd.s32 %s13, 1
    %s21 = ssub.s32 %s13, %s20
    %p22 = scmp.eq.s32.totalorder %s21, 0
    %s24 = sadd.s32 %s23, 1
    %s25 = scalar_select %p22, %s23, %s24
    %p28 = pneg %p22
    %p29 = scmp.eq.s32.totalorder %s13, 1
    %p30 = por %p28, %p29
    %p31 = scmp.ne.s32.totalorder %s23, %s26
    %p32 = scmp.eq.s32.totalorder %s13, 0
    %p33 = por %p31, %p32
    %p34 = scmp.ne.s32.totalorder %s23, %s26
    %p35 = scmp.eq.s32.totalorder %s18, 1
    %p36 = por %p34, %p35
    %p37 = scmp.ne.s32.totalorder %s26, %s27
    %p38 = scmp.eq.s32.totalorder %s18, 0
    %p39 = por %p37, %p38
    %p40 = scmp.ne.s32.totalorder %s26, %s27
    %p41 = scmp.eq.s32.totalorder %s19, 1
    %p42 = por %p40, %p41
    %p44 = scmp.ne.s32.totalorder %s27, %s43
    %p45 = scmp.eq.s32.totalorder %s19, 0
    %p46 = por %p44, %p45
    %s48 = sadd.s32 %s47, 1
    %p51 = scmp.eq.s32.totalorder %s13, 1
    %p52 = scmp.ne.s32.totalorder %s47, %s49
    %p53 = scmp.eq.s32.totalorder %s13, 0
    %p54 = por %p52, %p53
    %p55 = scmp.ne.s32.totalorder %s47, %s49
    %p56 = scmp.eq.s32.totalorder %s18, 1
    %p57 = por %p55, %p56
    %p58 = scmp.ne.s32.totalorder %s49, %s50
    %p59 = scmp.eq.s32.totalorder %s18, 0
    %p60 = por %p58, %p59
    %p61 = scmp.ne.s32.totalorder %s49, %s50
    %p62 = scmp.eq.s32.totalorder %s19, 1
    %p63 = por %p61, %p62
    %p65 = scmp.ne.s32.totalorder %s50, %s64
    %p66 = scmp.eq.s32.totalorder %s19, 0
    %p67 = por %p65, %p66
    %s69 = sadd.s32 %s68, 1
    %p72 = scmp.eq.s32.totalorder %s13, 1
    %p73 = scmp.ne.s32.totalorder %s68, %s70
    %p74 = scmp.eq.s32.totalorder %s13, 0
    %p75 = por %p73, %p74
    %p76 = scmp.ne.s32.totalorder %s68, %s70
    %p77 = scmp.eq.s32.totalorder %s18, 1
    %p78 = por %p76, %p77
    %p79 = scmp.ne.s32.totalorder %s70, %s71
    %p80 = scmp.eq.s32.totalorder %s18, 0
    %p81 = por %p79, %p80
    %p82 = scmp.ne.s32.totalorder %s70, %s71
    %p83 = scmp.eq.s32.totalorder %s19, 1
    %p84 = por %p82, %p83
    %p86 = scmp.ne.s32.totalorder %s71, %s85
    %p87 = scmp.eq.s32.totalorder %s19, 0
    %p88 = por %p86, %p87
    %s90 = sadd.s32 %s89, 1
    %p93 = scmp.eq.s32.totalorder %s13, 1
    %p94 = scmp.ne.s32.totalorder %s89, %s91
    %p95 = scmp.eq.s32.totalorder %s13, 0
    %p96 = por %p94, %p95
    %p97 = scmp.ne.s32.totalorder %s89, %s91
    %p98 = scmp.eq.s32.totalorder %s18, 1
    %p99 = por %p97, %p98
    %p100 = scmp.ne.s32.totalorder %s91, %s92
    %p101 = scmp.eq.s32.totalorder %s18, 0
    %p102 = por %p100, %p101
    %p103 = scmp.ne.s32.totalorder %s91, %s92
    %p104 = scmp.eq.s32.totalorder %s19, 1
    %p105 = por %p103, %p104
    %p107 = scmp.ne.s32.totalorder %s92, %s106
    %p108 = scmp.eq.s32.totalorder %s19, 0
    %p109 = por %p107, %p108
    %s111 = sadd.s32 %s110, 1
    %p114 = scmp.eq.s32.totalorder %s13, 1
    %p115 = scmp.ne.s32.totalorder %s110, %s112
    %p116 = scmp.eq.s32.totalorder %s13, 0
    %p117 = por %p115, %p116
    %p118 = scmp.ne.s32.totalorder %s110, %s112
    %p119 = scmp.eq.s32.totalorder %s18, 1
    %p120 = por %p118, %p119
    %p121 = scmp.ne.s32.totalorder %s112, %s113
    %p122 = scmp.eq.s32.totalorder %s18, 0
    %p123 = por %p121, %p122
    %p124 = scmp.ne.s32.totalorder %s112, %s113
    %p125 = scmp.eq.s32.totalorder %s19, 1
    %p126 = por %p124, %p125
    %p128 = scmp.ne.s32.totalorder %s113, %s127
    %p129 = scmp.eq.s32.totalorder %s19, 0
    %p130 = por %p128, %p129
    %s132 = sadd.s32 %s131, 1
    %p135 = scmp.eq.s32.totalorder %s13, 1
    %p136 = scmp.ne.s32.totalorder %s131, %s133
    %p137 = scmp.eq.s32.totalorder %s13, 0
    %p138 = por %p136, %p137
    %p139 = scmp.ne.s32.totalorder %s131, %s133
    %p140 = scmp.eq.s32.totalorder %s18, 1
    %p141 = por %p139, %p140
    %p142 = scmp.ne.s32.totalorder %s133, %s134
    %p143 = scmp.eq.s32.totalorder %s18, 0
    %p144 = por %p142, %p143
    %p145 = scmp.ne.s32.totalorder %s133, %s134
    %p146 = scmp.eq.s32.totalorder %s19, 1
    %p147 = por %p145, %p146
    %p149 = scmp.ne.s32.totalorder %s134, %s148
    %p150 = scmp.eq.s32.totalorder %s19, 0
    %p151 = por %p149, %p150
    %s153 = sadd.s32 %s152, 1
    %p156 = scmp.eq.s32.totalorder %s13, 1
    %p157 = scmp.ne.s32.totalorder %s152, %s154
    %p158 = scmp.eq.s32.totalorder %s13, 0
    %p159 = por %p157, %p158
    %p160 = scmp.ne.s32.totalorder %s152, %s154
    %p161 = scmp.eq.s32.totalorder %s18, 1
    %p162 = por %p160, %p161
    %p163 = scmp.ne.s32.totalorder %s154, %s155
    %p164 = scmp.eq.s32.totalorder %s18, 0
    %p165 = por %p163, %p164
    %p166 = scmp.ne.s32.totalorder %s154, %s155
    %p167 = scmp.eq.s32.totalorder %s19, 1
    %p168 = por %p166, %p167
    %p170 = scmp.ne.s32.totalorder %s155, %s169
    %p171 = scmp.eq.s32.totalorder %s19, 0
    %p172 = por %p170, %p171
    %s173 = ssub.s32 %s13, %s20
    %p174 = scmp.eq.s32.totalorder %s173, 0
    %s176 = sadd.s32 %s175, 1
    %s177 = scalar_select %p174, %s175, %s176
    %p180 = pneg %p174
    %p181 = scmp.eq.s32.totalorder %s13, 1
    %p182 = por %p180, %p181
    %p183 = scmp.ne.s32.totalorder %s175, %s178
    %p184 = scmp.eq.s32.totalorder %s13, 0
    %p185 = por %p183, %p184
    %p186 = scmp.ne.s32.totalorder %s175, %s178
    %p187 = scmp.eq.s32.totalorder %s18, 1
    %p188 = por %p186, %p187
    %p189 = scmp.ne.s32.totalorder %s178, %s179
    %p190 = scmp.eq.s32.totalorder %s18, 0
    %p191 = por %p189, %p190
    %p192 = scmp.ne.s32.totalorder %s178, %s179
    %p193 = scmp.eq.s32.totalorder %s19, 1
    %p194 = por %p192, %p193
    %p196 = scmp.ne.s32.totalorder %s179, %s195
    %p197 = scmp.eq.s32.totalorder %s19, 0
    %p198 = por %p196, %p197
    %p199 = scmp.le.s32.totalorder 1, %s13
    %p200 = scmp.lt.s32.totalorder %s13, 3
    %p201 = pnand %p199, %p200
    %p202 = pneg %p201
    // Predicated region
    $region9: #{middle_part_forward.1} parent=5 // pred_check
      _
    $region10: #{middle_part_forward.1} parent=5 // pred_check_branch
      %204 = sbr.rel (%p201) target = $region12
    $region11: #{middle_part_forward.1} parent=5 // pred_region
      %s205 = ssub.s32 %s13, 1
      // Predicated region
      $region13: #{middle_part_forward.1} parent=11 // pred_check
        %p206 = pneg %p60
      $region14: #{middle_part_forward.1} parent=11 // pred_check_branch
        %208 = sbr.rel (%p206) target = $region16
      $region15: #{middle_part_forward.1} parent=11 // pred_region
        _
      $region16: #{middle_part_forward.1} parent=11 // pred_fallthru
        _
      // Predicated region
      $region17: #{middle_part_forward.1} parent=11 // pred_check
        %p209 = pneg %p81
      $region18: #{middle_part_forward.1} parent=11 // pred_check_branch
        %211 = sbr.rel (%p209) target = $region20
      $region19: #{middle_part_forward.1} parent=11 // pred_region
        _
      $region20: #{middle_part_forward.1} parent=11 // pred_fallthru
        _
      // Predicated region
      $region21: #{middle_part_forward.1} parent=11 // pred_check
        %p212 = pneg %p102
      $region22: #{middle_part_forward.1} parent=11 // pred_check_branch
        %214 = sbr.rel (%p212) target = $region24
      $region23: #{middle_part_forward.1} parent=11 // pred_region
        _
      $region24: #{middle_part_forward.1} parent=11 // pred_fallthru
        _
      // Predicated region
      $region25: #{middle_part_forward.1} parent=11 // pred_check
        %p215 = pneg %p123
      $region26: #{middle_part_forward.1} parent=11 // pred_check_branch
        %217 = sbr.rel (%p215) target = $region28
      $region27: #{middle_part_forward.1} parent=11 // pred_region
        _
      $region28: #{middle_part_forward.1} parent=11 // pred_fallthru
        _
      // Predicated region
      $region29: #{middle_part_forward.1} parent=11 // pred_check
        %p218 = pneg %p144
      $region30: #{middle_part_forward.1} parent=11 // pred_check_branch
        %220 = sbr.rel (%p218) target = $region32
      $region31: #{middle_part_forward.1} parent=11 // pred_region
        _
      $region32: #{middle_part_forward.1} parent=11 // pred_fallthru
        _
      // Predicated region
      $region33: #{middle_part_forward.1} parent=11 // pred_check
        %p221 = pneg %p165
      $region34: #{middle_part_forward.1} parent=11 // pred_check_branch
        %223 = sbr.rel (%p221) target = $region36
      $region35: #{middle_part_forward.1} parent=11 // pred_region
        _
      $region36: #{middle_part_forward.1} parent=11 // pred_fallthru
        _
    $region12: #{middle_part_forward.1} parent=5 // pred_fallthru
      _
    %p224 = scmp.lt.s32.totalorder %s13, 2
    // Predicated region
    $region37: #{middle_part_forward.1} parent=5 // pred_check
      %p225 = pneg %p224
    $region38: #{middle_part_forward.1} parent=5 // pred_check_branch
      %227 = sbr.rel (%p225) target = $region40
    $region39: #{middle_part_forward.1} parent=5 // pred_region
      // Predicated region
      $region41: #{middle_part_forward.1} parent=39 // pred_check
        %p228 = pneg %p33
      $region42: #{middle_part_forward.1} parent=39 // pred_check_branch
        %230 = sbr.rel (%p228) target = $region44
      $region43: #{middle_part_forward.1} parent=39 // pred_region
        %s231 = smul.u32 32, %s13
        %p232 = scmp.lt.s32.totalorder %s231, 63
        %s233 = scalar_select %p232, %s231, 63
        %s234 = smul.addr %s233, 4
        %s235 = scalar_lea.vmem %s0, %s234
        %s236 = smul.u32 32, %s13
      $region44: #{middle_part_forward.1} parent=39 // pred_fallthru
        _
    $region40: #{middle_part_forward.1} parent=5 // pred_fallthru
      _
    %p237 = scmp.le.s32.totalorder 1, %s13
    %p238 = scmp.lt.s32.totalorder %s13, 3
    %p239 = pnand %p237, %p238
    %p240 = pneg %p239
    // Predicated region
    $region45: #{middle_part_forward.1} parent=5 // pred_check
      _
    $region46: #{middle_part_forward.1} parent=5 // pred_check_branch
      %242 = sbr.rel (%p239) target = $region48
    $region47: #{middle_part_forward.1} parent=5 // pred_region
      %s243 = ssub.s32 %s13, 1
      %s244 = smul.u32 32, %s18
      %p245 = scmp.lt.s32.totalorder %s244, 63
      %s246 = scalar_select %p245, %s244, 63
      %s247 = smul.addr %s246, 4
      %s248 = scalar_lea.vmem %s0, %s247
      %p249 = pneg %p39
      %p250 = pneg %p36
      %p251 = pneg %p60
      %p252 = pneg %p57
      %p253 = pneg %p81
      %p254 = pneg %p78
      %p255 = pneg %p102
      %p256 = pneg %p99
      %p257 = pneg %p123
      %p258 = pneg %p120
      %p259 = pneg %p144
      %p260 = pneg %p141
      %p261 = pneg %p165
      %p262 = pneg %p162
      %p263 = pneg %p191
      %p264 = pneg %p188
      %s265 = smul.u32 2, %s18
      %p266 = scmp.lt.s32.totalorder %s265, 3
      %s267 = scalar_select %p266, %s265, 3
      %s268 = smul.addr %s267, 2
      %s269 = smul.addr %s268, 8
      %s270 = scalar_lea.vmem %s7, %s269
      %s271 = smul.u32 32, %s18
      %p272 = scmp.lt.s32.totalorder %s271, 63
      %s273 = scalar_select %p272, %s271, 63
      %s274 = smul.addr %s273, 4
      %s275 = scalar_lea.vmem %s0, %s274
      %s276 = smul.u32 32, %s18
      %s277 = smul.u32 2, %s18
      %p278 = scmp.lt.s32.totalorder %s277, 3
      %s279 = scalar_select %p278, %s277, 3
      %s280 = smul.addr %s279, 2
      %s281 = smul.addr %s280, 8
      %s282 = scalar_lea.vmem %s7, %s281
      %s283 = smul.u32 2, %s18
      %v285 = vld [vmem:[%s1] sm:$0xff]
      %v286 = vld [vmem:[%s1 + $0x8] sm:$0xff]
      %v287 = vld [vmem:[%s1 + $0x10] sm:$0xff]
      %v288 = vld [vmem:[%s1 + $0x18] sm:$0xff]
      %v289 = vld [vmem:[%s1 + $0x20] sm:$0x33]
      %v290 = vld [vmem:[%s5] sm:$0xff]
      %v291 = vld [vmem:[%s5 + $0x8] sm:$0xff]
      %v292 = vld [vmem:[%s5 + $0x10] sm:$0xff]
      %v293 = vld [vmem:[%s5 + $0x18] sm:$0xff]
      %v294 = vld [vmem:[%s5 + $0x20] sm:$0xff]
      %v295 = vld [vmem:[%s5 + $0x28] sm:$0xff]
      %v296 = vld [vmem:[%s5 + $0x30] sm:$0xff]
      %v297 = vld [vmem:[%s5 + $0x38] sm:$0xff]
      %v298 = vld [vmem:[%s5 + $0x40] sm:$0xff]
      %v299 = vld [vmem:[%s5 + $0x48] sm:$0xff]
      %v300 = vld [vmem:[%s5 + $0x50] sm:$0xff]
      %v301 = vld [vmem:[%s5 + $0x58] sm:$0xff]
      %v302 = vld [vmem:[%s5 + $0x60] sm:$0xff]
      %v303 = vld [vmem:[%s5 + $0x68] sm:$0xff]
      %v304 = vld [vmem:[%s5 + $0x70] sm:$0xff]
      %v305 = vld [vmem:[%s5 + $0x78] sm:$0xff]
      %v306 = vld [vmem:[%s5 + $0x80] sm:$0xff]
      %v307 = vld [vmem:[%s5 + $0x88] sm:$0xff]
      %v308 = vld [vmem:[%s5 + $0x90] sm:$0xff]
      %v309 = vld [vmem:[%s5 + $0x98] sm:$0xff]
      %v310 = vld [vmem:[%s5 + $0xa0] sm:$0xff]
      %v311 = vld [vmem:[%s5 + $0xa8] sm:$0xff]
      %v312 = vld [vmem:[%s5 + $0xb0] sm:$0xff]
      %v313 = vld [vmem:[%s5 + $0xb8] sm:$0xff]
      %v314 = vld [vmem:[%s5 + $0xc0] sm:$0xff]
      %v315 = vld [vmem:[%s5 + $0xc8] sm:$0xff]
      %v316 = vld [vmem:[%s5 + $0xd0] sm:$0xff]
      %v317 = vld [vmem:[%s5 + $0xd8] sm:$0xff]
      %v318 = vld [vmem:[%s5 + $0xe0] sm:$0xff]
      %v319 = vld [vmem:[%s5 + $0xe8] sm:$0xff]
      %v320 = vld [vmem:[%s5 + $0xf0] sm:$0xff]
      %v321 = vld [vmem:[%s5 + $0xf8] sm:$0xff]
      %v322 = vld [vmem:[%s2] sm:$0x3]
      %v323 = vld [vmem:[%s6] sm:$0x3]
      %324 = vst [vmem:[#allocation2] sm:$0xff] 0
      %325 = vst [vmem:[#allocation2 + $0x8] sm:$0x11] 0
      %s326 = scalar_lea.vmem [#allocation2], 144
      %327 = vst [vmem:[%s326] sm:$0xff] 0
      %328 = vst [vmem:[%s326 + $0x8] sm:$0x11] 0
      %vm329 = vcmask 1040384
      %vm330 = vsmask.f32 256
      %vm331 = vmand %vm329, %vm330
      %vm332 = vcmask 1044484
      %vm333 = vsmask.f32 4352
      %vm334 = vmand %vm332, %vm333
      %vm335 = vmor %vm334, %vm331
      %v336 = vld [vmem:[#allocation2] sm:$0x11]
      %v337 = vsel %vm335, 0, %v336
      %338 = vst [vmem:[#allocation2] sm:$0x11] %v337
      %v339 = vld [vmem:[#allocation2 + $0x10] sm:$0x11]
      %v340 = vsel %vm335, 0, %v339
      %341 = vst [vmem:[#allocation2 + $0x10] sm:$0x11] %v340
      %v342 = vld [vmem:[#allocation2 + $0x20] sm:$0x11]
      %v343 = vsel %vm335, 0, %v342
      %344 = vst [vmem:[#allocation2 + $0x20] sm:$0x11] %v343
      %v345 = vld [vmem:[#allocation2 + $0x30] sm:$0x11]
      %v346 = vsel %vm335, 0, %v345
      %347 = vst [vmem:[#allocation2 + $0x30] sm:$0x11] %v346
      %v348 = vld [vmem:[#allocation2 + $0x40] sm:$0x11]
      %v349 = vsel %vm335, 0, %v348
      %350 = vst [vmem:[#allocation2 + $0x40] sm:$0x11] %v349
      %v351 = vld [vmem:[#allocation2 + $0x50] sm:$0x11]
      %v352 = vsel %vm335, 0, %v351
      %353 = vst [vmem:[#allocation2 + $0x50] sm:$0x11] %v352
      %v354 = vld [vmem:[#allocation2 + $0x60] sm:$0x11]
      %v355 = vsel %vm335, 0, %v354
      %356 = vst [vmem:[#allocation2 + $0x60] sm:$0x11] %v355
      %v357 = vld [vmem:[#allocation2 + $0x70] sm:$0x11]
      %v358 = vsel %vm335, 0, %v357
      %359 = vst [vmem:[#allocation2 + $0x70] sm:$0x11] %v358
      %v360 = vld [vmem:[#allocation2 + $0x80] sm:$0x11]
      %v361 = vsel %vm335, 0, %v360
      %362 = vst [vmem:[#allocation2 + $0x80] sm:$0x11] %v361
      %v363 = vld [vmem:[#allocation2 + $0x90] sm:$0x11]
      %v364 = vsel %vm335, 0, %v363
      %365 = vst [vmem:[#allocation2 + $0x90] sm:$0x11] %v364
      %vm366 = vsmask.f32 7938
      %vm367 = vmand %vm329, %vm366
      %vm368 = vsmask.f32 7954
      %vm369 = vmand %vm332, %vm368
      %vm370 = vmor %vm369, %vm367
      %v371 = vld [vmem:[#allocation2 + $0x8] sm:$0x11]
      %v372 = vsel %vm370, 0, %v371
      %373 = vst [vmem:[#allocation2 + $0x8] sm:$0x11] %v372
      %v374 = vld [vmem:[#allocation2 + $0x18] sm:$0x11]
      %v375 = vsel %vm370, 0, %v374
      %376 = vst [vmem:[#allocation2 + $0x18] sm:$0x11] %v375
      %v377 = vld [vmem:[#allocation2 + $0x28] sm:$0x11]
      %v378 = vsel %vm370, 0, %v377
      %379 = vst [vmem:[#allocation2 + $0x28] sm:$0x11] %v378
      %v380 = vld [vmem:[#allocation2 + $0x38] sm:$0x11]
      %v381 = vsel %vm370, 0, %v380
      %382 = vst [vmem:[#allocation2 + $0x38] sm:$0x11] %v381
      %v383 = vld [vmem:[#allocation2 + $0x48] sm:$0x11]
      %v384 = vsel %vm370, 0, %v383
      %385 = vst [vmem:[#allocation2 + $0x48] sm:$0x11] %v384
      %v386 = vld [vmem:[#allocation2 + $0x58] sm:$0x11]
      %v387 = vsel %vm370, 0, %v386
      %388 = vst [vmem:[#allocation2 + $0x58] sm:$0x11] %v387
      %v389 = vld [vmem:[#allocation2 + $0x68] sm:$0x11]
      %v390 = vsel %vm370, 0, %v389
      %391 = vst [vmem:[#allocation2 + $0x68] sm:$0x11] %v390
      %v392 = vld [vmem:[#allocation2 + $0x78] sm:$0x11]
      %v393 = vsel %vm370, 0, %v392
      %394 = vst [vmem:[#allocation2 + $0x78] sm:$0x11] %v393
      %v395 = vld [vmem:[#allocation2 + $0x88] sm:$0x11]
      %v396 = vsel %vm370, 0, %v395
      %397 = vst [vmem:[#allocation2 + $0x88] sm:$0x11] %v396
      %v398 = vld [vmem:[#allocation2 + $0x98] sm:$0x11]
      %v399 = vsel %vm370, 0, %v398
      %400 = vst [vmem:[#allocation2 + $0x98] sm:$0x11] %v399
      %v401 = vld [vmem:[%s275] sm:$0xf]
      %v402 = vld [vmem:[%s275 + $0x4] sm:$0xf]
      %v403 = vld [vmem:[%s275 + $0x8] sm:$0xf]
      %v404 = vld [vmem:[%s275 + $0xc] sm:$0xf]
      %v405 = vld [vmem:[%s275 + $0x10] sm:$0xf]
      %v406 = vld [vmem:[%s275 + $0x14] sm:$0xf]
      %v407 = vld [vmem:[%s275 + $0x18] sm:$0xf]
      %v408 = vld [vmem:[%s275 + $0x1c] sm:$0xf]
      %v409 = vld [vmem:[%s275 + $0x20] sm:$0xf]
      %v410 = vld [vmem:[%s275 + $0x24] sm:$0xf]
      %v411 = vld [vmem:[%s275 + $0x28] sm:$0xf]
      %v412 = vld [vmem:[%s275 + $0x2c] sm:$0xf]
      %v413 = vld [vmem:[%s275 + $0x30] sm:$0xf]
      %v414 = vld [vmem:[%s275 + $0x34] sm:$0xf]
      %v415 = vld [vmem:[%s275 + $0x38] sm:$0xf]
      %v416 = vld [vmem:[%s275 + $0x3c] sm:$0xf]
      %v418 = vlaneseq
      %v419 = vshrl.u32 %v418, 7
      %v420 = vsub.s32 0, %v419
      %v421 = vrot.slane %v322, %v420
      %v422 = vlaneseq
      %v423 = vshrl.u32 %v422, 7
      %v424 = vsub.s32 1, %v423
      %v425 = vrot.slane %v322, %v424
      %v444 = vunpack.c.l.b16 %v401
      %v445 = vunpack.c.l.b16 %v402
      %v446 = vunpack.c.l.b16 %v403
      %v447 = vunpack.c.l.b16 %v404
      %v448 = vunpack.c.l.b16 %v405
      %v449 = vunpack.c.l.b16 %v406
      %v450 = vunpack.c.l.b16 %v407
      %v451 = vunpack.c.l.b16 %v408
      %v452 = vunpack.c.l.b16 %v409
      %v453 = vunpack.c.l.b16 %v410
      %v454 = vunpack.c.l.b16 %v411
      %v455 = vunpack.c.l.b16 %v412
      %v456 = vunpack.c.l.b16 %v413
      %v457 = vunpack.c.l.b16 %v414
      %v458 = vunpack.c.l.b16 %v415
      %v459 = vunpack.c.l.b16 %v416
      %v460 = vpack.c.b16 %v445, %v444
      %v461 = vpack.c.b16 %v447, %v446
      %v462 = vpack.c.b16 %v449, %v448
      %v463 = vpack.c.b16 %v451, %v450
      %v464 = vpack.c.b16 %v453, %v452
      %v465 = vpack.c.b16 %v455, %v454
      %v466 = vpack.c.b16 %v457, %v456
      %v467 = vpack.c.b16 %v459, %v458
      %v473 = vunpack.c.l.b16 %v285
      %v474 = vunpack.c.h.b16 %v285
      %v475 = vunpack.c.l.b16 %v286
      %v476 = vunpack.c.h.b16 %v286
      %v477 = vunpack.c.l.b16 %v287
      %v478 = vunpack.c.h.b16 %v287
      %v479 = vunpack.c.l.b16 %v288
      %v480 = vunpack.c.h.b16 %v288
      %v481 = vunpack.c.l.b16 %v289
      %v482 = vunpack.c.h.b16 %v289
      %v483 = vpack.c.b16 %v475, %v473
      %v484 = vpack.c.b16 %v476, %v474
      %v485 = vpack.c.b16 %v479, %v477
      %v486 = vpack.c.b16 %v480, %v478
      %v487 = vpack.c.b16 %v481, %v481
      %v488 = vpack.c.b16 %v482, %v482
      %vm493 = vcmask 293888
      %v495 = vsel %vm493, %v460, 0
      %v498 = vsel %vm493, %v461, 0
      %v501 = vsel %vm493, %v462, 0
      %v504 = vsel %vm493, %v463, 0
      %v507 = vsel %vm493, %v464, 0
      %v510 = vsel %vm493, %v465, 0
      %v513 = vsel %vm493, %v466, 0
      %v516 = vsel %vm493, %v467, 0
      %vm518 = vcmask 1041408
      %v520 = vsel %vm518, %v487, 0
      %v523 = vsel %vm518, %v488, 0
      %525 = vmatprep.subr.bf16.mxu0 0
      %526 = vmatpush1.bf16.msra.mxu0 0
      %527 = vmatprep.subr.bf16.mxu0 0
      %528 = vmatpush1.bf16.msra.mxu0 0
      %529 = vmatprep.subr.bf16.mxu0 0
      %530 = vmatpush1.bf16.msra.mxu0 0
      %531 = vmatprep.subr.bf16.mxu0 0
      %532 = vmatpush1.bf16.msra.mxu0 0
      %533 = vmatprep.subr.bf16.mxu0 0
      %534 = vmatpush1.bf16.msra.mxu0 0
      %535 = vmatprep.subr.bf16.mxu0 %v523
      %536 = vmatpush1.bf16.msra.mxu0 %v520
      %537 = vmatprep.subr.bf16.mxu0 %v486
      %538 = vmatpush1.bf16.msra.mxu0 %v485
      %539 = vmatprep.subr.bf16.mxu0 %v484
      %540 = vmatpush1.bf16.msra.mxu0 %v483
      %541 = vmatprep.subr.bf16.mxu0 0
      %542 = vmatpush2.bf16.msra.mxu0 0
      %543 = vmatprep.subr.bf16.mxu0 0
      %544 = vmatpush2.bf16.msra.mxu0 0
      %545 = vmatprep.subr.bf16.mxu0 0
      %546 = vmatpush2.bf16.msra.mxu0 0
      %547 = vmatprep.subr.bf16.mxu0 0
      %548 = vmatpush2.bf16.msra.mxu0 0
      %549 = vmatprep.subr.bf16.mxu0 0
      %550 = vmatpush2.bf16.msra.mxu0 0
      %551 = vmatprep.subr.bf16.mxu0 0
      %552 = vmatpush2.bf16.msra.mxu0 0
      %553 = vmatprep.subr.bf16.mxu0 0
      %554 = vmatpush2.bf16.msra.mxu0 0
      %555 = vmatprep.subr.bf16.mxu0 0
      %556 = vmatpush2.bf16.msra.mxu0 0
      %557 = vmatprep.mubr.bf16.mxu0 0
      %558 = vmatmul.mubr.bf16.gmra.mxu0 %v495
      %v559 = vpop.f32.mrf.mxu0
      %v560 = vadd.f32 %v421, %v559
      %v561 = vpop.f32.mrf.mxu0
      %v562 = vadd.f32 %v425, %v561
      %v563 = vpop.f32.mrf.mxu0
      %v564 = vadd.f32 %v421, %v563
      %v565 = vpop.f32.mrf.mxu0
      %v566 = vadd.f32 %v425, %v565
      %567 = vmatprep.mubr.bf16.mxu0 0
      %568 = vmatmul.mubr.bf16.gmra.mxu0 %v498
      %v569 = vpop.f32.mrf.mxu0
      %v570 = vadd.f32 %v421, %v569
      %v571 = vpop.f32.mrf.mxu0
      %v572 = vadd.f32 %v425, %v571
      %v573 = vpop.f32.mrf.mxu0
      %v574 = vadd.f32 %v421, %v573
      %v575 = vpop.f32.mrf.mxu0
      %v576 = vadd.f32 %v425, %v575
      %577 = vmatprep.mubr.bf16.mxu0 0
      %578 = vmatmul.mubr.bf16.gmra.mxu0 %v501
      %v579 = vpop.f32.mrf.mxu0
      %v580 = vadd.f32 %v421, %v579
      %v581 = vpop.f32.mrf.mxu0
      %v582 = vadd.f32 %v425, %v581
      %v583 = vpop.f32.mrf.mxu0
      %v584 = vadd.f32 %v421, %v583
      %v585 = vpop.f32.mrf.mxu0
      %v586 = vadd.f32 %v425, %v585
      %587 = vmatprep.mubr.bf16.mxu0 0
      %588 = vmatmul.mubr.bf16.gmra.mxu0 %v504
      %v589 = vpop.f32.mrf.mxu0
      %v590 = vadd.f32 %v421, %v589
      %v591 = vpop.f32.mrf.mxu0
      %v592 = vadd.f32 %v425, %v591
      %v593 = vpop.f32.mrf.mxu0
      %v594 = vadd.f32 %v421, %v593
      %v595 = vpop.f32.mrf.mxu0
      %v596 = vadd.f32 %v425, %v595
      %597 = vmatprep.mubr.bf16.mxu0 0
      %598 = vmatmul.mubr.bf16.gmra.mxu0 %v507
      %v599 = vpop.f32.mrf.mxu0
      %v600 = vadd.f32 %v421, %v599
      %v601 = vpop.f32.mrf.mxu0
      %v602 = vadd.f32 %v425, %v601
      %v603 = vpop.f32.mrf.mxu0
      %v604 = vadd.f32 %v421, %v603
      %v605 = vpop.f32.mrf.mxu0
      %v606 = vadd.f32 %v425, %v605
      %607 = vmatprep.mubr.bf16.mxu0 0
      %608 = vmatmul.mubr.bf16.gmra.mxu0 %v510
      %v609 = vpop.f32.mrf.mxu0
      %v610 = vadd.f32 %v421, %v609
      %v611 = vpop.f32.mrf.mxu0
      %v612 = vadd.f32 %v425, %v611
      %v613 = vpop.f32.mrf.mxu0
      %v614 = vadd.f32 %v421, %v613
      %v615 = vpop.f32.mrf.mxu0
      %v616 = vadd.f32 %v425, %v615
      %617 = vmatprep.mubr.bf16.mxu0 0
      %618 = vmatmul.mubr.bf16.gmra.mxu0 %v513
      %v619 = vpop.f32.mrf.mxu0
      %v620 = vadd.f32 %v421, %v619
      %v621 = vpop.f32.mrf.mxu0
      %v622 = vadd.f32 %v425, %v621
      %v623 = vpop.f32.mrf.mxu0
      %v624 = vadd.f32 %v421, %v623
      %v625 = vpop.f32.mrf.mxu0
      %v626 = vadd.f32 %v425, %v625
      %627 = vmatprep.mubr.bf16.mxu0 0
      %628 = vmatmul.mubr.bf16.gmra.mxu0 %v516
      %v629 = vpop.f32.mrf.mxu0
      %v630 = vadd.f32 %v421, %v629
      %v631 = vpop.f32.mrf.mxu0
      %v632 = vadd.f32 %v425, %v631
      %v633 = vpop.f32.mrf.mxu0
      %v634 = vadd.f32 %v421, %v633
      %v635 = vpop.f32.mrf.mxu0
      %v636 = vadd.f32 %v425, %v635
      %637 = vdwg.mxu0
      %v638 = vmax.f32 %v560, 0.0
      %v639 = vmax.f32 %v562, 0.0
      %v640 = vmax.f32 %v564, 0.0
      %v641 = vmax.f32 %v566, 0.0
      %v642 = vmax.f32 %v570, 0.0
      %v643 = vmax.f32 %v572, 0.0
      %v644 = vmax.f32 %v574, 0.0
      %v645 = vmax.f32 %v576, 0.0
      %v646 = vmax.f32 %v580, 0.0
      %v647 = vmax.f32 %v582, 0.0
      %v648 = vmax.f32 %v584, 0.0
      %v649 = vmax.f32 %v586, 0.0
      %v650 = vmax.f32 %v590, 0.0
      %v651 = vmax.f32 %v592, 0.0
      %v652 = vmax.f32 %v594, 0.0
      %v653 = vmax.f32 %v596, 0.0
      %v654 = vmax.f32 %v600, 0.0
      %v655 = vmax.f32 %v602, 0.0
      %v656 = vmax.f32 %v604, 0.0
      %v657 = vmax.f32 %v606, 0.0
      %v658 = vmax.f32 %v610, 0.0
      %v659 = vmax.f32 %v612, 0.0
      %v660 = vmax.f32 %v614, 0.0
      %v661 = vmax.f32 %v616, 0.0
      %v662 = vmax.f32 %v620, 0.0
      %v663 = vmax.f32 %v622, 0.0
      %v664 = vmax.f32 %v624, 0.0
      %v665 = vmax.f32 %v626, 0.0
      %v666 = vmax.f32 %v630, 0.0
      %v667 = vmax.f32 %v632, 0.0
      %v668 = vmax.f32 %v634, 0.0
      %v669 = vmax.f32 %v636, 0.0
      %v670 = vpack.c.bf16 %v640, %v638
      %v671 = vpack.c.bf16 %v641, %v639
      %v672 = vpack.c.bf16 %v644, %v642
      %v673 = vpack.c.bf16 %v645, %v643
      %v674 = vpack.c.bf16 %v648, %v646
      %v675 = vpack.c.bf16 %v649, %v647
      %v676 = vpack.c.bf16 %v652, %v650
      %v677 = vpack.c.bf16 %v653, %v651
      %v678 = vpack.c.bf16 %v656, %v654
      %v679 = vpack.c.bf16 %v657, %v655
      %v680 = vpack.c.bf16 %v660, %v658
      %v681 = vpack.c.bf16 %v661, %v659
      %v682 = vpack.c.bf16 %v664, %v662
      %v683 = vpack.c.bf16 %v665, %v663
      %v684 = vpack.c.bf16 %v668, %v666
      %v685 = vpack.c.bf16 %v669, %v667
      %v718 = vunpack.c.l.b16 %v290
      %v719 = vunpack.c.h.b16 %v290
      %v720 = vunpack.c.l.b16 %v291
      %v721 = vunpack.c.h.b16 %v291
      %v722 = vunpack.c.l.b16 %v292
      %v723 = vunpack.c.h.b16 %v292
      %v724 = vunpack.c.l.b16 %v293
      %v725 = vunpack.c.h.b16 %v293
      %v726 = vunpack.c.l.b16 %v294
      %v727 = vunpack.c.h.b16 %v294
      %v728 = vunpack.c.l.b16 %v295
      %v729 = vunpack.c.h.b16 %v295
      %v730 = vunpack.c.l.b16 %v296
      %v731 = vunpack.c.h.b16 %v296
      %v732 = vunpack.c.l.b16 %v297
      %v733 = vunpack.c.h.b16 %v297
      %v734 = vunpack.c.l.b16 %v298
      %v735 = vunpack.c.h.b16 %v298
      %v736 = vunpack.c.l.b16 %v299
      %v737 = vunpack.c.h.b16 %v299
      %v738 = vunpack.c.l.b16 %v300
      %v739 = vunpack.c.h.b16 %v300
      %v740 = vunpack.c.l.b16 %v301
      %v741 = vunpack.c.h.b16 %v301
      %v742 = vunpack.c.l.b16 %v302
      %v743 = vunpack.c.h.b16 %v302
      %v744 = vunpack.c.l.b16 %v303
      %v745 = vunpack.c.h.b16 %v303
      %v746 = vunpack.c.l.b16 %v304
      %v747 = vunpack.c.h.b16 %v304
      %v748 = vunpack.c.l.b16 %v305
      %v749 = vunpack.c.h.b16 %v305
      %v750 = vunpack.c.l.b16 %v306
      %v751 = vunpack.c.h.b16 %v306
      %v752 = vunpack.c.l.b16 %v307
      %v753 = vunpack.c.h.b16 %v307
      %v754 = vunpack.c.l.b16 %v308
      %v755 = vunpack.c.h.b16 %v308
      %v756 = vunpack.c.l.b16 %v309
      %v757 = vunpack.c.h.b16 %v309
      %v758 = vunpack.c.l.b16 %v310
      %v759 = vunpack.c.h.b16 %v310
      %v760 = vunpack.c.l.b16 %v311
      %v761 = vunpack.c.h.b16 %v311
      %v762 = vunpack.c.l.b16 %v312
      %v763 = vunpack.c.h.b16 %v312
      %v764 = vunpack.c.l.b16 %v313
      %v765 = vunpack.c.h.b16 %v313
      %v766 = vunpack.c.l.b16 %v314
      %v767 = vunpack.c.h.b16 %v314
      %v768 = vunpack.c.l.b16 %v315
      %v769 = vunpack.c.h.b16 %v315
      %v770 = vunpack.c.l.b16 %v316
      %v771 = vunpack.c.h.b16 %v316
      %v772 = vunpack.c.l.b16 %v317
      %v773 = vunpack.c.h.b16 %v317
      %v774 = vunpack.c.l.b16 %v318
      %v775 = vunpack.c.h.b16 %v318
      %v776 = vunpack.c.l.b16 %v319
      %v777 = vunpack.c.h.b16 %v319
      %v778 = vunpack.c.l.b16 %v320
      %v779 = vunpack.c.h.b16 %v320
      %v780 = vunpack.c.l.b16 %v321
      %v781 = vunpack.c.h.b16 %v321
      %v782 = vpack.c.b16 %v720, %v718
      %v783 = vpack.c.b16 %v721, %v719
      %v784 = vpack.c.b16 %v724, %v722
      %v785 = vpack.c.b16 %v725, %v723
      %v786 = vpack.c.b16 %v728, %v726
      %v787 = vpack.c.b16 %v729, %v727
      %v788 = vpack.c.b16 %v732, %v730
      %v789 = vpack.c.b16 %v733, %v731
      %v790 = vpack.c.b16 %v736, %v734
      %v791 = vpack.c.b16 %v737, %v735
      %v792 = vpack.c.b16 %v740, %v738
      %v793 = vpack.c.b16 %v741, %v739
      %v794 = vpack.c.b16 %v744, %v742
      %v795 = vpack.c.b16 %v745, %v743
      %v796 = vpack.c.b16 %v748, %v746
      %v797 = vpack.c.b16 %v749, %v747
      %v798 = vpack.c.b16 %v752, %v750
      %v799 = vpack.c.b16 %v753, %v751
      %v800 = vpack.c.b16 %v756, %v754
      %v801 = vpack.c.b16 %v757, %v755
      %v802 = vpack.c.b16 %v760, %v758
      %v803 = vpack.c.b16 %v761, %v759
      %v804 = vpack.c.b16 %v764, %v762
      %v805 = vpack.c.b16 %v765, %v763
      %v806 = vpack.c.b16 %v768, %v766
      %v807 = vpack.c.b16 %v769, %v767
      %v808 = vpack.c.b16 %v772, %v770
      %v809 = vpack.c.b16 %v773, %v771
      %v810 = vpack.c.b16 %v776, %v774
      %v811 = vpack.c.b16 %v777, %v775
      %v812 = vpack.c.b16 %v780, %v778
      %v813 = vpack.c.b16 %v781, %v779
      %846 = vmatprep.subr.bf16.mxu0 %v797
      %847 = vmatpush1.bf16.msra.mxu0 %v796
      %848 = vmatprep.subr.bf16.mxu0 %v795
      %849 = vmatpush1.bf16.msra.mxu0 %v794
      %850 = vmatprep.subr.bf16.mxu0 %v793
      %851 = vmatpush1.bf16.msra.mxu0 %v792
      %852 = vmatprep.subr.bf16.mxu0 %v791
      %853 = vmatpush1.bf16.msra.mxu0 %v790
      %854 = vmatprep.subr.bf16.mxu0 %v789
      %855 = vmatpush1.bf16.msra.mxu0 %v788
      %856 = vmatprep.subr.bf16.mxu0 %v787
      %857 = vmatpush1.bf16.msra.mxu0 %v786
      %858 = vmatprep.subr.bf16.mxu0 %v785
      %859 = vmatpush1.bf16.msra.mxu0 %v784
      %860 = vmatprep.subr.bf16.mxu0 %v783
      %861 = vmatpush1.bf16.msra.mxu0 %v782
      %862 = vmatprep.subr.bf16.mxu0 %v813
      %863 = vmatpush2.bf16.msra.mxu0 %v812
      %864 = vmatprep.subr.bf16.mxu0 %v811
      %865 = vmatpush2.bf16.msra.mxu0 %v810
      %866 = vmatprep.subr.bf16.mxu0 %v809
      %867 = vmatpush2.bf16.msra.mxu0 %v808
      %868 = vmatprep.subr.bf16.mxu0 %v807
      %869 = vmatpush2.bf16.msra.mxu0 %v806
      %870 = vmatprep.subr.bf16.mxu0 %v805
      %871 = vmatpush2.bf16.msra.mxu0 %v804
      %872 = vmatprep.subr.bf16.mxu0 %v803
      %873 = vmatpush2.bf16.msra.mxu0 %v802
      %874 = vmatprep.subr.bf16.mxu0 %v801
      %875 = vmatpush2.bf16.msra.mxu0 %v800
      %876 = vmatprep.subr.bf16.mxu0 %v799
      %877 = vmatpush2.bf16.msra.mxu0 %v798
      %878 = vmatprep.mubr.bf16.mxu0 %v671
      %879 = vmatmul.mubr.bf16.gmra.mxu0 %v670
      %v880 = vpop.f32.mrf.mxu0
      %v881 = vadd.f32 0.0, %v880
      %v882 = vpop.f32.mrf.mxu0
      %v883 = vadd.f32 0.0, %v882
      %v884 = vpop.f32.mrf.mxu0
      %v885 = vadd.f32 0.0, %v884
      %v886 = vpop.f32.mrf.mxu0
      %v887 = vadd.f32 0.0, %v886
      %888 = vmatprep.mubr.bf16.mxu0 %v673
      %889 = vmatmul.mubr.bf16.gmra.mxu0 %v672
      %v890 = vpop.f32.mrf.mxu0
      %v891 = vadd.f32 0.0, %v890
      %v892 = vpop.f32.mrf.mxu0
      %v893 = vadd.f32 0.0, %v892
      %v894 = vpop.f32.mrf.mxu0
      %v895 = vadd.f32 0.0, %v894
      %v896 = vpop.f32.mrf.mxu0
      %v897 = vadd.f32 0.0, %v896
      %898 = vmatprep.mubr.bf16.mxu0 %v675
      %899 = vmatmul.mubr.bf16.gmra.mxu0 %v674
      %v900 = vpop.f32.mrf.mxu0
      %v901 = vadd.f32 0.0, %v900
      %v902 = vpop.f32.mrf.mxu0
      %v903 = vadd.f32 0.0, %v902
      %v904 = vpop.f32.mrf.mxu0
      %v905 = vadd.f32 0.0, %v904
      %v906 = vpop.f32.mrf.mxu0
      %v907 = vadd.f32 0.0, %v906
      %908 = vmatprep.mubr.bf16.mxu0 %v677
      %909 = vmatmul.mubr.bf16.gmra.mxu0 %v676
      %v910 = vpop.f32.mrf.mxu0
      %v911 = vadd.f32 0.0, %v910
      %v912 = vpop.f32.mrf.mxu0
      %v913 = vadd.f32 0.0, %v912
      %v914 = vpop.f32.mrf.mxu0
      %v915 = vadd.f32 0.0, %v914
      %v916 = vpop.f32.mrf.mxu0
      %v917 = vadd.f32 0.0, %v916
      %918 = vmatprep.mubr.bf16.mxu0 %v679
      %919 = vmatmul.mubr.bf16.gmra.mxu0 %v678
      %v920 = vpop.f32.mrf.mxu0
      %v921 = vadd.f32 0.0, %v920
      %v922 = vpop.f32.mrf.mxu0
      %v923 = vadd.f32 0.0, %v922
      %v924 = vpop.f32.mrf.mxu0
      %v925 = vadd.f32 0.0, %v924
      %v926 = vpop.f32.mrf.mxu0
      %v927 = vadd.f32 0.0, %v926
      %928 = vmatprep.mubr.bf16.mxu0 %v681
      %929 = vmatmul.mubr.bf16.gmra.mxu0 %v680
      %v930 = vpop.f32.mrf.mxu0
      %v931 = vadd.f32 0.0, %v930
      %v932 = vpop.f32.mrf.mxu0
      %v933 = vadd.f32 0.0, %v932
      %v934 = vpop.f32.mrf.mxu0
      %v935 = vadd.f32 0.0, %v934
      %v936 = vpop.f32.mrf.mxu0
      %v937 = vadd.f32 0.0, %v936
      %938 = vmatprep.mubr.bf16.mxu0 %v683
      %939 = vmatmul.mubr.bf16.gmra.mxu0 %v682
      %v940 = vpop.f32.mrf.mxu0
      %v941 = vadd.f32 0.0, %v940
      %v942 = vpop.f32.mrf.mxu0
      %v943 = vadd.f32 0.0, %v942
      %v944 = vpop.f32.mrf.mxu0
      %v945 = vadd.f32 0.0, %v944
      %v946 = vpop.f32.mrf.mxu0
      %v947 = vadd.f32 0.0, %v946
      %948 = vmatprep.mubr.bf16.mxu0 %v685
      %949 = vmatmul.mubr.bf16.gmra.mxu0 %v684
      %v950 = vpop.f32.mrf.mxu0
      %v951 = vadd.f32 0.0, %v950
      %v952 = vpop.f32.mrf.mxu0
      %v953 = vadd.f32 0.0, %v952
      %v954 = vpop.f32.mrf.mxu0
      %v955 = vadd.f32 0.0, %v954
      %v956 = vpop.f32.mrf.mxu0
      %v957 = vadd.f32 0.0, %v956
      %958 = vdwg.mxu0
      %v991 = vcombine.low %v881, %v883
      %v992 = vcombine.high %v881, %v883
      %v994 = vunpack.c.l.s4 1983009808
      %v995 = vunpack.c.0.s8 %v994
      %v996 = vlaneseq
      %v997 = vshrl.u32 %v996, 7
      %v998 = vsub.s32 %v995, %v997
      %v999 = vrot.slane %v991, %v998
      %v1001 = vunpack.c.l.s4 1983009808
      %v1002 = vunpack.c.0.s8 %v1001
      %v1003 = vlaneseq
      %v1004 = vshrl.u32 %v1003, 7
      %v1005 = vsub.s32 %v1002, %v1004
      %v1006 = vrot.slane %v992, %v1005
      %v1007 = vcombine.high %v999, %v999
      %v1008 = vcombine.high %v1006, %v1006
      %v1009 = vcombine.low %v885, %v887
      %v1010 = vcombine.high %v885, %v887
      %v1012 = vunpack.c.l.s4 1983009808
      %v1013 = vunpack.c.0.s8 %v1012
      %v1014 = vlaneseq
      %v1015 = vshrl.u32 %v1014, 7
      %v1016 = vsub.s32 %v1013, %v1015
      %v1017 = vrot.slane %v1009, %v1016
      %v1019 = vunpack.c.l.s4 1983009808
      %v1020 = vunpack.c.0.s8 %v1019
      %v1021 = vlaneseq
      %v1022 = vshrl.u32 %v1021, 7
      %v1023 = vsub.s32 %v1020, %v1022
      %v1024 = vrot.slane %v1010, %v1023
      %v1025 = vcombine.high %v1017, %v1017
      %v1026 = vcombine.high %v1024, %v1024
      %v1027 = vcombine.low %v891, %v893
      %v1028 = vcombine.high %v891, %v893
      %v1030 = vunpack.c.l.s4 1983009808
      %v1031 = vunpack.c.0.s8 %v1030
      %v1032 = vlaneseq
      %v1033 = vshrl.u32 %v1032, 7
      %v1034 = vsub.s32 %v1031, %v1033
      %v1035 = vrot.slane %v1027, %v1034
      %v1037 = vunpack.c.l.s4 1983009808
      %v1038 = vunpack.c.0.s8 %v1037
      %v1039 = vlaneseq
      %v1040 = vshrl.u32 %v1039, 7
      %v1041 = vsub.s32 %v1038, %v1040
      %v1042 = vrot.slane %v1028, %v1041
      %v1043 = vcombine.high %v1035, %v1035
      %v1044 = vcombine.high %v1042, %v1042
      %v1045 = vcombine.low %v895, %v897
      %v1046 = vcombine.high %v895, %v897
      %v1048 = vunpack.c.l.s4 1983009808
      %v1049 = vunpack.c.0.s8 %v1048
      %v1050 = vlaneseq
      %v1051 = vshrl.u32 %v1050, 7
      %v1052 = vsub.s32 %v1049, %v1051
      %v1053 = vrot.slane %v1045, %v1052
      %v1055 = vunpack.c.l.s4 1983009808
      %v1056 = vunpack.c.0.s8 %v1055
      %v1057 = vlaneseq
      %v1058 = vshrl.u32 %v1057, 7
      %v1059 = vsub.s32 %v1056, %v1058
      %v1060 = vrot.slane %v1046, %v1059
      %v1061 = vcombine.high %v1053, %v1053
      %v1062 = vcombine.high %v1060, %v1060
      %v1063 = vcombine.low %v901, %v903
      %v1064 = vcombine.high %v901, %v903
      %v1066 = vunpack.c.l.s4 1983009808
      %v1067 = vunpack.c.0.s8 %v1066
      %v1068 = vlaneseq
      %v1069 = vshrl.u32 %v1068, 7
      %v1070 = vsub.s32 %v1067, %v1069
      %v1071 = vrot.slane %v1063, %v1070
      %v1073 = vunpack.c.l.s4 1983009808
      %v1074 = vunpack.c.0.s8 %v1073
      %v1075 = vlaneseq
      %v1076 = vshrl.u32 %v1075, 7
      %v1077 = vsub.s32 %v1074, %v1076
      %v1078 = vrot.slane %v1064, %v1077
      %v1079 = vcombine.high %v1071, %v1071
      %v1080 = vcombine.high %v1078, %v1078
      %v1081 = vcombine.low %v905, %v907
      %v1082 = vcombine.high %v905, %v907
      %v1084 = vunpack.c.l.s4 1983009808
      %v1085 = vunpack.c.0.s8 %v1084
      %v1086 = vlaneseq
      %v1087 = vshrl.u32 %v1086, 7
      %v1088 = vsub.s32 %v1085, %v1087
      %v1089 = vrot.slane %v1081, %v1088
      %v1091 = vunpack.c.l.s4 1983009808
      %v1092 = vunpack.c.0.s8 %v1091
      %v1093 = vlaneseq
      %v1094 = vshrl.u32 %v1093, 7
      %v1095 = vsub.s32 %v1092, %v1094
      %v1096 = vrot.slane %v1082, %v1095
      %v1097 = vcombine.high %v1089, %v1089
      %v1098 = vcombine.high %v1096, %v1096
      %v1099 = vcombine.low %v911, %v913
      %v1100 = vcombine.high %v911, %v913
      %v1102 = vunpack.c.l.s4 1983009808
      %v1103 = vunpack.c.0.s8 %v1102
      %v1104 = vlaneseq
      %v1105 = vshrl.u32 %v1104, 7
      %v1106 = vsub.s32 %v1103, %v1105
      %v1107 = vrot.slane %v1099, %v1106
      %v1109 = vunpack.c.l.s4 1983009808
      %v1110 = vunpack.c.0.s8 %v1109
      %v1111 = vlaneseq
      %v1112 = vshrl.u32 %v1111, 7
      %v1113 = vsub.s32 %v1110, %v1112
      %v1114 = vrot.slane %v1100, %v1113
      %v1115 = vcombine.high %v1107, %v1107
      %v1116 = vcombine.high %v1114, %v1114
      %v1117 = vcombine.low %v915, %v917
      %v1118 = vcombine.high %v915, %v917
      %v1120 = vunpack.c.l.s4 1983009808
      %v1121 = vunpack.c.0.s8 %v1120
      %v1122 = vlaneseq
      %v1123 = vshrl.u32 %v1122, 7
      %v1124 = vsub.s32 %v1121, %v1123
      %v1125 = vrot.slane %v1117, %v1124
      %v1127 = vunpack.c.l.s4 1983009808
      %v1128 = vunpack.c.0.s8 %v1127
      %v1129 = vlaneseq
      %v1130 = vshrl.u32 %v1129, 7
      %v1131 = vsub.s32 %v1128, %v1130
      %v1132 = vrot.slane %v1118, %v1131
      %v1133 = vcombine.high %v1125, %v1125
      %v1134 = vcombine.high %v1132, %v1132
      %v1135 = vcombine.low %v921, %v923
      %v1136 = vcombine.high %v921, %v923
      %v1138 = vunpack.c.l.s4 1983009808
      %v1139 = vunpack.c.0.s8 %v1138
      %v1140 = vlaneseq
      %v1141 = vshrl.u32 %v1140, 7
      %v1142 = vsub.s32 %v1139, %v1141
      %v1143 = vrot.slane %v1135, %v1142
      %v1145 = vunpack.c.l.s4 1983009808
      %v1146 = vunpack.c.0.s8 %v1145
      %v1147 = vlaneseq
      %v1148 = vshrl.u32 %v1147, 7
      %v1149 = vsub.s32 %v1146, %v1148
      %v1150 = vrot.slane %v1136, %v1149
      %v1151 = vcombine.high %v1143, %v1143
      %v1152 = vcombine.high %v1150, %v1150
      %v1153 = vcombine.low %v925, %v927
      %v1154 = vcombine.high %v925, %v927
      %v1156 = vunpack.c.l.s4 1983009808
      %v1157 = vunpack.c.0.s8 %v1156
      %v1158 = vlaneseq
      %v1159 = vshrl.u32 %v1158, 7
      %v1160 = vsub.s32 %v1157, %v1159
      %v1161 = vrot.slane %v1153, %v1160
      %v1163 = vunpack.c.l.s4 1983009808
      %v1164 = vunpack.c.0.s8 %v1163
      %v1165 = vlaneseq
      %v1166 = vshrl.u32 %v1165, 7
      %v1167 = vsub.s32 %v1164, %v1166
      %v1168 = vrot.slane %v1154, %v1167
      %v1169 = vcombine.high %v1161, %v1161
      %v1170 = vcombine.high %v1168, %v1168
      %v1171 = vcombine.low %v931, %v933
      %v1172 = vcombine.high %v931, %v933
      %v1174 = vunpack.c.l.s4 1983009808
      %v1175 = vunpack.c.0.s8 %v1174
      %v1176 = vlaneseq
      %v1177 = vshrl.u32 %v1176, 7
      %v1178 = vsub.s32 %v1175, %v1177
      %v1179 = vrot.slane %v1171, %v1178
      %v1181 = vunpack.c.l.s4 1983009808
      %v1182 = vunpack.c.0.s8 %v1181
      %v1183 = vlaneseq
      %v1184 = vshrl.u32 %v1183, 7
      %v1185 = vsub.s32 %v1182, %v1184
      %v1186 = vrot.slane %v1172, %v1185
      %v1187 = vcombine.high %v1179, %v1179
      %v1188 = vcombine.high %v1186, %v1186
      %v1189 = vcombine.low %v935, %v937
      %v1190 = vcombine.high %v935, %v937
      %v1192 = vunpack.c.l.s4 1983009808
      %v1193 = vunpack.c.0.s8 %v1192
      %v1194 = vlaneseq
      %v1195 = vshrl.u32 %v1194, 7
      %v1196 = vsub.s32 %v1193, %v1195
      %v1197 = vrot.slane %v1189, %v1196
      %v1199 = vunpack.c.l.s4 1983009808
      %v1200 = vunpack.c.0.s8 %v1199
      %v1201 = vlaneseq
      %v1202 = vshrl.u32 %v1201, 7
      %v1203 = vsub.s32 %v1200, %v1202
      %v1204 = vrot.slane %v1190, %v1203
      %v1205 = vcombine.high %v1197, %v1197
      %v1206 = vcombine.high %v1204, %v1204
      %v1207 = vcombine.low %v941, %v943
      %v1208 = vcombine.high %v941, %v943
      %v1210 = vunpack.c.l.s4 1983009808
      %v1211 = vunpack.c.0.s8 %v1210
      %v1212 = vlaneseq
      %v1213 = vshrl.u32 %v1212, 7
      %v1214 = vsub.s32 %v1211, %v1213
      %v1215 = vrot.slane %v1207, %v1214
      %v1217 = vunpack.c.l.s4 1983009808
      %v1218 = vunpack.c.0.s8 %v1217
      %v1219 = vlaneseq
      %v1220 = vshrl.u32 %v1219, 7
      %v1221 = vsub.s32 %v1218, %v1220
      %v1222 = vrot.slane %v1208, %v1221
      %v1223 = vcombine.high %v1215, %v1215
      %v1224 = vcombine.high %v1222, %v1222
      %v1225 = vcombine.low %v945, %v947
      %v1226 = vcombine.high %v945, %v947
      %v1228 = vunpack.c.l.s4 1983009808
      %v1229 = vunpack.c.0.s8 %v1228
      %v1230 = vlaneseq
      %v1231 = vshrl.u32 %v1230, 7
      %v1232 = vsub.s32 %v1229, %v1231
      %v1233 = vrot.slane %v1225, %v1232
      %v1235 = vunpack.c.l.s4 1983009808
      %v1236 = vunpack.c.0.s8 %v1235
      %v1237 = vlaneseq
      %v1238 = vshrl.u32 %v1237, 7
      %v1239 = vsub.s32 %v1236, %v1238
      %v1240 = vrot.slane %v1226, %v1239
      %v1241 = vcombine.high %v1233, %v1233
      %v1242 = vcombine.high %v1240, %v1240
      %v1243 = vcombine.low %v951, %v953
      %v1244 = vcombine.high %v951, %v953
      %v1246 = vunpack.c.l.s4 1983009808
      %v1247 = vunpack.c.0.s8 %v1246
      %v1248 = vlaneseq
      %v1249 = vshrl.u32 %v1248, 7
      %v1250 = vsub.s32 %v1247, %v1249
      %v1251 = vrot.slane %v1243, %v1250
      %v1253 = vunpack.c.l.s4 1983009808
      %v1254 = vunpack.c.0.s8 %v1253
      %v1255 = vlaneseq
      %v1256 = vshrl.u32 %v1255, 7
      %v1257 = vsub.s32 %v1254, %v1256
      %v1258 = vrot.slane %v1244, %v1257
      %v1259 = vcombine.high %v1251, %v1251
      %v1260 = vcombine.high %v1258, %v1258
      %v1261 = vcombine.low %v955, %v957
      %v1262 = vcombine.high %v955, %v957
      %v1264 = vunpack.c.l.s4 1983009808
      %v1265 = vunpack.c.0.s8 %v1264
      %v1266 = vlaneseq
      %v1267 = vshrl.u32 %v1266, 7
      %v1268 = vsub.s32 %v1265, %v1267
      %v1269 = vrot.slane %v1261, %v1268
      %v1271 = vunpack.c.l.s4 1983009808
      %v1272 = vunpack.c.0.s8 %v1271
      %v1273 = vlaneseq
      %v1274 = vshrl.u32 %v1273, 7
      %v1275 = vsub.s32 %v1272, %v1274
      %v1276 = vrot.slane %v1262, %v1275
      %v1277 = vcombine.high %v1269, %v1269
      %v1278 = vcombine.high %v1276, %v1276
      %v1280 = vunpack.c.l.s4 1983009808
      %v1281 = vunpack.c.0.s8 %v1280
      %v1282 = vlaneseq
      %v1283 = vshrl.u32 %v1282, 7
      %v1284 = vsub.s32 %v1281, %v1283
      %v1285 = vrot.slane %v999, %v1284
      %v1286 = vcombine.high %v1285, %v1285
      %v1288 = vunpack.c.l.s4 1983009808
      %v1289 = vunpack.c.0.s8 %v1288
      %v1290 = vlaneseq
      %v1291 = vshrl.u32 %v1290, 7
      %v1292 = vsub.s32 %v1289, %v1291
      %v1293 = vrot.slane %v1007, %v1292
      %v1294 = vcombine.high %v1293, %v1293
      %v1296 = vunpack.c.l.s4 1983009808
      %v1297 = vunpack.c.0.s8 %v1296
      %v1298 = vlaneseq
      %v1299 = vshrl.u32 %v1298, 7
      %v1300 = vsub.s32 %v1297, %v1299
      %v1301 = vrot.slane %v1006, %v1300
      %v1302 = vcombine.high %v1301, %v1301
      %v1304 = vunpack.c.l.s4 1983009808
      %v1305 = vunpack.c.0.s8 %v1304
      %v1306 = vlaneseq
      %v1307 = vshrl.u32 %v1306, 7
      %v1308 = vsub.s32 %v1305, %v1307
      %v1309 = vrot.slane %v1008, %v1308
      %v1310 = vcombine.high %v1309, %v1309
      %v1312 = vunpack.c.l.s4 1983009808
      %v1313 = vunpack.c.0.s8 %v1312
      %v1314 = vlaneseq
      %v1315 = vshrl.u32 %v1314, 7
      %v1316 = vsub.s32 %v1313, %v1315
      %v1317 = vrot.slane %v1017, %v1316
      %v1318 = vcombine.high %v1317, %v1317
      %v1320 = vunpack.c.l.s4 1983009808
      %v1321 = vunpack.c.0.s8 %v1320
      %v1322 = vlaneseq
      %v1323 = vshrl.u32 %v1322, 7
      %v1324 = vsub.s32 %v1321, %v1323
      %v1325 = vrot.slane %v1025, %v1324
      %v1326 = vcombine.high %v1325, %v1325
      %v1328 = vunpack.c.l.s4 1983009808
      %v1329 = vunpack.c.0.s8 %v1328
      %v1330 = vlaneseq
      %v1331 = vshrl.u32 %v1330, 7
      %v1332 = vsub.s32 %v1329, %v1331
      %v1333 = vrot.slane %v1024, %v1332
      %v1334 = vcombine.high %v1333, %v1333
      %v1336 = vunpack.c.l.s4 1983009808
      %v1337 = vunpack.c.0.s8 %v1336
      %v1338 = vlaneseq
      %v1339 = vshrl.u32 %v1338, 7
      %v1340 = vsub.s32 %v1337, %v1339
      %v1341 = vrot.slane %v1026, %v1340
      %v1342 = vcombine.high %v1341, %v1341
      %v1344 = vunpack.c.l.s4 1983009808
      %v1345 = vunpack.c.0.s8 %v1344
      %v1346 = vlaneseq
      %v1347 = vshrl.u32 %v1346, 7
      %v1348 = vsub.s32 %v1345, %v1347
      %v1349 = vrot.slane %v1035, %v1348
      %v1350 = vcombine.high %v1349, %v1349
      %v1352 = vunpack.c.l.s4 1983009808
      %v1353 = vunpack.c.0.s8 %v1352
      %v1354 = vlaneseq
      %v1355 = vshrl.u32 %v1354, 7
      %v1356 = vsub.s32 %v1353, %v1355
      %v1357 = vrot.slane %v1043, %v1356
      %v1358 = vcombine.high %v1357, %v1357
      %v1360 = vunpack.c.l.s4 1983009808
      %v1361 = vunpack.c.0.s8 %v1360
      %v1362 = vlaneseq
      %v1363 = vshrl.u32 %v1362, 7
      %v1364 = vsub.s32 %v1361, %v1363
      %v1365 = vrot.slane %v1042, %v1364
      %v1366 = vcombine.high %v1365, %v1365
      %v1368 = vunpack.c.l.s4 1983009808
      %v1369 = vunpack.c.0.s8 %v1368
      %v1370 = vlaneseq
      %v1371 = vshrl.u32 %v1370, 7
      %v1372 = vsub.s32 %v1369, %v1371
      %v1373 = vrot.slane %v1044, %v1372
      %v1374 = vcombine.high %v1373, %v1373
      %v1376 = vunpack.c.l.s4 1983009808
      %v1377 = vunpack.c.0.s8 %v1376
      %v1378 = vlaneseq
      %v1379 = vshrl.u32 %v1378, 7
      %v1380 = vsub.s32 %v1377, %v1379
      %v1381 = vrot.slane %v1053, %v1380
      %v1382 = vcombine.high %v1381, %v1381
      %v1384 = vunpack.c.l.s4 1983009808
      %v1385 = vunpack.c.0.s8 %v1384
      %v1386 = vlaneseq
      %v1387 = vshrl.u32 %v1386, 7
      %v1388 = vsub.s32 %v1385, %v1387
      %v1389 = vrot.slane %v1061, %v1388
      %v1390 = vcombine.high %v1389, %v1389
      %v1392 = vunpack.c.l.s4 1983009808
      %v1393 = vunpack.c.0.s8 %v1392
      %v1394 = vlaneseq
      %v1395 = vshrl.u32 %v1394, 7
      %v1396 = vsub.s32 %v1393, %v1395
      %v1397 = vrot.slane %v1060, %v1396
      %v1398 = vcombine.high %v1397, %v1397
      %v1400 = vunpack.c.l.s4 1983009808
      %v1401 = vunpack.c.0.s8 %v1400
      %v1402 = vlaneseq
      %v1403 = vshrl.u32 %v1402, 7
      %v1404 = vsub.s32 %v1401, %v1403
      %v1405 = vrot.slane %v1062, %v1404
      %v1406 = vcombine.high %v1405, %v1405
      %v1408 = vunpack.c.l.s4 1983009808
      %v1409 = vunpack.c.0.s8 %v1408
      %v1410 = vlaneseq
      %v1411 = vshrl.u32 %v1410, 7
      %v1412 = vsub.s32 %v1409, %v1411
      %v1413 = vrot.slane %v1071, %v1412
      %v1414 = vcombine.high %v1413, %v1413
      %v1416 = vunpack.c.l.s4 1983009808
      %v1417 = vunpack.c.0.s8 %v1416
      %v1418 = vlaneseq
      %v1419 = vshrl.u32 %v1418, 7
      %v1420 = vsub.s32 %v1417, %v1419
      %v1421 = vrot.slane %v1079, %v1420
      %v1422 = vcombine.high %v1421, %v1421
      %v1424 = vunpack.c.l.s4 1983009808
      %v1425 = vunpack.c.0.s8 %v1424
      %v1426 = vlaneseq
      %v1427 = vshrl.u32 %v1426, 7
      %v1428 = vsub.s32 %v1425, %v1427
      %v1429 = vrot.slane %v1078, %v1428
      %v1430 = vcombine.high %v1429, %v1429
      %v1432 = vunpack.c.l.s4 1983009808
      %v1433 = vunpack.c.0.s8 %v1432
      %v1434 = vlaneseq
      %v1435 = vshrl.u32 %v1434, 7
      %v1436 = vsub.s32 %v1433, %v1435
      %v1437 = vrot.slane %v1080, %v1436
      %v1438 = vcombine.high %v1437, %v1437
      %v1440 = vunpack.c.l.s4 1983009808
      %v1441 = vunpack.c.0.s8 %v1440
      %v1442 = vlaneseq
      %v1443 = vshrl.u32 %v1442, 7
      %v1444 = vsub.s32 %v1441, %v1443
      %v1445 = vrot.slane %v1089, %v1444
      %v1446 = vcombine.high %v1445, %v1445
      %v1448 = vunpack.c.l.s4 1983009808
      %v1449 = vunpack.c.0.s8 %v1448
      %v1450 = vlaneseq
      %v1451 = vshrl.u32 %v1450, 7
      %v1452 = vsub.s32 %v1449, %v1451
      %v1453 = vrot.slane %v1097, %v1452
      %v1454 = vcombine.high %v1453, %v1453
      %v1456 = vunpack.c.l.s4 1983009808
      %v1457 = vunpack.c.0.s8 %v1456
      %v1458 = vlaneseq
      %v1459 = vshrl.u32 %v1458, 7
      %v1460 = vsub.s32 %v1457, %v1459
      %v1461 = vrot.slane %v1096, %v1460
      %v1462 = vcombine.high %v1461, %v1461
      %v1464 = vunpack.c.l.s4 1983009808
      %v1465 = vunpack.c.0.s8 %v1464
      %v1466 = vlaneseq
      %v1467 = vshrl.u32 %v1466, 7
      %v1468 = vsub.s32 %v1465, %v1467
      %v1469 = vrot.slane %v1098, %v1468
      %v1470 = vcombine.high %v1469, %v1469
      %v1472 = vunpack.c.l.s4 1983009808
      %v1473 = vunpack.c.0.s8 %v1472
      %v1474 = vlaneseq
      %v1475 = vshrl.u32 %v1474, 7
      %v1476 = vsub.s32 %v1473, %v1475
      %v1477 = vrot.slane %v1107, %v1476
      %v1478 = vcombine.high %v1477, %v1477
      %v1480 = vunpack.c.l.s4 1983009808
      %v1481 = vunpack.c.0.s8 %v1480
      %v1482 = vlaneseq
      %v1483 = vshrl.u32 %v1482, 7
      %v1484 = vsub.s32 %v1481, %v1483
      %v1485 = vrot.slane %v1115, %v1484
      %v1486 = vcombine.high %v1485, %v1485
      %v1488 = vunpack.c.l.s4 1983009808
      %v1489 = vunpack.c.0.s8 %v1488
      %v1490 = vlaneseq
      %v1491 = vshrl.u32 %v1490, 7
      %v1492 = vsub.s32 %v1489, %v1491
      %v1493 = vrot.slane %v1114, %v1492
      %v1494 = vcombine.high %v1493, %v1493
      %v1496 = vunpack.c.l.s4 1983009808
      %v1497 = vunpack.c.0.s8 %v1496
      %v1498 = vlaneseq
      %v1499 = vshrl.u32 %v1498, 7
      %v1500 = vsub.s32 %v1497, %v1499
      %v1501 = vrot.slane %v1116, %v1500
      %v1502 = vcombine.high %v1501, %v1501
      %v1504 = vunpack.c.l.s4 1983009808
      %v1505 = vunpack.c.0.s8 %v1504
      %v1506 = vlaneseq
      %v1507 = vshrl.u32 %v1506, 7
      %v1508 = vsub.s32 %v1505, %v1507
      %v1509 = vrot.slane %v1125, %v1508
      %v1510 = vcombine.high %v1509, %v1509
      %v1512 = vunpack.c.l.s4 1983009808
      %v1513 = vunpack.c.0.s8 %v1512
      %v1514 = vlaneseq
      %v1515 = vshrl.u32 %v1514, 7
      %v1516 = vsub.s32 %v1513, %v1515
      %v1517 = vrot.slane %v1133, %v1516
      %v1518 = vcombine.high %v1517, %v1517
      %v1520 = vunpack.c.l.s4 1983009808
      %v1521 = vunpack.c.0.s8 %v1520
      %v1522 = vlaneseq
      %v1523 = vshrl.u32 %v1522, 7
      %v1524 = vsub.s32 %v1521, %v1523
      %v1525 = vrot.slane %v1132, %v1524
      %v1526 = vcombine.high %v1525, %v1525
      %v1528 = vunpack.c.l.s4 1983009808
      %v1529 = vunpack.c.0.s8 %v1528
      %v1530 = vlaneseq
      %v1531 = vshrl.u32 %v1530, 7
      %v1532 = vsub.s32 %v1529, %v1531
      %v1533 = vrot.slane %v1134, %v1532
      %v1534 = vcombine.high %v1533, %v1533
      %v1536 = vunpack.c.l.s4 1983009808
      %v1537 = vunpack.c.0.s8 %v1536
      %v1538 = vlaneseq
      %v1539 = vshrl.u32 %v1538, 7
      %v1540 = vsub.s32 %v1537, %v1539
      %v1541 = vrot.slane %v1143, %v1540
      %v1542 = vcombine.high %v1541, %v1541
      %v1544 = vunpack.c.l.s4 1983009808
      %v1545 = vunpack.c.0.s8 %v1544
      %v1546 = vlaneseq
      %v1547 = vshrl.u32 %v1546, 7
      %v1548 = vsub.s32 %v1545, %v1547
      %v1549 = vrot.slane %v1151, %v1548
      %v1550 = vcombine.high %v1549, %v1549
      %v1552 = vunpack.c.l.s4 1983009808
      %v1553 = vunpack.c.0.s8 %v1552
      %v1554 = vlaneseq
      %v1555 = vshrl.u32 %v1554, 7
      %v1556 = vsub.s32 %v1553, %v1555
      %v1557 = vrot.slane %v1150, %v1556
      %v1558 = vcombine.high %v1557, %v1557
      %v1560 = vunpack.c.l.s4 1983009808
      %v1561 = vunpack.c.0.s8 %v1560
      %v1562 = vlaneseq
      %v1563 = vshrl.u32 %v1562, 7
      %v1564 = vsub.s32 %v1561, %v1563
      %v1565 = vrot.slane %v1152, %v1564
      %v1566 = vcombine.high %v1565, %v1565
      %v1568 = vunpack.c.l.s4 1983009808
      %v1569 = vunpack.c.0.s8 %v1568
      %v1570 = vlaneseq
      %v1571 = vshrl.u32 %v1570, 7
      %v1572 = vsub.s32 %v1569, %v1571
      %v1573 = vrot.slane %v1161, %v1572
      %v1574 = vcombine.high %v1573, %v1573
      %v1576 = vunpack.c.l.s4 1983009808
      %v1577 = vunpack.c.0.s8 %v1576
      %v1578 = vlaneseq
      %v1579 = vshrl.u32 %v1578, 7
      %v1580 = vsub.s32 %v1577, %v1579
      %v1581 = vrot.slane %v1169, %v1580
      %v1582 = vcombine.high %v1581, %v1581
      %v1584 = vunpack.c.l.s4 1983009808
      %v1585 = vunpack.c.0.s8 %v1584
      %v1586 = vlaneseq
      %v1587 = vshrl.u32 %v1586, 7
      %v1588 = vsub.s32 %v1585, %v1587
      %v1589 = vrot.slane %v1168, %v1588
      %v1590 = vcombine.high %v1589, %v1589
      %v1592 = vunpack.c.l.s4 1983009808
      %v1593 = vunpack.c.0.s8 %v1592
      %v1594 = vlaneseq
      %v1595 = vshrl.u32 %v1594, 7
      %v1596 = vsub.s32 %v1593, %v1595
      %v1597 = vrot.slane %v1170, %v1596
      %v1598 = vcombine.high %v1597, %v1597
      %v1600 = vunpack.c.l.s4 1983009808
      %v1601 = vunpack.c.0.s8 %v1600
      %v1602 = vlaneseq
      %v1603 = vshrl.u32 %v1602, 7
      %v1604 = vsub.s32 %v1601, %v1603
      %v1605 = vrot.slane %v1179, %v1604
      %v1606 = vcombine.high %v1605, %v1605
      %v1608 = vunpack.c.l.s4 1983009808
      %v1609 = vunpack.c.0.s8 %v1608
      %v1610 = vlaneseq
      %v1611 = vshrl.u32 %v1610, 7
      %v1612 = vsub.s32 %v1609, %v1611
      %v1613 = vrot.slane %v1187, %v1612
      %v1614 = vcombine.high %v1613, %v1613
      %v1616 = vunpack.c.l.s4 1983009808
      %v1617 = vunpack.c.0.s8 %v1616
      %v1618 = vlaneseq
      %v1619 = vshrl.u32 %v1618, 7
      %v1620 = vsub.s32 %v1617, %v1619
      %v1621 = vrot.slane %v1186, %v1620
      %v1622 = vcombine.high %v1621, %v1621
      %v1624 = vunpack.c.l.s4 1983009808
      %v1625 = vunpack.c.0.s8 %v1624
      %v1626 = vlaneseq
      %v1627 = vshrl.u32 %v1626, 7
      %v1628 = vsub.s32 %v1625, %v1627
      %v1629 = vrot.slane %v1188, %v1628
      %v1630 = vcombine.high %v1629, %v1629
      %v1632 = vunpack.c.l.s4 1983009808
      %v1633 = vunpack.c.0.s8 %v1632
      %v1634 = vlaneseq
      %v1635 = vshrl.u32 %v1634, 7
      %v1636 = vsub.s32 %v1633, %v1635
      %v1637 = vrot.slane %v1197, %v1636
      %v1638 = vcombine.high %v1637, %v1637
      %v1640 = vunpack.c.l.s4 1983009808
      %v1641 = vunpack.c.0.s8 %v1640
      %v1642 = vlaneseq
      %v1643 = vshrl.u32 %v1642, 7
      %v1644 = vsub.s32 %v1641, %v1643
      %v1645 = vrot.slane %v1205, %v1644
      %v1646 = vcombine.high %v1645, %v1645
      %v1648 = vunpack.c.l.s4 1983009808
      %v1649 = vunpack.c.0.s8 %v1648
      %v1650 = vlaneseq
      %v1651 = vshrl.u32 %v1650, 7
      %v1652 = vsub.s32 %v1649, %v1651
      %v1653 = vrot.slane %v1204, %v1652
      %v1654 = vcombine.high %v1653, %v1653
      %v1656 = vunpack.c.l.s4 1983009808
      %v1657 = vunpack.c.0.s8 %v1656
      %v1658 = vlaneseq
      %v1659 = vshrl.u32 %v1658, 7
      %v1660 = vsub.s32 %v1657, %v1659
      %v1661 = vrot.slane %v1206, %v1660
      %v1662 = vcombine.high %v1661, %v1661
      %v1664 = vunpack.c.l.s4 1983009808
      %v1665 = vunpack.c.0.s8 %v1664
      %v1666 = vlaneseq
      %v1667 = vshrl.u32 %v1666, 7
      %v1668 = vsub.s32 %v1665, %v1667
      %v1669 = vrot.slane %v1215, %v1668
      %v1670 = vcombine.high %v1669, %v1669
      %v1672 = vunpack.c.l.s4 1983009808
      %v1673 = vunpack.c.0.s8 %v1672
      %v1674 = vlaneseq
      %v1675 = vshrl.u32 %v1674, 7
      %v1676 = vsub.s32 %v1673, %v1675
      %v1677 = vrot.slane %v1223, %v1676
      %v1678 = vcombine.high %v1677, %v1677
      %v1680 = vunpack.c.l.s4 1983009808
      %v1681 = vunpack.c.0.s8 %v1680
      %v1682 = vlaneseq
      %v1683 = vshrl.u32 %v1682, 7
      %v1684 = vsub.s32 %v1681, %v1683
      %v1685 = vrot.slane %v1222, %v1684
      %v1686 = vcombine.high %v1685, %v1685
      %v1688 = vunpack.c.l.s4 1983009808
      %v1689 = vunpack.c.0.s8 %v1688
      %v1690 = vlaneseq
      %v1691 = vshrl.u32 %v1690, 7
      %v1692 = vsub.s32 %v1689, %v1691
      %v1693 = vrot.slane %v1224, %v1692
      %v1694 = vcombine.high %v1693, %v1693
      %v1696 = vunpack.c.l.s4 1983009808
      %v1697 = vunpack.c.0.s8 %v1696
      %v1698 = vlaneseq
      %v1699 = vshrl.u32 %v1698, 7
      %v1700 = vsub.s32 %v1697, %v1699
      %v1701 = vrot.slane %v1233, %v1700
      %v1702 = vcombine.high %v1701, %v1701
      %v1704 = vunpack.c.l.s4 1983009808
      %v1705 = vunpack.c.0.s8 %v1704
      %v1706 = vlaneseq
      %v1707 = vshrl.u32 %v1706, 7
      %v1708 = vsub.s32 %v1705, %v1707
      %v1709 = vrot.slane %v1241, %v1708
      %v1710 = vcombine.high %v1709, %v1709
      %v1712 = vunpack.c.l.s4 1983009808
      %v1713 = vunpack.c.0.s8 %v1712
      %v1714 = vlaneseq
      %v1715 = vshrl.u32 %v1714, 7
      %v1716 = vsub.s32 %v1713, %v1715
      %v1717 = vrot.slane %v1240, %v1716
      %v1718 = vcombine.high %v1717, %v1717
      %v1720 = vunpack.c.l.s4 1983009808
      %v1721 = vunpack.c.0.s8 %v1720
      %v1722 = vlaneseq
      %v1723 = vshrl.u32 %v1722, 7
      %v1724 = vsub.s32 %v1721, %v1723
      %v1725 = vrot.slane %v1242, %v1724
      %v1726 = vcombine.high %v1725, %v1725
      %v1728 = vunpack.c.l.s4 1983009808
      %v1729 = vunpack.c.0.s8 %v1728
      %v1730 = vlaneseq
      %v1731 = vshrl.u32 %v1730, 7
      %v1732 = vsub.s32 %v1729, %v1731
      %v1733 = vrot.slane %v1251, %v1732
      %v1734 = vcombine.high %v1733, %v1733
      %v1736 = vunpack.c.l.s4 1983009808
      %v1737 = vunpack.c.0.s8 %v1736
      %v1738 = vlaneseq
      %v1739 = vshrl.u32 %v1738, 7
      %v1740 = vsub.s32 %v1737, %v1739
      %v1741 = vrot.slane %v1259, %v1740
      %v1742 = vcombine.high %v1741, %v1741
      %v1744 = vunpack.c.l.s4 1983009808
      %v1745 = vunpack.c.0.s8 %v1744
      %v1746 = vlaneseq
      %v1747 = vshrl.u32 %v1746, 7
      %v1748 = vsub.s32 %v1745, %v1747
      %v1749 = vrot.slane %v1258, %v1748
      %v1750 = vcombine.high %v1749, %v1749
      %v1752 = vunpack.c.l.s4 1983009808
      %v1753 = vunpack.c.0.s8 %v1752
      %v1754 = vlaneseq
      %v1755 = vshrl.u32 %v1754, 7
      %v1756 = vsub.s32 %v1753, %v1755
      %v1757 = vrot.slane %v1260, %v1756
      %v1758 = vcombine.high %v1757, %v1757
      %v1760 = vunpack.c.l.s4 1983009808
      %v1761 = vunpack.c.0.s8 %v1760
      %v1762 = vlaneseq
      %v1763 = vshrl.u32 %v1762, 7
      %v1764 = vsub.s32 %v1761, %v1763
      %v1765 = vrot.slane %v1269, %v1764
      %v1766 = vcombine.high %v1765, %v1765
      %v1768 = vunpack.c.l.s4 1983009808
      %v1769 = vunpack.c.0.s8 %v1768
      %v1770 = vlaneseq
      %v1771 = vshrl.u32 %v1770, 7
      %v1772 = vsub.s32 %v1769, %v1771
      %v1773 = vrot.slane %v1277, %v1772
      %v1774 = vcombine.high %v1773, %v1773
      %v1776 = vunpack.c.l.s4 1983009808
      %v1777 = vunpack.c.0.s8 %v1776
      %v1778 = vlaneseq
      %v1779 = vshrl.u32 %v1778, 7
      %v1780 = vsub.s32 %v1777, %v1779
      %v1781 = vrot.slane %v1276, %v1780
      %v1782 = vcombine.high %v1781, %v1781
      %v1784 = vunpack.c.l.s4 1983009808
      %v1785 = vunpack.c.0.s8 %v1784
      %v1786 = vlaneseq
      %v1787 = vshrl.u32 %v1786, 7
      %v1788 = vsub.s32 %v1785, %v1787
      %v1789 = vrot.slane %v1278, %v1788
      %v1790 = vcombine.high %v1789, %v1789
      %v1919 = vsel %vm518, %v1285, -inf
      %v1920 = vrot.slane %v1919, 4
      %v1921 = vmax.f32 %v1919, %v1920
      %v1922 = vrot.slane %v1921, 2
      %v1923 = vmax.f32 %v1921, %v1922
      %v1924 = vrot.slane %v1923, 1
      %v1925 = vmax.f32 %v1923, %v1924
      %v1926 = vsel %vm518, %v1286, -inf
      %v1927 = vrot.slane %v1926, 4
      %v1928 = vmax.f32 %v1926, %v1927
      %v1929 = vrot.slane %v1928, 2
      %v1930 = vmax.f32 %v1928, %v1929
      %v1931 = vrot.slane %v1930, 1
      %v1932 = vmax.f32 %v1930, %v1931
      %v1933 = vsel %vm518, %v1293, -inf
      %v1934 = vrot.slane %v1933, 4
      %v1935 = vmax.f32 %v1933, %v1934
      %v1936 = vrot.slane %v1935, 2
      %v1937 = vmax.f32 %v1935, %v1936
      %v1938 = vrot.slane %v1937, 1
      %v1939 = vmax.f32 %v1937, %v1938
      %v1940 = vsel %vm518, %v1294, -inf
      %v1941 = vrot.slane %v1940, 4
      %v1942 = vmax.f32 %v1940, %v1941
      %v1943 = vrot.slane %v1942, 2
      %v1944 = vmax.f32 %v1942, %v1943
      %v1945 = vrot.slane %v1944, 1
      %v1946 = vmax.f32 %v1944, %v1945
      %v1947 = vsel %vm518, %v1301, -inf
      %v1948 = vrot.slane %v1947, 4
      %v1949 = vmax.f32 %v1947, %v1948
      %v1950 = vrot.slane %v1949, 2
      %v1951 = vmax.f32 %v1949, %v1950
      %v1952 = vrot.slane %v1951, 1
      %v1953 = vmax.f32 %v1951, %v1952
      %v1954 = vsel %vm518, %v1302, -inf
      %v1955 = vrot.slane %v1954, 4
      %v1956 = vmax.f32 %v1954, %v1955
      %v1957 = vrot.slane %v1956, 2
      %v1958 = vmax.f32 %v1956, %v1957
      %v1959 = vrot.slane %v1958, 1
      %v1960 = vmax.f32 %v1958, %v1959
      %v1961 = vsel %vm518, %v1309, -inf
      %v1962 = vrot.slane %v1961, 4
      %v1963 = vmax.f32 %v1961, %v1962
      %v1964 = vrot.slane %v1963, 2
      %v1965 = vmax.f32 %v1963, %v1964
      %v1966 = vrot.slane %v1965, 1
      %v1967 = vmax.f32 %v1965, %v1966
      %v1968 = vsel %vm518, %v1310, -inf
      %v1969 = vrot.slane %v1968, 4
      %v1970 = vmax.f32 %v1968, %v1969
      %v1971 = vrot.slane %v1970, 2
      %v1972 = vmax.f32 %v1970, %v1971
      %v1973 = vrot.slane %v1972, 1
      %v1974 = vmax.f32 %v1972, %v1973
      %v1975 = vsel %vm518, %v1317, -inf
      %v1976 = vrot.slane %v1975, 4
      %v1977 = vmax.f32 %v1975, %v1976
      %v1978 = vrot.slane %v1977, 2
      %v1979 = vmax.f32 %v1977, %v1978
      %v1980 = vrot.slane %v1979, 1
      %v1981 = vmax.f32 %v1979, %v1980
      %v1982 = vsel %vm518, %v1318, -inf
      %v1983 = vrot.slane %v1982, 4
      %v1984 = vmax.f32 %v1982, %v1983
      %v1985 = vrot.slane %v1984, 2
      %v1986 = vmax.f32 %v1984, %v1985
      %v1987 = vrot.slane %v1986, 1
      %v1988 = vmax.f32 %v1986, %v1987
      %v1989 = vsel %vm518, %v1325, -inf
      %v1990 = vrot.slane %v1989, 4
      %v1991 = vmax.f32 %v1989, %v1990
      %v1992 = vrot.slane %v1991, 2
      %v1993 = vmax.f32 %v1991, %v1992
      %v1994 = vrot.slane %v1993, 1
      %v1995 = vmax.f32 %v1993, %v1994
      %v1996 = vsel %vm518, %v1326, -inf
      %v1997 = vrot.slane %v1996, 4
      %v1998 = vmax.f32 %v1996, %v1997
      %v1999 = vrot.slane %v1998, 2
      %v2000 = vmax.f32 %v1998, %v1999
      %v2001 = vrot.slane %v2000, 1
      %v2002 = vmax.f32 %v2000, %v2001
      %v2003 = vsel %vm518, %v1333, -inf
      %v2004 = vrot.slane %v2003, 4
      %v2005 = vmax.f32 %v2003, %v2004
      %v2006 = vrot.slane %v2005, 2
      %v2007 = vmax.f32 %v2005, %v2006
      %v2008 = vrot.slane %v2007, 1
      %v2009 = vmax.f32 %v2007, %v2008
      %v2010 = vsel %vm518, %v1334, -inf
      %v2011 = vrot.slane %v2010, 4
      %v2012 = vmax.f32 %v2010, %v2011
      %v2013 = vrot.slane %v2012, 2
      %v2014 = vmax.f32 %v2012, %v2013
      %v2015 = vrot.slane %v2014, 1
      %v2016 = vmax.f32 %v2014, %v2015
      %v2017 = vsel %vm518, %v1341, -inf
      %v2018 = vrot.slane %v2017, 4
      %v2019 = vmax.f32 %v2017, %v2018
      %v2020 = vrot.slane %v2019, 2
      %v2021 = vmax.f32 %v2019, %v2020
      %v2022 = vrot.slane %v2021, 1
      %v2023 = vmax.f32 %v2021, %v2022
      %v2024 = vsel %vm518, %v1342, -inf
      %v2025 = vrot.slane %v2024, 4
      %v2026 = vmax.f32 %v2024, %v2025
      %v2027 = vrot.slane %v2026, 2
      %v2028 = vmax.f32 %v2026, %v2027
      %v2029 = vrot.slane %v2028, 1
      %v2030 = vmax.f32 %v2028, %v2029
      %v2031 = vsel %vm518, %v1349, -inf
      %v2032 = vrot.slane %v2031, 4
      %v2033 = vmax.f32 %v2031, %v2032
      %v2034 = vrot.slane %v2033, 2
      %v2035 = vmax.f32 %v2033, %v2034
      %v2036 = vrot.slane %v2035, 1
      %v2037 = vmax.f32 %v2035, %v2036
      %v2038 = vsel %vm518, %v1350, -inf
      %v2039 = vrot.slane %v2038, 4
      %v2040 = vmax.f32 %v2038, %v2039
      %v2041 = vrot.slane %v2040, 2
      %v2042 = vmax.f32 %v2040, %v2041
      %v2043 = vrot.slane %v2042, 1
      %v2044 = vmax.f32 %v2042, %v2043
      %v2045 = vsel %vm518, %v1357, -inf
      %v2046 = vrot.slane %v2045, 4
      %v2047 = vmax.f32 %v2045, %v2046
      %v2048 = vrot.slane %v2047, 2
      %v2049 = vmax.f32 %v2047, %v2048
      %v2050 = vrot.slane %v2049, 1
      %v2051 = vmax.f32 %v2049, %v2050
      %v2052 = vsel %vm518, %v1358, -inf
      %v2053 = vrot.slane %v2052, 4
      %v2054 = vmax.f32 %v2052, %v2053
      %v2055 = vrot.slane %v2054, 2
      %v2056 = vmax.f32 %v2054, %v2055
      %v2057 = vrot.slane %v2056, 1
      %v2058 = vmax.f32 %v2056, %v2057
      %v2059 = vsel %vm518, %v1365, -inf
      %v2060 = vrot.slane %v2059, 4
      %v2061 = vmax.f32 %v2059, %v2060
      %v2062 = vrot.slane %v2061, 2
      %v2063 = vmax.f32 %v2061, %v2062
      %v2064 = vrot.slane %v2063, 1
      %v2065 = vmax.f32 %v2063, %v2064
      %v2066 = vsel %vm518, %v1366, -inf
      %v2067 = vrot.slane %v2066, 4
      %v2068 = vmax.f32 %v2066, %v2067
      %v2069 = vrot.slane %v2068, 2
      %v2070 = vmax.f32 %v2068, %v2069
      %v2071 = vrot.slane %v2070, 1
      %v2072 = vmax.f32 %v2070, %v2071
      %v2073 = vsel %vm518, %v1373, -inf
      %v2074 = vrot.slane %v2073, 4
      %v2075 = vmax.f32 %v2073, %v2074
      %v2076 = vrot.slane %v2075, 2
      %v2077 = vmax.f32 %v2075, %v2076
      %v2078 = vrot.slane %v2077, 1
      %v2079 = vmax.f32 %v2077, %v2078
      %v2080 = vsel %vm518, %v1374, -inf
      %v2081 = vrot.slane %v2080, 4
      %v2082 = vmax.f32 %v2080, %v2081
      %v2083 = vrot.slane %v2082, 2
      %v2084 = vmax.f32 %v2082, %v2083
      %v2085 = vrot.slane %v2084, 1
      %v2086 = vmax.f32 %v2084, %v2085
      %v2087 = vsel %vm518, %v1381, -inf
      %v2088 = vrot.slane %v2087, 4
      %v2089 = vmax.f32 %v2087, %v2088
      %v2090 = vrot.slane %v2089, 2
      %v2091 = vmax.f32 %v2089, %v2090
      %v2092 = vrot.slane %v2091, 1
      %v2093 = vmax.f32 %v2091, %v2092
      %v2094 = vsel %vm518, %v1382, -inf
      %v2095 = vrot.slane %v2094, 4
      %v2096 = vmax.f32 %v2094, %v2095
      %v2097 = vrot.slane %v2096, 2
      %v2098 = vmax.f32 %v2096, %v2097
      %v2099 = vrot.slane %v2098, 1
      %v2100 = vmax.f32 %v2098, %v2099
      %v2101 = vsel %vm518, %v1389, -inf
      %v2102 = vrot.slane %v2101, 4
      %v2103 = vmax.f32 %v2101, %v2102
      %v2104 = vrot.slane %v2103, 2
      %v2105 = vmax.f32 %v2103, %v2104
      %v2106 = vrot.slane %v2105, 1
      %v2107 = vmax.f32 %v2105, %v2106
      %v2108 = vsel %vm518, %v1390, -inf
      %v2109 = vrot.slane %v2108, 4
      %v2110 = vmax.f32 %v2108, %v2109
      %v2111 = vrot.slane %v2110, 2
      %v2112 = vmax.f32 %v2110, %v2111
      %v2113 = vrot.slane %v2112, 1
      %v2114 = vmax.f32 %v2112, %v2113
      %v2115 = vsel %vm518, %v1397, -inf
      %v2116 = vrot.slane %v2115, 4
      %v2117 = vmax.f32 %v2115, %v2116
      %v2118 = vrot.slane %v2117, 2
      %v2119 = vmax.f32 %v2117, %v2118
      %v2120 = vrot.slane %v2119, 1
      %v2121 = vmax.f32 %v2119, %v2120
      %v2122 = vsel %vm518, %v1398, -inf
      %v2123 = vrot.slane %v2122, 4
      %v2124 = vmax.f32 %v2122, %v2123
      %v2125 = vrot.slane %v2124, 2
      %v2126 = vmax.f32 %v2124, %v2125
      %v2127 = vrot.slane %v2126, 1
      %v2128 = vmax.f32 %v2126, %v2127
      %v2129 = vsel %vm518, %v1405, -inf
      %v2130 = vrot.slane %v2129, 4
      %v2131 = vmax.f32 %v2129, %v2130
      %v2132 = vrot.slane %v2131, 2
      %v2133 = vmax.f32 %v2131, %v2132
      %v2134 = vrot.slane %v2133, 1
      %v2135 = vmax.f32 %v2133, %v2134
      %v2136 = vsel %vm518, %v1406, -inf
      %v2137 = vrot.slane %v2136, 4
      %v2138 = vmax.f32 %v2136, %v2137
      %v2139 = vrot.slane %v2138, 2
      %v2140 = vmax.f32 %v2138, %v2139
      %v2141 = vrot.slane %v2140, 1
      %v2142 = vmax.f32 %v2140, %v2141
      %v2143 = vsel %vm518, %v1413, -inf
      %v2144 = vrot.slane %v2143, 4
      %v2145 = vmax.f32 %v2143, %v2144
      %v2146 = vrot.slane %v2145, 2
      %v2147 = vmax.f32 %v2145, %v2146
      %v2148 = vrot.slane %v2147, 1
      %v2149 = vmax.f32 %v2147, %v2148
      %v2150 = vsel %vm518, %v1414, -inf
      %v2151 = vrot.slane %v2150, 4
      %v2152 = vmax.f32 %v2150, %v2151
      %v2153 = vrot.slane %v2152, 2
      %v2154 = vmax.f32 %v2152, %v2153
      %v2155 = vrot.slane %v2154, 1
      %v2156 = vmax.f32 %v2154, %v2155
      %v2157 = vsel %vm518, %v1421, -inf
      %v2158 = vrot.slane %v2157, 4
      %v2159 = vmax.f32 %v2157, %v2158
      %v2160 = vrot.slane %v2159, 2
      %v2161 = vmax.f32 %v2159, %v2160
      %v2162 = vrot.slane %v2161, 1
      %v2163 = vmax.f32 %v2161, %v2162
      %v2164 = vsel %vm518, %v1422, -inf
      %v2165 = vrot.slane %v2164, 4
      %v2166 = vmax.f32 %v2164, %v2165
      %v2167 = vrot.slane %v2166, 2
      %v2168 = vmax.f32 %v2166, %v2167
      %v2169 = vrot.slane %v2168, 1
      %v2170 = vmax.f32 %v2168, %v2169
      %v2171 = vsel %vm518, %v1429, -inf
      %v2172 = vrot.slane %v2171, 4
      %v2173 = vmax.f32 %v2171, %v2172
      %v2174 = vrot.slane %v2173, 2
      %v2175 = vmax.f32 %v2173, %v2174
      %v2176 = vrot.slane %v2175, 1
      %v2177 = vmax.f32 %v2175, %v2176
      %v2178 = vsel %vm518, %v1430, -inf
      %v2179 = vrot.slane %v2178, 4
      %v2180 = vmax.f32 %v2178, %v2179
      %v2181 = vrot.slane %v2180, 2
      %v2182 = vmax.f32 %v2180, %v2181
      %v2183 = vrot.slane %v2182, 1
      %v2184 = vmax.f32 %v2182, %v2183
      %v2185 = vsel %vm518, %v1437, -inf
      %v2186 = vrot.slane %v2185, 4
      %v2187 = vmax.f32 %v2185, %v2186
      %v2188 = vrot.slane %v2187, 2
      %v2189 = vmax.f32 %v2187, %v2188
      %v2190 = vrot.slane %v2189, 1
      %v2191 = vmax.f32 %v2189, %v2190
      %v2192 = vsel %vm518, %v1438, -inf
      %v2193 = vrot.slane %v2192, 4
      %v2194 = vmax.f32 %v2192, %v2193
      %v2195 = vrot.slane %v2194, 2
      %v2196 = vmax.f32 %v2194, %v2195
      %v2197 = vrot.slane %v2196, 1
      %v2198 = vmax.f32 %v2196, %v2197
      %v2199 = vsel %vm518, %v1445, -inf
      %v2200 = vrot.slane %v2199, 4
      %v2201 = vmax.f32 %v2199, %v2200
      %v2202 = vrot.slane %v2201, 2
      %v2203 = vmax.f32 %v2201, %v2202
      %v2204 = vrot.slane %v2203, 1
      %v2205 = vmax.f32 %v2203, %v2204
      %v2206 = vsel %vm518, %v1446, -inf
      %v2207 = vrot.slane %v2206, 4
      %v2208 = vmax.f32 %v2206, %v2207
      %v2209 = vrot.slane %v2208, 2
      %v2210 = vmax.f32 %v2208, %v2209
      %v2211 = vrot.slane %v2210, 1
      %v2212 = vmax.f32 %v2210, %v2211
      %v2213 = vsel %vm518, %v1453, -inf
      %v2214 = vrot.slane %v2213, 4
      %v2215 = vmax.f32 %v2213, %v2214
      %v2216 = vrot.slane %v2215, 2
      %v2217 = vmax.f32 %v2215, %v2216
      %v2218 = vrot.slane %v2217, 1
      %v2219 = vmax.f32 %v2217, %v2218
      %v2220 = vsel %vm518, %v1454, -inf
      %v2221 = vrot.slane %v2220, 4
      %v2222 = vmax.f32 %v2220, %v2221
      %v2223 = vrot.slane %v2222, 2
      %v2224 = vmax.f32 %v2222, %v2223
      %v2225 = vrot.slane %v2224, 1
      %v2226 = vmax.f32 %v2224, %v2225
      %v2227 = vsel %vm518, %v1461, -inf
      %v2228 = vrot.slane %v2227, 4
      %v2229 = vmax.f32 %v2227, %v2228
      %v2230 = vrot.slane %v2229, 2
      %v2231 = vmax.f32 %v2229, %v2230
      %v2232 = vrot.slane %v2231, 1
      %v2233 = vmax.f32 %v2231, %v2232
      %v2234 = vsel %vm518, %v1462, -inf
      %v2235 = vrot.slane %v2234, 4
      %v2236 = vmax.f32 %v2234, %v2235
      %v2237 = vrot.slane %v2236, 2
      %v2238 = vmax.f32 %v2236, %v2237
      %v2239 = vrot.slane %v2238, 1
      %v2240 = vmax.f32 %v2238, %v2239
      %v2241 = vsel %vm518, %v1469, -inf
      %v2242 = vrot.slane %v2241, 4
      %v2243 = vmax.f32 %v2241, %v2242
      %v2244 = vrot.slane %v2243, 2
      %v2245 = vmax.f32 %v2243, %v2244
      %v2246 = vrot.slane %v2245, 1
      %v2247 = vmax.f32 %v2245, %v2246
      %v2248 = vsel %vm518, %v1470, -inf
      %v2249 = vrot.slane %v2248, 4
      %v2250 = vmax.f32 %v2248, %v2249
      %v2251 = vrot.slane %v2250, 2
      %v2252 = vmax.f32 %v2250, %v2251
      %v2253 = vrot.slane %v2252, 1
      %v2254 = vmax.f32 %v2252, %v2253
      %v2255 = vsel %vm518, %v1477, -inf
      %v2256 = vrot.slane %v2255, 4
      %v2257 = vmax.f32 %v2255, %v2256
      %v2258 = vrot.slane %v2257, 2
      %v2259 = vmax.f32 %v2257, %v2258
      %v2260 = vrot.slane %v2259, 1
      %v2261 = vmax.f32 %v2259, %v2260
      %v2262 = vsel %vm518, %v1478, -inf
      %v2263 = vrot.slane %v2262, 4
      %v2264 = vmax.f32 %v2262, %v2263
      %v2265 = vrot.slane %v2264, 2
      %v2266 = vmax.f32 %v2264, %v2265
      %v2267 = vrot.slane %v2266, 1
      %v2268 = vmax.f32 %v2266, %v2267
      %v2269 = vsel %vm518, %v1485, -inf
      %v2270 = vrot.slane %v2269, 4
      %v2271 = vmax.f32 %v2269, %v2270
      %v2272 = vrot.slane %v2271, 2
      %v2273 = vmax.f32 %v2271, %v2272
      %v2274 = vrot.slane %v2273, 1
      %v2275 = vmax.f32 %v2273, %v2274
      %v2276 = vsel %vm518, %v1486, -inf
      %v2277 = vrot.slane %v2276, 4
      %v2278 = vmax.f32 %v2276, %v2277
      %v2279 = vrot.slane %v2278, 2
      %v2280 = vmax.f32 %v2278, %v2279
      %v2281 = vrot.slane %v2280, 1
      %v2282 = vmax.f32 %v2280, %v2281
      %v2283 = vsel %vm518, %v1493, -inf
      %v2284 = vrot.slane %v2283, 4
      %v2285 = vmax.f32 %v2283, %v2284
      %v2286 = vrot.slane %v2285, 2
      %v2287 = vmax.f32 %v2285, %v2286
      %v2288 = vrot.slane %v2287, 1
      %v2289 = vmax.f32 %v2287, %v2288
      %v2290 = vsel %vm518, %v1494, -inf
      %v2291 = vrot.slane %v2290, 4
      %v2292 = vmax.f32 %v2290, %v2291
      %v2293 = vrot.slane %v2292, 2
      %v2294 = vmax.f32 %v2292, %v2293
      %v2295 = vrot.slane %v2294, 1
      %v2296 = vmax.f32 %v2294, %v2295
      %v2297 = vsel %vm518, %v1501, -inf
      %v2298 = vrot.slane %v2297, 4
      %v2299 = vmax.f32 %v2297, %v2298
      %v2300 = vrot.slane %v2299, 2
      %v2301 = vmax.f32 %v2299, %v2300
      %v2302 = vrot.slane %v2301, 1
      %v2303 = vmax.f32 %v2301, %v2302
      %v2304 = vsel %vm518, %v1502, -inf
      %v2305 = vrot.slane %v2304, 4
      %v2306 = vmax.f32 %v2304, %v2305
      %v2307 = vrot.slane %v2306, 2
      %v2308 = vmax.f32 %v2306, %v2307
      %v2309 = vrot.slane %v2308, 1
      %v2310 = vmax.f32 %v2308, %v2309
      %v2311 = vsel %vm518, %v1509, -inf
      %v2312 = vrot.slane %v2311, 4
      %v2313 = vmax.f32 %v2311, %v2312
      %v2314 = vrot.slane %v2313, 2
      %v2315 = vmax.f32 %v2313, %v2314
      %v2316 = vrot.slane %v2315, 1
      %v2317 = vmax.f32 %v2315, %v2316
      %v2318 = vsel %vm518, %v1510, -inf
      %v2319 = vrot.slane %v2318, 4
      %v2320 = vmax.f32 %v2318, %v2319
      %v2321 = vrot.slane %v2320, 2
      %v2322 = vmax.f32 %v2320, %v2321
      %v2323 = vrot.slane %v2322, 1
      %v2324 = vmax.f32 %v2322, %v2323
      %v2325 = vsel %vm518, %v1517, -inf
      %v2326 = vrot.slane %v2325, 4
      %v2327 = vmax.f32 %v2325, %v2326
      %v2328 = vrot.slane %v2327, 2
      %v2329 = vmax.f32 %v2327, %v2328
      %v2330 = vrot.slane %v2329, 1
      %v2331 = vmax.f32 %v2329, %v2330
      %v2332 = vsel %vm518, %v1518, -inf
      %v2333 = vrot.slane %v2332, 4
      %v2334 = vmax.f32 %v2332, %v2333
      %v2335 = vrot.slane %v2334, 2
      %v2336 = vmax.f32 %v2334, %v2335
      %v2337 = vrot.slane %v2336, 1
      %v2338 = vmax.f32 %v2336, %v2337
      %v2339 = vsel %vm518, %v1525, -inf
      %v2340 = vrot.slane %v2339, 4
      %v2341 = vmax.f32 %v2339, %v2340
      %v2342 = vrot.slane %v2341, 2
      %v2343 = vmax.f32 %v2341, %v2342
      %v2344 = vrot.slane %v2343, 1
      %v2345 = vmax.f32 %v2343, %v2344
      %v2346 = vsel %vm518, %v1526, -inf
      %v2347 = vrot.slane %v2346, 4
      %v2348 = vmax.f32 %v2346, %v2347
      %v2349 = vrot.slane %v2348, 2
      %v2350 = vmax.f32 %v2348, %v2349
      %v2351 = vrot.slane %v2350, 1
      %v2352 = vmax.f32 %v2350, %v2351
      %v2353 = vsel %vm518, %v1533, -inf
      %v2354 = vrot.slane %v2353, 4
      %v2355 = vmax.f32 %v2353, %v2354
      %v2356 = vrot.slane %v2355, 2
      %v2357 = vmax.f32 %v2355, %v2356
      %v2358 = vrot.slane %v2357, 1
      %v2359 = vmax.f32 %v2357, %v2358
      %v2360 = vsel %vm518, %v1534, -inf
      %v2361 = vrot.slane %v2360, 4
      %v2362 = vmax.f32 %v2360, %v2361
      %v2363 = vrot.slane %v2362, 2
      %v2364 = vmax.f32 %v2362, %v2363
      %v2365 = vrot.slane %v2364, 1
      %v2366 = vmax.f32 %v2364, %v2365
      %v2367 = vsel %vm518, %v1541, -inf
      %v2368 = vrot.slane %v2367, 4
      %v2369 = vmax.f32 %v2367, %v2368
      %v2370 = vrot.slane %v2369, 2
      %v2371 = vmax.f32 %v2369, %v2370
      %v2372 = vrot.slane %v2371, 1
      %v2373 = vmax.f32 %v2371, %v2372
      %v2374 = vsel %vm518, %v1542, -inf
      %v2375 = vrot.slane %v2374, 4
      %v2376 = vmax.f32 %v2374, %v2375
      %v2377 = vrot.slane %v2376, 2
      %v2378 = vmax.f32 %v2376, %v2377
      %v2379 = vrot.slane %v2378, 1
      %v2380 = vmax.f32 %v2378, %v2379
      %v2381 = vsel %vm518, %v1549, -inf
      %v2382 = vrot.slane %v2381, 4
      %v2383 = vmax.f32 %v2381, %v2382
      %v2384 = vrot.slane %v2383, 2
      %v2385 = vmax.f32 %v2383, %v2384
      %v2386 = vrot.slane %v2385, 1
      %v2387 = vmax.f32 %v2385, %v2386
      %v2388 = vsel %vm518, %v1550, -inf
      %v2389 = vrot.slane %v2388, 4
      %v2390 = vmax.f32 %v2388, %v2389
      %v2391 = vrot.slane %v2390, 2
      %v2392 = vmax.f32 %v2390, %v2391
      %v2393 = vrot.slane %v2392, 1
      %v2394 = vmax.f32 %v2392, %v2393
      %v2395 = vsel %vm518, %v1557, -inf
      %v2396 = vrot.slane %v2395, 4
      %v2397 = vmax.f32 %v2395, %v2396
      %v2398 = vrot.slane %v2397, 2
      %v2399 = vmax.f32 %v2397, %v2398
      %v2400 = vrot.slane %v2399, 1
      %v2401 = vmax.f32 %v2399, %v2400
      %v2402 = vsel %vm518, %v1558, -inf
      %v2403 = vrot.slane %v2402, 4
      %v2404 = vmax.f32 %v2402, %v2403
      %v2405 = vrot.slane %v2404, 2
      %v2406 = vmax.f32 %v2404, %v2405
      %v2407 = vrot.slane %v2406, 1
      %v2408 = vmax.f32 %v2406, %v2407
      %v2409 = vsel %vm518, %v1565, -inf
      %v2410 = vrot.slane %v2409, 4
      %v2411 = vmax.f32 %v2409, %v2410
      %v2412 = vrot.slane %v2411, 2
      %v2413 = vmax.f32 %v2411, %v2412
      %v2414 = vrot.slane %v2413, 1
      %v2415 = vmax.f32 %v2413, %v2414
      %v2416 = vsel %vm518, %v1566, -inf
      %v2417 = vrot.slane %v2416, 4
      %v2418 = vmax.f32 %v2416, %v2417
      %v2419 = vrot.slane %v2418, 2
      %v2420 = vmax.f32 %v2418, %v2419
      %v2421 = vrot.slane %v2420, 1
      %v2422 = vmax.f32 %v2420, %v2421
      %v2423 = vsel %vm518, %v1573, -inf
      %v2424 = vrot.slane %v2423, 4
      %v2425 = vmax.f32 %v2423, %v2424
      %v2426 = vrot.slane %v2425, 2
      %v2427 = vmax.f32 %v2425, %v2426
      %v2428 = vrot.slane %v2427, 1
      %v2429 = vmax.f32 %v2427, %v2428
      %v2430 = vsel %vm518, %v1574, -inf
      %v2431 = vrot.slane %v2430, 4
      %v2432 = vmax.f32 %v2430, %v2431
      %v2433 = vrot.slane %v2432, 2
      %v2434 = vmax.f32 %v2432, %v2433
      %v2435 = vrot.slane %v2434, 1
      %v2436 = vmax.f32 %v2434, %v2435
      %v2437 = vsel %vm518, %v1581, -inf
      %v2438 = vrot.slane %v2437, 4
      %v2439 = vmax.f32 %v2437, %v2438
      %v2440 = vrot.slane %v2439, 2
      %v2441 = vmax.f32 %v2439, %v2440
      %v2442 = vrot.slane %v2441, 1
      %v2443 = vmax.f32 %v2441, %v2442
      %v2444 = vsel %vm518, %v1582, -inf
      %v2445 = vrot.slane %v2444, 4
      %v2446 = vmax.f32 %v2444, %v2445
      %v2447 = vrot.slane %v2446, 2
      %v2448 = vmax.f32 %v2446, %v2447
      %v2449 = vrot.slane %v2448, 1
      %v2450 = vmax.f32 %v2448, %v2449
      %v2451 = vsel %vm518, %v1589, -inf
      %v2452 = vrot.slane %v2451, 4
      %v2453 = vmax.f32 %v2451, %v2452
      %v2454 = vrot.slane %v2453, 2
      %v2455 = vmax.f32 %v2453, %v2454
      %v2456 = vrot.slane %v2455, 1
      %v2457 = vmax.f32 %v2455, %v2456
      %v2458 = vsel %vm518, %v1590, -inf
      %v2459 = vrot.slane %v2458, 4
      %v2460 = vmax.f32 %v2458, %v2459
      %v2461 = vrot.slane %v2460, 2
      %v2462 = vmax.f32 %v2460, %v2461
      %v2463 = vrot.slane %v2462, 1
      %v2464 = vmax.f32 %v2462, %v2463
      %v2465 = vsel %vm518, %v1597, -inf
      %v2466 = vrot.slane %v2465, 4
      %v2467 = vmax.f32 %v2465, %v2466
      %v2468 = vrot.slane %v2467, 2
      %v2469 = vmax.f32 %v2467, %v2468
      %v2470 = vrot.slane %v2469, 1
      %v2471 = vmax.f32 %v2469, %v2470
      %v2472 = vsel %vm518, %v1598, -inf
      %v2473 = vrot.slane %v2472, 4
      %v2474 = vmax.f32 %v2472, %v2473
      %v2475 = vrot.slane %v2474, 2
      %v2476 = vmax.f32 %v2474, %v2475
      %v2477 = vrot.slane %v2476, 1
      %v2478 = vmax.f32 %v2476, %v2477
      %v2479 = vsel %vm518, %v1605, -inf
      %v2480 = vrot.slane %v2479, 4
      %v2481 = vmax.f32 %v2479, %v2480
      %v2482 = vrot.slane %v2481, 2
      %v2483 = vmax.f32 %v2481, %v2482
      %v2484 = vrot.slane %v2483, 1
      %v2485 = vmax.f32 %v2483, %v2484
      %v2486 = vsel %vm518, %v1606, -inf
      %v2487 = vrot.slane %v2486, 4
      %v2488 = vmax.f32 %v2486, %v2487
      %v2489 = vrot.slane %v2488, 2
      %v2490 = vmax.f32 %v2488, %v2489
      %v2491 = vrot.slane %v2490, 1
      %v2492 = vmax.f32 %v2490, %v2491
      %v2493 = vsel %vm518, %v1613, -inf
      %v2494 = vrot.slane %v2493, 4
      %v2495 = vmax.f32 %v2493, %v2494
      %v2496 = vrot.slane %v2495, 2
      %v2497 = vmax.f32 %v2495, %v2496
      %v2498 = vrot.slane %v2497, 1
      %v2499 = vmax.f32 %v2497, %v2498
      %v2500 = vsel %vm518, %v1614, -inf
      %v2501 = vrot.slane %v2500, 4
      %v2502 = vmax.f32 %v2500, %v2501
      %v2503 = vrot.slane %v2502, 2
      %v2504 = vmax.f32 %v2502, %v2503
      %v2505 = vrot.slane %v2504, 1
      %v2506 = vmax.f32 %v2504, %v2505
      %v2507 = vsel %vm518, %v1621, -inf
      %v2508 = vrot.slane %v2507, 4
      %v2509 = vmax.f32 %v2507, %v2508
      %v2510 = vrot.slane %v2509, 2
      %v2511 = vmax.f32 %v2509, %v2510
      %v2512 = vrot.slane %v2511, 1
      %v2513 = vmax.f32 %v2511, %v2512
      %v2514 = vsel %vm518, %v1622, -inf
      %v2515 = vrot.slane %v2514, 4
      %v2516 = vmax.f32 %v2514, %v2515
      %v2517 = vrot.slane %v2516, 2
      %v2518 = vmax.f32 %v2516, %v2517
      %v2519 = vrot.slane %v2518, 1
      %v2520 = vmax.f32 %v2518, %v2519
      %v2521 = vsel %vm518, %v1629, -inf
      %v2522 = vrot.slane %v2521, 4
      %v2523 = vmax.f32 %v2521, %v2522
      %v2524 = vrot.slane %v2523, 2
      %v2525 = vmax.f32 %v2523, %v2524
      %v2526 = vrot.slane %v2525, 1
      %v2527 = vmax.f32 %v2525, %v2526
      %v2528 = vsel %vm518, %v1630, -inf
      %v2529 = vrot.slane %v2528, 4
      %v2530 = vmax.f32 %v2528, %v2529
      %v2531 = vrot.slane %v2530, 2
      %v2532 = vmax.f32 %v2530, %v2531
      %v2533 = vrot.slane %v2532, 1
      %v2534 = vmax.f32 %v2532, %v2533
      %v2535 = vsel %vm518, %v1637, -inf
      %v2536 = vrot.slane %v2535, 4
      %v2537 = vmax.f32 %v2535, %v2536
      %v2538 = vrot.slane %v2537, 2
      %v2539 = vmax.f32 %v2537, %v2538
      %v2540 = vrot.slane %v2539, 1
      %v2541 = vmax.f32 %v2539, %v2540
      %v2542 = vsel %vm518, %v1638, -inf
      %v2543 = vrot.slane %v2542, 4
      %v2544 = vmax.f32 %v2542, %v2543
      %v2545 = vrot.slane %v2544, 2
      %v2546 = vmax.f32 %v2544, %v2545
      %v2547 = vrot.slane %v2546, 1
      %v2548 = vmax.f32 %v2546, %v2547
      %v2549 = vsel %vm518, %v1645, -inf
      %v2550 = vrot.slane %v2549, 4
      %v2551 = vmax.f32 %v2549, %v2550
      %v2552 = vrot.slane %v2551, 2
      %v2553 = vmax.f32 %v2551, %v2552
      %v2554 = vrot.slane %v2553, 1
      %v2555 = vmax.f32 %v2553, %v2554
      %v2556 = vsel %vm518, %v1646, -inf
      %v2557 = vrot.slane %v2556, 4
      %v2558 = vmax.f32 %v2556, %v2557
      %v2559 = vrot.slane %v2558, 2
      %v2560 = vmax.f32 %v2558, %v2559
      %v2561 = vrot.slane %v2560, 1
      %v2562 = vmax.f32 %v2560, %v2561
      %v2563 = vsel %vm518, %v1653, -inf
      %v2564 = vrot.slane %v2563, 4
      %v2565 = vmax.f32 %v2563, %v2564
      %v2566 = vrot.slane %v2565, 2
      %v2567 = vmax.f32 %v2565, %v2566
      %v2568 = vrot.slane %v2567, 1
      %v2569 = vmax.f32 %v2567, %v2568
      %v2570 = vsel %vm518, %v1654, -inf
      %v2571 = vrot.slane %v2570, 4
      %v2572 = vmax.f32 %v2570, %v2571
      %v2573 = vrot.slane %v2572, 2
      %v2574 = vmax.f32 %v2572, %v2573
      %v2575 = vrot.slane %v2574, 1
      %v2576 = vmax.f32 %v2574, %v2575
      %v2577 = vsel %vm518, %v1661, -inf
      %v2578 = vrot.slane %v2577, 4
      %v2579 = vmax.f32 %v2577, %v2578
      %v2580 = vrot.slane %v2579, 2
      %v2581 = vmax.f32 %v2579, %v2580
      %v2582 = vrot.slane %v2581, 1
      %v2583 = vmax.f32 %v2581, %v2582
      %v2584 = vsel %vm518, %v1662, -inf
      %v2585 = vrot.slane %v2584, 4
      %v2586 = vmax.f32 %v2584, %v2585
      %v2587 = vrot.slane %v2586, 2
      %v2588 = vmax.f32 %v2586, %v2587
      %v2589 = vrot.slane %v2588, 1
      %v2590 = vmax.f32 %v2588, %v2589
      %v2591 = vsel %vm518, %v1669, -inf
      %v2592 = vrot.slane %v2591, 4
      %v2593 = vmax.f32 %v2591, %v2592
      %v2594 = vrot.slane %v2593, 2
      %v2595 = vmax.f32 %v2593, %v2594
      %v2596 = vrot.slane %v2595, 1
      %v2597 = vmax.f32 %v2595, %v2596
      %v2598 = vsel %vm518, %v1670, -inf
      %v2599 = vrot.slane %v2598, 4
      %v2600 = vmax.f32 %v2598, %v2599
      %v2601 = vrot.slane %v2600, 2
      %v2602 = vmax.f32 %v2600, %v2601
      %v2603 = vrot.slane %v2602, 1
      %v2604 = vmax.f32 %v2602, %v2603
      %v2605 = vsel %vm518, %v1677, -inf
      %v2606 = vrot.slane %v2605, 4
      %v2607 = vmax.f32 %v2605, %v2606
      %v2608 = vrot.slane %v2607, 2
      %v2609 = vmax.f32 %v2607, %v2608
      %v2610 = vrot.slane %v2609, 1
      %v2611 = vmax.f32 %v2609, %v2610
      %v2612 = vsel %vm518, %v1678, -inf
      %v2613 = vrot.slane %v2612, 4
      %v2614 = vmax.f32 %v2612, %v2613
      %v2615 = vrot.slane %v2614, 2
      %v2616 = vmax.f32 %v2614, %v2615
      %v2617 = vrot.slane %v2616, 1
      %v2618 = vmax.f32 %v2616, %v2617
      %v2619 = vsel %vm518, %v1685, -inf
      %v2620 = vrot.slane %v2619, 4
      %v2621 = vmax.f32 %v2619, %v2620
      %v2622 = vrot.slane %v2621, 2
      %v2623 = vmax.f32 %v2621, %v2622
      %v2624 = vrot.slane %v2623, 1
      %v2625 = vmax.f32 %v2623, %v2624
      %v2626 = vsel %vm518, %v1686, -inf
      %v2627 = vrot.slane %v2626, 4
      %v2628 = vmax.f32 %v2626, %v2627
      %v2629 = vrot.slane %v2628, 2
      %v2630 = vmax.f32 %v2628, %v2629
      %v2631 = vrot.slane %v2630, 1
      %v2632 = vmax.f32 %v2630, %v2631
      %v2633 = vsel %vm518, %v1693, -inf
      %v2634 = vrot.slane %v2633, 4
      %v2635 = vmax.f32 %v2633, %v2634
      %v2636 = vrot.slane %v2635, 2
      %v2637 = vmax.f32 %v2635, %v2636
      %v2638 = vrot.slane %v2637, 1
      %v2639 = vmax.f32 %v2637, %v2638
      %v2640 = vsel %vm518, %v1694, -inf
      %v2641 = vrot.slane %v2640, 4
      %v2642 = vmax.f32 %v2640, %v2641
      %v2643 = vrot.slane %v2642, 2
      %v2644 = vmax.f32 %v2642, %v2643
      %v2645 = vrot.slane %v2644, 1
      %v2646 = vmax.f32 %v2644, %v2645
      %v2647 = vsel %vm518, %v1701, -inf
      %v2648 = vrot.slane %v2647, 4
      %v2649 = vmax.f32 %v2647, %v2648
      %v2650 = vrot.slane %v2649, 2
      %v2651 = vmax.f32 %v2649, %v2650
      %v2652 = vrot.slane %v2651, 1
      %v2653 = vmax.f32 %v2651, %v2652
      %v2654 = vsel %vm518, %v1702, -inf
      %v2655 = vrot.slane %v2654, 4
      %v2656 = vmax.f32 %v2654, %v2655
      %v2657 = vrot.slane %v2656, 2
      %v2658 = vmax.f32 %v2656, %v2657
      %v2659 = vrot.slane %v2658, 1
      %v2660 = vmax.f32 %v2658, %v2659
      %v2661 = vsel %vm518, %v1709, -inf
      %v2662 = vrot.slane %v2661, 4
      %v2663 = vmax.f32 %v2661, %v2662
      %v2664 = vrot.slane %v2663, 2
      %v2665 = vmax.f32 %v2663, %v2664
      %v2666 = vrot.slane %v2665, 1
      %v2667 = vmax.f32 %v2665, %v2666
      %v2668 = vsel %vm518, %v1710, -inf
      %v2669 = vrot.slane %v2668, 4
      %v2670 = vmax.f32 %v2668, %v2669
      %v2671 = vrot.slane %v2670, 2
      %v2672 = vmax.f32 %v2670, %v2671
      %v2673 = vrot.slane %v2672, 1
      %v2674 = vmax.f32 %v2672, %v2673
      %v2675 = vsel %vm518, %v1717, -inf
      %v2676 = vrot.slane %v2675, 4
      %v2677 = vmax.f32 %v2675, %v2676
      %v2678 = vrot.slane %v2677, 2
      %v2679 = vmax.f32 %v2677, %v2678
      %v2680 = vrot.slane %v2679, 1
      %v2681 = vmax.f32 %v2679, %v2680
      %v2682 = vsel %vm518, %v1718, -inf
      %v2683 = vrot.slane %v2682, 4
      %v2684 = vmax.f32 %v2682, %v2683
      %v2685 = vrot.slane %v2684, 2
      %v2686 = vmax.f32 %v2684, %v2685
      %v2687 = vrot.slane %v2686, 1
      %v2688 = vmax.f32 %v2686, %v2687
      %v2689 = vsel %vm518, %v1725, -inf
      %v2690 = vrot.slane %v2689, 4
      %v2691 = vmax.f32 %v2689, %v2690
      %v2692 = vrot.slane %v2691, 2
      %v2693 = vmax.f32 %v2691, %v2692
      %v2694 = vrot.slane %v2693, 1
      %v2695 = vmax.f32 %v2693, %v2694
      %v2696 = vsel %vm518, %v1726, -inf
      %v2697 = vrot.slane %v2696, 4
      %v2698 = vmax.f32 %v2696, %v2697
      %v2699 = vrot.slane %v2698, 2
      %v2700 = vmax.f32 %v2698, %v2699
      %v2701 = vrot.slane %v2700, 1
      %v2702 = vmax.f32 %v2700, %v2701
      %v2703 = vsel %vm518, %v1733, -inf
      %v2704 = vrot.slane %v2703, 4
      %v2705 = vmax.f32 %v2703, %v2704
      %v2706 = vrot.slane %v2705, 2
      %v2707 = vmax.f32 %v2705, %v2706
      %v2708 = vrot.slane %v2707, 1
      %v2709 = vmax.f32 %v2707, %v2708
      %v2710 = vsel %vm518, %v1734, -inf
      %v2711 = vrot.slane %v2710, 4
      %v2712 = vmax.f32 %v2710, %v2711
      %v2713 = vrot.slane %v2712, 2
      %v2714 = vmax.f32 %v2712, %v2713
      %v2715 = vrot.slane %v2714, 1
      %v2716 = vmax.f32 %v2714, %v2715
      %v2717 = vsel %vm518, %v1741, -inf
      %v2718 = vrot.slane %v2717, 4
      %v2719 = vmax.f32 %v2717, %v2718
      %v2720 = vrot.slane %v2719, 2
      %v2721 = vmax.f32 %v2719, %v2720
      %v2722 = vrot.slane %v2721, 1
      %v2723 = vmax.f32 %v2721, %v2722
      %v2724 = vsel %vm518, %v1742, -inf
      %v2725 = vrot.slane %v2724, 4
      %v2726 = vmax.f32 %v2724, %v2725
      %v2727 = vrot.slane %v2726, 2
      %v2728 = vmax.f32 %v2726, %v2727
      %v2729 = vrot.slane %v2728, 1
      %v2730 = vmax.f32 %v2728, %v2729
      %v2731 = vsel %vm518, %v1749, -inf
      %v2732 = vrot.slane %v2731, 4
      %v2733 = vmax.f32 %v2731, %v2732
      %v2734 = vrot.slane %v2733, 2
      %v2735 = vmax.f32 %v2733, %v2734
      %v2736 = vrot.slane %v2735, 1
      %v2737 = vmax.f32 %v2735, %v2736
      %v2738 = vsel %vm518, %v1750, -inf
      %v2739 = vrot.slane %v2738, 4
      %v2740 = vmax.f32 %v2738, %v2739
      %v2741 = vrot.slane %v2740, 2
      %v2742 = vmax.f32 %v2740, %v2741
      %v2743 = vrot.slane %v2742, 1
      %v2744 = vmax.f32 %v2742, %v2743
      %v2745 = vsel %vm518, %v1757, -inf
      %v2746 = vrot.slane %v2745, 4
      %v2747 = vmax.f32 %v2745, %v2746
      %v2748 = vrot.slane %v2747, 2
      %v2749 = vmax.f32 %v2747, %v2748
      %v2750 = vrot.slane %v2749, 1
      %v2751 = vmax.f32 %v2749, %v2750
      %v2752 = vsel %vm518, %v1758, -inf
      %v2753 = vrot.slane %v2752, 4
      %v2754 = vmax.f32 %v2752, %v2753
      %v2755 = vrot.slane %v2754, 2
      %v2756 = vmax.f32 %v2754, %v2755
      %v2757 = vrot.slane %v2756, 1
      %v2758 = vmax.f32 %v2756, %v2757
      %v2759 = vsel %vm518, %v1765, -inf
      %v2760 = vrot.slane %v2759, 4
      %v2761 = vmax.f32 %v2759, %v2760
      %v2762 = vrot.slane %v2761, 2
      %v2763 = vmax.f32 %v2761, %v2762
      %v2764 = vrot.slane %v2763, 1
      %v2765 = vmax.f32 %v2763, %v2764
      %v2766 = vsel %vm518, %v1766, -inf
      %v2767 = vrot.slane %v2766, 4
      %v2768 = vmax.f32 %v2766, %v2767
      %v2769 = vrot.slane %v2768, 2
      %v2770 = vmax.f32 %v2768, %v2769
      %v2771 = vrot.slane %v2770, 1
      %v2772 = vmax.f32 %v2770, %v2771
      %v2773 = vsel %vm518, %v1773, -inf
      %v2774 = vrot.slane %v2773, 4
      %v2775 = vmax.f32 %v2773, %v2774
      %v2776 = vrot.slane %v2775, 2
      %v2777 = vmax.f32 %v2775, %v2776
      %v2778 = vrot.slane %v2777, 1
      %v2779 = vmax.f32 %v2777, %v2778
      %v2780 = vsel %vm518, %v1774, -inf
      %v2781 = vrot.slane %v2780, 4
      %v2782 = vmax.f32 %v2780, %v2781
      %v2783 = vrot.slane %v2782, 2
      %v2784 = vmax.f32 %v2782, %v2783
      %v2785 = vrot.slane %v2784, 1
      %v2786 = vmax.f32 %v2784, %v2785
      %v2787 = vsel %vm518, %v1781, -inf
      %v2788 = vrot.slane %v2787, 4
      %v2789 = vmax.f32 %v2787, %v2788
      %v2790 = vrot.slane %v2789, 2
      %v2791 = vmax.f32 %v2789, %v2790
      %v2792 = vrot.slane %v2791, 1
      %v2793 = vmax.f32 %v2791, %v2792
      %v2794 = vsel %vm518, %v1782, -inf
      %v2795 = vrot.slane %v2794, 4
      %v2796 = vmax.f32 %v2794, %v2795
      %v2797 = vrot.slane %v2796, 2
      %v2798 = vmax.f32 %v2796, %v2797
      %v2799 = vrot.slane %v2798, 1
      %v2800 = vmax.f32 %v2798, %v2799
      %v2801 = vsel %vm518, %v1789, -inf
      %v2802 = vrot.slane %v2801, 4
      %v2803 = vmax.f32 %v2801, %v2802
      %v2804 = vrot.slane %v2803, 2
      %v2805 = vmax.f32 %v2803, %v2804
      %v2806 = vrot.slane %v2805, 1
      %v2807 = vmax.f32 %v2805, %v2806
      %v2808 = vsel %vm518, %v1790, -inf
      %v2809 = vrot.slane %v2808, 4
      %v2810 = vmax.f32 %v2808, %v2809
      %v2811 = vrot.slane %v2810, 2
      %v2812 = vmax.f32 %v2810, %v2811
      %v2813 = vrot.slane %v2812, 1
      %v2814 = vmax.f32 %v2812, %v2813
      %v2815 = vmax.f32 %v1925, %v2037
      %v2816 = vmax.f32 %v1932, %v2044
      %v2817 = vmax.f32 %v1939, %v2051
      %v2818 = vmax.f32 %v1946, %v2058
      %v2819 = vmax.f32 %v1953, %v2065
      %v2820 = vmax.f32 %v1960, %v2072
      %v2821 = vmax.f32 %v1967, %v2079
      %v2822 = vmax.f32 %v1974, %v2086
      %v2823 = vmax.f32 %v1981, %v2093
      %v2824 = vmax.f32 %v1988, %v2100
      %v2825 = vmax.f32 %v1995, %v2107
      %v2826 = vmax.f32 %v2002, %v2114
      %v2827 = vmax.f32 %v2009, %v2121
      %v2828 = vmax.f32 %v2016, %v2128
      %v2829 = vmax.f32 %v2023, %v2135
      %v2830 = vmax.f32 %v2030, %v2142
      %v2831 = vmax.f32 %v2149, %v2261
      %v2832 = vmax.f32 %v2156, %v2268
      %v2833 = vmax.f32 %v2163, %v2275
      %v2834 = vmax.f32 %v2170, %v2282
      %v2835 = vmax.f32 %v2177, %v2289
      %v2836 = vmax.f32 %v2184, %v2296
      %v2837 = vmax.f32 %v2191, %v2303
      %v2838 = vmax.f32 %v2198, %v2310
      %v2839 = vmax.f32 %v2205, %v2317
      %v2840 = vmax.f32 %v2212, %v2324
      %v2841 = vmax.f32 %v2219, %v2331
      %v2842 = vmax.f32 %v2226, %v2338
      %v2843 = vmax.f32 %v2233, %v2345
      %v2844 = vmax.f32 %v2240, %v2352
      %v2845 = vmax.f32 %v2247, %v2359
      %v2846 = vmax.f32 %v2254, %v2366
      %v2847 = vmax.f32 %v2373, %v2485
      %v2848 = vmax.f32 %v2380, %v2492
      %v2849 = vmax.f32 %v2387, %v2499
      %v2850 = vmax.f32 %v2394, %v2506
      %v2851 = vmax.f32 %v2401, %v2513
      %v2852 = vmax.f32 %v2408, %v2520
      %v2853 = vmax.f32 %v2415, %v2527
      %v2854 = vmax.f32 %v2422, %v2534
      %v2855 = vmax.f32 %v2429, %v2541
      %v2856 = vmax.f32 %v2436, %v2548
      %v2857 = vmax.f32 %v2443, %v2555
      %v2858 = vmax.f32 %v2450, %v2562
      %v2859 = vmax.f32 %v2457, %v2569
      %v2860 = vmax.f32 %v2464, %v2576
      %v2861 = vmax.f32 %v2471, %v2583
      %v2862 = vmax.f32 %v2478, %v2590
      %v2863 = vmax.f32 %v2597, %v2709
      %v2864 = vmax.f32 %v2604, %v2716
      %v2865 = vmax.f32 %v2611, %v2723
      %v2866 = vmax.f32 %v2618, %v2730
      %v2867 = vmax.f32 %v2625, %v2737
      %v2868 = vmax.f32 %v2632, %v2744
      %v2869 = vmax.f32 %v2639, %v2751
      %v2870 = vmax.f32 %v2646, %v2758
      %v2871 = vmax.f32 %v2653, %v2765
      %v2872 = vmax.f32 %v2660, %v2772
      %v2873 = vmax.f32 %v2667, %v2779
      %v2874 = vmax.f32 %v2674, %v2786
      %v2875 = vmax.f32 %v2681, %v2793
      %v2876 = vmax.f32 %v2688, %v2800
      %v2877 = vmax.f32 %v2695, %v2807
      %v2878 = vmax.f32 %v2702, %v2814
      %v2880 = vlaneseq
      %v2881 = vshrl.u32 %v2880, 7
      %v2882 = vsub.s32 0, %v2881
      %v2883 = vrot.slane %v323, %v2882
      %v2884 = vlaneseq
      %v2885 = vshrl.u32 %v2884, 7
      %v2886 = vsub.s32 1, %v2885
      %v2887 = vrot.slane %v323, %v2886
      %v2890 = vadd.f32 %v2815, %v2883
      %v2891 = vadd.f32 %v2816, %v2887
      %v2892 = vadd.f32 %v2817, %v2883
      %v2893 = vadd.f32 %v2818, %v2887
      %v2894 = vadd.f32 %v2819, %v2883
      %v2895 = vadd.f32 %v2820, %v2887
      %v2896 = vadd.f32 %v2821, %v2883
      %v2897 = vadd.f32 %v2822, %v2887
      %v2898 = vadd.f32 %v2823, %v2883
      %v2899 = vadd.f32 %v2824, %v2887
      %v2900 = vadd.f32 %v2825, %v2883
      %v2901 = vadd.f32 %v2826, %v2887
      %v2902 = vadd.f32 %v2827, %v2883
      %v2903 = vadd.f32 %v2828, %v2887
      %v2904 = vadd.f32 %v2829, %v2883
      %v2905 = vadd.f32 %v2830, %v2887
      %v2906 = vadd.f32 %v2831, %v2883
      %v2907 = vadd.f32 %v2832, %v2887
      %v2908 = vadd.f32 %v2833, %v2883
      %v2909 = vadd.f32 %v2834, %v2887
      %v2910 = vadd.f32 %v2835, %v2883
      %v2911 = vadd.f32 %v2836, %v2887
      %v2912 = vadd.f32 %v2837, %v2883
      %v2913 = vadd.f32 %v2838, %v2887
      %v2914 = vadd.f32 %v2839, %v2883
      %v2915 = vadd.f32 %v2840, %v2887
      %v2916 = vadd.f32 %v2841, %v2883
      %v2917 = vadd.f32 %v2842, %v2887
      %v2918 = vadd.f32 %v2843, %v2883
      %v2919 = vadd.f32 %v2844, %v2887
      %v2920 = vadd.f32 %v2845, %v2883
      %v2921 = vadd.f32 %v2846, %v2887
      %v2922 = vadd.f32 %v2847, %v2883
      %v2923 = vadd.f32 %v2848, %v2887
      %v2924 = vadd.f32 %v2849, %v2883
      %v2925 = vadd.f32 %v2850, %v2887
      %v2926 = vadd.f32 %v2851, %v2883
      %v2927 = vadd.f32 %v2852, %v2887
      %v2928 = vadd.f32 %v2853, %v2883
      %v2929 = vadd.f32 %v2854, %v2887
      %v2930 = vadd.f32 %v2855, %v2883
      %v2931 = vadd.f32 %v2856, %v2887
      %v2932 = vadd.f32 %v2857, %v2883
      %v2933 = vadd.f32 %v2858, %v2887
      %v2934 = vadd.f32 %v2859, %v2883
      %v2935 = vadd.f32 %v2860, %v2887
      %v2936 = vadd.f32 %v2861, %v2883
      %v2937 = vadd.f32 %v2862, %v2887
      %v2938 = vadd.f32 %v2863, %v2883
      %v2939 = vadd.f32 %v2864, %v2887
      %v2940 = vadd.f32 %v2865, %v2883
      %v2941 = vadd.f32 %v2866, %v2887
      %v2942 = vadd.f32 %v2867, %v2883
      %v2943 = vadd.f32 %v2868, %v2887
      %v2944 = vadd.f32 %v2869, %v2883
      %v2945 = vadd.f32 %v2870, %v2887
      %v2946 = vadd.f32 %v2871, %v2883
      %v2947 = vadd.f32 %v2872, %v2887
      %v2948 = vadd.f32 %v2873, %v2883
      %v2949 = vadd.f32 %v2874, %v2887
      %v2950 = vadd.f32 %v2875, %v2883
      %v2951 = vadd.f32 %v2876, %v2887
      %v2952 = vadd.f32 %v2877, %v2883
      %v2953 = vadd.f32 %v2878, %v2887
      %v2954 = vmax.f32 %v2890, 0.0
      %v2955 = vmax.f32 %v2891, 0.0
      %v2956 = vmax.f32 %v2892, 0.0
      %v2957 = vmax.f32 %v2893, 0.0
      %v2958 = vmax.f32 %v2894, 0.0
      %v2959 = vmax.f32 %v2895, 0.0
      %v2960 = vmax.f32 %v2896, 0.0
      %v2961 = vmax.f32 %v2897, 0.0
      %v2962 = vmax.f32 %v2898, 0.0
      %v2963 = vmax.f32 %v2899, 0.0
      %v2964 = vmax.f32 %v2900, 0.0
      %v2965 = vmax.f32 %v2901, 0.0
      %v2966 = vmax.f32 %v2902, 0.0
      %v2967 = vmax.f32 %v2903, 0.0
      %v2968 = vmax.f32 %v2904, 0.0
      %v2969 = vmax.f32 %v2905, 0.0
      %v2970 = vmax.f32 %v2906, 0.0
      %v2971 = vmax.f32 %v2907, 0.0
      %v2972 = vmax.f32 %v2908, 0.0
      %v2973 = vmax.f32 %v2909, 0.0
      %v2974 = vmax.f32 %v2910, 0.0
      %v2975 = vmax.f32 %v2911, 0.0
      %v2976 = vmax.f32 %v2912, 0.0
      %v2977 = vmax.f32 %v2913, 0.0
      %v2978 = vmax.f32 %v2914, 0.0
      %v2979 = vmax.f32 %v2915, 0.0
      %v2980 = vmax.f32 %v2916, 0.0
      %v2981 = vmax.f32 %v2917, 0.0
      %v2982 = vmax.f32 %v2918, 0.0
      %v2983 = vmax.f32 %v2919, 0.0
      %v2984 = vmax.f32 %v2920, 0.0
      %v2985 = vmax.f32 %v2921, 0.0
      %v2986 = vmax.f32 %v2922, 0.0
      %v2987 = vmax.f32 %v2923, 0.0
      %v2988 = vmax.f32 %v2924, 0.0
      %v2989 = vmax.f32 %v2925, 0.0
      %v2990 = vmax.f32 %v2926, 0.0
      %v2991 = vmax.f32 %v2927, 0.0
      %v2992 = vmax.f32 %v2928, 0.0
      %v2993 = vmax.f32 %v2929, 0.0
      %v2994 = vmax.f32 %v2930, 0.0
      %v2995 = vmax.f32 %v2931, 0.0
      %v2996 = vmax.f32 %v2932, 0.0
      %v2997 = vmax.f32 %v2933, 0.0
      %v2998 = vmax.f32 %v2934, 0.0
      %v2999 = vmax.f32 %v2935, 0.0
      %v3000 = vmax.f32 %v2936, 0.0
      %v3001 = vmax.f32 %v2937, 0.0
      %v3002 = vmax.f32 %v2938, 0.0
      %v3003 = vmax.f32 %v2939, 0.0
      %v3004 = vmax.f32 %v2940, 0.0
      %v3005 = vmax.f32 %v2941, 0.0
      %v3006 = vmax.f32 %v2942, 0.0
      %v3007 = vmax.f32 %v2943, 0.0
      %v3008 = vmax.f32 %v2944, 0.0
      %v3009 = vmax.f32 %v2945, 0.0
      %v3010 = vmax.f32 %v2946, 0.0
      %v3011 = vmax.f32 %v2947, 0.0
      %v3012 = vmax.f32 %v2948, 0.0
      %v3013 = vmax.f32 %v2949, 0.0
      %v3014 = vmax.f32 %v2950, 0.0
      %v3015 = vmax.f32 %v2951, 0.0
      %v3016 = vmax.f32 %v2952, 0.0
      %v3017 = vmax.f32 %v2953, 0.0
      %v3018 = vpack.c.bf16 %v2954, %v2954
      %v3019 = vpack.c.bf16 %v2955, %v2955
      %v3020 = vpack.c.bf16 %v2956, %v2956
      %v3021 = vpack.c.bf16 %v2957, %v2957
      %v3022 = vpack.c.bf16 %v2958, %v2958
      %v3023 = vpack.c.bf16 %v2959, %v2959
      %v3024 = vpack.c.bf16 %v2960, %v2960
      %v3025 = vpack.c.bf16 %v2961, %v2961
      %v3026 = vpack.c.bf16 %v2962, %v2962
      %v3027 = vpack.c.bf16 %v2963, %v2963
      %v3028 = vpack.c.bf16 %v2964, %v2964
      %v3029 = vpack.c.bf16 %v2965, %v2965
      %v3030 = vpack.c.bf16 %v2966, %v2966
      %v3031 = vpack.c.bf16 %v2967, %v2967
      %v3032 = vpack.c.bf16 %v2968, %v2968
      %v3033 = vpack.c.bf16 %v2969, %v2969
      %v3034 = vpack.c.bf16 %v2970, %v2970
      %v3035 = vpack.c.bf16 %v2971, %v2971
      %v3036 = vpack.c.bf16 %v2972, %v2972
      %v3037 = vpack.c.bf16 %v2973, %v2973
      %v3038 = vpack.c.bf16 %v2974, %v2974
      %v3039 = vpack.c.bf16 %v2975, %v2975
      %v3040 = vpack.c.bf16 %v2976, %v2976
      %v3041 = vpack.c.bf16 %v2977, %v2977
      %v3042 = vpack.c.bf16 %v2978, %v2978
      %v3043 = vpack.c.bf16 %v2979, %v2979
      %v3044 = vpack.c.bf16 %v2980, %v2980
      %v3045 = vpack.c.bf16 %v2981, %v2981
      %v3046 = vpack.c.bf16 %v2982, %v2982
      %v3047 = vpack.c.bf16 %v2983, %v2983
      %v3048 = vpack.c.bf16 %v2984, %v2984
      %v3049 = vpack.c.bf16 %v2985, %v2985
      %v3050 = vpack.c.bf16 %v2986, %v2986
      %v3051 = vpack.c.bf16 %v2987, %v2987
      %v3052 = vpack.c.bf16 %v2988, %v2988
      %v3053 = vpack.c.bf16 %v2989, %v2989
      %v3054 = vpack.c.bf16 %v2990, %v2990
      %v3055 = vpack.c.bf16 %v2991, %v2991
      %v3056 = vpack.c.bf16 %v2992, %v2992
      %v3057 = vpack.c.bf16 %v2993, %v2993
      %v3058 = vpack.c.bf16 %v2994, %v2994
      %v3059 = vpack.c.bf16 %v2995, %v2995
      %v3060 = vpack.c.bf16 %v2996, %v2996
      %v3061 = vpack.c.bf16 %v2997, %v2997
      %v3062 = vpack.c.bf16 %v2998, %v2998
      %v3063 = vpack.c.bf16 %v2999, %v2999
      %v3064 = vpack.c.bf16 %v3000, %v3000
      %v3065 = vpack.c.bf16 %v3001, %v3001
      %v3066 = vpack.c.bf16 %v3002, %v3002
      %v3067 = vpack.c.bf16 %v3003, %v3003
      %v3068 = vpack.c.bf16 %v3004, %v3004
      %v3069 = vpack.c.bf16 %v3005, %v3005
      %v3070 = vpack.c.bf16 %v3006, %v3006
      %v3071 = vpack.c.bf16 %v3007, %v3007
      %v3072 = vpack.c.bf16 %v3008, %v3008
      %v3073 = vpack.c.bf16 %v3009, %v3009
      %v3074 = vpack.c.bf16 %v3010, %v3010
      %v3075 = vpack.c.bf16 %v3011, %v3011
      %v3076 = vpack.c.bf16 %v3012, %v3012
      %v3077 = vpack.c.bf16 %v3013, %v3013
      %v3078 = vpack.c.bf16 %v3014, %v3014
      %v3079 = vpack.c.bf16 %v3015, %v3015
      %v3080 = vpack.c.bf16 %v3016, %v3016
      %v3081 = vpack.c.bf16 %v3017, %v3017
      %v3146 = vunpack.c.l.b16 %v3018
      %v3147 = vunpack.c.l.b16 %v3019
      %v3148 = vunpack.c.l.b16 %v3020
      %v3149 = vunpack.c.l.b16 %v3021
      %v3150 = vunpack.c.l.b16 %v3022
      %v3151 = vunpack.c.l.b16 %v3023
      %v3152 = vunpack.c.l.b16 %v3024
      %v3153 = vunpack.c.l.b16 %v3025
      %v3154 = vunpack.c.l.b16 %v3026
      %v3155 = vunpack.c.l.b16 %v3027
      %v3156 = vunpack.c.l.b16 %v3028
      %v3157 = vunpack.c.l.b16 %v3029
      %v3158 = vunpack.c.l.b16 %v3030
      %v3159 = vunpack.c.l.b16 %v3031
      %v3160 = vunpack.c.l.b16 %v3032
      %v3161 = vunpack.c.l.b16 %v3033
      %v3162 = vunpack.c.l.b16 %v3034
      %v3163 = vunpack.c.l.b16 %v3035
      %v3164 = vunpack.c.l.b16 %v3036
      %v3165 = vunpack.c.l.b16 %v3037
      %v3166 = vunpack.c.l.b16 %v3038
      %v3167 = vunpack.c.l.b16 %v3039
      %v3168 = vunpack.c.l.b16 %v3040
      %v3169 = vunpack.c.l.b16 %v3041
      %v3170 = vunpack.c.l.b16 %v3042
      %v3171 = vunpack.c.l.b16 %v3043
      %v3172 = vunpack.c.l.b16 %v3044
      %v3173 = vunpack.c.l.b16 %v3045
      %v3174 = vunpack.c.l.b16 %v3046
      %v3175 = vunpack.c.l.b16 %v3047
      %v3176 = vunpack.c.l.b16 %v3048
      %v3177 = vunpack.c.l.b16 %v3049
      %v3178 = vunpack.c.l.b16 %v3050
      %v3179 = vunpack.c.l.b16 %v3051
      %v3180 = vunpack.c.l.b16 %v3052
      %v3181 = vunpack.c.l.b16 %v3053
      %v3182 = vunpack.c.l.b16 %v3054
      %v3183 = vunpack.c.l.b16 %v3055
      %v3184 = vunpack.c.l.b16 %v3056
      %v3185 = vunpack.c.l.b16 %v3057
      %v3186 = vunpack.c.l.b16 %v3058
      %v3187 = vunpack.c.l.b16 %v3059
      %v3188 = vunpack.c.l.b16 %v3060
      %v3189 = vunpack.c.l.b16 %v3061
      %v3190 = vunpack.c.l.b16 %v3062
      %v3191 = vunpack.c.l.b16 %v3063
      %v3192 = vunpack.c.l.b16 %v3064
      %v3193 = vunpack.c.l.b16 %v3065
      %v3194 = vunpack.c.l.b16 %v3066
      %v3195 = vunpack.c.l.b16 %v3067
      %v3196 = vunpack.c.l.b16 %v3068
      %v3197 = vunpack.c.l.b16 %v3069
      %v3198 = vunpack.c.l.b16 %v3070
      %v3199 = vunpack.c.l.b16 %v3071
      %v3200 = vunpack.c.l.b16 %v3072
      %v3201 = vunpack.c.l.b16 %v3073
      %v3202 = vunpack.c.l.b16 %v3074
      %v3203 = vunpack.c.l.b16 %v3075
      %v3204 = vunpack.c.l.b16 %v3076
      %v3205 = vunpack.c.l.b16 %v3077
      %v3206 = vunpack.c.l.b16 %v3078
      %v3207 = vunpack.c.l.b16 %v3079
      %v3208 = vunpack.c.l.b16 %v3080
      %v3209 = vunpack.c.l.b16 %v3081
      %v3210 = vpack.c.b16 %v3147, %v3146
      %v3211 = vpack.c.b16 %v3149, %v3148
      %v3212 = vpack.c.b16 %v3151, %v3150
      %v3213 = vpack.c.b16 %v3153, %v3152
      %v3214 = vpack.c.b16 %v3155, %v3154
      %v3215 = vpack.c.b16 %v3157, %v3156
      %v3216 = vpack.c.b16 %v3159, %v3158
      %v3217 = vpack.c.b16 %v3161, %v3160
      %v3218 = vpack.c.b16 %v3163, %v3162
      %v3219 = vpack.c.b16 %v3165, %v3164
      %v3220 = vpack.c.b16 %v3167, %v3166
      %v3221 = vpack.c.b16 %v3169, %v3168
      %v3222 = vpack.c.b16 %v3171, %v3170
      %v3223 = vpack.c.b16 %v3173, %v3172
      %v3224 = vpack.c.b16 %v3175, %v3174
      %v3225 = vpack.c.b16 %v3177, %v3176
      %v3226 = vpack.c.b16 %v3179, %v3178
      %v3227 = vpack.c.b16 %v3181, %v3180
      %v3228 = vpack.c.b16 %v3183, %v3182
      %v3229 = vpack.c.b16 %v3185, %v3184
      %v3230 = vpack.c.b16 %v3187, %v3186
      %v3231 = vpack.c.b16 %v3189, %v3188
      %v3232 = vpack.c.b16 %v3191, %v3190
      %v3233 = vpack.c.b16 %v3193, %v3192
      %v3234 = vpack.c.b16 %v3195, %v3194
      %v3235 = vpack.c.b16 %v3197, %v3196
      %v3236 = vpack.c.b16 %v3199, %v3198
      %v3237 = vpack.c.b16 %v3201, %v3200
      %v3238 = vpack.c.b16 %v3203, %v3202
      %v3239 = vpack.c.b16 %v3205, %v3204
      %v3240 = vpack.c.b16 %v3207, %v3206
      %v3241 = vpack.c.b16 %v3209, %v3208
      %v3242 = vunpack.c.l.b16 %v3210
      %v3243 = vunpack.c.h.b16 %v3210
      %v3244 = vunpack.c.l.b16 %v3211
      %v3245 = vunpack.c.h.b16 %v3211
      %v3246 = vunpack.c.l.b16 %v3212
      %v3247 = vunpack.c.h.b16 %v3212
      %v3248 = vunpack.c.l.b16 %v3213
      %v3249 = vunpack.c.h.b16 %v3213
      %v3250 = vunpack.c.l.b16 %v3214
      %v3251 = vunpack.c.h.b16 %v3214
      %v3252 = vunpack.c.l.b16 %v3215
      %v3253 = vunpack.c.h.b16 %v3215
      %v3254 = vunpack.c.l.b16 %v3216
      %v3255 = vunpack.c.h.b16 %v3216
      %v3256 = vunpack.c.l.b16 %v3217
      %v3257 = vunpack.c.h.b16 %v3217
      %v3258 = vunpack.c.l.b16 %v3218
      %v3259 = vunpack.c.h.b16 %v3218
      %v3260 = vunpack.c.l.b16 %v3219
      %v3261 = vunpack.c.h.b16 %v3219
      %v3262 = vunpack.c.l.b16 %v3220
      %v3263 = vunpack.c.h.b16 %v3220
      %v3264 = vunpack.c.l.b16 %v3221
      %v3265 = vunpack.c.h.b16 %v3221
      %v3266 = vunpack.c.l.b16 %v3222
      %v3267 = vunpack.c.h.b16 %v3222
      %v3268 = vunpack.c.l.b16 %v3223
      %v3269 = vunpack.c.h.b16 %v3223
      %v3270 = vunpack.c.l.b16 %v3224
      %v3271 = vunpack.c.h.b16 %v3224
      %v3272 = vunpack.c.l.b16 %v3225
      %v3273 = vunpack.c.h.b16 %v3225
      %v3274 = vunpack.c.l.b16 %v3226
      %v3275 = vunpack.c.h.b16 %v3226
      %v3276 = vunpack.c.l.b16 %v3227
      %v3277 = vunpack.c.h.b16 %v3227
      %v3278 = vunpack.c.l.b16 %v3228
      %v3279 = vunpack.c.h.b16 %v3228
      %v3280 = vunpack.c.l.b16 %v3229
      %v3281 = vunpack.c.h.b16 %v3229
      %v3282 = vunpack.c.l.b16 %v3230
      %v3283 = vunpack.c.h.b16 %v3230
      %v3284 = vunpack.c.l.b16 %v3231
      %v3285 = vunpack.c.h.b16 %v3231
      %v3286 = vunpack.c.l.b16 %v3232
      %v3287 = vunpack.c.h.b16 %v3232
      %v3288 = vunpack.c.l.b16 %v3233
      %v3289 = vunpack.c.h.b16 %v3233
      %v3290 = vunpack.c.l.b16 %v3234
      %v3291 = vunpack.c.h.b16 %v3234
      %v3292 = vunpack.c.l.b16 %v3235
      %v3293 = vunpack.c.h.b16 %v3235
      %v3294 = vunpack.c.l.b16 %v3236
      %v3295 = vunpack.c.h.b16 %v3236
      %v3296 = vunpack.c.l.b16 %v3237
      %v3297 = vunpack.c.h.b16 %v3237
      %v3298 = vunpack.c.l.b16 %v3238
      %v3299 = vunpack.c.h.b16 %v3238
      %v3300 = vunpack.c.l.b16 %v3239
      %v3301 = vunpack.c.h.b16 %v3239
      %v3302 = vunpack.c.l.b16 %v3240
      %v3303 = vunpack.c.h.b16 %v3240
      %v3304 = vunpack.c.l.b16 %v3241
      %v3305 = vunpack.c.h.b16 %v3241
      %v3306 = vrot.slane %v3242, 7
      %v3307 = vrot.slane %v3244, 6
      %vm3308 = vcmask 1042434
      %v3309 = vsel %vm3308, %v3307, %v3306
      %v3310 = vrot.slane %v3246, 5
      %vm3311 = vcmask 1043459
      %v3312 = vsel %vm3311, %v3310, %v3309
      %v3313 = vrot.slane %v3248, 4
      %vm3314 = vcmask 1044484
      %v3315 = vsel %vm3314, %v3313, %v3312
      %v3316 = vrot.slane %v3250, 3
      %vm3317 = vcmask 1045509
      %v3318 = vsel %vm3317, %v3316, %v3315
      %v3319 = vrot.slane %v3252, 2
      %vm3320 = vcmask 1046534
      %v3321 = vsel %vm3320, %v3319, %v3318
      %v3322 = vrot.slane %v3254, 1
      %vm3323 = vcmask 1047559
      %v3324 = vsel %vm3323, %v3322, %v3321
      %v3325 = vrot.slane %v3243, 7
      %v3326 = vrot.slane %v3245, 6
      %v3327 = vsel %vm3308, %v3326, %v3325
      %v3328 = vrot.slane %v3247, 5
      %v3329 = vsel %vm3311, %v3328, %v3327
      %v3330 = vrot.slane %v3249, 4
      %v3331 = vsel %vm3314, %v3330, %v3329
      %v3332 = vrot.slane %v3251, 3
      %v3333 = vsel %vm3317, %v3332, %v3331
      %v3334 = vrot.slane %v3253, 2
      %v3335 = vsel %vm3320, %v3334, %v3333
      %v3336 = vrot.slane %v3255, 1
      %v3337 = vsel %vm3323, %v3336, %v3335
      %v3338 = vrot.slane %v3258, 7
      %v3339 = vrot.slane %v3260, 6
      %v3340 = vsel %vm3308, %v3339, %v3338
      %v3341 = vrot.slane %v3262, 5
      %v3342 = vsel %vm3311, %v3341, %v3340
      %v3343 = vrot.slane %v3264, 4
      %v3344 = vsel %vm3314, %v3343, %v3342
      %v3345 = vrot.slane %v3266, 3
      %v3346 = vsel %vm3317, %v3345, %v3344
      %v3347 = vrot.slane %v3268, 2
      %v3348 = vsel %vm3320, %v3347, %v3346
      %v3349 = vrot.slane %v3270, 1
      %v3350 = vsel %vm3323, %v3349, %v3348
      %v3351 = vrot.slane %v3259, 7
      %v3352 = vrot.slane %v3261, 6
      %v3353 = vsel %vm3308, %v3352, %v3351
      %v3354 = vrot.slane %v3263, 5
      %v3355 = vsel %vm3311, %v3354, %v3353
      %v3356 = vrot.slane %v3265, 4
      %v3357 = vsel %vm3314, %v3356, %v3355
      %v3358 = vrot.slane %v3267, 3
      %v3359 = vsel %vm3317, %v3358, %v3357
      %v3360 = vrot.slane %v3269, 2
      %v3361 = vsel %vm3320, %v3360, %v3359
      %v3362 = vrot.slane %v3271, 1
      %v3363 = vsel %vm3323, %v3362, %v3361
      %v3364 = vrot.slane %v3274, 7
      %v3365 = vrot.slane %v3276, 6
      %v3366 = vsel %vm3308, %v3365, %v3364
      %v3367 = vrot.slane %v3278, 5
      %v3368 = vsel %vm3311, %v3367, %v3366
      %v3369 = vrot.slane %v3280, 4
      %v3370 = vsel %vm3314, %v3369, %v3368
      %v3371 = vrot.slane %v3282, 3
      %v3372 = vsel %vm3317, %v3371, %v3370
      %v3373 = vrot.slane %v3284, 2
      %v3374 = vsel %vm3320, %v3373, %v3372
      %v3375 = vrot.slane %v3286, 1
      %v3376 = vsel %vm3323, %v3375, %v3374
      %v3377 = vrot.slane %v3275, 7
      %v3378 = vrot.slane %v3277, 6
      %v3379 = vsel %vm3308, %v3378, %v3377
      %v3380 = vrot.slane %v3279, 5
      %v3381 = vsel %vm3311, %v3380, %v3379
      %v3382 = vrot.slane %v3281, 4
      %v3383 = vsel %vm3314, %v3382, %v3381
      %v3384 = vrot.slane %v3283, 3
      %v3385 = vsel %vm3317, %v3384, %v3383
      %v3386 = vrot.slane %v3285, 2
      %v3387 = vsel %vm3320, %v3386, %v3385
      %v3388 = vrot.slane %v3287, 1
      %v3389 = vsel %vm3323, %v3388, %v3387
      %v3390 = vrot.slane %v3290, 7
      %v3391 = vrot.slane %v3292, 6
      %v3392 = vsel %vm3308, %v3391, %v3390
      %v3393 = vrot.slane %v3294, 5
      %v3394 = vsel %vm3311, %v3393, %v3392
      %v3395 = vrot.slane %v3296, 4
      %v3396 = vsel %vm3314, %v3395, %v3394
      %v3397 = vrot.slane %v3298, 3
      %v3398 = vsel %vm3317, %v3397, %v3396
      %v3399 = vrot.slane %v3300, 2
      %v3400 = vsel %vm3320, %v3399, %v3398
      %v3401 = vrot.slane %v3302, 1
      %v3402 = vsel %vm3323, %v3401, %v3400
      %v3403 = vrot.slane %v3291, 7
      %v3404 = vrot.slane %v3293, 6
      %v3405 = vsel %vm3308, %v3404, %v3403
      %v3406 = vrot.slane %v3295, 5
      %v3407 = vsel %vm3311, %v3406, %v3405
      %v3408 = vrot.slane %v3297, 4
      %v3409 = vsel %vm3314, %v3408, %v3407
      %v3410 = vrot.slane %v3299, 3
      %v3411 = vsel %vm3317, %v3410, %v3409
      %v3412 = vrot.slane %v3301, 2
      %v3413 = vsel %vm3320, %v3412, %v3411
      %v3414 = vrot.slane %v3303, 1
      %v3415 = vsel %vm3323, %v3414, %v3413
      %v3416 = vpack.c.b16 %v3337, %v3324
      %v3417 = vpack.c.b16 %v3257, %v3256
      %v3418 = vpack.c.b16 %v3363, %v3350
      %v3419 = vpack.c.b16 %v3273, %v3272
      %v3420 = vpack.c.b16 %v3389, %v3376
      %v3421 = vpack.c.b16 %v3289, %v3288
      %v3422 = vpack.c.b16 %v3415, %v3402
      %v3423 = vpack.c.b16 %v3305, %v3304
      %s3432 = scalar_lea.vmem [#allocation2], 16
      %vm3433 = vcmask 1043456
      %vm3434 = vmand %vm3433, %vm366
      %vm3435 = vcmask 1047556
      %vm3436 = vmand %vm3435, %vm368
      %vm3437 = vmor %vm3436, %vm3434
      %v3438 = vld [vmem:[%s3432] sm:$0xff]
      %v3439 = vsel %vm3437, %v3416, %v3438
      %3440 = vst [vmem:[%s3432] sm:$0xff] %v3439
      %v3441 = vld [vmem:[%s3432 + $0x8] sm:$0x11]
      %v3442 = vsel %vm335, %v3417, %v3441
      %3443 = vst [vmem:[%s3432 + $0x8] sm:$0x11] %v3442
      %v3444 = vld [vmem:[%s3432 + $0x10] sm:$0xff]
      %v3445 = vsel %vm3437, %v3418, %v3444
      %3446 = vst [vmem:[%s3432 + $0x10] sm:$0xff] %v3445
      %v3447 = vld [vmem:[%s3432 + $0x18] sm:$0x11]
      %v3448 = vsel %vm335, %v3419, %v3447
      %3449 = vst [vmem:[%s3432 + $0x18] sm:$0x11] %v3448
      %v3450 = vld [vmem:[%s3432 + $0x20] sm:$0xff]
      %v3451 = vsel %vm3437, %v3420, %v3450
      %3452 = vst [vmem:[%s3432 + $0x20] sm:$0xff] %v3451
      %v3453 = vld [vmem:[%s3432 + $0x28] sm:$0x11]
      %v3454 = vsel %vm335, %v3421, %v3453
      %3455 = vst [vmem:[%s3432 + $0x28] sm:$0x11] %v3454
      %v3456 = vld [vmem:[%s3432 + $0x30] sm:$0xff]
      %v3457 = vsel %vm3437, %v3422, %v3456
      %3458 = vst [vmem:[%s3432 + $0x30] sm:$0xff] %v3457
      %v3459 = vld [vmem:[%s3432 + $0x38] sm:$0x11]
      %v3460 = vsel %vm335, %v3423, %v3459
      %3461 = vst [vmem:[%s3432 + $0x38] sm:$0x11] %v3460
      %s3462 = scalar_lea.vmem %s275, 64
      %v3463 = vld [vmem:[%s3462] sm:$0xf]
      %v3464 = vld [vmem:[%s3462 + $0x4] sm:$0xf]
      %v3465 = vld [vmem:[%s3462 + $0x8] sm:$0xf]
      %v3466 = vld [vmem:[%s3462 + $0xc] sm:$0xf]
      %v3467 = vld [vmem:[%s3462 + $0x10] sm:$0xf]
      %v3468 = vld [vmem:[%s3462 + $0x14] sm:$0xf]
      %v3469 = vld [vmem:[%s3462 + $0x18] sm:$0xf]
      %v3470 = vld [vmem:[%s3462 + $0x1c] sm:$0xf]
      %v3471 = vld [vmem:[%s3462 + $0x20] sm:$0xf]
      %v3472 = vld [vmem:[%s3462 + $0x24] sm:$0xf]
      %v3473 = vld [vmem:[%s3462 + $0x28] sm:$0xf]
      %v3474 = vld [vmem:[%s3462 + $0x2c] sm:$0xf]
      %v3475 = vld [vmem:[%s3462 + $0x30] sm:$0xf]
      %v3476 = vld [vmem:[%s3462 + $0x34] sm:$0xf]
      %v3477 = vld [vmem:[%s3462 + $0x38] sm:$0xf]
      %v3478 = vld [vmem:[%s3462 + $0x3c] sm:$0xf]
      %v3495 = vunpack.c.l.b16 %v3463
      %v3496 = vunpack.c.l.b16 %v3464
      %v3497 = vunpack.c.l.b16 %v3465
      %v3498 = vunpack.c.l.b16 %v3466
      %v3499 = vunpack.c.l.b16 %v3467
      %v3500 = vunpack.c.l.b16 %v3468
      %v3501 = vunpack.c.l.b16 %v3469
      %v3502 = vunpack.c.l.b16 %v3470
      %v3503 = vunpack.c.l.b16 %v3471
      %v3504 = vunpack.c.l.b16 %v3472
      %v3505 = vunpack.c.l.b16 %v3473
      %v3506 = vunpack.c.l.b16 %v3474
      %v3507 = vunpack.c.l.b16 %v3475
      %v3508 = vunpack.c.l.b16 %v3476
      %v3509 = vunpack.c.l.b16 %v3477
      %v3510 = vunpack.c.l.b16 %v3478
      %v3511 = vpack.c.b16 %v3496, %v3495
      %v3512 = vpack.c.b16 %v3498, %v3497
      %v3513 = vpack.c.b16 %v3500, %v3499
      %v3514 = vpack.c.b16 %v3502, %v3501
      %v3515 = vpack.c.b16 %v3504, %v3503
      %v3516 = vpack.c.b16 %v3506, %v3505
      %v3517 = vpack.c.b16 %v3508, %v3507
      %v3518 = vpack.c.b16 %v3510, %v3509
      %v3520 = vsel %vm493, %v3511, 0
      %v3523 = vsel %vm493, %v3512, 0
      %v3526 = vsel %vm493, %v3513, 0
      %v3529 = vsel %vm493, %v3514, 0
      %v3532 = vsel %vm493, %v3515, 0
      %v3535 = vsel %vm493, %v3516, 0
      %v3538 = vsel %vm493, %v3517, 0
      %v3541 = vsel %vm493, %v3518, 0
      %3543 = vmatprep.subr.bf16.mxu0 0
      %3544 = vmatpush1.bf16.msra.mxu0 0
      %3545 = vmatprep.subr.bf16.mxu0 0
      %3546 = vmatpush1.bf16.msra.mxu0 0
      %3547 = vmatprep.subr.bf16.mxu0 0
      %3548 = vmatpush1.bf16.msra.mxu0 0
      %3549 = vmatprep.subr.bf16.mxu0 0
      %3550 = vmatpush1.bf16.msra.mxu0 0
      %3551 = vmatprep.subr.bf16.mxu0 0
      %3552 = vmatpush1.bf16.msra.mxu0 0
      %3553 = vmatprep.subr.bf16.mxu0 %v523
      %3554 = vmatpush1.bf16.msra.mxu0 %v520
      %3555 = vmatprep.subr.bf16.mxu0 %v486
      %3556 = vmatpush1.bf16.msra.mxu0 %v485
      %3557 = vmatprep.subr.bf16.mxu0 %v484
      %3558 = vmatpush1.bf16.msra.mxu0 %v483
      %3559 = vmatprep.subr.bf16.mxu0 0
      %3560 = vmatpush2.bf16.msra.mxu0 0
      %3561 = vmatprep.subr.bf16.mxu0 0
      %3562 = vmatpush2.bf16.msra.mxu0 0
      %3563 = vmatprep.subr.bf16.mxu0 0
      %3564 = vmatpush2.bf16.msra.mxu0 0
      %3565 = vmatprep.subr.bf16.mxu0 0
      %3566 = vmatpush2.bf16.msra.mxu0 0
      %3567 = vmatprep.subr.bf16.mxu0 0
      %3568 = vmatpush2.bf16.msra.mxu0 0
      %3569 = vmatprep.subr.bf16.mxu0 0
      %3570 = vmatpush2.bf16.msra.mxu0 0
      %3571 = vmatprep.subr.bf16.mxu0 0
      %3572 = vmatpush2.bf16.msra.mxu0 0
      %3573 = vmatprep.subr.bf16.mxu0 0
      %3574 = vmatpush2.bf16.msra.mxu0 0
      %3575 = vmatprep.mubr.bf16.mxu0 0
      %3576 = vmatmul.mubr.bf16.gmra.mxu0 %v3520
      %v3577 = vpop.f32.mrf.mxu0
      %v3578 = vadd.f32 %v421, %v3577
      %v3579 = vpop.f32.mrf.mxu0
      %v3580 = vadd.f32 %v425, %v3579
      %v3581 = vpop.f32.mrf.mxu0
      %v3582 = vadd.f32 %v421, %v3581
      %v3583 = vpop.f32.mrf.mxu0
      %v3584 = vadd.f32 %v425, %v3583
      %3585 = vmatprep.mubr.bf16.mxu0 0
      %3586 = vmatmul.mubr.bf16.gmra.mxu0 %v3523
      %v3587 = vpop.f32.mrf.mxu0
      %v3588 = vadd.f32 %v421, %v3587
      %v3589 = vpop.f32.mrf.mxu0
      %v3590 = vadd.f32 %v425, %v3589
      %v3591 = vpop.f32.mrf.mxu0
      %v3592 = vadd.f32 %v421, %v3591
      %v3593 = vpop.f32.mrf.mxu0
      %v3594 = vadd.f32 %v425, %v3593
      %3595 = vmatprep.mubr.bf16.mxu0 0
      %3596 = vmatmul.mubr.bf16.gmra.mxu0 %v3526
      %v3597 = vpop.f32.mrf.mxu0
      %v3598 = vadd.f32 %v421, %v3597
      %v3599 = vpop.f32.mrf.mxu0
      %v3600 = vadd.f32 %v425, %v3599
      %v3601 = vpop.f32.mrf.mxu0
      %v3602 = vadd.f32 %v421, %v3601
      %v3603 = vpop.f32.mrf.mxu0
      %v3604 = vadd.f32 %v425, %v3603
      %3605 = vmatprep.mubr.bf16.mxu0 0
      %3606 = vmatmul.mubr.bf16.gmra.mxu0 %v3529
      %v3607 = vpop.f32.mrf.mxu0
      %v3608 = vadd.f32 %v421, %v3607
      %v3609 = vpop.f32.mrf.mxu0
      %v3610 = vadd.f32 %v425, %v3609
      %v3611 = vpop.f32.mrf.mxu0
      %v3612 = vadd.f32 %v421, %v3611
      %v3613 = vpop.f32.mrf.mxu0
      %v3614 = vadd.f32 %v425, %v3613
      %3615 = vmatprep.mubr.bf16.mxu0 0
      %3616 = vmatmul.mubr.bf16.gmra.mxu0 %v3532
      %v3617 = vpop.f32.mrf.mxu0
      %v3618 = vadd.f32 %v421, %v3617
      %v3619 = vpop.f32.mrf.mxu0
      %v3620 = vadd.f32 %v425, %v3619
      %v3621 = vpop.f32.mrf.mxu0
      %v3622 = vadd.f32 %v421, %v3621
      %v3623 = vpop.f32.mrf.mxu0
      %v3624 = vadd.f32 %v425, %v3623
      %3625 = vmatprep.mubr.bf16.mxu0 0
      %3626 = vmatmul.mubr.bf16.gmra.mxu0 %v3535
      %v3627 = vpop.f32.mrf.mxu0
      %v3628 = vadd.f32 %v421, %v3627
      %v3629 = vpop.f32.mrf.mxu0
      %v3630 = vadd.f32 %v425, %v3629
      %v3631 = vpop.f32.mrf.mxu0
      %v3632 = vadd.f32 %v421, %v3631
      %v3633 = vpop.f32.mrf.mxu0
      %v3634 = vadd.f32 %v425, %v3633
      %3635 = vmatprep.mubr.bf16.mxu0 0
      %3636 = vmatmul.mubr.bf16.gmra.mxu0 %v3538
      %v3637 = vpop.f32.mrf.mxu0
      %v3638 = vadd.f32 %v421, %v3637
      %v3639 = vpop.f32.mrf.mxu0
      %v3640 = vadd.f32 %v425, %v3639
      %v3641 = vpop.f32.mrf.mxu0
      %v3642 = vadd.f32 %v421, %v3641
      %v3643 = vpop.f32.mrf.mxu0
      %v3644 = vadd.f32 %v425, %v3643
      %3645 = vmatprep.mubr.bf16.mxu0 0
      %3646 = vmatmul.mubr.bf16.gmra.mxu0 %v3541
      %v3647 = vpop.f32.mrf.mxu0
      %v3648 = vadd.f32 %v421, %v3647
      %v3649 = vpop.f32.mrf.mxu0
      %v3650 = vadd.f32 %v425, %v3649
      %v3651 = vpop.f32.mrf.mxu0
      %v3652 = vadd.f32 %v421, %v3651
      %v3653 = vpop.f32.mrf.mxu0
      %v3654 = vadd.f32 %v425, %v3653
      %3655 = vdwg.mxu0
      %v3656 = vmax.f32 %v3578, 0.0
      %v3657 = vmax.f32 %v3580, 0.0
      %v3658 = vmax.f32 %v3582, 0.0
      %v3659 = vmax.f32 %v3584, 0.0
      %v3660 = vmax.f32 %v3588, 0.0
      %v3661 = vmax.f32 %v3590, 0.0
      %v3662 = vmax.f32 %v3592, 0.0
      %v3663 = vmax.f32 %v3594, 0.0
      %v3664 = vmax.f32 %v3598, 0.0
      %v3665 = vmax.f32 %v3600, 0.0
      %v3666 = vmax.f32 %v3602, 0.0
      %v3667 = vmax.f32 %v3604, 0.0
      %v3668 = vmax.f32 %v3608, 0.0
      %v3669 = vmax.f32 %v3610, 0.0
      %v3670 = vmax.f32 %v3612, 0.0
      %v3671 = vmax.f32 %v3614, 0.0
      %v3672 = vmax.f32 %v3618, 0.0
      %v3673 = vmax.f32 %v3620, 0.0
      %v3674 = vmax.f32 %v3622, 0.0
      %v3675 = vmax.f32 %v3624, 0.0
      %v3676 = vmax.f32 %v3628, 0.0
      %v3677 = vmax.f32 %v3630, 0.0
      %v3678 = vmax.f32 %v3632, 0.0
      %v3679 = vmax.f32 %v3634, 0.0
      %v3680 = vmax.f32 %v3638, 0.0
      %v3681 = vmax.f32 %v3640, 0.0
      %v3682 = vmax.f32 %v3642, 0.0
      %v3683 = vmax.f32 %v3644, 0.0
      %v3684 = vmax.f32 %v3648, 0.0
      %v3685 = vmax.f32 %v3650, 0.0
      %v3686 = vmax.f32 %v3652, 0.0
      %v3687 = vmax.f32 %v3654, 0.0
      %v3688 = vpack.c.bf16 %v3658, %v3656
      %v3689 = vpack.c.bf16 %v3659, %v3657
      %v3690 = vpack.c.bf16 %v3662, %v3660
      %v3691 = vpack.c.bf16 %v3663, %v3661
      %v3692 = vpack.c.bf16 %v3666, %v3664
      %v3693 = vpack.c.bf16 %v3667, %v3665
      %v3694 = vpack.c.bf16 %v3670, %v3668
      %v3695 = vpack.c.bf16 %v3671, %v3669
      %v3696 = vpack.c.bf16 %v3674, %v3672
      %v3697 = vpack.c.bf16 %v3675, %v3673
      %v3698 = vpack.c.bf16 %v3678, %v3676
      %v3699 = vpack.c.bf16 %v3679, %v3677
      %v3700 = vpack.c.bf16 %v3682, %v3680
      %v3701 = vpack.c.bf16 %v3683, %v3681
      %v3702 = vpack.c.bf16 %v3686, %v3684
      %v3703 = vpack.c.bf16 %v3687, %v3685
      %3704 = vmatprep.subr.bf16.mxu0 %v797
      %3705 = vmatpush1.bf16.msra.mxu0 %v796
      %3706 = vmatprep.subr.bf16.mxu0 %v795
      %3707 = vmatpush1.bf16.msra.mxu0 %v794
      %3708 = vmatprep.subr.bf16.mxu0 %v793
      %3709 = vmatpush1.bf16.msra.mxu0 %v792
      %3710 = vmatprep.subr.bf16.mxu0 %v791
      %3711 = vmatpush1.bf16.msra.mxu0 %v790
      %3712 = vmatprep.subr.bf16.mxu0 %v789
      %3713 = vmatpush1.bf16.msra.mxu0 %v788
      %3714 = vmatprep.subr.bf16.mxu0 %v787
      %3715 = vmatpush1.bf16.msra.mxu0 %v786
      %3716 = vmatprep.subr.bf16.mxu0 %v785
      %3717 = vmatpush1.bf16.msra.mxu0 %v784
      %3718 = vmatprep.subr.bf16.mxu0 %v783
      %3719 = vmatpush1.bf16.msra.mxu0 %v782
      %3720 = vmatprep.subr.bf16.mxu0 %v813
      %3721 = vmatpush2.bf16.msra.mxu0 %v812
      %3722 = vmatprep.subr.bf16.mxu0 %v811
      %3723 = vmatpush2.bf16.msra.mxu0 %v810
      %3724 = vmatprep.subr.bf16.mxu0 %v809
      %3725 = vmatpush2.bf16.msra.mxu0 %v808
      %3726 = vmatprep.subr.bf16.mxu0 %v807
      %3727 = vmatpush2.bf16.msra.mxu0 %v806
      %3728 = vmatprep.subr.bf16.mxu0 %v805
      %3729 = vmatpush2.bf16.msra.mxu0 %v804
      %3730 = vmatprep.subr.bf16.mxu0 %v803
      %3731 = vmatpush2.bf16.msra.mxu0 %v802
      %3732 = vmatprep.subr.bf16.mxu0 %v801
      %3733 = vmatpush2.bf16.msra.mxu0 %v800
      %3734 = vmatprep.subr.bf16.mxu0 %v799
      %3735 = vmatpush2.bf16.msra.mxu0 %v798
      %3736 = vmatprep.mubr.bf16.mxu0 %v3689
      %3737 = vmatmul.mubr.bf16.gmra.mxu0 %v3688
      %v3738 = vpop.f32.mrf.mxu0
      %v3739 = vadd.f32 0.0, %v3738
      %v3740 = vpop.f32.mrf.mxu0
      %v3741 = vadd.f32 0.0, %v3740
      %v3742 = vpop.f32.mrf.mxu0
      %v3743 = vadd.f32 0.0, %v3742
      %v3744 = vpop.f32.mrf.mxu0
      %v3745 = vadd.f32 0.0, %v3744
      %3746 = vmatprep.mubr.bf16.mxu0 %v3691
      %3747 = vmatmul.mubr.bf16.gmra.mxu0 %v3690
      %v3748 = vpop.f32.mrf.mxu0
      %v3749 = vadd.f32 0.0, %v3748
      %v3750 = vpop.f32.mrf.mxu0
      %v3751 = vadd.f32 0.0, %v3750
      %v3752 = vpop.f32.mrf.mxu0
      %v3753 = vadd.f32 0.0, %v3752
      %v3754 = vpop.f32.mrf.mxu0
      %v3755 = vadd.f32 0.0, %v3754
      %3756 = vmatprep.mubr.bf16.mxu0 %v3693
      %3757 = vmatmul.mubr.bf16.gmra.mxu0 %v3692
      %v3758 = vpop.f32.mrf.mxu0
      %v3759 = vadd.f32 0.0, %v3758
      %v3760 = vpop.f32.mrf.mxu0
      %v3761 = vadd.f32 0.0, %v3760
      %v3762 = vpop.f32.mrf.mxu0
      %v3763 = vadd.f32 0.0, %v3762
      %v3764 = vpop.f32.mrf.mxu0
      %v3765 = vadd.f32 0.0, %v3764
      %3766 = vmatprep.mubr.bf16.mxu0 %v3695
      %3767 = vmatmul.mubr.bf16.gmra.mxu0 %v3694
      %v3768 = vpop.f32.mrf.mxu0
      %v3769 = vadd.f32 0.0, %v3768
      %v3770 = vpop.f32.mrf.mxu0
      %v3771 = vadd.f32 0.0, %v3770
      %v3772 = vpop.f32.mrf.mxu0
      %v3773 = vadd.f32 0.0, %v3772
      %v3774 = vpop.f32.mrf.mxu0
      %v3775 = vadd.f32 0.0, %v3774
      %3776 = vmatprep.mubr.bf16.mxu0 %v3697
      %3777 = vmatmul.mubr.bf16.gmra.mxu0 %v3696
      %v3778 = vpop.f32.mrf.mxu0
      %v3779 = vadd.f32 0.0, %v3778
      %v3780 = vpop.f32.mrf.mxu0
      %v3781 = vadd.f32 0.0, %v3780
      %v3782 = vpop.f32.mrf.mxu0
      %v3783 = vadd.f32 0.0, %v3782
      %v3784 = vpop.f32.mrf.mxu0
      %v3785 = vadd.f32 0.0, %v3784
      %3786 = vmatprep.mubr.bf16.mxu0 %v3699
      %3787 = vmatmul.mubr.bf16.gmra.mxu0 %v3698
      %v3788 = vpop.f32.mrf.mxu0
      %v3789 = vadd.f32 0.0, %v3788
      %v3790 = vpop.f32.mrf.mxu0
      %v3791 = vadd.f32 0.0, %v3790
      %v3792 = vpop.f32.mrf.mxu0
      %v3793 = vadd.f32 0.0, %v3792
      %v3794 = vpop.f32.mrf.mxu0
      %v3795 = vadd.f32 0.0, %v3794
      %3796 = vmatprep.mubr.bf16.mxu0 %v3701
      %3797 = vmatmul.mubr.bf16.gmra.mxu0 %v3700
      %v3798 = vpop.f32.mrf.mxu0
      %v3799 = vadd.f32 0.0, %v3798
      %v3800 = vpop.f32.mrf.mxu0
      %v3801 = vadd.f32 0.0, %v3800
      %v3802 = vpop.f32.mrf.mxu0
      %v3803 = vadd.f32 0.0, %v3802
      %v3804 = vpop.f32.mrf.mxu0
      %v3805 = vadd.f32 0.0, %v3804
      %3806 = vmatprep.mubr.bf16.mxu0 %v3703
      %3807 = vmatmul.mubr.bf16.gmra.mxu0 %v3702
      %v3808 = vpop.f32.mrf.mxu0
      %v3809 = vadd.f32 0.0, %v3808
      %v3810 = vpop.f32.mrf.mxu0
      %v3811 = vadd.f32 0.0, %v3810
      %v3812 = vpop.f32.mrf.mxu0
      %v3813 = vadd.f32 0.0, %v3812
      %v3814 = vpop.f32.mrf.mxu0
      %v3815 = vadd.f32 0.0, %v3814
      %3816 = vdwg.mxu0
      %v3849 = vcombine.low %v3739, %v3741
      %v3850 = vcombine.high %v3739, %v3741
      %v3852 = vunpack.c.l.s4 1983009808
      %v3853 = vunpack.c.0.s8 %v3852
      %v3854 = vlaneseq
      %v3855 = vshrl.u32 %v3854, 7
      %v3856 = vsub.s32 %v3853, %v3855
      %v3857 = vrot.slane %v3849, %v3856
      %v3859 = vunpack.c.l.s4 1983009808
      %v3860 = vunpack.c.0.s8 %v3859
      %v3861 = vlaneseq
      %v3862 = vshrl.u32 %v3861, 7
      %v3863 = vsub.s32 %v3860, %v3862
      %v3864 = vrot.slane %v3850, %v3863
      %v3865 = vcombine.high %v3857, %v3857
      %v3866 = vcombine.high %v3864, %v3864
      %v3867 = vcombine.low %v3743, %v3745
      %v3868 = vcombine.high %v3743, %v3745
      %v3870 = vunpack.c.l.s4 1983009808
      %v3871 = vunpack.c.0.s8 %v3870
      %v3872 = vlaneseq
      %v3873 = vshrl.u32 %v3872, 7
      %v3874 = vsub.s32 %v3871, %v3873
      %v3875 = vrot.slane %v3867, %v3874
      %v3877 = vunpack.c.l.s4 1983009808
      %v3878 = vunpack.c.0.s8 %v3877
      %v3879 = vlaneseq
      %v3880 = vshrl.u32 %v3879, 7
      %v3881 = vsub.s32 %v3878, %v3880
      %v3882 = vrot.slane %v3868, %v3881
      %v3883 = vcombine.high %v3875, %v3875
      %v3884 = vcombine.high %v3882, %v3882
      %v3885 = vcombine.low %v3749, %v3751
      %v3886 = vcombine.high %v3749, %v3751
      %v3888 = vunpack.c.l.s4 1983009808
      %v3889 = vunpack.c.0.s8 %v3888
      %v3890 = vlaneseq
      %v3891 = vshrl.u32 %v3890, 7
      %v3892 = vsub.s32 %v3889, %v3891
      %v3893 = vrot.slane %v3885, %v3892
      %v3895 = vunpack.c.l.s4 1983009808
      %v3896 = vunpack.c.0.s8 %v3895
      %v3897 = vlaneseq
      %v3898 = vshrl.u32 %v3897, 7
      %v3899 = vsub.s32 %v3896, %v3898
      %v3900 = vrot.slane %v3886, %v3899
      %v3901 = vcombine.high %v3893, %v3893
      %v3902 = vcombine.high %v3900, %v3900
      %v3903 = vcombine.low %v3753, %v3755
      %v3904 = vcombine.high %v3753, %v3755
      %v3906 = vunpack.c.l.s4 1983009808
      %v3907 = vunpack.c.0.s8 %v3906
      %v3908 = vlaneseq
      %v3909 = vshrl.u32 %v3908, 7
      %v3910 = vsub.s32 %v3907, %v3909
      %v3911 = vrot.slane %v3903, %v3910
      %v3913 = vunpack.c.l.s4 1983009808
      %v3914 = vunpack.c.0.s8 %v3913
      %v3915 = vlaneseq
      %v3916 = vshrl.u32 %v3915, 7
      %v3917 = vsub.s32 %v3914, %v3916
      %v3918 = vrot.slane %v3904, %v3917
      %v3919 = vcombine.high %v3911, %v3911
      %v3920 = vcombine.high %v3918, %v3918
      %v3921 = vcombine.low %v3759, %v3761
      %v3922 = vcombine.high %v3759, %v3761
      %v3924 = vunpack.c.l.s4 1983009808
      %v3925 = vunpack.c.0.s8 %v3924
      %v3926 = vlaneseq
      %v3927 = vshrl.u32 %v3926, 7
      %v3928 = vsub.s32 %v3925, %v3927
      %v3929 = vrot.slane %v3921, %v3928
      %v3931 = vunpack.c.l.s4 1983009808
      %v3932 = vunpack.c.0.s8 %v3931
      %v3933 = vlaneseq
      %v3934 = vshrl.u32 %v3933, 7
      %v3935 = vsub.s32 %v3932, %v3934
      %v3936 = vrot.slane %v3922, %v3935
      %v3937 = vcombine.high %v3929, %v3929
      %v3938 = vcombine.high %v3936, %v3936
      %v3939 = vcombine.low %v3763, %v3765
      %v3940 = vcombine.high %v3763, %v3765
      %v3942 = vunpack.c.l.s4 1983009808
      %v3943 = vunpack.c.0.s8 %v3942
      %v3944 = vlaneseq
      %v3945 = vshrl.u32 %v3944, 7
      %v3946 = vsub.s32 %v3943, %v3945
      %v3947 = vrot.slane %v3939, %v3946
      %v3949 = vunpack.c.l.s4 1983009808
      %v3950 = vunpack.c.0.s8 %v3949
      %v3951 = vlaneseq
      %v3952 = vshrl.u32 %v3951, 7
      %v3953 = vsub.s32 %v3950, %v3952
      %v3954 = vrot.slane %v3940, %v3953
      %v3955 = vcombine.high %v3947, %v3947
      %v3956 = vcombine.high %v3954, %v3954
      %v3957 = vcombine.low %v3769, %v3771
      %v3958 = vcombine.high %v3769, %v3771
      %v3960 = vunpack.c.l.s4 1983009808
      %v3961 = vunpack.c.0.s8 %v3960
      %v3962 = vlaneseq
      %v3963 = vshrl.u32 %v3962, 7
      %v3964 = vsub.s32 %v3961, %v3963
      %v3965 = vrot.slane %v3957, %v3964
      %v3967 = vunpack.c.l.s4 1983009808
      %v3968 = vunpack.c.0.s8 %v3967
      %v3969 = vlaneseq
      %v3970 = vshrl.u32 %v3969, 7
      %v3971 = vsub.s32 %v3968, %v3970
      %v3972 = vrot.slane %v3958, %v3971
      %v3973 = vcombine.high %v3965, %v3965
      %v3974 = vcombine.high %v3972, %v3972
      %v3975 = vcombine.low %v3773, %v3775
      %v3976 = vcombine.high %v3773, %v3775
      %v3978 = vunpack.c.l.s4 1983009808
      %v3979 = vunpack.c.0.s8 %v3978
      %v3980 = vlaneseq
      %v3981 = vshrl.u32 %v3980, 7
      %v3982 = vsub.s32 %v3979, %v3981
      %v3983 = vrot.slane %v3975, %v3982
      %v3985 = vunpack.c.l.s4 1983009808
      %v3986 = vunpack.c.0.s8 %v3985
      %v3987 = vlaneseq
      %v3988 = vshrl.u32 %v3987, 7
      %v3989 = vsub.s32 %v3986, %v3988
      %v3990 = vrot.slane %v3976, %v3989
      %v3991 = vcombine.high %v3983, %v3983
      %v3992 = vcombine.high %v3990, %v3990
      %v3993 = vcombine.low %v3779, %v3781
      %v3994 = vcombine.high %v3779, %v3781
      %v3996 = vunpack.c.l.s4 1983009808
      %v3997 = vunpack.c.0.s8 %v3996
      %v3998 = vlaneseq
      %v3999 = vshrl.u32 %v3998, 7
      %v4000 = vsub.s32 %v3997, %v3999
      %v4001 = vrot.slane %v3993, %v4000
      %v4003 = vunpack.c.l.s4 1983009808
      %v4004 = vunpack.c.0.s8 %v4003
      %v4005 = vlaneseq
      %v4006 = vshrl.u32 %v4005, 7
      %v4007 = vsub.s32 %v4004, %v4006
      %v4008 = vrot.slane %v3994, %v4007
      %v4009 = vcombine.high %v4001, %v4001
      %v4010 = vcombine.high %v4008, %v4008
      %v4011 = vcombine.low %v3783, %v3785
      %v4012 = vcombine.high %v3783, %v3785
      %v4014 = vunpack.c.l.s4 1983009808
      %v4015 = vunpack.c.0.s8 %v4014
      %v4016 = vlaneseq
      %v4017 = vshrl.u32 %v4016, 7
      %v4018 = vsub.s32 %v4015, %v4017
      %v4019 = vrot.slane %v4011, %v4018
      %v4021 = vunpack.c.l.s4 1983009808
      %v4022 = vunpack.c.0.s8 %v4021
      %v4023 = vlaneseq
      %v4024 = vshrl.u32 %v4023, 7
      %v4025 = vsub.s32 %v4022, %v4024
      %v4026 = vrot.slane %v4012, %v4025
      %v4027 = vcombine.high %v4019, %v4019
      %v4028 = vcombine.high %v4026, %v4026
      %v4029 = vcombine.low %v3789, %v3791
      %v4030 = vcombine.high %v3789, %v3791
      %v4032 = vunpack.c.l.s4 1983009808
      %v4033 = vunpack.c.0.s8 %v4032
      %v4034 = vlaneseq
      %v4035 = vshrl.u32 %v4034, 7
      %v4036 = vsub.s32 %v4033, %v4035
      %v4037 = vrot.slane %v4029, %v4036
      %v4039 = vunpack.c.l.s4 1983009808
      %v4040 = vunpack.c.0.s8 %v4039
      %v4041 = vlaneseq
      %v4042 = vshrl.u32 %v4041, 7
      %v4043 = vsub.s32 %v4040, %v4042
      %v4044 = vrot.slane %v4030, %v4043
      %v4045 = vcombine.high %v4037, %v4037
      %v4046 = vcombine.high %v4044, %v4044
      %v4047 = vcombine.low %v3793, %v3795
      %v4048 = vcombine.high %v3793, %v3795
      %v4050 = vunpack.c.l.s4 1983009808
      %v4051 = vunpack.c.0.s8 %v4050
      %v4052 = vlaneseq
      %v4053 = vshrl.u32 %v4052, 7
      %v4054 = vsub.s32 %v4051, %v4053
      %v4055 = vrot.slane %v4047, %v4054
      %v4057 = vunpack.c.l.s4 1983009808
      %v4058 = vunpack.c.0.s8 %v4057
      %v4059 = vlaneseq
      %v4060 = vshrl.u32 %v4059, 7
      %v4061 = vsub.s32 %v4058, %v4060
      %v4062 = vrot.slane %v4048, %v4061
      %v4063 = vcombine.high %v4055, %v4055
      %v4064 = vcombine.high %v4062, %v4062
      %v4065 = vcombine.low %v3799, %v3801
      %v4066 = vcombine.high %v3799, %v3801
      %v4068 = vunpack.c.l.s4 1983009808
      %v4069 = vunpack.c.0.s8 %v4068
      %v4070 = vlaneseq
      %v4071 = vshrl.u32 %v4070, 7
      %v4072 = vsub.s32 %v4069, %v4071
      %v4073 = vrot.slane %v4065, %v4072
      %v4075 = vunpack.c.l.s4 1983009808
      %v4076 = vunpack.c.0.s8 %v4075
      %v4077 = vlaneseq
      %v4078 = vshrl.u32 %v4077, 7
      %v4079 = vsub.s32 %v4076, %v4078
      %v4080 = vrot.slane %v4066, %v4079
      %v4081 = vcombine.high %v4073, %v4073
      %v4082 = vcombine.high %v4080, %v4080
      %v4083 = vcombine.low %v3803, %v3805
      %v4084 = vcombine.high %v3803, %v3805
      %v4086 = vunpack.c.l.s4 1983009808
      %v4087 = vunpack.c.0.s8 %v4086
      %v4088 = vlaneseq
      %v4089 = vshrl.u32 %v4088, 7
      %v4090 = vsub.s32 %v4087, %v4089
      %v4091 = vrot.slane %v4083, %v4090
      %v4093 = vunpack.c.l.s4 1983009808
      %v4094 = vunpack.c.0.s8 %v4093
      %v4095 = vlaneseq
      %v4096 = vshrl.u32 %v4095, 7
      %v4097 = vsub.s32 %v4094, %v4096
      %v4098 = vrot.slane %v4084, %v4097
      %v4099 = vcombine.high %v4091, %v4091
      %v4100 = vcombine.high %v4098, %v4098
      %v4101 = vcombine.low %v3809, %v3811
      %v4102 = vcombine.high %v3809, %v3811
      %v4104 = vunpack.c.l.s4 1983009808
      %v4105 = vunpack.c.0.s8 %v4104
      %v4106 = vlaneseq
      %v4107 = vshrl.u32 %v4106, 7
      %v4108 = vsub.s32 %v4105, %v4107
      %v4109 = vrot.slane %v4101, %v4108
      %v4111 = vunpack.c.l.s4 1983009808
      %v4112 = vunpack.c.0.s8 %v4111
      %v4113 = vlaneseq
      %v4114 = vshrl.u32 %v4113, 7
      %v4115 = vsub.s32 %v4112, %v4114
      %v4116 = vrot.slane %v4102, %v4115
      %v4117 = vcombine.high %v4109, %v4109
      %v4118 = vcombine.high %v4116, %v4116
      %v4119 = vcombine.low %v3813, %v3815
      %v4120 = vcombine.high %v3813, %v3815
      %v4122 = vunpack.c.l.s4 1983009808
      %v4123 = vunpack.c.0.s8 %v4122
      %v4124 = vlaneseq
      %v4125 = vshrl.u32 %v4124, 7
      %v4126 = vsub.s32 %v4123, %v4125
      %v4127 = vrot.slane %v4119, %v4126
      %v4129 = vunpack.c.l.s4 1983009808
      %v4130 = vunpack.c.0.s8 %v4129
      %v4131 = vlaneseq
      %v4132 = vshrl.u32 %v4131, 7
      %v4133 = vsub.s32 %v4130, %v4132
      %v4134 = vrot.slane %v4120, %v4133
      %v4135 = vcombine.high %v4127, %v4127
      %v4136 = vcombine.high %v4134, %v4134
      %v4138 = vunpack.c.l.s4 1983009808
      %v4139 = vunpack.c.0.s8 %v4138
      %v4140 = vlaneseq
      %v4141 = vshrl.u32 %v4140, 7
      %v4142 = vsub.s32 %v4139, %v4141
      %v4143 = vrot.slane %v3857, %v4142
      %v4144 = vcombine.high %v4143, %v4143
      %v4146 = vunpack.c.l.s4 1983009808
      %v4147 = vunpack.c.0.s8 %v4146
      %v4148 = vlaneseq
      %v4149 = vshrl.u32 %v4148, 7
      %v4150 = vsub.s32 %v4147, %v4149
      %v4151 = vrot.slane %v3865, %v4150
      %v4152 = vcombine.high %v4151, %v4151
      %v4154 = vunpack.c.l.s4 1983009808
      %v4155 = vunpack.c.0.s8 %v4154
      %v4156 = vlaneseq
      %v4157 = vshrl.u32 %v4156, 7
      %v4158 = vsub.s32 %v4155, %v4157
      %v4159 = vrot.slane %v3864, %v4158
      %v4160 = vcombine.high %v4159, %v4159
      %v4162 = vunpack.c.l.s4 1983009808
      %v4163 = vunpack.c.0.s8 %v4162
      %v4164 = vlaneseq
      %v4165 = vshrl.u32 %v4164, 7
      %v4166 = vsub.s32 %v4163, %v4165
      %v4167 = vrot.slane %v3866, %v4166
      %v4168 = vcombine.high %v4167, %v4167
      %v4170 = vunpack.c.l.s4 1983009808
      %v4171 = vunpack.c.0.s8 %v4170
      %v4172 = vlaneseq
      %v4173 = vshrl.u32 %v4172, 7
      %v4174 = vsub.s32 %v4171, %v4173
      %v4175 = vrot.slane %v3875, %v4174
      %v4176 = vcombine.high %v4175, %v4175
      %v4178 = vunpack.c.l.s4 1983009808
      %v4179 = vunpack.c.0.s8 %v4178
      %v4180 = vlaneseq
      %v4181 = vshrl.u32 %v4180, 7
      %v4182 = vsub.s32 %v4179, %v4181
      %v4183 = vrot.slane %v3883, %v4182
      %v4184 = vcombine.high %v4183, %v4183
      %v4186 = vunpack.c.l.s4 1983009808
      %v4187 = vunpack.c.0.s8 %v4186
      %v4188 = vlaneseq
      %v4189 = vshrl.u32 %v4188, 7
      %v4190 = vsub.s32 %v4187, %v4189
      %v4191 = vrot.slane %v3882, %v4190
      %v4192 = vcombine.high %v4191, %v4191
      %v4194 = vunpack.c.l.s4 1983009808
      %v4195 = vunpack.c.0.s8 %v4194
      %v4196 = vlaneseq
      %v4197 = vshrl.u32 %v4196, 7
      %v4198 = vsub.s32 %v4195, %v4197
      %v4199 = vrot.slane %v3884, %v4198
      %v4200 = vcombine.high %v4199, %v4199
      %v4202 = vunpack.c.l.s4 1983009808
      %v4203 = vunpack.c.0.s8 %v4202
      %v4204 = vlaneseq
      %v4205 = vshrl.u32 %v4204, 7
      %v4206 = vsub.s32 %v4203, %v4205
      %v4207 = vrot.slane %v3893, %v4206
      %v4208 = vcombine.high %v4207, %v4207
      %v4210 = vunpack.c.l.s4 1983009808
      %v4211 = vunpack.c.0.s8 %v4210
      %v4212 = vlaneseq
      %v4213 = vshrl.u32 %v4212, 7
      %v4214 = vsub.s32 %v4211, %v4213
      %v4215 = vrot.slane %v3901, %v4214
      %v4216 = vcombine.high %v4215, %v4215
      %v4218 = vunpack.c.l.s4 1983009808
      %v4219 = vunpack.c.0.s8 %v4218
      %v4220 = vlaneseq
      %v4221 = vshrl.u32 %v4220, 7
      %v4222 = vsub.s32 %v4219, %v4221
      %v4223 = vrot.slane %v3900, %v4222
      %v4224 = vcombine.high %v4223, %v4223
      %v4226 = vunpack.c.l.s4 1983009808
      %v4227 = vunpack.c.0.s8 %v4226
      %v4228 = vlaneseq
      %v4229 = vshrl.u32 %v4228, 7
      %v4230 = vsub.s32 %v4227, %v4229
      %v4231 = vrot.slane %v3902, %v4230
      %v4232 = vcombine.high %v4231, %v4231
      %v4234 = vunpack.c.l.s4 1983009808
      %v4235 = vunpack.c.0.s8 %v4234
      %v4236 = vlaneseq
      %v4237 = vshrl.u32 %v4236, 7
      %v4238 = vsub.s32 %v4235, %v4237
      %v4239 = vrot.slane %v3911, %v4238
      %v4240 = vcombine.high %v4239, %v4239
      %v4242 = vunpack.c.l.s4 1983009808
      %v4243 = vunpack.c.0.s8 %v4242
      %v4244 = vlaneseq
      %v4245 = vshrl.u32 %v4244, 7
      %v4246 = vsub.s32 %v4243, %v4245
      %v4247 = vrot.slane %v3919, %v4246
      %v4248 = vcombine.high %v4247, %v4247
      %v4250 = vunpack.c.l.s4 1983009808
      %v4251 = vunpack.c.0.s8 %v4250
      %v4252 = vlaneseq
      %v4253 = vshrl.u32 %v4252, 7
      %v4254 = vsub.s32 %v4251, %v4253
      %v4255 = vrot.slane %v3918, %v4254
      %v4256 = vcombine.high %v4255, %v4255
      %v4258 = vunpack.c.l.s4 1983009808
      %v4259 = vunpack.c.0.s8 %v4258
      %v4260 = vlaneseq
      %v4261 = vshrl.u32 %v4260, 7
      %v4262 = vsub.s32 %v4259, %v4261
      %v4263 = vrot.slane %v3920, %v4262
      %v4264 = vcombine.high %v4263, %v4263
      %v4266 = vunpack.c.l.s4 1983009808
      %v4267 = vunpack.c.0.s8 %v4266
      %v4268 = vlaneseq
      %v4269 = vshrl.u32 %v4268, 7
      %v4270 = vsub.s32 %v4267, %v4269
      %v4271 = vrot.slane %v3929, %v4270
      %v4272 = vcombine.high %v4271, %v4271
      %v4274 = vunpack.c.l.s4 1983009808
      %v4275 = vunpack.c.0.s8 %v4274
      %v4276 = vlaneseq
      %v4277 = vshrl.u32 %v4276, 7
      %v4278 = vsub.s32 %v4275, %v4277
      %v4279 = vrot.slane %v3937, %v4278
      %v4280 = vcombine.high %v4279, %v4279
      %v4282 = vunpack.c.l.s4 1983009808
      %v4283 = vunpack.c.0.s8 %v4282
      %v4284 = vlaneseq
      %v4285 = vshrl.u32 %v4284, 7
      %v4286 = vsub.s32 %v4283, %v4285
      %v4287 = vrot.slane %v3936, %v4286
      %v4288 = vcombine.high %v4287, %v4287
      %v4290 = vunpack.c.l.s4 1983009808
      %v4291 = vunpack.c.0.s8 %v4290
      %v4292 = vlaneseq
      %v4293 = vshrl.u32 %v4292, 7
      %v4294 = vsub.s32 %v4291, %v4293
      %v4295 = vrot.slane %v3938, %v4294
      %v4296 = vcombine.high %v4295, %v4295
      %v4298 = vunpack.c.l.s4 1983009808
      %v4299 = vunpack.c.0.s8 %v4298
      %v4300 = vlaneseq
      %v4301 = vshrl.u32 %v4300, 7
      %v4302 = vsub.s32 %v4299, %v4301
      %v4303 = vrot.slane %v3947, %v4302
      %v4304 = vcombine.high %v4303, %v4303
      %v4306 = vunpack.c.l.s4 1983009808
      %v4307 = vunpack.c.0.s8 %v4306
      %v4308 = vlaneseq
      %v4309 = vshrl.u32 %v4308, 7
      %v4310 = vsub.s32 %v4307, %v4309
      %v4311 = vrot.slane %v3955, %v4310
      %v4312 = vcombine.high %v4311, %v4311
      %v4314 = vunpack.c.l.s4 1983009808
      %v4315 = vunpack.c.0.s8 %v4314
      %v4316 = vlaneseq
      %v4317 = vshrl.u32 %v4316, 7
      %v4318 = vsub.s32 %v4315, %v4317
      %v4319 = vrot.slane %v3954, %v4318
      %v4320 = vcombine.high %v4319, %v4319
      %v4322 = vunpack.c.l.s4 1983009808
      %v4323 = vunpack.c.0.s8 %v4322
      %v4324 = vlaneseq
      %v4325 = vshrl.u32 %v4324, 7
      %v4326 = vsub.s32 %v4323, %v4325
      %v4327 = vrot.slane %v3956, %v4326
      %v4328 = vcombine.high %v4327, %v4327
      %v4330 = vunpack.c.l.s4 1983009808
      %v4331 = vunpack.c.0.s8 %v4330
      %v4332 = vlaneseq
      %v4333 = vshrl.u32 %v4332, 7
      %v4334 = vsub.s32 %v4331, %v4333
      %v4335 = vrot.slane %v3965, %v4334
      %v4336 = vcombine.high %v4335, %v4335
      %v4338 = vunpack.c.l.s4 1983009808
      %v4339 = vunpack.c.0.s8 %v4338
      %v4340 = vlaneseq
      %v4341 = vshrl.u32 %v4340, 7
      %v4342 = vsub.s32 %v4339, %v4341
      %v4343 = vrot.slane %v3973, %v4342
      %v4344 = vcombine.high %v4343, %v4343
      %v4346 = vunpack.c.l.s4 1983009808
      %v4347 = vunpack.c.0.s8 %v4346
      %v4348 = vlaneseq
      %v4349 = vshrl.u32 %v4348, 7
      %v4350 = vsub.s32 %v4347, %v4349
      %v4351 = vrot.slane %v3972, %v4350
      %v4352 = vcombine.high %v4351, %v4351
      %v4354 = vunpack.c.l.s4 1983009808
      %v4355 = vunpack.c.0.s8 %v4354
      %v4356 = vlaneseq
      %v4357 = vshrl.u32 %v4356, 7
      %v4358 = vsub.s32 %v4355, %v4357
      %v4359 = vrot.slane %v3974, %v4358
      %v4360 = vcombine.high %v4359, %v4359
      %v4362 = vunpack.c.l.s4 1983009808
      %v4363 = vunpack.c.0.s8 %v4362
      %v4364 = vlaneseq
      %v4365 = vshrl.u32 %v4364, 7
      %v4366 = vsub.s32 %v4363, %v4365
      %v4367 = vrot.slane %v3983, %v4366
      %v4368 = vcombine.high %v4367, %v4367
      %v4370 = vunpack.c.l.s4 1983009808
      %v4371 = vunpack.c.0.s8 %v4370
      %v4372 = vlaneseq
      %v4373 = vshrl.u32 %v4372, 7
      %v4374 = vsub.s32 %v4371, %v4373
      %v4375 = vrot.slane %v3991, %v4374
      %v4376 = vcombine.high %v4375, %v4375
      %v4378 = vunpack.c.l.s4 1983009808
      %v4379 = vunpack.c.0.s8 %v4378
      %v4380 = vlaneseq
      %v4381 = vshrl.u32 %v4380, 7
      %v4382 = vsub.s32 %v4379, %v4381
      %v4383 = vrot.slane %v3990, %v4382
      %v4384 = vcombine.high %v4383, %v4383
      %v4386 = vunpack.c.l.s4 1983009808
      %v4387 = vunpack.c.0.s8 %v4386
      %v4388 = vlaneseq
      %v4389 = vshrl.u32 %v4388, 7
      %v4390 = vsub.s32 %v4387, %v4389
      %v4391 = vrot.slane %v3992, %v4390
      %v4392 = vcombine.high %v4391, %v4391
      %v4394 = vunpack.c.l.s4 1983009808
      %v4395 = vunpack.c.0.s8 %v4394
      %v4396 = vlaneseq
      %v4397 = vshrl.u32 %v4396, 7
      %v4398 = vsub.s32 %v4395, %v4397
      %v4399 = vrot.slane %v4001, %v4398
      %v4400 = vcombine.high %v4399, %v4399
      %v4402 = vunpack.c.l.s4 1983009808
      %v4403 = vunpack.c.0.s8 %v4402
      %v4404 = vlaneseq
      %v4405 = vshrl.u32 %v4404, 7
      %v4406 = vsub.s32 %v4403, %v4405
      %v4407 = vrot.slane %v4009, %v4406
      %v4408 = vcombine.high %v4407, %v4407
      %v4410 = vunpack.c.l.s4 1983009808
      %v4411 = vunpack.c.0.s8 %v4410
      %v4412 = vlaneseq
      %v4413 = vshrl.u32 %v4412, 7
      %v4414 = vsub.s32 %v4411, %v4413
      %v4415 = vrot.slane %v4008, %v4414
      %v4416 = vcombine.high %v4415, %v4415
      %v4418 = vunpack.c.l.s4 1983009808
      %v4419 = vunpack.c.0.s8 %v4418
      %v4420 = vlaneseq
      %v4421 = vshrl.u32 %v4420, 7
      %v4422 = vsub.s32 %v4419, %v4421
      %v4423 = vrot.slane %v4010, %v4422
      %v4424 = vcombine.high %v4423, %v4423
      %v4426 = vunpack.c.l.s4 1983009808
      %v4427 = vunpack.c.0.s8 %v4426
      %v4428 = vlaneseq
      %v4429 = vshrl.u32 %v4428, 7
      %v4430 = vsub.s32 %v4427, %v4429
      %v4431 = vrot.slane %v4019, %v4430
      %v4432 = vcombine.high %v4431, %v4431
      %v4434 = vunpack.c.l.s4 1983009808
      %v4435 = vunpack.c.0.s8 %v4434
      %v4436 = vlaneseq
      %v4437 = vshrl.u32 %v4436, 7
      %v4438 = vsub.s32 %v4435, %v4437
      %v4439 = vrot.slane %v4027, %v4438
      %v4440 = vcombine.high %v4439, %v4439
      %v4442 = vunpack.c.l.s4 1983009808
      %v4443 = vunpack.c.0.s8 %v4442
      %v4444 = vlaneseq
      %v4445 = vshrl.u32 %v4444, 7
      %v4446 = vsub.s32 %v4443, %v4445
      %v4447 = vrot.slane %v4026, %v4446
      %v4448 = vcombine.high %v4447, %v4447
      %v4450 = vunpack.c.l.s4 1983009808
      %v4451 = vunpack.c.0.s8 %v4450
      %v4452 = vlaneseq
      %v4453 = vshrl.u32 %v4452, 7
      %v4454 = vsub.s32 %v4451, %v4453
      %v4455 = vrot.slane %v4028, %v4454
      %v4456 = vcombine.high %v4455, %v4455
      %v4458 = vunpack.c.l.s4 1983009808
      %v4459 = vunpack.c.0.s8 %v4458
      %v4460 = vlaneseq
      %v4461 = vshrl.u32 %v4460, 7
      %v4462 = vsub.s32 %v4459, %v4461
      %v4463 = vrot.slane %v4037, %v4462
      %v4464 = vcombine.high %v4463, %v4463
      %v4466 = vunpack.c.l.s4 1983009808
      %v4467 = vunpack.c.0.s8 %v4466
      %v4468 = vlaneseq
      %v4469 = vshrl.u32 %v4468, 7
      %v4470 = vsub.s32 %v4467, %v4469
      %v4471 = vrot.slane %v4045, %v4470
      %v4472 = vcombine.high %v4471, %v4471
      %v4474 = vunpack.c.l.s4 1983009808
      %v4475 = vunpack.c.0.s8 %v4474
      %v4476 = vlaneseq
      %v4477 = vshrl.u32 %v4476, 7
      %v4478 = vsub.s32 %v4475, %v4477
      %v4479 = vrot.slane %v4044, %v4478
      %v4480 = vcombine.high %v4479, %v4479
      %v4482 = vunpack.c.l.s4 1983009808
      %v4483 = vunpack.c.0.s8 %v4482
      %v4484 = vlaneseq
      %v4485 = vshrl.u32 %v4484, 7
      %v4486 = vsub.s32 %v4483, %v4485
      %v4487 = vrot.slane %v4046, %v4486
      %v4488 = vcombine.high %v4487, %v4487
      %v4490 = vunpack.c.l.s4 1983009808
      %v4491 = vunpack.c.0.s8 %v4490
      %v4492 = vlaneseq
      %v4493 = vshrl.u32 %v4492, 7
      %v4494 = vsub.s32 %v4491, %v4493
      %v4495 = vrot.slane %v4055, %v4494
      %v4496 = vcombine.high %v4495, %v4495
      %v4498 = vunpack.c.l.s4 1983009808
      %v4499 = vunpack.c.0.s8 %v4498
      %v4500 = vlaneseq
      %v4501 = vshrl.u32 %v4500, 7
      %v4502 = vsub.s32 %v4499, %v4501
      %v4503 = vrot.slane %v4063, %v4502
      %v4504 = vcombine.high %v4503, %v4503
      %v4506 = vunpack.c.l.s4 1983009808
      %v4507 = vunpack.c.0.s8 %v4506
      %v4508 = vlaneseq
      %v4509 = vshrl.u32 %v4508, 7
      %v4510 = vsub.s32 %v4507, %v4509
      %v4511 = vrot.slane %v4062, %v4510
      %v4512 = vcombine.high %v4511, %v4511
      %v4514 = vunpack.c.l.s4 1983009808
      %v4515 = vunpack.c.0.s8 %v4514
      %v4516 = vlaneseq
      %v4517 = vshrl.u32 %v4516, 7
      %v4518 = vsub.s32 %v4515, %v4517
      %v4519 = vrot.slane %v4064, %v4518
      %v4520 = vcombine.high %v4519, %v4519
      %v4522 = vunpack.c.l.s4 1983009808
      %v4523 = vunpack.c.0.s8 %v4522
      %v4524 = vlaneseq
      %v4525 = vshrl.u32 %v4524, 7
      %v4526 = vsub.s32 %v4523, %v4525
      %v4527 = vrot.slane %v4073, %v4526
      %v4528 = vcombine.high %v4527, %v4527
      %v4530 = vunpack.c.l.s4 1983009808
      %v4531 = vunpack.c.0.s8 %v4530
      %v4532 = vlaneseq
      %v4533 = vshrl.u32 %v4532, 7
      %v4534 = vsub.s32 %v4531, %v4533
      %v4535 = vrot.slane %v4081, %v4534
      %v4536 = vcombine.high %v4535, %v4535
      %v4538 = vunpack.c.l.s4 1983009808
      %v4539 = vunpack.c.0.s8 %v4538
      %v4540 = vlaneseq
      %v4541 = vshrl.u32 %v4540, 7
      %v4542 = vsub.s32 %v4539, %v4541
      %v4543 = vrot.slane %v4080, %v4542
      %v4544 = vcombine.high %v4543, %v4543
      %v4546 = vunpack.c.l.s4 1983009808
      %v4547 = vunpack.c.0.s8 %v4546
      %v4548 = vlaneseq
      %v4549 = vshrl.u32 %v4548, 7
      %v4550 = vsub.s32 %v4547, %v4549
      %v4551 = vrot.slane %v4082, %v4550
      %v4552 = vcombine.high %v4551, %v4551
      %v4554 = vunpack.c.l.s4 1983009808
      %v4555 = vunpack.c.0.s8 %v4554
      %v4556 = vlaneseq
      %v4557 = vshrl.u32 %v4556, 7
      %v4558 = vsub.s32 %v4555, %v4557
      %v4559 = vrot.slane %v4091, %v4558
      %v4560 = vcombine.high %v4559, %v4559
      %v4562 = vunpack.c.l.s4 1983009808
      %v4563 = vunpack.c.0.s8 %v4562
      %v4564 = vlaneseq
      %v4565 = vshrl.u32 %v4564, 7
      %v4566 = vsub.s32 %v4563, %v4565
      %v4567 = vrot.slane %v4099, %v4566
      %v4568 = vcombine.high %v4567, %v4567
      %v4570 = vunpack.c.l.s4 1983009808
      %v4571 = vunpack.c.0.s8 %v4570
      %v4572 = vlaneseq
      %v4573 = vshrl.u32 %v4572, 7
      %v4574 = vsub.s32 %v4571, %v4573
      %v4575 = vrot.slane %v4098, %v4574
      %v4576 = vcombine.high %v4575, %v4575
      %v4578 = vunpack.c.l.s4 1983009808
      %v4579 = vunpack.c.0.s8 %v4578
      %v4580 = vlaneseq
      %v4581 = vshrl.u32 %v4580, 7
      %v4582 = vsub.s32 %v4579, %v4581
      %v4583 = vrot.slane %v4100, %v4582
      %v4584 = vcombine.high %v4583, %v4583
      %v4586 = vunpack.c.l.s4 1983009808
      %v4587 = vunpack.c.0.s8 %v4586
      %v4588 = vlaneseq
      %v4589 = vshrl.u32 %v4588, 7
      %v4590 = vsub.s32 %v4587, %v4589
      %v4591 = vrot.slane %v4109, %v4590
      %v4592 = vcombine.high %v4591, %v4591
      %v4594 = vunpack.c.l.s4 1983009808
      %v4595 = vunpack.c.0.s8 %v4594
      %v4596 = vlaneseq
      %v4597 = vshrl.u32 %v4596, 7
      %v4598 = vsub.s32 %v4595, %v4597
      %v4599 = vrot.slane %v4117, %v4598
      %v4600 = vcombine.high %v4599, %v4599
      %v4602 = vunpack.c.l.s4 1983009808
      %v4603 = vunpack.c.0.s8 %v4602
      %v4604 = vlaneseq
      %v4605 = vshrl.u32 %v4604, 7
      %v4606 = vsub.s32 %v4603, %v4605
      %v4607 = vrot.slane %v4116, %v4606
      %v4608 = vcombine.high %v4607, %v4607
      %v4610 = vunpack.c.l.s4 1983009808
      %v4611 = vunpack.c.0.s8 %v4610
      %v4612 = vlaneseq
      %v4613 = vshrl.u32 %v4612, 7
      %v4614 = vsub.s32 %v4611, %v4613
      %v4615 = vrot.slane %v4118, %v4614
      %v4616 = vcombine.high %v4615, %v4615
      %v4618 = vunpack.c.l.s4 1983009808
      %v4619 = vunpack.c.0.s8 %v4618
      %v4620 = vlaneseq
      %v4621 = vshrl.u32 %v4620, 7
      %v4622 = vsub.s32 %v4619, %v4621
      %v4623 = vrot.slane %v4127, %v4622
      %v4624 = vcombine.high %v4623, %v4623
      %v4626 = vunpack.c.l.s4 1983009808
      %v4627 = vunpack.c.0.s8 %v4626
      %v4628 = vlaneseq
      %v4629 = vshrl.u32 %v4628, 7
      %v4630 = vsub.s32 %v4627, %v4629
      %v4631 = vrot.slane %v4135, %v4630
      %v4632 = vcombine.high %v4631, %v4631
      %v4634 = vunpack.c.l.s4 1983009808
      %v4635 = vunpack.c.0.s8 %v4634
      %v4636 = vlaneseq
      %v4637 = vshrl.u32 %v4636, 7
      %v4638 = vsub.s32 %v4635, %v4637
      %v4639 = vrot.slane %v4134, %v4638
      %v4640 = vcombine.high %v4639, %v4639
      %v4642 = vunpack.c.l.s4 1983009808
      %v4643 = vunpack.c.0.s8 %v4642
      %v4644 = vlaneseq
      %v4645 = vshrl.u32 %v4644, 7
      %v4646 = vsub.s32 %v4643, %v4645
      %v4647 = vrot.slane %v4136, %v4646
      %v4648 = vcombine.high %v4647, %v4647
      %v4777 = vsel %vm518, %v4143, -inf
      %v4778 = vrot.slane %v4777, 4
      %v4779 = vmax.f32 %v4777, %v4778
      %v4780 = vrot.slane %v4779, 2
      %v4781 = vmax.f32 %v4779, %v4780
      %v4782 = vrot.slane %v4781, 1
      %v4783 = vmax.f32 %v4781, %v4782
      %v4784 = vsel %vm518, %v4144, -inf
      %v4785 = vrot.slane %v4784, 4
      %v4786 = vmax.f32 %v4784, %v4785
      %v4787 = vrot.slane %v4786, 2
      %v4788 = vmax.f32 %v4786, %v4787
      %v4789 = vrot.slane %v4788, 1
      %v4790 = vmax.f32 %v4788, %v4789
      %v4791 = vsel %vm518, %v4151, -inf
      %v4792 = vrot.slane %v4791, 4
      %v4793 = vmax.f32 %v4791, %v4792
      %v4794 = vrot.slane %v4793, 2
      %v4795 = vmax.f32 %v4793, %v4794
      %v4796 = vrot.slane %v4795, 1
      %v4797 = vmax.f32 %v4795, %v4796
      %v4798 = vsel %vm518, %v4152, -inf
      %v4799 = vrot.slane %v4798, 4
      %v4800 = vmax.f32 %v4798, %v4799
      %v4801 = vrot.slane %v4800, 2
      %v4802 = vmax.f32 %v4800, %v4801
      %v4803 = vrot.slane %v4802, 1
      %v4804 = vmax.f32 %v4802, %v4803
      %v4805 = vsel %vm518, %v4159, -inf
      %v4806 = vrot.slane %v4805, 4
      %v4807 = vmax.f32 %v4805, %v4806
      %v4808 = vrot.slane %v4807, 2
      %v4809 = vmax.f32 %v4807, %v4808
      %v4810 = vrot.slane %v4809, 1
      %v4811 = vmax.f32 %v4809, %v4810
      %v4812 = vsel %vm518, %v4160, -inf
      %v4813 = vrot.slane %v4812, 4
      %v4814 = vmax.f32 %v4812, %v4813
      %v4815 = vrot.slane %v4814, 2
      %v4816 = vmax.f32 %v4814, %v4815
      %v4817 = vrot.slane %v4816, 1
      %v4818 = vmax.f32 %v4816, %v4817
      %v4819 = vsel %vm518, %v4167, -inf
      %v4820 = vrot.slane %v4819, 4
      %v4821 = vmax.f32 %v4819, %v4820
      %v4822 = vrot.slane %v4821, 2
      %v4823 = vmax.f32 %v4821, %v4822
      %v4824 = vrot.slane %v4823, 1
      %v4825 = vmax.f32 %v4823, %v4824
      %v4826 = vsel %vm518, %v4168, -inf
      %v4827 = vrot.slane %v4826, 4
      %v4828 = vmax.f32 %v4826, %v4827
      %v4829 = vrot.slane %v4828, 2
      %v4830 = vmax.f32 %v4828, %v4829
      %v4831 = vrot.slane %v4830, 1
      %v4832 = vmax.f32 %v4830, %v4831
      %v4833 = vsel %vm518, %v4175, -inf
      %v4834 = vrot.slane %v4833, 4
      %v4835 = vmax.f32 %v4833, %v4834
      %v4836 = vrot.slane %v4835, 2
      %v4837 = vmax.f32 %v4835, %v4836
      %v4838 = vrot.slane %v4837, 1
      %v4839 = vmax.f32 %v4837, %v4838
      %v4840 = vsel %vm518, %v4176, -inf
      %v4841 = vrot.slane %v4840, 4
      %v4842 = vmax.f32 %v4840, %v4841
      %v4843 = vrot.slane %v4842, 2
      %v4844 = vmax.f32 %v4842, %v4843
      %v4845 = vrot.slane %v4844, 1
      %v4846 = vmax.f32 %v4844, %v4845
      %v4847 = vsel %vm518, %v4183, -inf
      %v4848 = vrot.slane %v4847, 4
      %v4849 = vmax.f32 %v4847, %v4848
      %v4850 = vrot.slane %v4849, 2
      %v4851 = vmax.f32 %v4849, %v4850
      %v4852 = vrot.slane %v4851, 1
      %v4853 = vmax.f32 %v4851, %v4852
      %v4854 = vsel %vm518, %v4184, -inf
      %v4855 = vrot.slane %v4854, 4
      %v4856 = vmax.f32 %v4854, %v4855
      %v4857 = vrot.slane %v4856, 2
      %v4858 = vmax.f32 %v4856, %v4857
      %v4859 = vrot.slane %v4858, 1
      %v4860 = vmax.f32 %v4858, %v4859
      %v4861 = vsel %vm518, %v4191, -inf
      %v4862 = vrot.slane %v4861, 4
      %v4863 = vmax.f32 %v4861, %v4862
      %v4864 = vrot.slane %v4863, 2
      %v4865 = vmax.f32 %v4863, %v4864
      %v4866 = vrot.slane %v4865, 1
      %v4867 = vmax.f32 %v4865, %v4866
      %v4868 = vsel %vm518, %v4192, -inf
      %v4869 = vrot.slane %v4868, 4
      %v4870 = vmax.f32 %v4868, %v4869
      %v4871 = vrot.slane %v4870, 2
      %v4872 = vmax.f32 %v4870, %v4871
      %v4873 = vrot.slane %v4872, 1
      %v4874 = vmax.f32 %v4872, %v4873
      %v4875 = vsel %vm518, %v4199, -inf
      %v4876 = vrot.slane %v4875, 4
      %v4877 = vmax.f32 %v4875, %v4876
      %v4878 = vrot.slane %v4877, 2
      %v4879 = vmax.f32 %v4877, %v4878
      %v4880 = vrot.slane %v4879, 1
      %v4881 = vmax.f32 %v4879, %v4880
      %v4882 = vsel %vm518, %v4200, -inf
      %v4883 = vrot.slane %v4882, 4
      %v4884 = vmax.f32 %v4882, %v4883
      %v4885 = vrot.slane %v4884, 2
      %v4886 = vmax.f32 %v4884, %v4885
      %v4887 = vrot.slane %v4886, 1
      %v4888 = vmax.f32 %v4886, %v4887
      %v4889 = vsel %vm518, %v4207, -inf
      %v4890 = vrot.slane %v4889, 4
      %v4891 = vmax.f32 %v4889, %v4890
      %v4892 = vrot.slane %v4891, 2
      %v4893 = vmax.f32 %v4891, %v4892
      %v4894 = vrot.slane %v4893, 1
      %v4895 = vmax.f32 %v4893, %v4894
      %v4896 = vsel %vm518, %v4208, -inf
      %v4897 = vrot.slane %v4896, 4
      %v4898 = vmax.f32 %v4896, %v4897
      %v4899 = vrot.slane %v4898, 2
      %v4900 = vmax.f32 %v4898, %v4899
      %v4901 = vrot.slane %v4900, 1
      %v4902 = vmax.f32 %v4900, %v4901
      %v4903 = vsel %vm518, %v4215, -inf
      %v4904 = vrot.slane %v4903, 4
      %v4905 = vmax.f32 %v4903, %v4904
      %v4906 = vrot.slane %v4905, 2
      %v4907 = vmax.f32 %v4905, %v4906
      %v4908 = vrot.slane %v4907, 1
      %v4909 = vmax.f32 %v4907, %v4908
      %v4910 = vsel %vm518, %v4216, -inf
      %v4911 = vrot.slane %v4910, 4
      %v4912 = vmax.f32 %v4910, %v4911
      %v4913 = vrot.slane %v4912, 2
      %v4914 = vmax.f32 %v4912, %v4913
      %v4915 = vrot.slane %v4914, 1
      %v4916 = vmax.f32 %v4914, %v4915
      %v4917 = vsel %vm518, %v4223, -inf
      %v4918 = vrot.slane %v4917, 4
      %v4919 = vmax.f32 %v4917, %v4918
      %v4920 = vrot.slane %v4919, 2
      %v4921 = vmax.f32 %v4919, %v4920
      %v4922 = vrot.slane %v4921, 1
      %v4923 = vmax.f32 %v4921, %v4922
      %v4924 = vsel %vm518, %v4224, -inf
      %v4925 = vrot.slane %v4924, 4
      %v4926 = vmax.f32 %v4924, %v4925
      %v4927 = vrot.slane %v4926, 2
      %v4928 = vmax.f32 %v4926, %v4927
      %v4929 = vrot.slane %v4928, 1
      %v4930 = vmax.f32 %v4928, %v4929
      %v4931 = vsel %vm518, %v4231, -inf
      %v4932 = vrot.slane %v4931, 4
      %v4933 = vmax.f32 %v4931, %v4932
      %v4934 = vrot.slane %v4933, 2
      %v4935 = vmax.f32 %v4933, %v4934
      %v4936 = vrot.slane %v4935, 1
      %v4937 = vmax.f32 %v4935, %v4936
      %v4938 = vsel %vm518, %v4232, -inf
      %v4939 = vrot.slane %v4938, 4
      %v4940 = vmax.f32 %v4938, %v4939
      %v4941 = vrot.slane %v4940, 2
      %v4942 = vmax.f32 %v4940, %v4941
      %v4943 = vrot.slane %v4942, 1
      %v4944 = vmax.f32 %v4942, %v4943
      %v4945 = vsel %vm518, %v4239, -inf
      %v4946 = vrot.slane %v4945, 4
      %v4947 = vmax.f32 %v4945, %v4946
      %v4948 = vrot.slane %v4947, 2
      %v4949 = vmax.f32 %v4947, %v4948
      %v4950 = vrot.slane %v4949, 1
      %v4951 = vmax.f32 %v4949, %v4950
      %v4952 = vsel %vm518, %v4240, -inf
      %v4953 = vrot.slane %v4952, 4
      %v4954 = vmax.f32 %v4952, %v4953
      %v4955 = vrot.slane %v4954, 2
      %v4956 = vmax.f32 %v4954, %v4955
      %v4957 = vrot.slane %v4956, 1
      %v4958 = vmax.f32 %v4956, %v4957
      %v4959 = vsel %vm518, %v4247, -inf
      %v4960 = vrot.slane %v4959, 4
      %v4961 = vmax.f32 %v4959, %v4960
      %v4962 = vrot.slane %v4961, 2
      %v4963 = vmax.f32 %v4961, %v4962
      %v4964 = vrot.slane %v4963, 1
      %v4965 = vmax.f32 %v4963, %v4964
      %v4966 = vsel %vm518, %v4248, -inf
      %v4967 = vrot.slane %v4966, 4
      %v4968 = vmax.f32 %v4966, %v4967
      %v4969 = vrot.slane %v4968, 2
      %v4970 = vmax.f32 %v4968, %v4969
      %v4971 = vrot.slane %v4970, 1
      %v4972 = vmax.f32 %v4970, %v4971
      %v4973 = vsel %vm518, %v4255, -inf
      %v4974 = vrot.slane %v4973, 4
      %v4975 = vmax.f32 %v4973, %v4974
      %v4976 = vrot.slane %v4975, 2
      %v4977 = vmax.f32 %v4975, %v4976
      %v4978 = vrot.slane %v4977, 1
      %v4979 = vmax.f32 %v4977, %v4978
      %v4980 = vsel %vm518, %v4256, -inf
      %v4981 = vrot.slane %v4980, 4
      %v4982 = vmax.f32 %v4980, %v4981
      %v4983 = vrot.slane %v4982, 2
      %v4984 = vmax.f32 %v4982, %v4983
      %v4985 = vrot.slane %v4984, 1
      %v4986 = vmax.f32 %v4984, %v4985
      %v4987 = vsel %vm518, %v4263, -inf
      %v4988 = vrot.slane %v4987, 4
      %v4989 = vmax.f32 %v4987, %v4988
      %v4990 = vrot.slane %v4989, 2
      %v4991 = vmax.f32 %v4989, %v4990
      %v4992 = vrot.slane %v4991, 1
      %v4993 = vmax.f32 %v4991, %v4992
      %v4994 = vsel %vm518, %v4264, -inf
      %v4995 = vrot.slane %v4994, 4
      %v4996 = vmax.f32 %v4994, %v4995
      %v4997 = vrot.slane %v4996, 2
      %v4998 = vmax.f32 %v4996, %v4997
      %v4999 = vrot.slane %v4998, 1
      %v5000 = vmax.f32 %v4998, %v4999
      %v5001 = vsel %vm518, %v4271, -inf
      %v5002 = vrot.slane %v5001, 4
      %v5003 = vmax.f32 %v5001, %v5002
      %v5004 = vrot.slane %v5003, 2
      %v5005 = vmax.f32 %v5003, %v5004
      %v5006 = vrot.slane %v5005, 1
      %v5007 = vmax.f32 %v5005, %v5006
      %v5008 = vsel %vm518, %v4272, -inf
      %v5009 = vrot.slane %v5008, 4
      %v5010 = vmax.f32 %v5008, %v5009
      %v5011 = vrot.slane %v5010, 2
      %v5012 = vmax.f32 %v5010, %v5011
      %v5013 = vrot.slane %v5012, 1
      %v5014 = vmax.f32 %v5012, %v5013
      %v5015 = vsel %vm518, %v4279, -inf
      %v5016 = vrot.slane %v5015, 4
      %v5017 = vmax.f32 %v5015, %v5016
      %v5018 = vrot.slane %v5017, 2
      %v5019 = vmax.f32 %v5017, %v5018
      %v5020 = vrot.slane %v5019, 1
      %v5021 = vmax.f32 %v5019, %v5020
      %v5022 = vsel %vm518, %v4280, -inf
      %v5023 = vrot.slane %v5022, 4
      %v5024 = vmax.f32 %v5022, %v5023
      %v5025 = vrot.slane %v5024, 2
      %v5026 = vmax.f32 %v5024, %v5025
      %v5027 = vrot.slane %v5026, 1
      %v5028 = vmax.f32 %v5026, %v5027
      %v5029 = vsel %vm518, %v4287, -inf
      %v5030 = vrot.slane %v5029, 4
      %v5031 = vmax.f32 %v5029, %v5030
      %v5032 = vrot.slane %v5031, 2
      %v5033 = vmax.f32 %v5031, %v5032
      %v5034 = vrot.slane %v5033, 1
      %v5035 = vmax.f32 %v5033, %v5034
      %v5036 = vsel %vm518, %v4288, -inf
      %v5037 = vrot.slane %v5036, 4
      %v5038 = vmax.f32 %v5036, %v5037
      %v5039 = vrot.slane %v5038, 2
      %v5040 = vmax.f32 %v5038, %v5039
      %v5041 = vrot.slane %v5040, 1
      %v5042 = vmax.f32 %v5040, %v5041
      %v5043 = vsel %vm518, %v4295, -inf
      %v5044 = vrot.slane %v5043, 4
      %v5045 = vmax.f32 %v5043, %v5044
      %v5046 = vrot.slane %v5045, 2
      %v5047 = vmax.f32 %v5045, %v5046
      %v5048 = vrot.slane %v5047, 1
      %v5049 = vmax.f32 %v5047, %v5048
      %v5050 = vsel %vm518, %v4296, -inf
      %v5051 = vrot.slane %v5050, 4
      %v5052 = vmax.f32 %v5050, %v5051
      %v5053 = vrot.slane %v5052, 2
      %v5054 = vmax.f32 %v5052, %v5053
      %v5055 = vrot.slane %v5054, 1
      %v5056 = vmax.f32 %v5054, %v5055
      %v5057 = vsel %vm518, %v4303, -inf
      %v5058 = vrot.slane %v5057, 4
      %v5059 = vmax.f32 %v5057, %v5058
      %v5060 = vrot.slane %v5059, 2
      %v5061 = vmax.f32 %v5059, %v5060
      %v5062 = vrot.slane %v5061, 1
      %v5063 = vmax.f32 %v5061, %v5062
      %v5064 = vsel %vm518, %v4304, -inf
      %v5065 = vrot.slane %v5064, 4
      %v5066 = vmax.f32 %v5064, %v5065
      %v5067 = vrot.slane %v5066, 2
      %v5068 = vmax.f32 %v5066, %v5067
      %v5069 = vrot.slane %v5068, 1
      %v5070 = vmax.f32 %v5068, %v5069
      %v5071 = vsel %vm518, %v4311, -inf
      %v5072 = vrot.slane %v5071, 4
      %v5073 = vmax.f32 %v5071, %v5072
      %v5074 = vrot.slane %v5073, 2
      %v5075 = vmax.f32 %v5073, %v5074
      %v5076 = vrot.slane %v5075, 1
      %v5077 = vmax.f32 %v5075, %v5076
      %v5078 = vsel %vm518, %v4312, -inf
      %v5079 = vrot.slane %v5078, 4
      %v5080 = vmax.f32 %v5078, %v5079
      %v5081 = vrot.slane %v5080, 2
      %v5082 = vmax.f32 %v5080, %v5081
      %v5083 = vrot.slane %v5082, 1
      %v5084 = vmax.f32 %v5082, %v5083
      %v5085 = vsel %vm518, %v4319, -inf
      %v5086 = vrot.slane %v5085, 4
      %v5087 = vmax.f32 %v5085, %v5086
      %v5088 = vrot.slane %v5087, 2
      %v5089 = vmax.f32 %v5087, %v5088
      %v5090 = vrot.slane %v5089, 1
      %v5091 = vmax.f32 %v5089, %v5090
      %v5092 = vsel %vm518, %v4320, -inf
      %v5093 = vrot.slane %v5092, 4
      %v5094 = vmax.f32 %v5092, %v5093
      %v5095 = vrot.slane %v5094, 2
      %v5096 = vmax.f32 %v5094, %v5095
      %v5097 = vrot.slane %v5096, 1
      %v5098 = vmax.f32 %v5096, %v5097
      %v5099 = vsel %vm518, %v4327, -inf
      %v5100 = vrot.slane %v5099, 4
      %v5101 = vmax.f32 %v5099, %v5100
      %v5102 = vrot.slane %v5101, 2
      %v5103 = vmax.f32 %v5101, %v5102
      %v5104 = vrot.slane %v5103, 1
      %v5105 = vmax.f32 %v5103, %v5104
      %v5106 = vsel %vm518, %v4328, -inf
      %v5107 = vrot.slane %v5106, 4
      %v5108 = vmax.f32 %v5106, %v5107
      %v5109 = vrot.slane %v5108, 2
      %v5110 = vmax.f32 %v5108, %v5109
      %v5111 = vrot.slane %v5110, 1
      %v5112 = vmax.f32 %v5110, %v5111
      %v5113 = vsel %vm518, %v4335, -inf
      %v5114 = vrot.slane %v5113, 4
      %v5115 = vmax.f32 %v5113, %v5114
      %v5116 = vrot.slane %v5115, 2
      %v5117 = vmax.f32 %v5115, %v5116
      %v5118 = vrot.slane %v5117, 1
      %v5119 = vmax.f32 %v5117, %v5118
      %v5120 = vsel %vm518, %v4336, -inf
      %v5121 = vrot.slane %v5120, 4
      %v5122 = vmax.f32 %v5120, %v5121
      %v5123 = vrot.slane %v5122, 2
      %v5124 = vmax.f32 %v5122, %v5123
      %v5125 = vrot.slane %v5124, 1
      %v5126 = vmax.f32 %v5124, %v5125
      %v5127 = vsel %vm518, %v4343, -inf
      %v5128 = vrot.slane %v5127, 4
      %v5129 = vmax.f32 %v5127, %v5128
      %v5130 = vrot.slane %v5129, 2
      %v5131 = vmax.f32 %v5129, %v5130
      %v5132 = vrot.slane %v5131, 1
      %v5133 = vmax.f32 %v5131, %v5132
      %v5134 = vsel %vm518, %v4344, -inf
      %v5135 = vrot.slane %v5134, 4
      %v5136 = vmax.f32 %v5134, %v5135
      %v5137 = vrot.slane %v5136, 2
      %v5138 = vmax.f32 %v5136, %v5137
      %v5139 = vrot.slane %v5138, 1
      %v5140 = vmax.f32 %v5138, %v5139
      %v5141 = vsel %vm518, %v4351, -inf
      %v5142 = vrot.slane %v5141, 4
      %v5143 = vmax.f32 %v5141, %v5142
      %v5144 = vrot.slane %v5143, 2
      %v5145 = vmax.f32 %v5143, %v5144
      %v5146 = vrot.slane %v5145, 1
      %v5147 = vmax.f32 %v5145, %v5146
      %v5148 = vsel %vm518, %v4352, -inf
      %v5149 = vrot.slane %v5148, 4
      %v5150 = vmax.f32 %v5148, %v5149
      %v5151 = vrot.slane %v5150, 2
      %v5152 = vmax.f32 %v5150, %v5151
      %v5153 = vrot.slane %v5152, 1
      %v5154 = vmax.f32 %v5152, %v5153
      %v5155 = vsel %vm518, %v4359, -inf
      %v5156 = vrot.slane %v5155, 4
      %v5157 = vmax.f32 %v5155, %v5156
      %v5158 = vrot.slane %v5157, 2
      %v5159 = vmax.f32 %v5157, %v5158
      %v5160 = vrot.slane %v5159, 1
      %v5161 = vmax.f32 %v5159, %v5160
      %v5162 = vsel %vm518, %v4360, -inf
      %v5163 = vrot.slane %v5162, 4
      %v5164 = vmax.f32 %v5162, %v5163
      %v5165 = vrot.slane %v5164, 2
      %v5166 = vmax.f32 %v5164, %v5165
      %v5167 = vrot.slane %v5166, 1
      %v5168 = vmax.f32 %v5166, %v5167
      %v5169 = vsel %vm518, %v4367, -inf
      %v5170 = vrot.slane %v5169, 4
      %v5171 = vmax.f32 %v5169, %v5170
      %v5172 = vrot.slane %v5171, 2
      %v5173 = vmax.f32 %v5171, %v5172
      %v5174 = vrot.slane %v5173, 1
      %v5175 = vmax.f32 %v5173, %v5174
      %v5176 = vsel %vm518, %v4368, -inf
      %v5177 = vrot.slane %v5176, 4
      %v5178 = vmax.f32 %v5176, %v5177
      %v5179 = vrot.slane %v5178, 2
      %v5180 = vmax.f32 %v5178, %v5179
      %v5181 = vrot.slane %v5180, 1
      %v5182 = vmax.f32 %v5180, %v5181
      %v5183 = vsel %vm518, %v4375, -inf
      %v5184 = vrot.slane %v5183, 4
      %v5185 = vmax.f32 %v5183, %v5184
      %v5186 = vrot.slane %v5185, 2
      %v5187 = vmax.f32 %v5185, %v5186
      %v5188 = vrot.slane %v5187, 1
      %v5189 = vmax.f32 %v5187, %v5188
      %v5190 = vsel %vm518, %v4376, -inf
      %v5191 = vrot.slane %v5190, 4
      %v5192 = vmax.f32 %v5190, %v5191
      %v5193 = vrot.slane %v5192, 2
      %v5194 = vmax.f32 %v5192, %v5193
      %v5195 = vrot.slane %v5194, 1
      %v5196 = vmax.f32 %v5194, %v5195
      %v5197 = vsel %vm518, %v4383, -inf
      %v5198 = vrot.slane %v5197, 4
      %v5199 = vmax.f32 %v5197, %v5198
      %v5200 = vrot.slane %v5199, 2
      %v5201 = vmax.f32 %v5199, %v5200
      %v5202 = vrot.slane %v5201, 1
      %v5203 = vmax.f32 %v5201, %v5202
      %v5204 = vsel %vm518, %v4384, -inf
      %v5205 = vrot.slane %v5204, 4
      %v5206 = vmax.f32 %v5204, %v5205
      %v5207 = vrot.slane %v5206, 2
      %v5208 = vmax.f32 %v5206, %v5207
      %v5209 = vrot.slane %v5208, 1
      %v5210 = vmax.f32 %v5208, %v5209
      %v5211 = vsel %vm518, %v4391, -inf
      %v5212 = vrot.slane %v5211, 4
      %v5213 = vmax.f32 %v5211, %v5212
      %v5214 = vrot.slane %v5213, 2
      %v5215 = vmax.f32 %v5213, %v5214
      %v5216 = vrot.slane %v5215, 1
      %v5217 = vmax.f32 %v5215, %v5216
      %v5218 = vsel %vm518, %v4392, -inf
      %v5219 = vrot.slane %v5218, 4
      %v5220 = vmax.f32 %v5218, %v5219
      %v5221 = vrot.slane %v5220, 2
      %v5222 = vmax.f32 %v5220, %v5221
      %v5223 = vrot.slane %v5222, 1
      %v5224 = vmax.f32 %v5222, %v5223
      %v5225 = vsel %vm518, %v4399, -inf
      %v5226 = vrot.slane %v5225, 4
      %v5227 = vmax.f32 %v5225, %v5226
      %v5228 = vrot.slane %v5227, 2
      %v5229 = vmax.f32 %v5227, %v5228
      %v5230 = vrot.slane %v5229, 1
      %v5231 = vmax.f32 %v5229, %v5230
      %v5232 = vsel %vm518, %v4400, -inf
      %v5233 = vrot.slane %v5232, 4
      %v5234 = vmax.f32 %v5232, %v5233
      %v5235 = vrot.slane %v5234, 2
      %v5236 = vmax.f32 %v5234, %v5235
      %v5237 = vrot.slane %v5236, 1
      %v5238 = vmax.f32 %v5236, %v5237
      %v5239 = vsel %vm518, %v4407, -inf
      %v5240 = vrot.slane %v5239, 4
      %v5241 = vmax.f32 %v5239, %v5240
      %v5242 = vrot.slane %v5241, 2
      %v5243 = vmax.f32 %v5241, %v5242
      %v5244 = vrot.slane %v5243, 1
      %v5245 = vmax.f32 %v5243, %v5244
      %v5246 = vsel %vm518, %v4408, -inf
      %v5247 = vrot.slane %v5246, 4
      %v5248 = vmax.f32 %v5246, %v5247
      %v5249 = vrot.slane %v5248, 2
      %v5250 = vmax.f32 %v5248, %v5249
      %v5251 = vrot.slane %v5250, 1
      %v5252 = vmax.f32 %v5250, %v5251
      %v5253 = vsel %vm518, %v4415, -inf
      %v5254 = vrot.slane %v5253, 4
      %v5255 = vmax.f32 %v5253, %v5254
      %v5256 = vrot.slane %v5255, 2
      %v5257 = vmax.f32 %v5255, %v5256
      %v5258 = vrot.slane %v5257, 1
      %v5259 = vmax.f32 %v5257, %v5258
      %v5260 = vsel %vm518, %v4416, -inf
      %v5261 = vrot.slane %v5260, 4
      %v5262 = vmax.f32 %v5260, %v5261
      %v5263 = vrot.slane %v5262, 2
      %v5264 = vmax.f32 %v5262, %v5263
      %v5265 = vrot.slane %v5264, 1
      %v5266 = vmax.f32 %v5264, %v5265
      %v5267 = vsel %vm518, %v4423, -inf
      %v5268 = vrot.slane %v5267, 4
      %v5269 = vmax.f32 %v5267, %v5268
      %v5270 = vrot.slane %v5269, 2
      %v5271 = vmax.f32 %v5269, %v5270
      %v5272 = vrot.slane %v5271, 1
      %v5273 = vmax.f32 %v5271, %v5272
      %v5274 = vsel %vm518, %v4424, -inf
      %v5275 = vrot.slane %v5274, 4
      %v5276 = vmax.f32 %v5274, %v5275
      %v5277 = vrot.slane %v5276, 2
      %v5278 = vmax.f32 %v5276, %v5277
      %v5279 = vrot.slane %v5278, 1
      %v5280 = vmax.f32 %v5278, %v5279
      %v5281 = vsel %vm518, %v4431, -inf
      %v5282 = vrot.slane %v5281, 4
      %v5283 = vmax.f32 %v5281, %v5282
      %v5284 = vrot.slane %v5283, 2
      %v5285 = vmax.f32 %v5283, %v5284
      %v5286 = vrot.slane %v5285, 1
      %v5287 = vmax.f32 %v5285, %v5286
      %v5288 = vsel %vm518, %v4432, -inf
      %v5289 = vrot.slane %v5288, 4
      %v5290 = vmax.f32 %v5288, %v5289
      %v5291 = vrot.slane %v5290, 2
      %v5292 = vmax.f32 %v5290, %v5291
      %v5293 = vrot.slane %v5292, 1
      %v5294 = vmax.f32 %v5292, %v5293
      %v5295 = vsel %vm518, %v4439, -inf
      %v5296 = vrot.slane %v5295, 4
      %v5297 = vmax.f32 %v5295, %v5296
      %v5298 = vrot.slane %v5297, 2
      %v5299 = vmax.f32 %v5297, %v5298
      %v5300 = vrot.slane %v5299, 1
      %v5301 = vmax.f32 %v5299, %v5300
      %v5302 = vsel %vm518, %v4440, -inf
      %v5303 = vrot.slane %v5302, 4
      %v5304 = vmax.f32 %v5302, %v5303
      %v5305 = vrot.slane %v5304, 2
      %v5306 = vmax.f32 %v5304, %v5305
      %v5307 = vrot.slane %v5306, 1
      %v5308 = vmax.f32 %v5306, %v5307
      %v5309 = vsel %vm518, %v4447, -inf
      %v5310 = vrot.slane %v5309, 4
      %v5311 = vmax.f32 %v5309, %v5310
      %v5312 = vrot.slane %v5311, 2
      %v5313 = vmax.f32 %v5311, %v5312
      %v5314 = vrot.slane %v5313, 1
      %v5315 = vmax.f32 %v5313, %v5314
      %v5316 = vsel %vm518, %v4448, -inf
      %v5317 = vrot.slane %v5316, 4
      %v5318 = vmax.f32 %v5316, %v5317
      %v5319 = vrot.slane %v5318, 2
      %v5320 = vmax.f32 %v5318, %v5319
      %v5321 = vrot.slane %v5320, 1
      %v5322 = vmax.f32 %v5320, %v5321
      %v5323 = vsel %vm518, %v4455, -inf
      %v5324 = vrot.slane %v5323, 4
      %v5325 = vmax.f32 %v5323, %v5324
      %v5326 = vrot.slane %v5325, 2
      %v5327 = vmax.f32 %v5325, %v5326
      %v5328 = vrot.slane %v5327, 1
      %v5329 = vmax.f32 %v5327, %v5328
      %v5330 = vsel %vm518, %v4456, -inf
      %v5331 = vrot.slane %v5330, 4
      %v5332 = vmax.f32 %v5330, %v5331
      %v5333 = vrot.slane %v5332, 2
      %v5334 = vmax.f32 %v5332, %v5333
      %v5335 = vrot.slane %v5334, 1
      %v5336 = vmax.f32 %v5334, %v5335
      %v5337 = vsel %vm518, %v4463, -inf
      %v5338 = vrot.slane %v5337, 4
      %v5339 = vmax.f32 %v5337, %v5338
      %v5340 = vrot.slane %v5339, 2
      %v5341 = vmax.f32 %v5339, %v5340
      %v5342 = vrot.slane %v5341, 1
      %v5343 = vmax.f32 %v5341, %v5342
      %v5344 = vsel %vm518, %v4464, -inf
      %v5345 = vrot.slane %v5344, 4
      %v5346 = vmax.f32 %v5344, %v5345
      %v5347 = vrot.slane %v5346, 2
      %v5348 = vmax.f32 %v5346, %v5347
      %v5349 = vrot.slane %v5348, 1
      %v5350 = vmax.f32 %v5348, %v5349
      %v5351 = vsel %vm518, %v4471, -inf
      %v5352 = vrot.slane %v5351, 4
      %v5353 = vmax.f32 %v5351, %v5352
      %v5354 = vrot.slane %v5353, 2
      %v5355 = vmax.f32 %v5353, %v5354
      %v5356 = vrot.slane %v5355, 1
      %v5357 = vmax.f32 %v5355, %v5356
      %v5358 = vsel %vm518, %v4472, -inf
      %v5359 = vrot.slane %v5358, 4
      %v5360 = vmax.f32 %v5358, %v5359
      %v5361 = vrot.slane %v5360, 2
      %v5362 = vmax.f32 %v5360, %v5361
      %v5363 = vrot.slane %v5362, 1
      %v5364 = vmax.f32 %v5362, %v5363
      %v5365 = vsel %vm518, %v4479, -inf
      %v5366 = vrot.slane %v5365, 4
      %v5367 = vmax.f32 %v5365, %v5366
      %v5368 = vrot.slane %v5367, 2
      %v5369 = vmax.f32 %v5367, %v5368
      %v5370 = vrot.slane %v5369, 1
      %v5371 = vmax.f32 %v5369, %v5370
      %v5372 = vsel %vm518, %v4480, -inf
      %v5373 = vrot.slane %v5372, 4
      %v5374 = vmax.f32 %v5372, %v5373
      %v5375 = vrot.slane %v5374, 2
      %v5376 = vmax.f32 %v5374, %v5375
      %v5377 = vrot.slane %v5376, 1
      %v5378 = vmax.f32 %v5376, %v5377
      %v5379 = vsel %vm518, %v4487, -inf
      %v5380 = vrot.slane %v5379, 4
      %v5381 = vmax.f32 %v5379, %v5380
      %v5382 = vrot.slane %v5381, 2
      %v5383 = vmax.f32 %v5381, %v5382
      %v5384 = vrot.slane %v5383, 1
      %v5385 = vmax.f32 %v5383, %v5384
      %v5386 = vsel %vm518, %v4488, -inf
      %v5387 = vrot.slane %v5386, 4
      %v5388 = vmax.f32 %v5386, %v5387
      %v5389 = vrot.slane %v5388, 2
      %v5390 = vmax.f32 %v5388, %v5389
      %v5391 = vrot.slane %v5390, 1
      %v5392 = vmax.f32 %v5390, %v5391
      %v5393 = vsel %vm518, %v4495, -inf
      %v5394 = vrot.slane %v5393, 4
      %v5395 = vmax.f32 %v5393, %v5394
      %v5396 = vrot.slane %v5395, 2
      %v5397 = vmax.f32 %v5395, %v5396
      %v5398 = vrot.slane %v5397, 1
      %v5399 = vmax.f32 %v5397, %v5398
      %v5400 = vsel %vm518, %v4496, -inf
      %v5401 = vrot.slane %v5400, 4
      %v5402 = vmax.f32 %v5400, %v5401
      %v5403 = vrot.slane %v5402, 2
      %v5404 = vmax.f32 %v5402, %v5403
      %v5405 = vrot.slane %v5404, 1
      %v5406 = vmax.f32 %v5404, %v5405
      %v5407 = vsel %vm518, %v4503, -inf
      %v5408 = vrot.slane %v5407, 4
      %v5409 = vmax.f32 %v5407, %v5408
      %v5410 = vrot.slane %v5409, 2
      %v5411 = vmax.f32 %v5409, %v5410
      %v5412 = vrot.slane %v5411, 1
      %v5413 = vmax.f32 %v5411, %v5412
      %v5414 = vsel %vm518, %v4504, -inf
      %v5415 = vrot.slane %v5414, 4
      %v5416 = vmax.f32 %v5414, %v5415
      %v5417 = vrot.slane %v5416, 2
      %v5418 = vmax.f32 %v5416, %v5417
      %v5419 = vrot.slane %v5418, 1
      %v5420 = vmax.f32 %v5418, %v5419
      %v5421 = vsel %vm518, %v4511, -inf
      %v5422 = vrot.slane %v5421, 4
      %v5423 = vmax.f32 %v5421, %v5422
      %v5424 = vrot.slane %v5423, 2
      %v5425 = vmax.f32 %v5423, %v5424
      %v5426 = vrot.slane %v5425, 1
      %v5427 = vmax.f32 %v5425, %v5426
      %v5428 = vsel %vm518, %v4512, -inf
      %v5429 = vrot.slane %v5428, 4
      %v5430 = vmax.f32 %v5428, %v5429
      %v5431 = vrot.slane %v5430, 2
      %v5432 = vmax.f32 %v5430, %v5431
      %v5433 = vrot.slane %v5432, 1
      %v5434 = vmax.f32 %v5432, %v5433
      %v5435 = vsel %vm518, %v4519, -inf
      %v5436 = vrot.slane %v5435, 4
      %v5437 = vmax.f32 %v5435, %v5436
      %v5438 = vrot.slane %v5437, 2
      %v5439 = vmax.f32 %v5437, %v5438
      %v5440 = vrot.slane %v5439, 1
      %v5441 = vmax.f32 %v5439, %v5440
      %v5442 = vsel %vm518, %v4520, -inf
      %v5443 = vrot.slane %v5442, 4
      %v5444 = vmax.f32 %v5442, %v5443
      %v5445 = vrot.slane %v5444, 2
      %v5446 = vmax.f32 %v5444, %v5445
      %v5447 = vrot.slane %v5446, 1
      %v5448 = vmax.f32 %v5446, %v5447
      %v5449 = vsel %vm518, %v4527, -inf
      %v5450 = vrot.slane %v5449, 4
      %v5451 = vmax.f32 %v5449, %v5450
      %v5452 = vrot.slane %v5451, 2
      %v5453 = vmax.f32 %v5451, %v5452
      %v5454 = vrot.slane %v5453, 1
      %v5455 = vmax.f32 %v5453, %v5454
      %v5456 = vsel %vm518, %v4528, -inf
      %v5457 = vrot.slane %v5456, 4
      %v5458 = vmax.f32 %v5456, %v5457
      %v5459 = vrot.slane %v5458, 2
      %v5460 = vmax.f32 %v5458, %v5459
      %v5461 = vrot.slane %v5460, 1
      %v5462 = vmax.f32 %v5460, %v5461
      %v5463 = vsel %vm518, %v4535, -inf
      %v5464 = vrot.slane %v5463, 4
      %v5465 = vmax.f32 %v5463, %v5464
      %v5466 = vrot.slane %v5465, 2
      %v5467 = vmax.f32 %v5465, %v5466
      %v5468 = vrot.slane %v5467, 1
      %v5469 = vmax.f32 %v5467, %v5468
      %v5470 = vsel %vm518, %v4536, -inf
      %v5471 = vrot.slane %v5470, 4
      %v5472 = vmax.f32 %v5470, %v5471
      %v5473 = vrot.slane %v5472, 2
      %v5474 = vmax.f32 %v5472, %v5473
      %v5475 = vrot.slane %v5474, 1
      %v5476 = vmax.f32 %v5474, %v5475
      %v5477 = vsel %vm518, %v4543, -inf
      %v5478 = vrot.slane %v5477, 4
      %v5479 = vmax.f32 %v5477, %v5478
      %v5480 = vrot.slane %v5479, 2
      %v5481 = vmax.f32 %v5479, %v5480
      %v5482 = vrot.slane %v5481, 1
      %v5483 = vmax.f32 %v5481, %v5482
      %v5484 = vsel %vm518, %v4544, -inf
      %v5485 = vrot.slane %v5484, 4
      %v5486 = vmax.f32 %v5484, %v5485
      %v5487 = vrot.slane %v5486, 2
      %v5488 = vmax.f32 %v5486, %v5487
      %v5489 = vrot.slane %v5488, 1
      %v5490 = vmax.f32 %v5488, %v5489
      %v5491 = vsel %vm518, %v4551, -inf
      %v5492 = vrot.slane %v5491, 4
      %v5493 = vmax.f32 %v5491, %v5492
      %v5494 = vrot.slane %v5493, 2
      %v5495 = vmax.f32 %v5493, %v5494
      %v5496 = vrot.slane %v5495, 1
      %v5497 = vmax.f32 %v5495, %v5496
      %v5498 = vsel %vm518, %v4552, -inf
      %v5499 = vrot.slane %v5498, 4
      %v5500 = vmax.f32 %v5498, %v5499
      %v5501 = vrot.slane %v5500, 2
      %v5502 = vmax.f32 %v5500, %v5501
      %v5503 = vrot.slane %v5502, 1
      %v5504 = vmax.f32 %v5502, %v5503
      %v5505 = vsel %vm518, %v4559, -inf
      %v5506 = vrot.slane %v5505, 4
      %v5507 = vmax.f32 %v5505, %v5506
      %v5508 = vrot.slane %v5507, 2
      %v5509 = vmax.f32 %v5507, %v5508
      %v5510 = vrot.slane %v5509, 1
      %v5511 = vmax.f32 %v5509, %v5510
      %v5512 = vsel %vm518, %v4560, -inf
      %v5513 = vrot.slane %v5512, 4
      %v5514 = vmax.f32 %v5512, %v5513
      %v5515 = vrot.slane %v5514, 2
      %v5516 = vmax.f32 %v5514, %v5515
      %v5517 = vrot.slane %v5516, 1
      %v5518 = vmax.f32 %v5516, %v5517
      %v5519 = vsel %vm518, %v4567, -inf
      %v5520 = vrot.slane %v5519, 4
      %v5521 = vmax.f32 %v5519, %v5520
      %v5522 = vrot.slane %v5521, 2
      %v5523 = vmax.f32 %v5521, %v5522
      %v5524 = vrot.slane %v5523, 1
      %v5525 = vmax.f32 %v5523, %v5524
      %v5526 = vsel %vm518, %v4568, -inf
      %v5527 = vrot.slane %v5526, 4
      %v5528 = vmax.f32 %v5526, %v5527
      %v5529 = vrot.slane %v5528, 2
      %v5530 = vmax.f32 %v5528, %v5529
      %v5531 = vrot.slane %v5530, 1
      %v5532 = vmax.f32 %v5530, %v5531
      %v5533 = vsel %vm518, %v4575, -inf
      %v5534 = vrot.slane %v5533, 4
      %v5535 = vmax.f32 %v5533, %v5534
      %v5536 = vrot.slane %v5535, 2
      %v5537 = vmax.f32 %v5535, %v5536
      %v5538 = vrot.slane %v5537, 1
      %v5539 = vmax.f32 %v5537, %v5538
      %v5540 = vsel %vm518, %v4576, -inf
      %v5541 = vrot.slane %v5540, 4
      %v5542 = vmax.f32 %v5540, %v5541
      %v5543 = vrot.slane %v5542, 2
      %v5544 = vmax.f32 %v5542, %v5543
      %v5545 = vrot.slane %v5544, 1
      %v5546 = vmax.f32 %v5544, %v5545
      %v5547 = vsel %vm518, %v4583, -inf
      %v5548 = vrot.slane %v5547, 4
      %v5549 = vmax.f32 %v5547, %v5548
      %v5550 = vrot.slane %v5549, 2
      %v5551 = vmax.f32 %v5549, %v5550
      %v5552 = vrot.slane %v5551, 1
      %v5553 = vmax.f32 %v5551, %v5552
      %v5554 = vsel %vm518, %v4584, -inf
      %v5555 = vrot.slane %v5554, 4
      %v5556 = vmax.f32 %v5554, %v5555
      %v5557 = vrot.slane %v5556, 2
      %v5558 = vmax.f32 %v5556, %v5557
      %v5559 = vrot.slane %v5558, 1
      %v5560 = vmax.f32 %v5558, %v5559
      %v5561 = vsel %vm518, %v4591, -inf
      %v5562 = vrot.slane %v5561, 4
      %v5563 = vmax.f32 %v5561, %v5562
      %v5564 = vrot.slane %v5563, 2
      %v5565 = vmax.f32 %v5563, %v5564
      %v5566 = vrot.slane %v5565, 1
      %v5567 = vmax.f32 %v5565, %v5566
      %v5568 = vsel %vm518, %v4592, -inf
      %v5569 = vrot.slane %v5568, 4
      %v5570 = vmax.f32 %v5568, %v5569
      %v5571 = vrot.slane %v5570, 2
      %v5572 = vmax.f32 %v5570, %v5571
      %v5573 = vrot.slane %v5572, 1
      %v5574 = vmax.f32 %v5572, %v5573
      %v5575 = vsel %vm518, %v4599, -inf
      %v5576 = vrot.slane %v5575, 4
      %v5577 = vmax.f32 %v5575, %v5576
      %v5578 = vrot.slane %v5577, 2
      %v5579 = vmax.f32 %v5577, %v5578
      %v5580 = vrot.slane %v5579, 1
      %v5581 = vmax.f32 %v5579, %v5580
      %v5582 = vsel %vm518, %v4600, -inf
      %v5583 = vrot.slane %v5582, 4
      %v5584 = vmax.f32 %v5582, %v5583
      %v5585 = vrot.slane %v5584, 2
      %v5586 = vmax.f32 %v5584, %v5585
      %v5587 = vrot.slane %v5586, 1
      %v5588 = vmax.f32 %v5586, %v5587
      %v5589 = vsel %vm518, %v4607, -inf
      %v5590 = vrot.slane %v5589, 4
      %v5591 = vmax.f32 %v5589, %v5590
      %v5592 = vrot.slane %v5591, 2
      %v5593 = vmax.f32 %v5591, %v5592
      %v5594 = vrot.slane %v5593, 1
      %v5595 = vmax.f32 %v5593, %v5594
      %v5596 = vsel %vm518, %v4608, -inf
      %v5597 = vrot.slane %v5596, 4
      %v5598 = vmax.f32 %v5596, %v5597
      %v5599 = vrot.slane %v5598, 2
      %v5600 = vmax.f32 %v5598, %v5599
      %v5601 = vrot.slane %v5600, 1
      %v5602 = vmax.f32 %v5600, %v5601
      %v5603 = vsel %vm518, %v4615, -inf
      %v5604 = vrot.slane %v5603, 4
      %v5605 = vmax.f32 %v5603, %v5604
      %v5606 = vrot.slane %v5605, 2
      %v5607 = vmax.f32 %v5605, %v5606
      %v5608 = vrot.slane %v5607, 1
      %v5609 = vmax.f32 %v5607, %v5608
      %v5610 = vsel %vm518, %v4616, -inf
      %v5611 = vrot.slane %v5610, 4
      %v5612 = vmax.f32 %v5610, %v5611
      %v5613 = vrot.slane %v5612, 2
      %v5614 = vmax.f32 %v5612, %v5613
      %v5615 = vrot.slane %v5614, 1
      %v5616 = vmax.f32 %v5614, %v5615
      %v5617 = vsel %vm518, %v4623, -inf
      %v5618 = vrot.slane %v5617, 4
      %v5619 = vmax.f32 %v5617, %v5618
      %v5620 = vrot.slane %v5619, 2
      %v5621 = vmax.f32 %v5619, %v5620
      %v5622 = vrot.slane %v5621, 1
      %v5623 = vmax.f32 %v5621, %v5622
      %v5624 = vsel %vm518, %v4624, -inf
      %v5625 = vrot.slane %v5624, 4
      %v5626 = vmax.f32 %v5624, %v5625
      %v5627 = vrot.slane %v5626, 2
      %v5628 = vmax.f32 %v5626, %v5627
      %v5629 = vrot.slane %v5628, 1
      %v5630 = vmax.f32 %v5628, %v5629
      %v5631 = vsel %vm518, %v4631, -inf
      %v5632 = vrot.slane %v5631, 4
      %v5633 = vmax.f32 %v5631, %v5632
      %v5634 = vrot.slane %v5633, 2
      %v5635 = vmax.f32 %v5633, %v5634
      %v5636 = vrot.slane %v5635, 1
      %v5637 = vmax.f32 %v5635, %v5636
      %v5638 = vsel %vm518, %v4632, -inf
      %v5639 = vrot.slane %v5638, 4
      %v5640 = vmax.f32 %v5638, %v5639
      %v5641 = vrot.slane %v5640, 2
      %v5642 = vmax.f32 %v5640, %v5641
      %v5643 = vrot.slane %v5642, 1
      %v5644 = vmax.f32 %v5642, %v5643
      %v5645 = vsel %vm518, %v4639, -inf
      %v5646 = vrot.slane %v5645, 4
      %v5647 = vmax.f32 %v5645, %v5646
      %v5648 = vrot.slane %v5647, 2
      %v5649 = vmax.f32 %v5647, %v5648
      %v5650 = vrot.slane %v5649, 1
      %v5651 = vmax.f32 %v5649, %v5650
      %v5652 = vsel %vm518, %v4640, -inf
      %v5653 = vrot.slane %v5652, 4
      %v5654 = vmax.f32 %v5652, %v5653
      %v5655 = vrot.slane %v5654, 2
      %v5656 = vmax.f32 %v5654, %v5655
      %v5657 = vrot.slane %v5656, 1
      %v5658 = vmax.f32 %v5656, %v5657
      %v5659 = vsel %vm518, %v4647, -inf
      %v5660 = vrot.slane %v5659, 4
      %v5661 = vmax.f32 %v5659, %v5660
      %v5662 = vrot.slane %v5661, 2
      %v5663 = vmax.f32 %v5661, %v5662
      %v5664 = vrot.slane %v5663, 1
      %v5665 = vmax.f32 %v5663, %v5664
      %v5666 = vsel %vm518, %v4648, -inf
      %v5667 = vrot.slane %v5666, 4
      %v5668 = vmax.f32 %v5666, %v5667
      %v5669 = vrot.slane %v5668, 2
      %v5670 = vmax.f32 %v5668, %v5669
      %v5671 = vrot.slane %v5670, 1
      %v5672 = vmax.f32 %v5670, %v5671
      %v5673 = vmax.f32 %v4783, %v4895
      %v5674 = vmax.f32 %v4790, %v4902
      %v5675 = vmax.f32 %v4797, %v4909
      %v5676 = vmax.f32 %v4804, %v4916
      %v5677 = vmax.f32 %v4811, %v4923
      %v5678 = vmax.f32 %v4818, %v4930
      %v5679 = vmax.f32 %v4825, %v4937
      %v5680 = vmax.f32 %v4832, %v4944
      %v5681 = vmax.f32 %v4839, %v4951
      %v5682 = vmax.f32 %v4846, %v4958
      %v5683 = vmax.f32 %v4853, %v4965
      %v5684 = vmax.f32 %v4860, %v4972
      %v5685 = vmax.f32 %v4867, %v4979
      %v5686 = vmax.f32 %v4874, %v4986
      %v5687 = vmax.f32 %v4881, %v4993
      %v5688 = vmax.f32 %v4888, %v5000
      %v5689 = vmax.f32 %v5007, %v5119
      %v5690 = vmax.f32 %v5014, %v5126
      %v5691 = vmax.f32 %v5021, %v5133
      %v5692 = vmax.f32 %v5028, %v5140
      %v5693 = vmax.f32 %v5035, %v5147
      %v5694 = vmax.f32 %v5042, %v5154
      %v5695 = vmax.f32 %v5049, %v5161
      %v5696 = vmax.f32 %v5056, %v5168
      %v5697 = vmax.f32 %v5063, %v5175
      %v5698 = vmax.f32 %v5070, %v5182
      %v5699 = vmax.f32 %v5077, %v5189
      %v5700 = vmax.f32 %v5084, %v5196
      %v5701 = vmax.f32 %v5091, %v5203
      %v5702 = vmax.f32 %v5098, %v5210
      %v5703 = vmax.f32 %v5105, %v5217
      %v5704 = vmax.f32 %v5112, %v5224
      %v5705 = vmax.f32 %v5231, %v5343
      %v5706 = vmax.f32 %v5238, %v5350
      %v5707 = vmax.f32 %v5245, %v5357
      %v5708 = vmax.f32 %v5252, %v5364
      %v5709 = vmax.f32 %v5259, %v5371
      %v5710 = vmax.f32 %v5266, %v5378
      %v5711 = vmax.f32 %v5273, %v5385
      %v5712 = vmax.f32 %v5280, %v5392
      %v5713 = vmax.f32 %v5287, %v5399
      %v5714 = vmax.f32 %v5294, %v5406
      %v5715 = vmax.f32 %v5301, %v5413
      %v5716 = vmax.f32 %v5308, %v5420
      %v5717 = vmax.f32 %v5315, %v5427
      %v5718 = vmax.f32 %v5322, %v5434
      %v5719 = vmax.f32 %v5329, %v5441
      %v5720 = vmax.f32 %v5336, %v5448
      %v5721 = vmax.f32 %v5455, %v5567
      %v5722 = vmax.f32 %v5462, %v5574
      %v5723 = vmax.f32 %v5469, %v5581
      %v5724 = vmax.f32 %v5476, %v5588
      %v5725 = vmax.f32 %v5483, %v5595
      %v5726 = vmax.f32 %v5490, %v5602
      %v5727 = vmax.f32 %v5497, %v5609
      %v5728 = vmax.f32 %v5504, %v5616
      %v5729 = vmax.f32 %v5511, %v5623
      %v5730 = vmax.f32 %v5518, %v5630
      %v5731 = vmax.f32 %v5525, %v5637
      %v5732 = vmax.f32 %v5532, %v5644
      %v5733 = vmax.f32 %v5539, %v5651
      %v5734 = vmax.f32 %v5546, %v5658
      %v5735 = vmax.f32 %v5553, %v5665
      %v5736 = vmax.f32 %v5560, %v5672
      %v5737 = vadd.f32 %v5673, %v2883
      %v5738 = vadd.f32 %v5674, %v2887
      %v5739 = vadd.f32 %v5675, %v2883
      %v5740 = vadd.f32 %v5676, %v2887
      %v5741 = vadd.f32 %v5677, %v2883
      %v5742 = vadd.f32 %v5678, %v2887
      %v5743 = vadd.f32 %v5679, %v2883
      %v5744 = vadd.f32 %v5680, %v2887
      %v5745 = vadd.f32 %v5681, %v2883
      %v5746 = vadd.f32 %v5682, %v2887
      %v5747 = vadd.f32 %v5683, %v2883
      %v5748 = vadd.f32 %v5684, %v2887
      %v5749 = vadd.f32 %v5685, %v2883
      %v5750 = vadd.f32 %v5686, %v2887
      %v5751 = vadd.f32 %v5687, %v2883
      %v5752 = vadd.f32 %v5688, %v2887
      %v5753 = vadd.f32 %v5689, %v2883
      %v5754 = vadd.f32 %v5690, %v2887
      %v5755 = vadd.f32 %v5691, %v2883
      %v5756 = vadd.f32 %v5692, %v2887
      %v5757 = vadd.f32 %v5693, %v2883
      %v5758 = vadd.f32 %v5694, %v2887
      %v5759 = vadd.f32 %v5695, %v2883
      %v5760 = vadd.f32 %v5696, %v2887
      %v5761 = vadd.f32 %v5697, %v2883
      %v5762 = vadd.f32 %v5698, %v2887
      %v5763 = vadd.f32 %v5699, %v2883
      %v5764 = vadd.f32 %v5700, %v2887
      %v5765 = vadd.f32 %v5701, %v2883
      %v5766 = vadd.f32 %v5702, %v2887
      %v5767 = vadd.f32 %v5703, %v2883
      %v5768 = vadd.f32 %v5704, %v2887
      %v5769 = vadd.f32 %v5705, %v2883
      %v5770 = vadd.f32 %v5706, %v2887
      %v5771 = vadd.f32 %v5707, %v2883
      %v5772 = vadd.f32 %v5708, %v2887
      %v5773 = vadd.f32 %v5709, %v2883
      %v5774 = vadd.f32 %v5710, %v2887
      %v5775 = vadd.f32 %v5711, %v2883
      %v5776 = vadd.f32 %v5712, %v2887
      %v5777 = vadd.f32 %v5713, %v2883
      %v5778 = vadd.f32 %v5714, %v2887
      %v5779 = vadd.f32 %v5715, %v2883
      %v5780 = vadd.f32 %v5716, %v2887
      %v5781 = vadd.f32 %v5717, %v2883
      %v5782 = vadd.f32 %v5718, %v2887
      %v5783 = vadd.f32 %v5719, %v2883
      %v5784 = vadd.f32 %v5720, %v2887
      %v5785 = vadd.f32 %v5721, %v2883
      %v5786 = vadd.f32 %v5722, %v2887
      %v5787 = vadd.f32 %v5723, %v2883
      %v5788 = vadd.f32 %v5724, %v2887
      %v5789 = vadd.f32 %v5725, %v2883
      %v5790 = vadd.f32 %v5726, %v2887
      %v5791 = vadd.f32 %v5727, %v2883
      %v5792 = vadd.f32 %v5728, %v2887
      %v5793 = vadd.f32 %v5729, %v2883
      %v5794 = vadd.f32 %v5730, %v2887
      %v5795 = vadd.f32 %v5731, %v2883
      %v5796 = vadd.f32 %v5732, %v2887
      %v5797 = vadd.f32 %v5733, %v2883
      %v5798 = vadd.f32 %v5734, %v2887
      %v5799 = vadd.f32 %v5735, %v2883
      %v5800 = vadd.f32 %v5736, %v2887
      %v5801 = vmax.f32 %v5737, 0.0
      %v5802 = vmax.f32 %v5738, 0.0
      %v5803 = vmax.f32 %v5739, 0.0
      %v5804 = vmax.f32 %v5740, 0.0
      %v5805 = vmax.f32 %v5741, 0.0
      %v5806 = vmax.f32 %v5742, 0.0
      %v5807 = vmax.f32 %v5743, 0.0
      %v5808 = vmax.f32 %v5744, 0.0
      %v5809 = vmax.f32 %v5745, 0.0
      %v5810 = vmax.f32 %v5746, 0.0
      %v5811 = vmax.f32 %v5747, 0.0
      %v5812 = vmax.f32 %v5748, 0.0
      %v5813 = vmax.f32 %v5749, 0.0
      %v5814 = vmax.f32 %v5750, 0.0
      %v5815 = vmax.f32 %v5751, 0.0
      %v5816 = vmax.f32 %v5752, 0.0
      %v5817 = vmax.f32 %v5753, 0.0
      %v5818 = vmax.f32 %v5754, 0.0
      %v5819 = vmax.f32 %v5755, 0.0
      %v5820 = vmax.f32 %v5756, 0.0
      %v5821 = vmax.f32 %v5757, 0.0
      %v5822 = vmax.f32 %v5758, 0.0
      %v5823 = vmax.f32 %v5759, 0.0
      %v5824 = vmax.f32 %v5760, 0.0
      %v5825 = vmax.f32 %v5761, 0.0
      %v5826 = vmax.f32 %v5762, 0.0
      %v5827 = vmax.f32 %v5763, 0.0
      %v5828 = vmax.f32 %v5764, 0.0
      %v5829 = vmax.f32 %v5765, 0.0
      %v5830 = vmax.f32 %v5766, 0.0
      %v5831 = vmax.f32 %v5767, 0.0
      %v5832 = vmax.f32 %v5768, 0.0
      %v5833 = vmax.f32 %v5769, 0.0
      %v5834 = vmax.f32 %v5770, 0.0
      %v5835 = vmax.f32 %v5771, 0.0
      %v5836 = vmax.f32 %v5772, 0.0
      %v5837 = vmax.f32 %v5773, 0.0
      %v5838 = vmax.f32 %v5774, 0.0
      %v5839 = vmax.f32 %v5775, 0.0
      %v5840 = vmax.f32 %v5776, 0.0
      %v5841 = vmax.f32 %v5777, 0.0
      %v5842 = vmax.f32 %v5778, 0.0
      %v5843 = vmax.f32 %v5779, 0.0
      %v5844 = vmax.f32 %v5780, 0.0
      %v5845 = vmax.f32 %v5781, 0.0
      %v5846 = vmax.f32 %v5782, 0.0
      %v5847 = vmax.f32 %v5783, 0.0
      %v5848 = vmax.f32 %v5784, 0.0
      %v5849 = vmax.f32 %v5785, 0.0
      %v5850 = vmax.f32 %v5786, 0.0
      %v5851 = vmax.f32 %v5787, 0.0
      %v5852 = vmax.f32 %v5788, 0.0
      %v5853 = vmax.f32 %v5789, 0.0
      %v5854 = vmax.f32 %v5790, 0.0
      %v5855 = vmax.f32 %v5791, 0.0
      %v5856 = vmax.f32 %v5792, 0.0
      %v5857 = vmax.f32 %v5793, 0.0
      %v5858 = vmax.f32 %v5794, 0.0
      %v5859 = vmax.f32 %v5795, 0.0
      %v5860 = vmax.f32 %v5796, 0.0
      %v5861 = vmax.f32 %v5797, 0.0
      %v5862 = vmax.f32 %v5798, 0.0
      %v5863 = vmax.f32 %v5799, 0.0
      %v5864 = vmax.f32 %v5800, 0.0
      %v5865 = vpack.c.bf16 %v5801, %v5801
      %v5866 = vpack.c.bf16 %v5802, %v5802
      %v5867 = vpack.c.bf16 %v5803, %v5803
      %v5868 = vpack.c.bf16 %v5804, %v5804
      %v5869 = vpack.c.bf16 %v5805, %v5805
      %v5870 = vpack.c.bf16 %v5806, %v5806
      %v5871 = vpack.c.bf16 %v5807, %v5807
      %v5872 = vpack.c.bf16 %v5808, %v5808
      %v5873 = vpack.c.bf16 %v5809, %v5809
      %v5874 = vpack.c.bf16 %v5810, %v5810
      %v5875 = vpack.c.bf16 %v5811, %v5811
      %v5876 = vpack.c.bf16 %v5812, %v5812
      %v5877 = vpack.c.bf16 %v5813, %v5813
      %v5878 = vpack.c.bf16 %v5814, %v5814
      %v5879 = vpack.c.bf16 %v5815, %v5815
      %v5880 = vpack.c.bf16 %v5816, %v5816
      %v5881 = vpack.c.bf16 %v5817, %v5817
      %v5882 = vpack.c.bf16 %v5818, %v5818
      %v5883 = vpack.c.bf16 %v5819, %v5819
      %v5884 = vpack.c.bf16 %v5820, %v5820
      %v5885 = vpack.c.bf16 %v5821, %v5821
      %v5886 = vpack.c.bf16 %v5822, %v5822
      %v5887 = vpack.c.bf16 %v5823, %v5823
      %v5888 = vpack.c.bf16 %v5824, %v5824
      %v5889 = vpack.c.bf16 %v5825, %v5825
      %v5890 = vpack.c.bf16 %v5826, %v5826
      %v5891 = vpack.c.bf16 %v5827, %v5827
      %v5892 = vpack.c.bf16 %v5828, %v5828
      %v5893 = vpack.c.bf16 %v5829, %v5829
      %v5894 = vpack.c.bf16 %v5830, %v5830
      %v5895 = vpack.c.bf16 %v5831, %v5831
      %v5896 = vpack.c.bf16 %v5832, %v5832
      %v5897 = vpack.c.bf16 %v5833, %v5833
      %v5898 = vpack.c.bf16 %v5834, %v5834
      %v5899 = vpack.c.bf16 %v5835, %v5835
      %v5900 = vpack.c.bf16 %v5836, %v5836
      %v5901 = vpack.c.bf16 %v5837, %v5837
      %v5902 = vpack.c.bf16 %v5838, %v5838
      %v5903 = vpack.c.bf16 %v5839, %v5839
      %v5904 = vpack.c.bf16 %v5840, %v5840
      %v5905 = vpack.c.bf16 %v5841, %v5841
      %v5906 = vpack.c.bf16 %v5842, %v5842
      %v5907 = vpack.c.bf16 %v5843, %v5843
      %v5908 = vpack.c.bf16 %v5844, %v5844
      %v5909 = vpack.c.bf16 %v5845, %v5845
      %v5910 = vpack.c.bf16 %v5846, %v5846
      %v5911 = vpack.c.bf16 %v5847, %v5847
      %v5912 = vpack.c.bf16 %v5848, %v5848
      %v5913 = vpack.c.bf16 %v5849, %v5849
      %v5914 = vpack.c.bf16 %v5850, %v5850
      %v5915 = vpack.c.bf16 %v5851, %v5851
      %v5916 = vpack.c.bf16 %v5852, %v5852
      %v5917 = vpack.c.bf16 %v5853, %v5853
      %v5918 = vpack.c.bf16 %v5854, %v5854
      %v5919 = vpack.c.bf16 %v5855, %v5855
      %v5920 = vpack.c.bf16 %v5856, %v5856
      %v5921 = vpack.c.bf16 %v5857, %v5857
      %v5922 = vpack.c.bf16 %v5858, %v5858
      %v5923 = vpack.c.bf16 %v5859, %v5859
      %v5924 = vpack.c.bf16 %v5860, %v5860
      %v5925 = vpack.c.bf16 %v5861, %v5861
      %v5926 = vpack.c.bf16 %v5862, %v5862
      %v5927 = vpack.c.bf16 %v5863, %v5863
      %v5928 = vpack.c.bf16 %v5864, %v5864
      %v5993 = vunpack.c.l.b16 %v5865
      %v5994 = vunpack.c.l.b16 %v5866
      %v5995 = vunpack.c.l.b16 %v5867
      %v5996 = vunpack.c.l.b16 %v5868
      %v5997 = vunpack.c.l.b16 %v5869
      %v5998 = vunpack.c.l.b16 %v5870
      %v5999 = vunpack.c.l.b16 %v5871
      %v6000 = vunpack.c.l.b16 %v5872
      %v6001 = vunpack.c.l.b16 %v5873
      %v6002 = vunpack.c.l.b16 %v5874
      %v6003 = vunpack.c.l.b16 %v5875
      %v6004 = vunpack.c.l.b16 %v5876
      %v6005 = vunpack.c.l.b16 %v5877
      %v6006 = vunpack.c.l.b16 %v5878
      %v6007 = vunpack.c.l.b16 %v5879
      %v6008 = vunpack.c.l.b16 %v5880
      %v6009 = vunpack.c.l.b16 %v5881
      %v6010 = vunpack.c.l.b16 %v5882
      %v6011 = vunpack.c.l.b16 %v5883
      %v6012 = vunpack.c.l.b16 %v5884
      %v6013 = vunpack.c.l.b16 %v5885
      %v6014 = vunpack.c.l.b16 %v5886
      %v6015 = vunpack.c.l.b16 %v5887
      %v6016 = vunpack.c.l.b16 %v5888
      %v6017 = vunpack.c.l.b16 %v5889
      %v6018 = vunpack.c.l.b16 %v5890
      %v6019 = vunpack.c.l.b16 %v5891
      %v6020 = vunpack.c.l.b16 %v5892
      %v6021 = vunpack.c.l.b16 %v5893
      %v6022 = vunpack.c.l.b16 %v5894
      %v6023 = vunpack.c.l.b16 %v5895
      %v6024 = vunpack.c.l.b16 %v5896
      %v6025 = vunpack.c.l.b16 %v5897
      %v6026 = vunpack.c.l.b16 %v5898
      %v6027 = vunpack.c.l.b16 %v5899
      %v6028 = vunpack.c.l.b16 %v5900
      %v6029 = vunpack.c.l.b16 %v5901
      %v6030 = vunpack.c.l.b16 %v5902
      %v6031 = vunpack.c.l.b16 %v5903
      %v6032 = vunpack.c.l.b16 %v5904
      %v6033 = vunpack.c.l.b16 %v5905
      %v6034 = vunpack.c.l.b16 %v5906
      %v6035 = vunpack.c.l.b16 %v5907
      %v6036 = vunpack.c.l.b16 %v5908
      %v6037 = vunpack.c.l.b16 %v5909
      %v6038 = vunpack.c.l.b16 %v5910
      %v6039 = vunpack.c.l.b16 %v5911
      %v6040 = vunpack.c.l.b16 %v5912
      %v6041 = vunpack.c.l.b16 %v5913
      %v6042 = vunpack.c.l.b16 %v5914
      %v6043 = vunpack.c.l.b16 %v5915
      %v6044 = vunpack.c.l.b16 %v5916
      %v6045 = vunpack.c.l.b16 %v5917
      %v6046 = vunpack.c.l.b16 %v5918
      %v6047 = vunpack.c.l.b16 %v5919
      %v6048 = vunpack.c.l.b16 %v5920
      %v6049 = vunpack.c.l.b16 %v5921
      %v6050 = vunpack.c.l.b16 %v5922
      %v6051 = vunpack.c.l.b16 %v5923
      %v6052 = vunpack.c.l.b16 %v5924
      %v6053 = vunpack.c.l.b16 %v5925
      %v6054 = vunpack.c.l.b16 %v5926
      %v6055 = vunpack.c.l.b16 %v5927
      %v6056 = vunpack.c.l.b16 %v5928
      %v6057 = vpack.c.b16 %v5994, %v5993
      %v6058 = vpack.c.b16 %v5996, %v5995
      %v6059 = vpack.c.b16 %v5998, %v5997
      %v6060 = vpack.c.b16 %v6000, %v5999
      %v6061 = vpack.c.b16 %v6002, %v6001
      %v6062 = vpack.c.b16 %v6004, %v6003
      %v6063 = vpack.c.b16 %v6006, %v6005
      %v6064 = vpack.c.b16 %v6008, %v6007
      %v6065 = vpack.c.b16 %v6010, %v6009
      %v6066 = vpack.c.b16 %v6012, %v6011
      %v6067 = vpack.c.b16 %v6014, %v6013
      %v6068 = vpack.c.b16 %v6016, %v6015
      %v6069 = vpack.c.b16 %v6018, %v6017
      %v6070 = vpack.c.b16 %v6020, %v6019
      %v6071 = vpack.c.b16 %v6022, %v6021
      %v6072 = vpack.c.b16 %v6024, %v6023
      %v6073 = vpack.c.b16 %v6026, %v6025
      %v6074 = vpack.c.b16 %v6028, %v6027
      %v6075 = vpack.c.b16 %v6030, %v6029
      %v6076 = vpack.c.b16 %v6032, %v6031
      %v6077 = vpack.c.b16 %v6034, %v6033
      %v6078 = vpack.c.b16 %v6036, %v6035
      %v6079 = vpack.c.b16 %v6038, %v6037
      %v6080 = vpack.c.b16 %v6040, %v6039
      %v6081 = vpack.c.b16 %v6042, %v6041
      %v6082 = vpack.c.b16 %v6044, %v6043
      %v6083 = vpack.c.b16 %v6046, %v6045
      %v6084 = vpack.c.b16 %v6048, %v6047
      %v6085 = vpack.c.b16 %v6050, %v6049
      %v6086 = vpack.c.b16 %v6052, %v6051
      %v6087 = vpack.c.b16 %v6054, %v6053
      %v6088 = vpack.c.b16 %v6056, %v6055
      %v6089 = vunpack.c.l.b16 %v6057
      %v6090 = vunpack.c.h.b16 %v6057
      %v6091 = vunpack.c.l.b16 %v6058
      %v6092 = vunpack.c.h.b16 %v6058
      %v6093 = vunpack.c.l.b16 %v6059
      %v6094 = vunpack.c.h.b16 %v6059
      %v6095 = vunpack.c.l.b16 %v6060
      %v6096 = vunpack.c.h.b16 %v6060
      %v6097 = vunpack.c.l.b16 %v6061
      %v6098 = vunpack.c.h.b16 %v6061
      %v6099 = vunpack.c.l.b16 %v6062
      %v6100 = vunpack.c.h.b16 %v6062
      %v6101 = vunpack.c.l.b16 %v6063
      %v6102 = vunpack.c.h.b16 %v6063
      %v6103 = vunpack.c.l.b16 %v6064
      %v6104 = vunpack.c.h.b16 %v6064
      %v6105 = vunpack.c.l.b16 %v6065
      %v6106 = vunpack.c.h.b16 %v6065
      %v6107 = vunpack.c.l.b16 %v6066
      %v6108 = vunpack.c.h.b16 %v6066
      %v6109 = vunpack.c.l.b16 %v6067
      %v6110 = vunpack.c.h.b16 %v6067
      %v6111 = vunpack.c.l.b16 %v6068
      %v6112 = vunpack.c.h.b16 %v6068
      %v6113 = vunpack.c.l.b16 %v6069
      %v6114 = vunpack.c.h.b16 %v6069
      %v6115 = vunpack.c.l.b16 %v6070
      %v6116 = vunpack.c.h.b16 %v6070
      %v6117 = vunpack.c.l.b16 %v6071
      %v6118 = vunpack.c.h.b16 %v6071
      %v6119 = vunpack.c.l.b16 %v6072
      %v6120 = vunpack.c.h.b16 %v6072
      %v6121 = vunpack.c.l.b16 %v6073
      %v6122 = vunpack.c.h.b16 %v6073
      %v6123 = vunpack.c.l.b16 %v6074
      %v6124 = vunpack.c.h.b16 %v6074
      %v6125 = vunpack.c.l.b16 %v6075
      %v6126 = vunpack.c.h.b16 %v6075
      %v6127 = vunpack.c.l.b16 %v6076
      %v6128 = vunpack.c.h.b16 %v6076
      %v6129 = vunpack.c.l.b16 %v6077
      %v6130 = vunpack.c.h.b16 %v6077
      %v6131 = vunpack.c.l.b16 %v6078
      %v6132 = vunpack.c.h.b16 %v6078
      %v6133 = vunpack.c.l.b16 %v6079
      %v6134 = vunpack.c.h.b16 %v6079
      %v6135 = vunpack.c.l.b16 %v6080
      %v6136 = vunpack.c.h.b16 %v6080
      %v6137 = vunpack.c.l.b16 %v6081
      %v6138 = vunpack.c.h.b16 %v6081
      %v6139 = vunpack.c.l.b16 %v6082
      %v6140 = vunpack.c.h.b16 %v6082
      %v6141 = vunpack.c.l.b16 %v6083
      %v6142 = vunpack.c.h.b16 %v6083
      %v6143 = vunpack.c.l.b16 %v6084
      %v6144 = vunpack.c.h.b16 %v6084
      %v6145 = vunpack.c.l.b16 %v6085
      %v6146 = vunpack.c.h.b16 %v6085
      %v6147 = vunpack.c.l.b16 %v6086
      %v6148 = vunpack.c.h.b16 %v6086
      %v6149 = vunpack.c.l.b16 %v6087
      %v6150 = vunpack.c.h.b16 %v6087
      %v6151 = vunpack.c.l.b16 %v6088
      %v6152 = vunpack.c.h.b16 %v6088
      %v6153 = vrot.slane %v6089, 7
      %v6154 = vrot.slane %v6091, 6
      %v6155 = vsel %vm3308, %v6154, %v6153
      %v6156 = vrot.slane %v6093, 5
      %v6157 = vsel %vm3311, %v6156, %v6155
      %v6158 = vrot.slane %v6095, 4
      %v6159 = vsel %vm3314, %v6158, %v6157
      %v6160 = vrot.slane %v6097, 3
      %v6161 = vsel %vm3317, %v6160, %v6159
      %v6162 = vrot.slane %v6099, 2
      %v6163 = vsel %vm3320, %v6162, %v6161
      %v6164 = vrot.slane %v6101, 1
      %v6165 = vsel %vm3323, %v6164, %v6163
      %v6166 = vrot.slane %v6090, 7
      %v6167 = vrot.slane %v6092, 6
      %v6168 = vsel %vm3308, %v6167, %v6166
      %v6169 = vrot.slane %v6094, 5
      %v6170 = vsel %vm3311, %v6169, %v6168
      %v6171 = vrot.slane %v6096, 4
      %v6172 = vsel %vm3314, %v6171, %v6170
      %v6173 = vrot.slane %v6098, 3
      %v6174 = vsel %vm3317, %v6173, %v6172
      %v6175 = vrot.slane %v6100, 2
      %v6176 = vsel %vm3320, %v6175, %v6174
      %v6177 = vrot.slane %v6102, 1
      %v6178 = vsel %vm3323, %v6177, %v6176
      %v6179 = vrot.slane %v6105, 7
      %v6180 = vrot.slane %v6107, 6
      %v6181 = vsel %vm3308, %v6180, %v6179
      %v6182 = vrot.slane %v6109, 5
      %v6183 = vsel %vm3311, %v6182, %v6181
      %v6184 = vrot.slane %v6111, 4
      %v6185 = vsel %vm3314, %v6184, %v6183
      %v6186 = vrot.slane %v6113, 3
      %v6187 = vsel %vm3317, %v6186, %v6185
      %v6188 = vrot.slane %v6115, 2
      %v6189 = vsel %vm3320, %v6188, %v6187
      %v6190 = vrot.slane %v6117, 1
      %v6191 = vsel %vm3323, %v6190, %v6189
      %v6192 = vrot.slane %v6106, 7
      %v6193 = vrot.slane %v6108, 6
      %v6194 = vsel %vm3308, %v6193, %v6192
      %v6195 = vrot.slane %v6110, 5
      %v6196 = vsel %vm3311, %v6195, %v6194
      %v6197 = vrot.slane %v6112, 4
      %v6198 = vsel %vm3314, %v6197, %v6196
      %v6199 = vrot.slane %v6114, 3
      %v6200 = vsel %vm3317, %v6199, %v6198
      %v6201 = vrot.slane %v6116, 2
      %v6202 = vsel %vm3320, %v6201, %v6200
      %v6203 = vrot.slane %v6118, 1
      %v6204 = vsel %vm3323, %v6203, %v6202
      %v6205 = vrot.slane %v6121, 7
      %v6206 = vrot.slane %v6123, 6
      %v6207 = vsel %vm3308, %v6206, %v6205
      %v6208 = vrot.slane %v6125, 5
      %v6209 = vsel %vm3311, %v6208, %v6207
      %v6210 = vrot.slane %v6127, 4
      %v6211 = vsel %vm3314, %v6210, %v6209
      %v6212 = vrot.slane %v6129, 3
      %v6213 = vsel %vm3317, %v6212, %v6211
      %v6214 = vrot.slane %v6131, 2
      %v6215 = vsel %vm3320, %v6214, %v6213
      %v6216 = vrot.slane %v6133, 1
      %v6217 = vsel %vm3323, %v6216, %v6215
      %v6218 = vrot.slane %v6122, 7
      %v6219 = vrot.slane %v6124, 6
      %v6220 = vsel %vm3308, %v6219, %v6218
      %v6221 = vrot.slane %v6126, 5
      %v6222 = vsel %vm3311, %v6221, %v6220
      %v6223 = vrot.slane %v6128, 4
      %v6224 = vsel %vm3314, %v6223, %v6222
      %v6225 = vrot.slane %v6130, 3
      %v6226 = vsel %vm3317, %v6225, %v6224
      %v6227 = vrot.slane %v6132, 2
      %v6228 = vsel %vm3320, %v6227, %v6226
      %v6229 = vrot.slane %v6134, 1
      %v6230 = vsel %vm3323, %v6229, %v6228
      %v6231 = vrot.slane %v6137, 7
      %v6232 = vrot.slane %v6139, 6
      %v6233 = vsel %vm3308, %v6232, %v6231
      %v6234 = vrot.slane %v6141, 5
      %v6235 = vsel %vm3311, %v6234, %v6233
      %v6236 = vrot.slane %v6143, 4
      %v6237 = vsel %vm3314, %v6236, %v6235
      %v6238 = vrot.slane %v6145, 3
      %v6239 = vsel %vm3317, %v6238, %v6237
      %v6240 = vrot.slane %v6147, 2
      %v6241 = vsel %vm3320, %v6240, %v6239
      %v6242 = vrot.slane %v6149, 1
      %v6243 = vsel %vm3323, %v6242, %v6241
      %v6244 = vrot.slane %v6138, 7
      %v6245 = vrot.slane %v6140, 6
      %v6246 = vsel %vm3308, %v6245, %v6244
      %v6247 = vrot.slane %v6142, 5
      %v6248 = vsel %vm3311, %v6247, %v6246
      %v6249 = vrot.slane %v6144, 4
      %v6250 = vsel %vm3314, %v6249, %v6248
      %v6251 = vrot.slane %v6146, 3
      %v6252 = vsel %vm3317, %v6251, %v6250
      %v6253 = vrot.slane %v6148, 2
      %v6254 = vsel %vm3320, %v6253, %v6252
      %v6255 = vrot.slane %v6150, 1
      %v6256 = vsel %vm3323, %v6255, %v6254
      %v6257 = vpack.c.b16 %v6178, %v6165
      %v6258 = vpack.c.b16 %v6104, %v6103
      %v6259 = vpack.c.b16 %v6204, %v6191
      %v6260 = vpack.c.b16 %v6120, %v6119
      %v6261 = vpack.c.b16 %v6230, %v6217
      %v6262 = vpack.c.b16 %v6136, %v6135
      %v6263 = vpack.c.b16 %v6256, %v6243
      %v6264 = vpack.c.b16 %v6152, %v6151
      %s6273 = scalar_lea.vmem [#allocation2], 80
      %v6274 = vld [vmem:[%s6273] sm:$0xff]
      %v6275 = vsel %vm3437, %v6257, %v6274
      %6276 = vst [vmem:[%s6273] sm:$0xff] %v6275
      %v6277 = vld [vmem:[%s6273 + $0x8] sm:$0x11]
      %v6278 = vsel %vm335, %v6258, %v6277
      %6279 = vst [vmem:[%s6273 + $0x8] sm:$0x11] %v6278
      %v6280 = vld [vmem:[%s6273 + $0x10] sm:$0xff]
      %v6281 = vsel %vm3437, %v6259, %v6280
      %6282 = vst [vmem:[%s6273 + $0x10] sm:$0xff] %v6281
      %v6283 = vld [vmem:[%s6273 + $0x18] sm:$0x11]
      %v6284 = vsel %vm335, %v6260, %v6283
      %6285 = vst [vmem:[%s6273 + $0x18] sm:$0x11] %v6284
      %v6286 = vld [vmem:[%s6273 + $0x20] sm:$0xff]
      %v6287 = vsel %vm3437, %v6261, %v6286
      %6288 = vst [vmem:[%s6273 + $0x20] sm:$0xff] %v6287
      %v6289 = vld [vmem:[%s6273 + $0x28] sm:$0x11]
      %v6290 = vsel %vm335, %v6262, %v6289
      %6291 = vst [vmem:[%s6273 + $0x28] sm:$0x11] %v6290
      %v6292 = vld [vmem:[%s6273 + $0x30] sm:$0xff]
      %v6293 = vsel %vm3437, %v6263, %v6292
      %6294 = vst [vmem:[%s6273 + $0x30] sm:$0xff] %v6293
      %v6295 = vld [vmem:[%s6273 + $0x38] sm:$0x11]
      %v6296 = vsel %vm335, %v6264, %v6295
      %6297 = vst [vmem:[%s6273 + $0x38] sm:$0x11] %v6296
      %v6298 = vld [vmem:[#allocation2] sm:$0xff]
      %v6299 = vld [vmem:[#allocation2 + $0x10] sm:$0xff]
      %v6300 = vld [vmem:[#allocation2 + $0x20] sm:$0xff]
      %v6301 = vld [vmem:[#allocation2 + $0x30] sm:$0xff]
      %v6302 = vld [vmem:[#allocation2 + $0x40] sm:$0xff]
      %v6303 = vld [vmem:[#allocation2 + $0x50] sm:$0xff]
      %v6304 = vld [vmem:[#allocation2 + $0x60] sm:$0xff]
      %v6305 = vld [vmem:[#allocation2 + $0x70] sm:$0xff]
      %v6306 = vld [vmem:[%s3] sm:$0xff]
      %v6307 = vld [vmem:[%s3 + $0x8] sm:$0xff]
      %v6308 = vld [vmem:[%s3 + $0x10] sm:$0xff]
      %v6309 = vld [vmem:[%s3 + $0x18] sm:$0xff]
      %v6310 = vld [vmem:[%s3 + $0x20] sm:$0xff]
      %v6311 = vld [vmem:[%s3 + $0x28] sm:$0xff]
      %v6312 = vld [vmem:[%s3 + $0x30] sm:$0xff]
      %v6313 = vld [vmem:[%s3 + $0x38] sm:$0xff]
      %v6314 = vld [vmem:[%s3 + $0x40] sm:$0xff]
      %v6315 = vld [vmem:[%s3 + $0x48] sm:$0xff]
      %v6316 = vld [vmem:[%s3 + $0x50] sm:$0xff]
      %v6317 = vld [vmem:[%s3 + $0x58] sm:$0xff]
      %v6318 = vld [vmem:[%s3 + $0x60] sm:$0xff]
      %v6319 = vld [vmem:[%s3 + $0x68] sm:$0xff]
      %v6320 = vld [vmem:[%s3 + $0x70] sm:$0xff]
      %v6321 = vld [vmem:[%s3 + $0x78] sm:$0xff]
      %v6322 = vld [vmem:[%s3 + $0x80] sm:$0xff]
      %v6323 = vld [vmem:[%s3 + $0x88] sm:$0xff]
      %v6324 = vld [vmem:[%s3 + $0x90] sm:$0xff]
      %v6325 = vld [vmem:[%s3 + $0x98] sm:$0xff]
      %v6326 = vld [vmem:[%s3 + $0xa0] sm:$0xff]
      %v6327 = vld [vmem:[%s3 + $0xa8] sm:$0xff]
      %v6328 = vld [vmem:[%s3 + $0xb0] sm:$0xff]
      %v6329 = vld [vmem:[%s3 + $0xb8] sm:$0xff]
      %v6330 = vld [vmem:[%s3 + $0xc0] sm:$0xff]
      %v6331 = vld [vmem:[%s3 + $0xc8] sm:$0xff]
      %v6332 = vld [vmem:[%s3 + $0xd0] sm:$0xff]
      %v6333 = vld [vmem:[%s3 + $0xd8] sm:$0xff]
      %v6334 = vld [vmem:[%s3 + $0xe0] sm:$0xff]
      %v6335 = vld [vmem:[%s3 + $0xe8] sm:$0xff]
      %v6336 = vld [vmem:[%s3 + $0xf0] sm:$0xff]
      %v6337 = vld [vmem:[%s3 + $0xf8] sm:$0xff]
      %v6338 = vld [vmem:[#allocation2 + $0x8] sm:$0x11]
      %v6339 = vld [vmem:[#allocation2 + $0x18] sm:$0x11]
      %v6340 = vld [vmem:[#allocation2 + $0x28] sm:$0x11]
      %v6341 = vld [vmem:[#allocation2 + $0x38] sm:$0x11]
      %v6342 = vld [vmem:[#allocation2 + $0x48] sm:$0x11]
      %v6343 = vld [vmem:[#allocation2 + $0x58] sm:$0x11]
      %v6344 = vld [vmem:[#allocation2 + $0x68] sm:$0x11]
      %v6345 = vld [vmem:[#allocation2 + $0x78] sm:$0x11]
      %vm6346 = vsmask.f32 3328
      %vm6347 = vsmask.f32 7440
      %vm6348 = vmor %vm6346, %vm6347
      %v6350 = vshrl.u32 %v6298, 16
      %v6352 = vrot.slane %v6350, 4
      %v6353 = vshll.u32 %v6298, 16
      %v6355 = vrot.slane %v6353, 5
      %v6356 = vor.u32 %v6352, %v6355
      %v6357 = vrot.slane %v6356, 4
      %v6359 = vshll.u32 %v6338, 16
      %v6361 = vrot.slane %v6359, 5
      %v6362 = vsel %vm6348, %v6357, %v6361
      %v6364 = vshrl.u32 %v6299, 16
      %v6366 = vrot.slane %v6364, 4
      %v6367 = vshll.u32 %v6299, 16
      %v6369 = vrot.slane %v6367, 5
      %v6370 = vor.u32 %v6366, %v6369
      %v6371 = vrot.slane %v6370, 4
      %v6373 = vshll.u32 %v6339, 16
      %v6375 = vrot.slane %v6373, 5
      %v6376 = vsel %vm6348, %v6371, %v6375
      %v6378 = vshrl.u32 %v6300, 16
      %v6380 = vrot.slane %v6378, 4
      %v6381 = vshll.u32 %v6300, 16
      %v6383 = vrot.slane %v6381, 5
      %v6384 = vor.u32 %v6380, %v6383
      %v6385 = vrot.slane %v6384, 4
      %v6387 = vshll.u32 %v6340, 16
      %v6389 = vrot.slane %v6387, 5
      %v6390 = vsel %vm6348, %v6385, %v6389
      %v6392 = vshrl.u32 %v6301, 16
      %v6394 = vrot.slane %v6392, 4
      %v6395 = vshll.u32 %v6301, 16
      %v6397 = vrot.slane %v6395, 5
      %v6398 = vor.u32 %v6394, %v6397
      %v6399 = vrot.slane %v6398, 4
      %v6401 = vshll.u32 %v6341, 16
      %v6403 = vrot.slane %v6401, 5
      %v6404 = vsel %vm6348, %v6399, %v6403
      %v6406 = vshrl.u32 %v6302, 16
      %v6408 = vrot.slane %v6406, 4
      %v6409 = vshll.u32 %v6302, 16
      %v6411 = vrot.slane %v6409, 5
      %v6412 = vor.u32 %v6408, %v6411
      %v6413 = vrot.slane %v6412, 4
      %v6415 = vshll.u32 %v6342, 16
      %v6417 = vrot.slane %v6415, 5
      %v6418 = vsel %vm6348, %v6413, %v6417
      %v6420 = vshrl.u32 %v6303, 16
      %v6422 = vrot.slane %v6420, 4
      %v6423 = vshll.u32 %v6303, 16
      %v6425 = vrot.slane %v6423, 5
      %v6426 = vor.u32 %v6422, %v6425
      %v6427 = vrot.slane %v6426, 4
      %v6429 = vshll.u32 %v6343, 16
      %v6431 = vrot.slane %v6429, 5
      %v6432 = vsel %vm6348, %v6427, %v6431
      %v6434 = vshrl.u32 %v6304, 16
      %v6436 = vrot.slane %v6434, 4
      %v6437 = vshll.u32 %v6304, 16
      %v6439 = vrot.slane %v6437, 5
      %v6440 = vor.u32 %v6436, %v6439
      %v6441 = vrot.slane %v6440, 4
      %v6443 = vshll.u32 %v6344, 16
      %v6445 = vrot.slane %v6443, 5
      %v6446 = vsel %vm6348, %v6441, %v6445
      %v6448 = vshrl.u32 %v6305, 16
      %v6450 = vrot.slane %v6448, 4
      %v6451 = vshll.u32 %v6305, 16
      %v6453 = vrot.slane %v6451, 5
      %v6454 = vor.u32 %v6450, %v6453
      %v6455 = vrot.slane %v6454, 4
      %v6457 = vshll.u32 %v6345, 16
      %v6459 = vrot.slane %v6457, 5
      %v6460 = vsel %vm6348, %v6455, %v6459
      %s6461 = scalar_lea.vmem %s3, 256
      %v6462 = vld [vmem:[%s6461] sm:$0xff]
      %v6463 = vld [vmem:[%s6461 + $0x8] sm:$0xff]
      %v6464 = vld [vmem:[%s6461 + $0x10] sm:$0xff]
      %v6465 = vld [vmem:[%s6461 + $0x18] sm:$0xff]
      %v6466 = vld [vmem:[%s6461 + $0x20] sm:$0xff]
      %v6467 = vld [vmem:[%s6461 + $0x28] sm:$0xff]
      %v6468 = vld [vmem:[%s6461 + $0x30] sm:$0xff]
      %v6469 = vld [vmem:[%s6461 + $0x38] sm:$0xff]
      %v6470 = vld [vmem:[%s6461 + $0x40] sm:$0xff]
      %v6471 = vld [vmem:[%s6461 + $0x48] sm:$0xff]
      %v6472 = vld [vmem:[%s6461 + $0x50] sm:$0xff]
      %v6473 = vld [vmem:[%s6461 + $0x58] sm:$0xff]
      %v6474 = vld [vmem:[%s6461 + $0x60] sm:$0xff]
      %v6475 = vld [vmem:[%s6461 + $0x68] sm:$0xff]
      %v6476 = vld [vmem:[%s6461 + $0x70] sm:$0xff]
      %v6477 = vld [vmem:[%s6461 + $0x78] sm:$0xff]
      %v6478 = vld [vmem:[%s6461 + $0x80] sm:$0xff]
      %v6479 = vld [vmem:[%s6461 + $0x88] sm:$0xff]
      %v6480 = vld [vmem:[%s6461 + $0x90] sm:$0xff]
      %v6481 = vld [vmem:[%s6461 + $0x98] sm:$0xff]
      %v6482 = vld [vmem:[%s6461 + $0xa0] sm:$0xff]
      %v6483 = vld [vmem:[%s6461 + $0xa8] sm:$0xff]
      %v6484 = vld [vmem:[%s6461 + $0xb0] sm:$0xff]
      %v6485 = vld [vmem:[%s6461 + $0xb8] sm:$0xff]
      %v6486 = vld [vmem:[%s6461 + $0xc0] sm:$0xff]
      %v6487 = vld [vmem:[%s6461 + $0xc8] sm:$0xff]
      %v6488 = vld [vmem:[%s6461 + $0xd0] sm:$0xff]
      %v6489 = vld [vmem:[%s6461 + $0xd8] sm:$0xff]
      %v6490 = vld [vmem:[%s6461 + $0xe0] sm:$0xff]
      %v6491 = vld [vmem:[%s6461 + $0xe8] sm:$0xff]
      %v6492 = vld [vmem:[%s6461 + $0xf0] sm:$0xff]
      %v6493 = vld [vmem:[%s6461 + $0xf8] sm:$0xff]
      %v6494 = vunpack.c.l.b16 %v6362
      %v6495 = vunpack.c.h.b16 %v6362
      %v6496 = vunpack.c.l.b16 %v6376
      %v6497 = vunpack.c.h.b16 %v6376
      %v6498 = vunpack.c.l.b16 %v6390
      %v6499 = vunpack.c.h.b16 %v6390
      %v6500 = vunpack.c.l.b16 %v6404
      %v6501 = vunpack.c.h.b16 %v6404
      %v6502 = vunpack.c.l.b16 %v6418
      %v6503 = vunpack.c.h.b16 %v6418
      %v6504 = vunpack.c.l.b16 %v6432
      %v6505 = vunpack.c.h.b16 %v6432
      %v6506 = vunpack.c.l.b16 %v6446
      %v6507 = vunpack.c.h.b16 %v6446
      %v6508 = vunpack.c.l.b16 %v6460
      %v6509 = vunpack.c.h.b16 %v6460
      %v6510 = vpack.c.b16 %v6496, %v6494
      %v6511 = vpack.c.b16 %v6497, %v6495
      %v6512 = vpack.c.b16 %v6500, %v6498
      %v6513 = vpack.c.b16 %v6501, %v6499
      %v6514 = vpack.c.b16 %v6504, %v6502
      %v6515 = vpack.c.b16 %v6505, %v6503
      %v6516 = vpack.c.b16 %v6508, %v6506
      %v6517 = vpack.c.b16 %v6509, %v6507
      %v6558 = vunpack.c.l.b16 %v6462
      %v6559 = vunpack.c.h.b16 %v6462
      %v6560 = vunpack.c.l.b16 %v6463
      %v6561 = vunpack.c.h.b16 %v6463
      %v6562 = vunpack.c.l.b16 %v6464
      %v6563 = vunpack.c.h.b16 %v6464
      %v6564 = vunpack.c.l.b16 %v6465
      %v6565 = vunpack.c.h.b16 %v6465
      %v6566 = vunpack.c.l.b16 %v6466
      %v6567 = vunpack.c.h.b16 %v6466
      %v6568 = vunpack.c.l.b16 %v6467
      %v6569 = vunpack.c.h.b16 %v6467
      %v6570 = vunpack.c.l.b16 %v6468
      %v6571 = vunpack.c.h.b16 %v6468
      %v6572 = vunpack.c.l.b16 %v6469
      %v6573 = vunpack.c.h.b16 %v6469
      %v6574 = vunpack.c.l.b16 %v6470
      %v6575 = vunpack.c.h.b16 %v6470
      %v6576 = vunpack.c.l.b16 %v6471
      %v6577 = vunpack.c.h.b16 %v6471
      %v6578 = vunpack.c.l.b16 %v6472
      %v6579 = vunpack.c.h.b16 %v6472
      %v6580 = vunpack.c.l.b16 %v6473
      %v6581 = vunpack.c.h.b16 %v6473
      %v6582 = vunpack.c.l.b16 %v6474
      %v6583 = vunpack.c.h.b16 %v6474
      %v6584 = vunpack.c.l.b16 %v6475
      %v6585 = vunpack.c.h.b16 %v6475
      %v6586 = vunpack.c.l.b16 %v6476
      %v6587 = vunpack.c.h.b16 %v6476
      %v6588 = vunpack.c.l.b16 %v6477
      %v6589 = vunpack.c.h.b16 %v6477
      %v6590 = vunpack.c.l.b16 %v6478
      %v6591 = vunpack.c.h.b16 %v6478
      %v6592 = vunpack.c.l.b16 %v6479
      %v6593 = vunpack.c.h.b16 %v6479
      %v6594 = vunpack.c.l.b16 %v6480
      %v6595 = vunpack.c.h.b16 %v6480
      %v6596 = vunpack.c.l.b16 %v6481
      %v6597 = vunpack.c.h.b16 %v6481
      %v6598 = vunpack.c.l.b16 %v6482
      %v6599 = vunpack.c.h.b16 %v6482
      %v6600 = vunpack.c.l.b16 %v6483
      %v6601 = vunpack.c.h.b16 %v6483
      %v6602 = vunpack.c.l.b16 %v6484
      %v6603 = vunpack.c.h.b16 %v6484
      %v6604 = vunpack.c.l.b16 %v6485
      %v6605 = vunpack.c.h.b16 %v6485
      %v6606 = vunpack.c.l.b16 %v6486
      %v6607 = vunpack.c.h.b16 %v6486
      %v6608 = vunpack.c.l.b16 %v6487
      %v6609 = vunpack.c.h.b16 %v6487
      %v6610 = vunpack.c.l.b16 %v6488
      %v6611 = vunpack.c.h.b16 %v6488
      %v6612 = vunpack.c.l.b16 %v6489
      %v6613 = vunpack.c.h.b16 %v6489
      %v6614 = vunpack.c.l.b16 %v6490
      %v6615 = vunpack.c.h.b16 %v6490
      %v6616 = vunpack.c.l.b16 %v6491
      %v6617 = vunpack.c.h.b16 %v6491
      %v6618 = vunpack.c.l.b16 %v6492
      %v6619 = vunpack.c.h.b16 %v6492
      %v6620 = vunpack.c.l.b16 %v6493
      %v6621 = vunpack.c.h.b16 %v6493
      %v6622 = vpack.c.b16 %v6560, %v6558
      %v6623 = vpack.c.b16 %v6561, %v6559
      %v6624 = vpack.c.b16 %v6564, %v6562
      %v6625 = vpack.c.b16 %v6565, %v6563
      %v6626 = vpack.c.b16 %v6568, %v6566
      %v6627 = vpack.c.b16 %v6569, %v6567
      %v6628 = vpack.c.b16 %v6572, %v6570
      %v6629 = vpack.c.b16 %v6573, %v6571
      %v6630 = vpack.c.b16 %v6576, %v6574
      %v6631 = vpack.c.b16 %v6577, %v6575
      %v6632 = vpack.c.b16 %v6580, %v6578
      %v6633 = vpack.c.b16 %v6581, %v6579
      %v6634 = vpack.c.b16 %v6584, %v6582
      %v6635 = vpack.c.b16 %v6585, %v6583
      %v6636 = vpack.c.b16 %v6588, %v6586
      %v6637 = vpack.c.b16 %v6589, %v6587
      %v6638 = vpack.c.b16 %v6592, %v6590
      %v6639 = vpack.c.b16 %v6593, %v6591
      %v6640 = vpack.c.b16 %v6596, %v6594
      %v6641 = vpack.c.b16 %v6597, %v6595
      %v6642 = vpack.c.b16 %v6600, %v6598
      %v6643 = vpack.c.b16 %v6601, %v6599
      %v6644 = vpack.c.b16 %v6604, %v6602
      %v6645 = vpack.c.b16 %v6605, %v6603
      %v6646 = vpack.c.b16 %v6608, %v6606
      %v6647 = vpack.c.b16 %v6609, %v6607
      %v6648 = vpack.c.b16 %v6612, %v6610
      %v6649 = vpack.c.b16 %v6613, %v6611
      %v6650 = vpack.c.b16 %v6616, %v6614
      %v6651 = vpack.c.b16 %v6617, %v6615
      %v6652 = vpack.c.b16 %v6620, %v6618
      %v6653 = vpack.c.b16 %v6621, %v6619
      %6686 = vmatprep.subr.bf16.mxu0 %v6637
      %6687 = vmatpush1.bf16.msra.mxu0 %v6636
      %6688 = vmatprep.subr.bf16.mxu0 %v6635
      %6689 = vmatpush1.bf16.msra.mxu0 %v6634
      %6690 = vmatprep.subr.bf16.mxu0 %v6633
      %6691 = vmatpush1.bf16.msra.mxu0 %v6632
      %6692 = vmatprep.subr.bf16.mxu0 %v6631
      %6693 = vmatpush1.bf16.msra.mxu0 %v6630
      %6694 = vmatprep.subr.bf16.mxu0 %v6629
      %6695 = vmatpush1.bf16.msra.mxu0 %v6628
      %6696 = vmatprep.subr.bf16.mxu0 %v6627
      %6697 = vmatpush1.bf16.msra.mxu0 %v6626
      %6698 = vmatprep.subr.bf16.mxu0 %v6625
      %6699 = vmatpush1.bf16.msra.mxu0 %v6624
      %6700 = vmatprep.subr.bf16.mxu0 %v6623
      %6701 = vmatpush1.bf16.msra.mxu0 %v6622
      %6702 = vmatprep.subr.bf16.mxu0 %v6653
      %6703 = vmatpush2.bf16.msra.mxu0 %v6652
      %6704 = vmatprep.subr.bf16.mxu0 %v6651
      %6705 = vmatpush2.bf16.msra.mxu0 %v6650
      %6706 = vmatprep.subr.bf16.mxu0 %v6649
      %6707 = vmatpush2.bf16.msra.mxu0 %v6648
      %6708 = vmatprep.subr.bf16.mxu0 %v6647
      %6709 = vmatpush2.bf16.msra.mxu0 %v6646
      %6710 = vmatprep.subr.bf16.mxu0 %v6645
      %6711 = vmatpush2.bf16.msra.mxu0 %v6644
      %6712 = vmatprep.subr.bf16.mxu0 %v6643
      %6713 = vmatpush2.bf16.msra.mxu0 %v6642
      %6714 = vmatprep.subr.bf16.mxu0 %v6641
      %6715 = vmatpush2.bf16.msra.mxu0 %v6640
      %6716 = vmatprep.subr.bf16.mxu0 %v6639
      %6717 = vmatpush2.bf16.msra.mxu0 %v6638
      %6718 = vmatprep.mubr.bf16.mxu0 %v6511
      %6719 = vmatmul.mubr.bf16.gmra.mxu0 %v6510
      %v6720 = vpop.f32.mrf.mxu0
      %v6721 = vadd.f32 0.0, %v6720
      %v6722 = vpop.f32.mrf.mxu0
      %v6723 = vadd.f32 0.0, %v6722
      %v6724 = vpop.f32.mrf.mxu0
      %v6725 = vadd.f32 0.0, %v6724
      %v6726 = vpop.f32.mrf.mxu0
      %v6727 = vadd.f32 0.0, %v6726
      %6728 = vmatprep.mubr.bf16.mxu0 %v6513
      %6729 = vmatmul.mubr.bf16.gmra.mxu0 %v6512
      %v6730 = vpop.f32.mrf.mxu0
      %v6731 = vadd.f32 0.0, %v6730
      %v6732 = vpop.f32.mrf.mxu0
      %v6733 = vadd.f32 0.0, %v6732
      %v6734 = vpop.f32.mrf.mxu0
      %v6735 = vadd.f32 0.0, %v6734
      %v6736 = vpop.f32.mrf.mxu0
      %v6737 = vadd.f32 0.0, %v6736
      %6738 = vmatprep.mubr.bf16.mxu0 %v6515
      %6739 = vmatmul.mubr.bf16.gmra.mxu0 %v6514
      %v6740 = vpop.f32.mrf.mxu0
      %v6741 = vadd.f32 0.0, %v6740
      %v6742 = vpop.f32.mrf.mxu0
      %v6743 = vadd.f32 0.0, %v6742
      %v6744 = vpop.f32.mrf.mxu0
      %v6745 = vadd.f32 0.0, %v6744
      %v6746 = vpop.f32.mrf.mxu0
      %v6747 = vadd.f32 0.0, %v6746
      %6748 = vmatprep.mubr.bf16.mxu0 %v6517
      %6749 = vmatmul.mubr.bf16.gmra.mxu0 %v6516
      %v6750 = vpop.f32.mrf.mxu0
      %v6751 = vadd.f32 0.0, %v6750
      %v6752 = vpop.f32.mrf.mxu0
      %v6753 = vadd.f32 0.0, %v6752
      %v6754 = vpop.f32.mrf.mxu0
      %v6755 = vadd.f32 0.0, %v6754
      %v6756 = vpop.f32.mrf.mxu0
      %v6757 = vadd.f32 0.0, %v6756
      %6758 = vdwg.mxu0
      %v6767 = vunpack.c.l.b16 %v6298
      %v6768 = vunpack.c.h.b16 %v6298
      %v6769 = vunpack.c.l.b16 %v6299
      %v6770 = vunpack.c.h.b16 %v6299
      %v6771 = vunpack.c.l.b16 %v6300
      %v6772 = vunpack.c.h.b16 %v6300
      %v6773 = vunpack.c.l.b16 %v6301
      %v6774 = vunpack.c.h.b16 %v6301
      %v6775 = vunpack.c.l.b16 %v6302
      %v6776 = vunpack.c.h.b16 %v6302
      %v6777 = vunpack.c.l.b16 %v6303
      %v6778 = vunpack.c.h.b16 %v6303
      %v6779 = vunpack.c.l.b16 %v6304
      %v6780 = vunpack.c.h.b16 %v6304
      %v6781 = vunpack.c.l.b16 %v6305
      %v6782 = vunpack.c.h.b16 %v6305
      %v6783 = vpack.c.b16 %v6769, %v6767
      %v6784 = vpack.c.b16 %v6770, %v6768
      %v6785 = vpack.c.b16 %v6773, %v6771
      %v6786 = vpack.c.b16 %v6774, %v6772
      %v6787 = vpack.c.b16 %v6777, %v6775
      %v6788 = vpack.c.b16 %v6778, %v6776
      %v6789 = vpack.c.b16 %v6781, %v6779
      %v6790 = vpack.c.b16 %v6782, %v6780
      %v6831 = vunpack.c.l.b16 %v6306
      %v6832 = vunpack.c.h.b16 %v6306
      %v6833 = vunpack.c.l.b16 %v6307
      %v6834 = vunpack.c.h.b16 %v6307
      %v6835 = vunpack.c.l.b16 %v6308
      %v6836 = vunpack.c.h.b16 %v6308
      %v6837 = vunpack.c.l.b16 %v6309
      %v6838 = vunpack.c.h.b16 %v6309
      %v6839 = vunpack.c.l.b16 %v6310
      %v6840 = vunpack.c.h.b16 %v6310
      %v6841 = vunpack.c.l.b16 %v6311
      %v6842 = vunpack.c.h.b16 %v6311
      %v6843 = vunpack.c.l.b16 %v6312
      %v6844 = vunpack.c.h.b16 %v6312
      %v6845 = vunpack.c.l.b16 %v6313
      %v6846 = vunpack.c.h.b16 %v6313
      %v6847 = vunpack.c.l.b16 %v6314
      %v6848 = vunpack.c.h.b16 %v6314
      %v6849 = vunpack.c.l.b16 %v6315
      %v6850 = vunpack.c.h.b16 %v6315
      %v6851 = vunpack.c.l.b16 %v6316
      %v6852 = vunpack.c.h.b16 %v6316
      %v6853 = vunpack.c.l.b16 %v6317
      %v6854 = vunpack.c.h.b16 %v6317
      %v6855 = vunpack.c.l.b16 %v6318
      %v6856 = vunpack.c.h.b16 %v6318
      %v6857 = vunpack.c.l.b16 %v6319
      %v6858 = vunpack.c.h.b16 %v6319
      %v6859 = vunpack.c.l.b16 %v6320
      %v6860 = vunpack.c.h.b16 %v6320
      %v6861 = vunpack.c.l.b16 %v6321
      %v6862 = vunpack.c.h.b16 %v6321
      %v6863 = vunpack.c.l.b16 %v6322
      %v6864 = vunpack.c.h.b16 %v6322
      %v6865 = vunpack.c.l.b16 %v6323
      %v6866 = vunpack.c.h.b16 %v6323
      %v6867 = vunpack.c.l.b16 %v6324
      %v6868 = vunpack.c.h.b16 %v6324
      %v6869 = vunpack.c.l.b16 %v6325
      %v6870 = vunpack.c.h.b16 %v6325
      %v6871 = vunpack.c.l.b16 %v6326
      %v6872 = vunpack.c.h.b16 %v6326
      %v6873 = vunpack.c.l.b16 %v6327
      %v6874 = vunpack.c.h.b16 %v6327
      %v6875 = vunpack.c.l.b16 %v6328
      %v6876 = vunpack.c.h.b16 %v6328
      %v6877 = vunpack.c.l.b16 %v6329
      %v6878 = vunpack.c.h.b16 %v6329
      %v6879 = vunpack.c.l.b16 %v6330
      %v6880 = vunpack.c.h.b16 %v6330
      %v6881 = vunpack.c.l.b16 %v6331
      %v6882 = vunpack.c.h.b16 %v6331
      %v6883 = vunpack.c.l.b16 %v6332
      %v6884 = vunpack.c.h.b16 %v6332
      %v6885 = vunpack.c.l.b16 %v6333
      %v6886 = vunpack.c.h.b16 %v6333
      %v6887 = vunpack.c.l.b16 %v6334
      %v6888 = vunpack.c.h.b16 %v6334
      %v6889 = vunpack.c.l.b16 %v6335
      %v6890 = vunpack.c.h.b16 %v6335
      %v6891 = vunpack.c.l.b16 %v6336
      %v6892 = vunpack.c.h.b16 %v6336
      %v6893 = vunpack.c.l.b16 %v6337
      %v6894 = vunpack.c.h.b16 %v6337
      %v6895 = vpack.c.b16 %v6833, %v6831
      %v6896 = vpack.c.b16 %v6834, %v6832
      %v6897 = vpack.c.b16 %v6837, %v6835
      %v6898 = vpack.c.b16 %v6838, %v6836
      %v6899 = vpack.c.b16 %v6841, %v6839
      %v6900 = vpack.c.b16 %v6842, %v6840
      %v6901 = vpack.c.b16 %v6845, %v6843
      %v6902 = vpack.c.b16 %v6846, %v6844
      %v6903 = vpack.c.b16 %v6849, %v6847
      %v6904 = vpack.c.b16 %v6850, %v6848
      %v6905 = vpack.c.b16 %v6853, %v6851
      %v6906 = vpack.c.b16 %v6854, %v6852
      %v6907 = vpack.c.b16 %v6857, %v6855
      %v6908 = vpack.c.b16 %v6858, %v6856
      %v6909 = vpack.c.b16 %v6861, %v6859
      %v6910 = vpack.c.b16 %v6862, %v6860
      %v6911 = vpack.c.b16 %v6865, %v6863
      %v6912 = vpack.c.b16 %v6866, %v6864
      %v6913 = vpack.c.b16 %v6869, %v6867
      %v6914 = vpack.c.b16 %v6870, %v6868
      %v6915 = vpack.c.b16 %v6873, %v6871
      %v6916 = vpack.c.b16 %v6874, %v6872
      %v6917 = vpack.c.b16 %v6877, %v6875
      %v6918 = vpack.c.b16 %v6878, %v6876
      %v6919 = vpack.c.b16 %v6881, %v6879
      %v6920 = vpack.c.b16 %v6882, %v6880
      %v6921 = vpack.c.b16 %v6885, %v6883
      %v6922 = vpack.c.b16 %v6886, %v6884
      %v6923 = vpack.c.b16 %v6889, %v6887
      %v6924 = vpack.c.b16 %v6890, %v6888
      %v6925 = vpack.c.b16 %v6893, %v6891
      %v6926 = vpack.c.b16 %v6894, %v6892
      %6959 = vmatprep.subr.bf16.mxu0 %v6910
      %6960 = vmatpush1.bf16.msra.mxu0 %v6909
      %6961 = vmatprep.subr.bf16.mxu0 %v6908
      %6962 = vmatpush1.bf16.msra.mxu0 %v6907
      %6963 = vmatprep.subr.bf16.mxu0 %v6906
      %6964 = vmatpush1.bf16.msra.mxu0 %v6905
      %6965 = vmatprep.subr.bf16.mxu0 %v6904
      %6966 = vmatpush1.bf16.msra.mxu0 %v6903
      %6967 = vmatprep.subr.bf16.mxu0 %v6902
      %6968 = vmatpush1.bf16.msra.mxu0 %v6901
      %6969 = vmatprep.subr.bf16.mxu0 %v6900
      %6970 = vmatpush1.bf16.msra.mxu0 %v6899
      %6971 = vmatprep.subr.bf16.mxu0 %v6898
      %6972 = vmatpush1.bf16.msra.mxu0 %v6897
      %6973 = vmatprep.subr.bf16.mxu0 %v6896
      %6974 = vmatpush1.bf16.msra.mxu0 %v6895
      %6975 = vmatprep.subr.bf16.mxu0 %v6926
      %6976 = vmatpush2.bf16.msra.mxu0 %v6925
      %6977 = vmatprep.subr.bf16.mxu0 %v6924
      %6978 = vmatpush2.bf16.msra.mxu0 %v6923
      %6979 = vmatprep.subr.bf16.mxu0 %v6922
      %6980 = vmatpush2.bf16.msra.mxu0 %v6921
      %6981 = vmatprep.subr.bf16.mxu0 %v6920
      %6982 = vmatpush2.bf16.msra.mxu0 %v6919
      %6983 = vmatprep.subr.bf16.mxu0 %v6918
      %6984 = vmatpush2.bf16.msra.mxu0 %v6917
      %6985 = vmatprep.subr.bf16.mxu0 %v6916
      %6986 = vmatpush2.bf16.msra.mxu0 %v6915
      %6987 = vmatprep.subr.bf16.mxu0 %v6914
      %6988 = vmatpush2.bf16.msra.mxu0 %v6913
      %6989 = vmatprep.subr.bf16.mxu0 %v6912
      %6990 = vmatpush2.bf16.msra.mxu0 %v6911
      %6991 = vmatprep.mubr.bf16.mxu0 %v6784
      %6992 = vmatmul.mubr.bf16.gmra.mxu0 %v6783
      %v6993 = vpop.f32.mrf.mxu0
      %v6994 = vadd.f32 %v6721, %v6993
      %v6995 = vpop.f32.mrf.mxu0
      %v6996 = vadd.f32 %v6723, %v6995
      %v6997 = vpop.f32.mrf.mxu0
      %v6998 = vadd.f32 %v6725, %v6997
      %v6999 = vpop.f32.mrf.mxu0
      %v7000 = vadd.f32 %v6727, %v6999
      %7001 = vmatprep.mubr.bf16.mxu0 %v6786
      %7002 = vmatmul.mubr.bf16.gmra.mxu0 %v6785
      %v7003 = vpop.f32.mrf.mxu0
      %v7004 = vadd.f32 %v6731, %v7003
      %v7005 = vpop.f32.mrf.mxu0
      %v7006 = vadd.f32 %v6733, %v7005
      %v7007 = vpop.f32.mrf.mxu0
      %v7008 = vadd.f32 %v6735, %v7007
      %v7009 = vpop.f32.mrf.mxu0
      %v7010 = vadd.f32 %v6737, %v7009
      %7011 = vmatprep.mubr.bf16.mxu0 %v6788
      %7012 = vmatmul.mubr.bf16.gmra.mxu0 %v6787
      %v7013 = vpop.f32.mrf.mxu0
      %v7014 = vadd.f32 %v6741, %v7013
      %v7015 = vpop.f32.mrf.mxu0
      %v7016 = vadd.f32 %v6743, %v7015
      %v7017 = vpop.f32.mrf.mxu0
      %v7018 = vadd.f32 %v6745, %v7017
      %v7019 = vpop.f32.mrf.mxu0
      %v7020 = vadd.f32 %v6747, %v7019
      %7021 = vmatprep.mubr.bf16.mxu0 %v6790
      %7022 = vmatmul.mubr.bf16.gmra.mxu0 %v6789
      %v7023 = vpop.f32.mrf.mxu0
      %v7024 = vadd.f32 %v6751, %v7023
      %v7025 = vpop.f32.mrf.mxu0
      %v7026 = vadd.f32 %v6753, %v7025
      %v7027 = vpop.f32.mrf.mxu0
      %v7028 = vadd.f32 %v6755, %v7027
      %v7029 = vpop.f32.mrf.mxu0
      %v7030 = vadd.f32 %v6757, %v7029
      %7031 = vdwg.mxu0
      %v7032 = vld [vmem:[#allocation2] sm:$0xee]
      %v7033 = vld [vmem:[#allocation2 + $0x10] sm:$0xee]
      %v7034 = vld [vmem:[#allocation2 + $0x20] sm:$0xee]
      %v7035 = vld [vmem:[#allocation2 + $0x30] sm:$0xee]
      %v7036 = vld [vmem:[#allocation2 + $0x40] sm:$0xee]
      %v7037 = vld [vmem:[#allocation2 + $0x50] sm:$0xee]
      %v7038 = vld [vmem:[#allocation2 + $0x60] sm:$0xee]
      %v7039 = vld [vmem:[#allocation2 + $0x70] sm:$0xee]
      %vm7056 = vcmask 1042432
      %vm7057 = vcmask 1046532
      %vm7058 = vmor %vm7056, %vm7057
      %v7059 = vrot.slane %v7032, 5
      %v7060 = vrot.slane %v7059, 4
      %v7061 = vrot.slane %v6338, 5
      %v7062 = vsel %vm7058, %v7060, %v7061
      %v7063 = vrot.slane %v7033, 5
      %v7064 = vrot.slane %v7063, 4
      %v7065 = vrot.slane %v6339, 5
      %v7066 = vsel %vm7058, %v7064, %v7065
      %v7067 = vrot.slane %v7034, 5
      %v7068 = vrot.slane %v7067, 4
      %v7069 = vrot.slane %v6340, 5
      %v7070 = vsel %vm7058, %v7068, %v7069
      %v7071 = vrot.slane %v7035, 5
      %v7072 = vrot.slane %v7071, 4
      %v7073 = vrot.slane %v6341, 5
      %v7074 = vsel %vm7058, %v7072, %v7073
      %v7075 = vrot.slane %v7036, 5
      %v7076 = vrot.slane %v7075, 4
      %v7077 = vrot.slane %v6342, 5
      %v7078 = vsel %vm7058, %v7076, %v7077
      %v7079 = vrot.slane %v7037, 5
      %v7080 = vrot.slane %v7079, 4
      %v7081 = vrot.slane %v6343, 5
      %v7082 = vsel %vm7058, %v7080, %v7081
      %v7083 = vrot.slane %v7038, 5
      %v7084 = vrot.slane %v7083, 4
      %v7085 = vrot.slane %v6344, 5
      %v7086 = vsel %vm7058, %v7084, %v7085
      %v7087 = vrot.slane %v7039, 5
      %v7088 = vrot.slane %v7087, 4
      %v7089 = vrot.slane %v6345, 5
      %v7090 = vsel %vm7058, %v7088, %v7089
      %s7091 = scalar_lea.vmem %s3, 512
      %v7092 = vld [vmem:[%s7091] sm:$0xff]
      %v7093 = vld [vmem:[%s7091 + $0x8] sm:$0xff]
      %v7094 = vld [vmem:[%s7091 + $0x10] sm:$0xff]
      %v7095 = vld [vmem:[%s7091 + $0x18] sm:$0xff]
      %v7096 = vld [vmem:[%s7091 + $0x20] sm:$0xff]
      %v7097 = vld [vmem:[%s7091 + $0x28] sm:$0xff]
      %v7098 = vld [vmem:[%s7091 + $0x30] sm:$0xff]
      %v7099 = vld [vmem:[%s7091 + $0x38] sm:$0xff]
      %v7100 = vld [vmem:[%s7091 + $0x40] sm:$0xff]
      %v7101 = vld [vmem:[%s7091 + $0x48] sm:$0xff]
      %v7102 = vld [vmem:[%s7091 + $0x50] sm:$0xff]
      %v7103 = vld [vmem:[%s7091 + $0x58] sm:$0xff]
      %v7104 = vld [vmem:[%s7091 + $0x60] sm:$0xff]
      %v7105 = vld [vmem:[%s7091 + $0x68] sm:$0xff]
      %v7106 = vld [vmem:[%s7091 + $0x70] sm:$0xff]
      %v7107 = vld [vmem:[%s7091 + $0x78] sm:$0xff]
      %v7108 = vld [vmem:[%s7091 + $0x80] sm:$0xff]
      %v7109 = vld [vmem:[%s7091 + $0x88] sm:$0xff]
      %v7110 = vld [vmem:[%s7091 + $0x90] sm:$0xff]
      %v7111 = vld [vmem:[%s7091 + $0x98] sm:$0xff]
      %v7112 = vld [vmem:[%s7091 + $0xa0] sm:$0xff]
      %v7113 = vld [vmem:[%s7091 + $0xa8] sm:$0xff]
      %v7114 = vld [vmem:[%s7091 + $0xb0] sm:$0xff]
      %v7115 = vld [vmem:[%s7091 + $0xb8] sm:$0xff]
      %v7116 = vld [vmem:[%s7091 + $0xc0] sm:$0xff]
      %v7117 = vld [vmem:[%s7091 + $0xc8] sm:$0xff]
      %v7118 = vld [vmem:[%s7091 + $0xd0] sm:$0xff]
      %v7119 = vld [vmem:[%s7091 + $0xd8] sm:$0xff]
      %v7120 = vld [vmem:[%s7091 + $0xe0] sm:$0xff]
      %v7121 = vld [vmem:[%s7091 + $0xe8] sm:$0xff]
      %v7122 = vld [vmem:[%s7091 + $0xf0] sm:$0xff]
      %v7123 = vld [vmem:[%s7091 + $0xf8] sm:$0xff]
      %v7124 = vunpack.c.l.b16 %v7062
      %v7125 = vunpack.c.h.b16 %v7062
      %v7126 = vunpack.c.l.b16 %v7066
      %v7127 = vunpack.c.h.b16 %v7066
      %v7128 = vunpack.c.l.b16 %v7070
      %v7129 = vunpack.c.h.b16 %v7070
      %v7130 = vunpack.c.l.b16 %v7074
      %v7131 = vunpack.c.h.b16 %v7074
      %v7132 = vunpack.c.l.b16 %v7078
      %v7133 = vunpack.c.h.b16 %v7078
      %v7134 = vunpack.c.l.b16 %v7082
      %v7135 = vunpack.c.h.b16 %v7082
      %v7136 = vunpack.c.l.b16 %v7086
      %v7137 = vunpack.c.h.b16 %v7086
      %v7138 = vunpack.c.l.b16 %v7090
      %v7139 = vunpack.c.h.b16 %v7090
      %v7140 = vpack.c.b16 %v7126, %v7124
      %v7141 = vpack.c.b16 %v7127, %v7125
      %v7142 = vpack.c.b16 %v7130, %v7128
      %v7143 = vpack.c.b16 %v7131, %v7129
      %v7144 = vpack.c.b16 %v7134, %v7132
      %v7145 = vpack.c.b16 %v7135, %v7133
      %v7146 = vpack.c.b16 %v7138, %v7136
      %v7147 = vpack.c.b16 %v7139, %v7137
      %v7188 = vunpack.c.l.b16 %v7092
      %v7189 = vunpack.c.h.b16 %v7092
      %v7190 = vunpack.c.l.b16 %v7093
      %v7191 = vunpack.c.h.b16 %v7093
      %v7192 = vunpack.c.l.b16 %v7094
      %v7193 = vunpack.c.h.b16 %v7094
      %v7194 = vunpack.c.l.b16 %v7095
      %v7195 = vunpack.c.h.b16 %v7095
      %v7196 = vunpack.c.l.b16 %v7096
      %v7197 = vunpack.c.h.b16 %v7096
      %v7198 = vunpack.c.l.b16 %v7097
      %v7199 = vunpack.c.h.b16 %v7097
      %v7200 = vunpack.c.l.b16 %v7098
      %v7201 = vunpack.c.h.b16 %v7098
      %v7202 = vunpack.c.l.b16 %v7099
      %v7203 = vunpack.c.h.b16 %v7099
      %v7204 = vunpack.c.l.b16 %v7100
      %v7205 = vunpack.c.h.b16 %v7100
      %v7206 = vunpack.c.l.b16 %v7101
      %v7207 = vunpack.c.h.b16 %v7101
      %v7208 = vunpack.c.l.b16 %v7102
      %v7209 = vunpack.c.h.b16 %v7102
      %v7210 = vunpack.c.l.b16 %v7103
      %v7211 = vunpack.c.h.b16 %v7103
      %v7212 = vunpack.c.l.b16 %v7104
      %v7213 = vunpack.c.h.b16 %v7104
      %v7214 = vunpack.c.l.b16 %v7105
      %v7215 = vunpack.c.h.b16 %v7105
      %v7216 = vunpack.c.l.b16 %v7106
      %v7217 = vunpack.c.h.b16 %v7106
      %v7218 = vunpack.c.l.b16 %v7107
      %v7219 = vunpack.c.h.b16 %v7107
      %v7220 = vunpack.c.l.b16 %v7108
      %v7221 = vunpack.c.h.b16 %v7108
      %v7222 = vunpack.c.l.b16 %v7109
      %v7223 = vunpack.c.h.b16 %v7109
      %v7224 = vunpack.c.l.b16 %v7110
      %v7225 = vunpack.c.h.b16 %v7110
      %v7226 = vunpack.c.l.b16 %v7111
      %v7227 = vunpack.c.h.b16 %v7111
      %v7228 = vunpack.c.l.b16 %v7112
      %v7229 = vunpack.c.h.b16 %v7112
      %v7230 = vunpack.c.l.b16 %v7113
      %v7231 = vunpack.c.h.b16 %v7113
      %v7232 = vunpack.c.l.b16 %v7114
      %v7233 = vunpack.c.h.b16 %v7114
      %v7234 = vunpack.c.l.b16 %v7115
      %v7235 = vunpack.c.h.b16 %v7115
      %v7236 = vunpack.c.l.b16 %v7116
      %v7237 = vunpack.c.h.b16 %v7116
      %v7238 = vunpack.c.l.b16 %v7117
      %v7239 = vunpack.c.h.b16 %v7117
      %v7240 = vunpack.c.l.b16 %v7118
      %v7241 = vunpack.c.h.b16 %v7118
      %v7242 = vunpack.c.l.b16 %v7119
      %v7243 = vunpack.c.h.b16 %v7119
      %v7244 = vunpack.c.l.b16 %v7120
      %v7245 = vunpack.c.h.b16 %v7120
      %v7246 = vunpack.c.l.b16 %v7121
      %v7247 = vunpack.c.h.b16 %v7121
      %v7248 = vunpack.c.l.b16 %v7122
      %v7249 = vunpack.c.h.b16 %v7122
      %v7250 = vunpack.c.l.b16 %v7123
      %v7251 = vunpack.c.h.b16 %v7123
      %v7252 = vpack.c.b16 %v7190, %v7188
      %v7253 = vpack.c.b16 %v7191, %v7189
      %v7254 = vpack.c.b16 %v7194, %v7192
      %v7255 = vpack.c.b16 %v7195, %v7193
      %v7256 = vpack.c.b16 %v7198, %v7196
      %v7257 = vpack.c.b16 %v7199, %v7197
      %v7258 = vpack.c.b16 %v7202, %v7200
      %v7259 = vpack.c.b16 %v7203, %v7201
      %v7260 = vpack.c.b16 %v7206, %v7204
      %v7261 = vpack.c.b16 %v7207, %v7205
      %v7262 = vpack.c.b16 %v7210, %v7208
      %v7263 = vpack.c.b16 %v7211, %v7209
      %v7264 = vpack.c.b16 %v7214, %v7212
      %v7265 = vpack.c.b16 %v7215, %v7213
      %v7266 = vpack.c.b16 %v7218, %v7216
      %v7267 = vpack.c.b16 %v7219, %v7217
      %v7268 = vpack.c.b16 %v7222, %v7220
      %v7269 = vpack.c.b16 %v7223, %v7221
      %v7270 = vpack.c.b16 %v7226, %v7224
      %v7271 = vpack.c.b16 %v7227, %v7225
      %v7272 = vpack.c.b16 %v7230, %v7228
      %v7273 = vpack.c.b16 %v7231, %v7229
      %v7274 = vpack.c.b16 %v7234, %v7232
      %v7275 = vpack.c.b16 %v7235, %v7233
      %v7276 = vpack.c.b16 %v7238, %v7236
      %v7277 = vpack.c.b16 %v7239, %v7237
      %v7278 = vpack.c.b16 %v7242, %v7240
      %v7279 = vpack.c.b16 %v7243, %v7241
      %v7280 = vpack.c.b16 %v7246, %v7244
      %v7281 = vpack.c.b16 %v7247, %v7245
      %v7282 = vpack.c.b16 %v7250, %v7248
      %v7283 = vpack.c.b16 %v7251, %v7249
      %7316 = vmatprep.subr.bf16.mxu0 %v7267
      %7317 = vmatpush1.bf16.msra.mxu0 %v7266
      %7318 = vmatprep.subr.bf16.mxu0 %v7265
      %7319 = vmatpush1.bf16.msra.mxu0 %v7264
      %7320 = vmatprep.subr.bf16.mxu0 %v7263
      %7321 = vmatpush1.bf16.msra.mxu0 %v7262
      %7322 = vmatprep.subr.bf16.mxu0 %v7261
      %7323 = vmatpush1.bf16.msra.mxu0 %v7260
      %7324 = vmatprep.subr.bf16.mxu0 %v7259
      %7325 = vmatpush1.bf16.msra.mxu0 %v7258
      %7326 = vmatprep.subr.bf16.mxu0 %v7257
      %7327 = vmatpush1.bf16.msra.mxu0 %v7256
      %7328 = vmatprep.subr.bf16.mxu0 %v7255
      %7329 = vmatpush1.bf16.msra.mxu0 %v7254
      %7330 = vmatprep.subr.bf16.mxu0 %v7253
      %7331 = vmatpush1.bf16.msra.mxu0 %v7252
      %7332 = vmatprep.subr.bf16.mxu0 %v7283
      %7333 = vmatpush2.bf16.msra.mxu0 %v7282
      %7334 = vmatprep.subr.bf16.mxu0 %v7281
      %7335 = vmatpush2.bf16.msra.mxu0 %v7280
      %7336 = vmatprep.subr.bf16.mxu0 %v7279
      %7337 = vmatpush2.bf16.msra.mxu0 %v7278
      %7338 = vmatprep.subr.bf16.mxu0 %v7277
      %7339 = vmatpush2.bf16.msra.mxu0 %v7276
      %7340 = vmatprep.subr.bf16.mxu0 %v7275
      %7341 = vmatpush2.bf16.msra.mxu0 %v7274
      %7342 = vmatprep.subr.bf16.mxu0 %v7273
      %7343 = vmatpush2.bf16.msra.mxu0 %v7272
      %7344 = vmatprep.subr.bf16.mxu0 %v7271
      %7345 = vmatpush2.bf16.msra.mxu0 %v7270
      %7346 = vmatprep.subr.bf16.mxu0 %v7269
      %7347 = vmatpush2.bf16.msra.mxu0 %v7268
      %7348 = vmatprep.mubr.bf16.mxu0 %v7141
      %7349 = vmatmul.mubr.bf16.gmra.mxu0 %v7140
      %v7350 = vpop.f32.mrf.mxu0
      %v7351 = vadd.f32 0.0, %v7350
      %v7352 = vpop.f32.mrf.mxu0
      %v7353 = vadd.f32 0.0, %v7352
      %v7354 = vpop.f32.mrf.mxu0
      %v7355 = vadd.f32 0.0, %v7354
      %v7356 = vpop.f32.mrf.mxu0
      %v7357 = vadd.f32 0.0, %v7356
      %7358 = vmatprep.mubr.bf16.mxu0 %v7143
      %7359 = vmatmul.mubr.bf16.gmra.mxu0 %v7142
      %v7360 = vpop.f32.mrf.mxu0
      %v7361 = vadd.f32 0.0, %v7360
      %v7362 = vpop.f32.mrf.mxu0
      %v7363 = vadd.f32 0.0, %v7362
      %v7364 = vpop.f32.mrf.mxu0
      %v7365 = vadd.f32 0.0, %v7364
      %v7366 = vpop.f32.mrf.mxu0
      %v7367 = vadd.f32 0.0, %v7366
      %7368 = vmatprep.mubr.bf16.mxu0 %v7145
      %7369 = vmatmul.mubr.bf16.gmra.mxu0 %v7144
      %v7370 = vpop.f32.mrf.mxu0
      %v7371 = vadd.f32 0.0, %v7370
      %v7372 = vpop.f32.mrf.mxu0
      %v7373 = vadd.f32 0.0, %v7372
      %v7374 = vpop.f32.mrf.mxu0
      %v7375 = vadd.f32 0.0, %v7374
      %v7376 = vpop.f32.mrf.mxu0
      %v7377 = vadd.f32 0.0, %v7376
      %7378 = vmatprep.mubr.bf16.mxu0 %v7147
      %7379 = vmatmul.mubr.bf16.gmra.mxu0 %v7146
      %v7380 = vpop.f32.mrf.mxu0
      %v7381 = vadd.f32 0.0, %v7380
      %v7382 = vpop.f32.mrf.mxu0
      %v7383 = vadd.f32 0.0, %v7382
      %v7384 = vpop.f32.mrf.mxu0
      %v7385 = vadd.f32 0.0, %v7384
      %v7386 = vpop.f32.mrf.mxu0
      %v7387 = vadd.f32 0.0, %v7386
      %7388 = vdwg.mxu0
      %v7389 = vadd.f32 %v6994, %v7351
      %v7390 = vadd.f32 %v6996, %v7353
      %v7391 = vadd.f32 %v6998, %v7355
      %v7392 = vadd.f32 %v7000, %v7357
      %v7393 = vadd.f32 %v7004, %v7361
      %v7394 = vadd.f32 %v7006, %v7363
      %v7395 = vadd.f32 %v7008, %v7365
      %v7396 = vadd.f32 %v7010, %v7367
      %v7397 = vadd.f32 %v7014, %v7371
      %v7398 = vadd.f32 %v7016, %v7373
      %v7399 = vadd.f32 %v7018, %v7375
      %v7400 = vadd.f32 %v7020, %v7377
      %v7401 = vadd.f32 %v7024, %v7381
      %v7402 = vadd.f32 %v7026, %v7383
      %v7403 = vadd.f32 %v7028, %v7385
      %v7404 = vadd.f32 %v7030, %v7387
      %v7405 = vld [vmem:[%s3432] sm:$0xff]
      %v7406 = vld [vmem:[%s3432 + $0x10] sm:$0xff]
      %v7407 = vld [vmem:[%s3432 + $0x20] sm:$0xff]
      %v7408 = vld [vmem:[%s3432 + $0x30] sm:$0xff]
      %v7409 = vld [vmem:[%s3432 + $0x40] sm:$0xff]
      %v7410 = vld [vmem:[%s3432 + $0x50] sm:$0xff]
      %v7411 = vld [vmem:[%s3432 + $0x60] sm:$0xff]
      %v7412 = vld [vmem:[%s3432 + $0x70] sm:$0xff]
      %s7413 = scalar_lea.vmem %s3, 768
      %v7414 = vld [vmem:[%s7413] sm:$0xff]
      %v7415 = vld [vmem:[%s7413 + $0x8] sm:$0xff]
      %v7416 = vld [vmem:[%s7413 + $0x10] sm:$0xff]
      %v7417 = vld [vmem:[%s7413 + $0x18] sm:$0xff]
      %v7418 = vld [vmem:[%s7413 + $0x20] sm:$0xff]
      %v7419 = vld [vmem:[%s7413 + $0x28] sm:$0xff]
      %v7420 = vld [vmem:[%s7413 + $0x30] sm:$0xff]
      %v7421 = vld [vmem:[%s7413 + $0x38] sm:$0xff]
      %v7422 = vld [vmem:[%s7413 + $0x40] sm:$0xff]
      %v7423 = vld [vmem:[%s7413 + $0x48] sm:$0xff]
      %v7424 = vld [vmem:[%s7413 + $0x50] sm:$0xff]
      %v7425 = vld [vmem:[%s7413 + $0x58] sm:$0xff]
      %v7426 = vld [vmem:[%s7413 + $0x60] sm:$0xff]
      %v7427 = vld [vmem:[%s7413 + $0x68] sm:$0xff]
      %v7428 = vld [vmem:[%s7413 + $0x70] sm:$0xff]
      %v7429 = vld [vmem:[%s7413 + $0x78] sm:$0xff]
      %v7430 = vld [vmem:[%s7413 + $0x80] sm:$0xff]
      %v7431 = vld [vmem:[%s7413 + $0x88] sm:$0xff]
      %v7432 = vld [vmem:[%s7413 + $0x90] sm:$0xff]
      %v7433 = vld [vmem:[%s7413 + $0x98] sm:$0xff]
      %v7434 = vld [vmem:[%s7413 + $0xa0] sm:$0xff]
      %v7435 = vld [vmem:[%s7413 + $0xa8] sm:$0xff]
      %v7436 = vld [vmem:[%s7413 + $0xb0] sm:$0xff]
      %v7437 = vld [vmem:[%s7413 + $0xb8] sm:$0xff]
      %v7438 = vld [vmem:[%s7413 + $0xc0] sm:$0xff]
      %v7439 = vld [vmem:[%s7413 + $0xc8] sm:$0xff]
      %v7440 = vld [vmem:[%s7413 + $0xd0] sm:$0xff]
      %v7441 = vld [vmem:[%s7413 + $0xd8] sm:$0xff]
      %v7442 = vld [vmem:[%s7413 + $0xe0] sm:$0xff]
      %v7443 = vld [vmem:[%s7413 + $0xe8] sm:$0xff]
      %v7444 = vld [vmem:[%s7413 + $0xf0] sm:$0xff]
      %v7445 = vld [vmem:[%s7413 + $0xf8] sm:$0xff]
      %v7454 = vunpack.c.l.b16 %v7405
      %v7455 = vunpack.c.h.b16 %v7405
      %v7456 = vunpack.c.l.b16 %v7406
      %v7457 = vunpack.c.h.b16 %v7406
      %v7458 = vunpack.c.l.b16 %v7407
      %v7459 = vunpack.c.h.b16 %v7407
      %v7460 = vunpack.c.l.b16 %v7408
      %v7461 = vunpack.c.h.b16 %v7408
      %v7462 = vunpack.c.l.b16 %v7409
      %v7463 = vunpack.c.h.b16 %v7409
      %v7464 = vunpack.c.l.b16 %v7410
      %v7465 = vunpack.c.h.b16 %v7410
      %v7466 = vunpack.c.l.b16 %v7411
      %v7467 = vunpack.c.h.b16 %v7411
      %v7468 = vunpack.c.l.b16 %v7412
      %v7469 = vunpack.c.h.b16 %v7412
      %v7470 = vpack.c.b16 %v7456, %v7454
      %v7471 = vpack.c.b16 %v7457, %v7455
      %v7472 = vpack.c.b16 %v7460, %v7458
      %v7473 = vpack.c.b16 %v7461, %v7459
      %v7474 = vpack.c.b16 %v7464, %v7462
      %v7475 = vpack.c.b16 %v7465, %v7463
      %v7476 = vpack.c.b16 %v7468, %v7466
      %v7477 = vpack.c.b16 %v7469, %v7467
      %v7518 = vunpack.c.l.b16 %v7414
      %v7519 = vunpack.c.h.b16 %v7414
      %v7520 = vunpack.c.l.b16 %v7415
      %v7521 = vunpack.c.h.b16 %v7415
      %v7522 = vunpack.c.l.b16 %v7416
      %v7523 = vunpack.c.h.b16 %v7416
      %v7524 = vunpack.c.l.b16 %v7417
      %v7525 = vunpack.c.h.b16 %v7417
      %v7526 = vunpack.c.l.b16 %v7418
      %v7527 = vunpack.c.h.b16 %v7418
      %v7528 = vunpack.c.l.b16 %v7419
      %v7529 = vunpack.c.h.b16 %v7419
      %v7530 = vunpack.c.l.b16 %v7420
      %v7531 = vunpack.c.h.b16 %v7420
      %v7532 = vunpack.c.l.b16 %v7421
      %v7533 = vunpack.c.h.b16 %v7421
      %v7534 = vunpack.c.l.b16 %v7422
      %v7535 = vunpack.c.h.b16 %v7422
      %v7536 = vunpack.c.l.b16 %v7423
      %v7537 = vunpack.c.h.b16 %v7423
      %v7538 = vunpack.c.l.b16 %v7424
      %v7539 = vunpack.c.h.b16 %v7424
      %v7540 = vunpack.c.l.b16 %v7425
      %v7541 = vunpack.c.h.b16 %v7425
      %v7542 = vunpack.c.l.b16 %v7426
      %v7543 = vunpack.c.h.b16 %v7426
      %v7544 = vunpack.c.l.b16 %v7427
      %v7545 = vunpack.c.h.b16 %v7427
      %v7546 = vunpack.c.l.b16 %v7428
      %v7547 = vunpack.c.h.b16 %v7428
      %v7548 = vunpack.c.l.b16 %v7429
      %v7549 = vunpack.c.h.b16 %v7429
      %v7550 = vunpack.c.l.b16 %v7430
      %v7551 = vunpack.c.h.b16 %v7430
      %v7552 = vunpack.c.l.b16 %v7431
      %v7553 = vunpack.c.h.b16 %v7431
      %v7554 = vunpack.c.l.b16 %v7432
      %v7555 = vunpack.c.h.b16 %v7432
      %v7556 = vunpack.c.l.b16 %v7433
      %v7557 = vunpack.c.h.b16 %v7433
      %v7558 = vunpack.c.l.b16 %v7434
      %v7559 = vunpack.c.h.b16 %v7434
      %v7560 = vunpack.c.l.b16 %v7435
      %v7561 = vunpack.c.h.b16 %v7435
      %v7562 = vunpack.c.l.b16 %v7436
      %v7563 = vunpack.c.h.b16 %v7436
      %v7564 = vunpack.c.l.b16 %v7437
      %v7565 = vunpack.c.h.b16 %v7437
      %v7566 = vunpack.c.l.b16 %v7438
      %v7567 = vunpack.c.h.b16 %v7438
      %v7568 = vunpack.c.l.b16 %v7439
      %v7569 = vunpack.c.h.b16 %v7439
      %v7570 = vunpack.c.l.b16 %v7440
      %v7571 = vunpack.c.h.b16 %v7440
      %v7572 = vunpack.c.l.b16 %v7441
      %v7573 = vunpack.c.h.b16 %v7441
      %v7574 = vunpack.c.l.b16 %v7442
      %v7575 = vunpack.c.h.b16 %v7442
      %v7576 = vunpack.c.l.b16 %v7443
      %v7577 = vunpack.c.h.b16 %v7443
      %v7578 = vunpack.c.l.b16 %v7444
      %v7579 = vunpack.c.h.b16 %v7444
      %v7580 = vunpack.c.l.b16 %v7445
      %v7581 = vunpack.c.h.b16 %v7445
      %v7582 = vpack.c.b16 %v7520, %v7518
      %v7583 = vpack.c.b16 %v7521, %v7519
      %v7584 = vpack.c.b16 %v7524, %v7522
      %v7585 = vpack.c.b16 %v7525, %v7523
      %v7586 = vpack.c.b16 %v7528, %v7526
      %v7587 = vpack.c.b16 %v7529, %v7527
      %v7588 = vpack.c.b16 %v7532, %v7530
      %v7589 = vpack.c.b16 %v7533, %v7531
      %v7590 = vpack.c.b16 %v7536, %v7534
      %v7591 = vpack.c.b16 %v7537, %v7535
      %v7592 = vpack.c.b16 %v7540, %v7538
      %v7593 = vpack.c.b16 %v7541, %v7539
      %v7594 = vpack.c.b16 %v7544, %v7542
      %v7595 = vpack.c.b16 %v7545, %v7543
      %v7596 = vpack.c.b16 %v7548, %v7546
      %v7597 = vpack.c.b16 %v7549, %v7547
      %v7598 = vpack.c.b16 %v7552, %v7550
      %v7599 = vpack.c.b16 %v7553, %v7551
      %v7600 = vpack.c.b16 %v7556, %v7554
      %v7601 = vpack.c.b16 %v7557, %v7555
      %v7602 = vpack.c.b16 %v7560, %v7558
      %v7603 = vpack.c.b16 %v7561, %v7559
      %v7604 = vpack.c.b16 %v7564, %v7562
      %v7605 = vpack.c.b16 %v7565, %v7563
      %v7606 = vpack.c.b16 %v7568, %v7566
      %v7607 = vpack.c.b16 %v7569, %v7567
      %v7608 = vpack.c.b16 %v7572, %v7570
      %v7609 = vpack.c.b16 %v7573, %v7571
      %v7610 = vpack.c.b16 %v7576, %v7574
      %v7611 = vpack.c.b16 %v7577, %v7575
      %v7612 = vpack.c.b16 %v7580, %v7578
      %v7613 = vpack.c.b16 %v7581, %v7579
      %7646 = vmatprep.subr.bf16.mxu0 %v7597
      %7647 = vmatpush1.bf16.msra.mxu0 %v7596
      %7648 = vmatprep.subr.bf16.mxu0 %v7595
      %7649 = vmatpush1.bf16.msra.mxu0 %v7594
      %7650 = vmatprep.subr.bf16.mxu0 %v7593
      %7651 = vmatpush1.bf16.msra.mxu0 %v7592
      %7652 = vmatprep.subr.bf16.mxu0 %v7591
      %7653 = vmatpush1.bf16.msra.mxu0 %v7590
      %7654 = vmatprep.subr.bf16.mxu0 %v7589
      %7655 = vmatpush1.bf16.msra.mxu0 %v7588
      %7656 = vmatprep.subr.bf16.mxu0 %v7587
      %7657 = vmatpush1.bf16.msra.mxu0 %v7586
      %7658 = vmatprep.subr.bf16.mxu0 %v7585
      %7659 = vmatpush1.bf16.msra.mxu0 %v7584
      %7660 = vmatprep.subr.bf16.mxu0 %v7583
      %7661 = vmatpush1.bf16.msra.mxu0 %v7582
      %7662 = vmatprep.subr.bf16.mxu0 %v7613
      %7663 = vmatpush2.bf16.msra.mxu0 %v7612
      %7664 = vmatprep.subr.bf16.mxu0 %v7611
      %7665 = vmatpush2.bf16.msra.mxu0 %v7610
      %7666 = vmatprep.subr.bf16.mxu0 %v7609
      %7667 = vmatpush2.bf16.msra.mxu0 %v7608
      %7668 = vmatprep.subr.bf16.mxu0 %v7607
      %7669 = vmatpush2.bf16.msra.mxu0 %v7606
      %7670 = vmatprep.subr.bf16.mxu0 %v7605
      %7671 = vmatpush2.bf16.msra.mxu0 %v7604
      %7672 = vmatprep.subr.bf16.mxu0 %v7603
      %7673 = vmatpush2.bf16.msra.mxu0 %v7602
      %7674 = vmatprep.subr.bf16.mxu0 %v7601
      %7675 = vmatpush2.bf16.msra.mxu0 %v7600
      %7676 = vmatprep.subr.bf16.mxu0 %v7599
      %7677 = vmatpush2.bf16.msra.mxu0 %v7598
      %7678 = vmatprep.mubr.bf16.mxu0 %v7471
      %7679 = vmatmul.mubr.bf16.gmra.mxu0 %v7470
      %v7680 = vpop.f32.mrf.mxu0
      %v7681 = vadd.f32 0.0, %v7680
      %v7682 = vpop.f32.mrf.mxu0
      %v7683 = vadd.f32 0.0, %v7682
      %v7684 = vpop.f32.mrf.mxu0
      %v7685 = vadd.f32 0.0, %v7684
      %v7686 = vpop.f32.mrf.mxu0
      %v7687 = vadd.f32 0.0, %v7686
      %7688 = vmatprep.mubr.bf16.mxu0 %v7473
      %7689 = vmatmul.mubr.bf16.gmra.mxu0 %v7472
      %v7690 = vpop.f32.mrf.mxu0
      %v7691 = vadd.f32 0.0, %v7690
      %v7692 = vpop.f32.mrf.mxu0
      %v7693 = vadd.f32 0.0, %v7692
      %v7694 = vpop.f32.mrf.mxu0
      %v7695 = vadd.f32 0.0, %v7694
      %v7696 = vpop.f32.mrf.mxu0
      %v7697 = vadd.f32 0.0, %v7696
      %7698 = vmatprep.mubr.bf16.mxu0 %v7475
      %7699 = vmatmul.mubr.bf16.gmra.mxu0 %v7474
      %v7700 = vpop.f32.mrf.mxu0
      %v7701 = vadd.f32 0.0, %v7700
      %v7702 = vpop.f32.mrf.mxu0
      %v7703 = vadd.f32 0.0, %v7702
      %v7704 = vpop.f32.mrf.mxu0
      %v7705 = vadd.f32 0.0, %v7704
      %v7706 = vpop.f32.mrf.mxu0
      %v7707 = vadd.f32 0.0, %v7706
      %7708 = vmatprep.mubr.bf16.mxu0 %v7477
      %7709 = vmatmul.mubr.bf16.gmra.mxu0 %v7476
      %v7710 = vpop.f32.mrf.mxu0
      %v7711 = vadd.f32 0.0, %v7710
      %v7712 = vpop.f32.mrf.mxu0
      %v7713 = vadd.f32 0.0, %v7712
      %v7714 = vpop.f32.mrf.mxu0
      %v7715 = vadd.f32 0.0, %v7714
      %v7716 = vpop.f32.mrf.mxu0
      %v7717 = vadd.f32 0.0, %v7716
      %7718 = vdwg.mxu0
      %v7719 = vadd.f32 %v7389, %v7681
      %v7720 = vadd.f32 %v7390, %v7683
      %v7721 = vadd.f32 %v7391, %v7685
      %v7722 = vadd.f32 %v7392, %v7687
      %v7723 = vadd.f32 %v7393, %v7691
      %v7724 = vadd.f32 %v7394, %v7693
      %v7725 = vadd.f32 %v7395, %v7695
      %v7726 = vadd.f32 %v7396, %v7697
      %v7727 = vadd.f32 %v7397, %v7701
      %v7728 = vadd.f32 %v7398, %v7703
      %v7729 = vadd.f32 %v7399, %v7705
      %v7730 = vadd.f32 %v7400, %v7707
      %v7731 = vadd.f32 %v7401, %v7711
      %v7732 = vadd.f32 %v7402, %v7713
      %v7733 = vadd.f32 %v7403, %v7715
      %v7734 = vadd.f32 %v7404, %v7717
      %v7735 = vld [vmem:[%s3432] sm:$0xff]
      %v7736 = vld [vmem:[%s3432 + $0x8] sm:$0x11]
      %v7737 = vld [vmem:[%s3432 + $0x10] sm:$0xff]
      %v7738 = vld [vmem:[%s3432 + $0x18] sm:$0x11]
      %v7739 = vld [vmem:[%s3432 + $0x20] sm:$0xff]
      %v7740 = vld [vmem:[%s3432 + $0x28] sm:$0x11]
      %v7741 = vld [vmem:[%s3432 + $0x30] sm:$0xff]
      %v7742 = vld [vmem:[%s3432 + $0x38] sm:$0x11]
      %v7743 = vld [vmem:[%s3432 + $0x40] sm:$0xff]
      %v7744 = vld [vmem:[%s3432 + $0x48] sm:$0x11]
      %v7745 = vld [vmem:[%s3432 + $0x50] sm:$0xff]
      %v7746 = vld [vmem:[%s3432 + $0x58] sm:$0x11]
      %v7747 = vld [vmem:[%s3432 + $0x60] sm:$0xff]
      %v7748 = vld [vmem:[%s3432 + $0x68] sm:$0x11]
      %v7749 = vld [vmem:[%s3432 + $0x70] sm:$0xff]
      %v7750 = vld [vmem:[%s3432 + $0x78] sm:$0x11]
      %v7752 = vshrl.u32 %v7735, 16
      %v7754 = vrot.slane %v7752, 4
      %v7755 = vshll.u32 %v7735, 16
      %v7757 = vrot.slane %v7755, 5
      %v7758 = vor.u32 %v7754, %v7757
      %v7759 = vrot.slane %v7758, 4
      %v7761 = vshll.u32 %v7736, 16
      %v7763 = vrot.slane %v7761, 5
      %v7764 = vsel %vm6348, %v7759, %v7763
      %v7766 = vshrl.u32 %v7737, 16
      %v7768 = vrot.slane %v7766, 4
      %v7769 = vshll.u32 %v7737, 16
      %v7771 = vrot.slane %v7769, 5
      %v7772 = vor.u32 %v7768, %v7771
      %v7773 = vrot.slane %v7772, 4
      %v7775 = vshll.u32 %v7738, 16
      %v7777 = vrot.slane %v7775, 5
      %v7778 = vsel %vm6348, %v7773, %v7777
      %v7780 = vshrl.u32 %v7739, 16
      %v7782 = vrot.slane %v7780, 4
      %v7783 = vshll.u32 %v7739, 16
      %v7785 = vrot.slane %v7783, 5
      %v7786 = vor.u32 %v7782, %v7785
      %v7787 = vrot.slane %v7786, 4
      %v7789 = vshll.u32 %v7740, 16
      %v7791 = vrot.slane %v7789, 5
      %v7792 = vsel %vm6348, %v7787, %v7791
      %v7794 = vshrl.u32 %v7741, 16
      %v7796 = vrot.slane %v7794, 4
      %v7797 = vshll.u32 %v7741, 16
      %v7799 = vrot.slane %v7797, 5
      %v7800 = vor.u32 %v7796, %v7799
      %v7801 = vrot.slane %v7800, 4
      %v7803 = vshll.u32 %v7742, 16
      %v7805 = vrot.slane %v7803, 5
      %v7806 = vsel %vm6348, %v7801, %v7805
      %v7808 = vshrl.u32 %v7743, 16
      %v7810 = vrot.slane %v7808, 4
      %v7811 = vshll.u32 %v7743, 16
      %v7813 = vrot.slane %v7811, 5
      %v7814 = vor.u32 %v7810, %v7813
      %v7815 = vrot.slane %v7814, 4
      %v7817 = vshll.u32 %v7744, 16
      %v7819 = vrot.slane %v7817, 5
      %v7820 = vsel %vm6348, %v7815, %v7819
      %v7822 = vshrl.u32 %v7745, 16
      %v7824 = vrot.slane %v7822, 4
      %v7825 = vshll.u32 %v7745, 16
      %v7827 = vrot.slane %v7825, 5
      %v7828 = vor.u32 %v7824, %v7827
      %v7829 = vrot.slane %v7828, 4
      %v7831 = vshll.u32 %v7746, 16
      %v7833 = vrot.slane %v7831, 5
      %v7834 = vsel %vm6348, %v7829, %v7833
      %v7836 = vshrl.u32 %v7747, 16
      %v7838 = vrot.slane %v7836, 4
      %v7839 = vshll.u32 %v7747, 16
      %v7841 = vrot.slane %v7839, 5
      %v7842 = vor.u32 %v7838, %v7841
      %v7843 = vrot.slane %v7842, 4
      %v7845 = vshll.u32 %v7748, 16
      %v7847 = vrot.slane %v7845, 5
      %v7848 = vsel %vm6348, %v7843, %v7847
      %v7850 = vshrl.u32 %v7749, 16
      %v7852 = vrot.slane %v7850, 4
      %v7853 = vshll.u32 %v7749, 16
      %v7855 = vrot.slane %v7853, 5
      %v7856 = vor.u32 %v7852, %v7855
      %v7857 = vrot.slane %v7856, 4
      %v7859 = vshll.u32 %v7750, 16
      %v7861 = vrot.slane %v7859, 5
      %v7862 = vsel %vm6348, %v7857, %v7861
      %s7863 = scalar_lea.vmem %s3, 1024
      %v7864 = vld [vmem:[%s7863] sm:$0xff]
      %v7865 = vld [vmem:[%s7863 + $0x8] sm:$0xff]
      %v7866 = vld [vmem:[%s7863 + $0x10] sm:$0xff]
      %v7867 = vld [vmem:[%s7863 + $0x18] sm:$0xff]
      %v7868 = vld [vmem:[%s7863 + $0x20] sm:$0xff]
      %v7869 = vld [vmem:[%s7863 + $0x28] sm:$0xff]
      %v7870 = vld [vmem:[%s7863 + $0x30] sm:$0xff]
      %v7871 = vld [vmem:[%s7863 + $0x38] sm:$0xff]
      %v7872 = vld [vmem:[%s7863 + $0x40] sm:$0xff]
      %v7873 = vld [vmem:[%s7863 + $0x48] sm:$0xff]
      %v7874 = vld [vmem:[%s7863 + $0x50] sm:$0xff]
      %v7875 = vld [vmem:[%s7863 + $0x58] sm:$0xff]
      %v7876 = vld [vmem:[%s7863 + $0x60] sm:$0xff]
      %v7877 = vld [vmem:[%s7863 + $0x68] sm:$0xff]
      %v7878 = vld [vmem:[%s7863 + $0x70] sm:$0xff]
      %v7879 = vld [vmem:[%s7863 + $0x78] sm:$0xff]
      %v7880 = vld [vmem:[%s7863 + $0x80] sm:$0xff]
      %v7881 = vld [vmem:[%s7863 + $0x88] sm:$0xff]
      %v7882 = vld [vmem:[%s7863 + $0x90] sm:$0xff]
      %v7883 = vld [vmem:[%s7863 + $0x98] sm:$0xff]
      %v7884 = vld [vmem:[%s7863 + $0xa0] sm:$0xff]
      %v7885 = vld [vmem:[%s7863 + $0xa8] sm:$0xff]
      %v7886 = vld [vmem:[%s7863 + $0xb0] sm:$0xff]
      %v7887 = vld [vmem:[%s7863 + $0xb8] sm:$0xff]
      %v7888 = vld [vmem:[%s7863 + $0xc0] sm:$0xff]
      %v7889 = vld [vmem:[%s7863 + $0xc8] sm:$0xff]
      %v7890 = vld [vmem:[%s7863 + $0xd0] sm:$0xff]
      %v7891 = vld [vmem:[%s7863 + $0xd8] sm:$0xff]
      %v7892 = vld [vmem:[%s7863 + $0xe0] sm:$0xff]
      %v7893 = vld [vmem:[%s7863 + $0xe8] sm:$0xff]
      %v7894 = vld [vmem:[%s7863 + $0xf0] sm:$0xff]
      %v7895 = vld [vmem:[%s7863 + $0xf8] sm:$0xff]
      %v7896 = vunpack.c.l.b16 %v7764
      %v7897 = vunpack.c.h.b16 %v7764
      %v7898 = vunpack.c.l.b16 %v7778
      %v7899 = vunpack.c.h.b16 %v7778
      %v7900 = vunpack.c.l.b16 %v7792
      %v7901 = vunpack.c.h.b16 %v7792
      %v7902 = vunpack.c.l.b16 %v7806
      %v7903 = vunpack.c.h.b16 %v7806
      %v7904 = vunpack.c.l.b16 %v7820
      %v7905 = vunpack.c.h.b16 %v7820
      %v7906 = vunpack.c.l.b16 %v7834
      %v7907 = vunpack.c.h.b16 %v7834
      %v7908 = vunpack.c.l.b16 %v7848
      %v7909 = vunpack.c.h.b16 %v7848
      %v7910 = vunpack.c.l.b16 %v7862
      %v7911 = vunpack.c.h.b16 %v7862
      %v7912 = vpack.c.b16 %v7898, %v7896
      %v7913 = vpack.c.b16 %v7899, %v7897
      %v7914 = vpack.c.b16 %v7902, %v7900
      %v7915 = vpack.c.b16 %v7903, %v7901
      %v7916 = vpack.c.b16 %v7906, %v7904
      %v7917 = vpack.c.b16 %v7907, %v7905
      %v7918 = vpack.c.b16 %v7910, %v7908
      %v7919 = vpack.c.b16 %v7911, %v7909
      %v7960 = vunpack.c.l.b16 %v7864
      %v7961 = vunpack.c.h.b16 %v7864
      %v7962 = vunpack.c.l.b16 %v7865
      %v7963 = vunpack.c.h.b16 %v7865
      %v7964 = vunpack.c.l.b16 %v7866
      %v7965 = vunpack.c.h.b16 %v7866
      %v7966 = vunpack.c.l.b16 %v7867
      %v7967 = vunpack.c.h.b16 %v7867
      %v7968 = vunpack.c.l.b16 %v7868
      %v7969 = vunpack.c.h.b16 %v7868
      %v7970 = vunpack.c.l.b16 %v7869
      %v7971 = vunpack.c.h.b16 %v7869
      %v7972 = vunpack.c.l.b16 %v7870
      %v7973 = vunpack.c.h.b16 %v7870
      %v7974 = vunpack.c.l.b16 %v7871
      %v7975 = vunpack.c.h.b16 %v7871
      %v7976 = vunpack.c.l.b16 %v7872
      %v7977 = vunpack.c.h.b16 %v7872
      %v7978 = vunpack.c.l.b16 %v7873
      %v7979 = vunpack.c.h.b16 %v7873
      %v7980 = vunpack.c.l.b16 %v7874
      %v7981 = vunpack.c.h.b16 %v7874
      %v7982 = vunpack.c.l.b16 %v7875
      %v7983 = vunpack.c.h.b16 %v7875
      %v7984 = vunpack.c.l.b16 %v7876
      %v7985 = vunpack.c.h.b16 %v7876
      %v7986 = vunpack.c.l.b16 %v7877
      %v7987 = vunpack.c.h.b16 %v7877
      %v7988 = vunpack.c.l.b16 %v7878
      %v7989 = vunpack.c.h.b16 %v7878
      %v7990 = vunpack.c.l.b16 %v7879
      %v7991 = vunpack.c.h.b16 %v7879
      %v7992 = vunpack.c.l.b16 %v7880
      %v7993 = vunpack.c.h.b16 %v7880
      %v7994 = vunpack.c.l.b16 %v7881
      %v7995 = vunpack.c.h.b16 %v7881
      %v7996 = vunpack.c.l.b16 %v7882
      %v7997 = vunpack.c.h.b16 %v7882
      %v7998 = vunpack.c.l.b16 %v7883
      %v7999 = vunpack.c.h.b16 %v7883
      %v8000 = vunpack.c.l.b16 %v7884
      %v8001 = vunpack.c.h.b16 %v7884
      %v8002 = vunpack.c.l.b16 %v7885
      %v8003 = vunpack.c.h.b16 %v7885
      %v8004 = vunpack.c.l.b16 %v7886
      %v8005 = vunpack.c.h.b16 %v7886
      %v8006 = vunpack.c.l.b16 %v7887
      %v8007 = vunpack.c.h.b16 %v7887
      %v8008 = vunpack.c.l.b16 %v7888
      %v8009 = vunpack.c.h.b16 %v7888
      %v8010 = vunpack.c.l.b16 %v7889
      %v8011 = vunpack.c.h.b16 %v7889
      %v8012 = vunpack.c.l.b16 %v7890
      %v8013 = vunpack.c.h.b16 %v7890
      %v8014 = vunpack.c.l.b16 %v7891
      %v8015 = vunpack.c.h.b16 %v7891
      %v8016 = vunpack.c.l.b16 %v7892
      %v8017 = vunpack.c.h.b16 %v7892
      %v8018 = vunpack.c.l.b16 %v7893
      %v8019 = vunpack.c.h.b16 %v7893
      %v8020 = vunpack.c.l.b16 %v7894
      %v8021 = vunpack.c.h.b16 %v7894
      %v8022 = vunpack.c.l.b16 %v7895
      %v8023 = vunpack.c.h.b16 %v7895
      %v8024 = vpack.c.b16 %v7962, %v7960
      %v8025 = vpack.c.b16 %v7963, %v7961
      %v8026 = vpack.c.b16 %v7966, %v7964
      %v8027 = vpack.c.b16 %v7967, %v7965
      %v8028 = vpack.c.b16 %v7970, %v7968
      %v8029 = vpack.c.b16 %v7971, %v7969
      %v8030 = vpack.c.b16 %v7974, %v7972
      %v8031 = vpack.c.b16 %v7975, %v7973
      %v8032 = vpack.c.b16 %v7978, %v7976
      %v8033 = vpack.c.b16 %v7979, %v7977
      %v8034 = vpack.c.b16 %v7982, %v7980
      %v8035 = vpack.c.b16 %v7983, %v7981
      %v8036 = vpack.c.b16 %v7986, %v7984
      %v8037 = vpack.c.b16 %v7987, %v7985
      %v8038 = vpack.c.b16 %v7990, %v7988
      %v8039 = vpack.c.b16 %v7991, %v7989
      %v8040 = vpack.c.b16 %v7994, %v7992
      %v8041 = vpack.c.b16 %v7995, %v7993
      %v8042 = vpack.c.b16 %v7998, %v7996
      %v8043 = vpack.c.b16 %v7999, %v7997
      %v8044 = vpack.c.b16 %v8002, %v8000
      %v8045 = vpack.c.b16 %v8003, %v8001
      %v8046 = vpack.c.b16 %v8006, %v8004
      %v8047 = vpack.c.b16 %v8007, %v8005
      %v8048 = vpack.c.b16 %v8010, %v8008
      %v8049 = vpack.c.b16 %v8011, %v8009
      %v8050 = vpack.c.b16 %v8014, %v8012
      %v8051 = vpack.c.b16 %v8015, %v8013
      %v8052 = vpack.c.b16 %v8018, %v8016
      %v8053 = vpack.c.b16 %v8019, %v8017
      %v8054 = vpack.c.b16 %v8022, %v8020
      %v8055 = vpack.c.b16 %v8023, %v8021
      %8088 = vmatprep.subr.bf16.mxu0 %v8039
      %8089 = vmatpush1.bf16.msra.mxu0 %v8038
      %8090 = vmatprep.subr.bf16.mxu0 %v8037
      %8091 = vmatpush1.bf16.msra.mxu0 %v8036
      %8092 = vmatprep.subr.bf16.mxu0 %v8035
      %8093 = vmatpush1.bf16.msra.mxu0 %v8034
      %8094 = vmatprep.subr.bf16.mxu0 %v8033
      %8095 = vmatpush1.bf16.msra.mxu0 %v8032
      %8096 = vmatprep.subr.bf16.mxu0 %v8031
      %8097 = vmatpush1.bf16.msra.mxu0 %v8030
      %8098 = vmatprep.subr.bf16.mxu0 %v8029
      %8099 = vmatpush1.bf16.msra.mxu0 %v8028
      %8100 = vmatprep.subr.bf16.mxu0 %v8027
      %8101 = vmatpush1.bf16.msra.mxu0 %v8026
      %8102 = vmatprep.subr.bf16.mxu0 %v8025
      %8103 = vmatpush1.bf16.msra.mxu0 %v8024
      %8104 = vmatprep.subr.bf16.mxu0 %v8055
      %8105 = vmatpush2.bf16.msra.mxu0 %v8054
      %8106 = vmatprep.subr.bf16.mxu0 %v8053
      %8107 = vmatpush2.bf16.msra.mxu0 %v8052
      %8108 = vmatprep.subr.bf16.mxu0 %v8051
      %8109 = vmatpush2.bf16.msra.mxu0 %v8050
      %8110 = vmatprep.subr.bf16.mxu0 %v8049
      %8111 = vmatpush2.bf16.msra.mxu0 %v8048
      %8112 = vmatprep.subr.bf16.mxu0 %v8047
      %8113 = vmatpush2.bf16.msra.mxu0 %v8046
      %8114 = vmatprep.subr.bf16.mxu0 %v8045
      %8115 = vmatpush2.bf16.msra.mxu0 %v8044
      %8116 = vmatprep.subr.bf16.mxu0 %v8043
      %8117 = vmatpush2.bf16.msra.mxu0 %v8042
      %8118 = vmatprep.subr.bf16.mxu0 %v8041
      %8119 = vmatpush2.bf16.msra.mxu0 %v8040
      %8120 = vmatprep.mubr.bf16.mxu0 %v7913
      %8121 = vmatmul.mubr.bf16.gmra.mxu0 %v7912
      %v8122 = vpop.f32.mrf.mxu0
      %v8123 = vadd.f32 0.0, %v8122
      %v8124 = vpop.f32.mrf.mxu0
      %v8125 = vadd.f32 0.0, %v8124
      %v8126 = vpop.f32.mrf.mxu0
      %v8127 = vadd.f32 0.0, %v8126
      %v8128 = vpop.f32.mrf.mxu0
      %v8129 = vadd.f32 0.0, %v8128
      %8130 = vmatprep.mubr.bf16.mxu0 %v7915
      %8131 = vmatmul.mubr.bf16.gmra.mxu0 %v7914
      %v8132 = vpop.f32.mrf.mxu0
      %v8133 = vadd.f32 0.0, %v8132
      %v8134 = vpop.f32.mrf.mxu0
      %v8135 = vadd.f32 0.0, %v8134
      %v8136 = vpop.f32.mrf.mxu0
      %v8137 = vadd.f32 0.0, %v8136
      %v8138 = vpop.f32.mrf.mxu0
      %v8139 = vadd.f32 0.0, %v8138
      %8140 = vmatprep.mubr.bf16.mxu0 %v7917
      %8141 = vmatmul.mubr.bf16.gmra.mxu0 %v7916
      %v8142 = vpop.f32.mrf.mxu0
      %v8143 = vadd.f32 0.0, %v8142
      %v8144 = vpop.f32.mrf.mxu0
      %v8145 = vadd.f32 0.0, %v8144
      %v8146 = vpop.f32.mrf.mxu0
      %v8147 = vadd.f32 0.0, %v8146
      %v8148 = vpop.f32.mrf.mxu0
      %v8149 = vadd.f32 0.0, %v8148
      %8150 = vmatprep.mubr.bf16.mxu0 %v7919
      %8151 = vmatmul.mubr.bf16.gmra.mxu0 %v7918
      %v8152 = vpop.f32.mrf.mxu0
      %v8153 = vadd.f32 0.0, %v8152
      %v8154 = vpop.f32.mrf.mxu0
      %v8155 = vadd.f32 0.0, %v8154
      %v8156 = vpop.f32.mrf.mxu0
      %v8157 = vadd.f32 0.0, %v8156
      %v8158 = vpop.f32.mrf.mxu0
      %v8159 = vadd.f32 0.0, %v8158
      %8160 = vdwg.mxu0
      %v8161 = vadd.f32 %v7719, %v8123
      %v8162 = vadd.f32 %v7720, %v8125
      %v8163 = vadd.f32 %v7721, %v8127
      %v8164 = vadd.f32 %v7722, %v8129
      %v8165 = vadd.f32 %v7723, %v8133
      %v8166 = vadd.f32 %v7724, %v8135
      %v8167 = vadd.f32 %v7725, %v8137
      %v8168 = vadd.f32 %v7726, %v8139
      %v8169 = vadd.f32 %v7727, %v8143
      %v8170 = vadd.f32 %v7728, %v8145
      %v8171 = vadd.f32 %v7729, %v8147
      %v8172 = vadd.f32 %v7730, %v8149
      %v8173 = vadd.f32 %v7731, %v8153
      %v8174 = vadd.f32 %v7732, %v8155
      %v8175 = vadd.f32 %v7733, %v8157
      %v8176 = vadd.f32 %v7734, %v8159
      %v8177 = vld [vmem:[%s3432] sm:$0xee]
      %v8178 = vld [vmem:[%s3432 + $0x10] sm:$0xee]
      %v8179 = vld [vmem:[%s3432 + $0x20] sm:$0xee]
      %v8180 = vld [vmem:[%s3432 + $0x30] sm:$0xee]
      %v8181 = vld [vmem:[%s3432 + $0x40] sm:$0xee]
      %v8182 = vld [vmem:[%s3432 + $0x50] sm:$0xee]
      %v8183 = vld [vmem:[%s3432 + $0x60] sm:$0xee]
      %v8184 = vld [vmem:[%s3432 + $0x70] sm:$0xee]
      %v8201 = vrot.slane %v8177, 5
      %v8202 = vrot.slane %v8201, 4
      %v8203 = vrot.slane %v7736, 5
      %v8204 = vsel %vm7058, %v8202, %v8203
      %v8205 = vrot.slane %v8178, 5
      %v8206 = vrot.slane %v8205, 4
      %v8207 = vrot.slane %v7738, 5
      %v8208 = vsel %vm7058, %v8206, %v8207
      %v8209 = vrot.slane %v8179, 5
      %v8210 = vrot.slane %v8209, 4
      %v8211 = vrot.slane %v7740, 5
      %v8212 = vsel %vm7058, %v8210, %v8211
      %v8213 = vrot.slane %v8180, 5
      %v8214 = vrot.slane %v8213, 4
      %v8215 = vrot.slane %v7742, 5
      %v8216 = vsel %vm7058, %v8214, %v8215
      %v8217 = vrot.slane %v8181, 5
      %v8218 = vrot.slane %v8217, 4
      %v8219 = vrot.slane %v7744, 5
      %v8220 = vsel %vm7058, %v8218, %v8219
      %v8221 = vrot.slane %v8182, 5
      %v8222 = vrot.slane %v8221, 4
      %v8223 = vrot.slane %v7746, 5
      %v8224 = vsel %vm7058, %v8222, %v8223
      %v8225 = vrot.slane %v8183, 5
      %v8226 = vrot.slane %v8225, 4
      %v8227 = vrot.slane %v7748, 5
      %v8228 = vsel %vm7058, %v8226, %v8227
      %v8229 = vrot.slane %v8184, 5
      %v8230 = vrot.slane %v8229, 4
      %v8231 = vrot.slane %v7750, 5
      %v8232 = vsel %vm7058, %v8230, %v8231
      %s8233 = scalar_lea.vmem %s3, 1280
      %v8234 = vld [vmem:[%s8233] sm:$0xff]
      %v8235 = vld [vmem:[%s8233 + $0x8] sm:$0xff]
      %v8236 = vld [vmem:[%s8233 + $0x10] sm:$0xff]
      %v8237 = vld [vmem:[%s8233 + $0x18] sm:$0xff]
      %v8238 = vld [vmem:[%s8233 + $0x20] sm:$0xff]
      %v8239 = vld [vmem:[%s8233 + $0x28] sm:$0xff]
      %v8240 = vld [vmem:[%s8233 + $0x30] sm:$0xff]
      %v8241 = vld [vmem:[%s8233 + $0x38] sm:$0xff]
      %v8242 = vld [vmem:[%s8233 + $0x40] sm:$0xff]
      %v8243 = vld [vmem:[%s8233 + $0x48] sm:$0xff]
      %v8244 = vld [vmem:[%s8233 + $0x50] sm:$0xff]
      %v8245 = vld [vmem:[%s8233 + $0x58] sm:$0xff]
      %v8246 = vld [vmem:[%s8233 + $0x60] sm:$0xff]
      %v8247 = vld [vmem:[%s8233 + $0x68] sm:$0xff]
      %v8248 = vld [vmem:[%s8233 + $0x70] sm:$0xff]
      %v8249 = vld [vmem:[%s8233 + $0x78] sm:$0xff]
      %v8250 = vld [vmem:[%s8233 + $0x80] sm:$0xff]
      %v8251 = vld [vmem:[%s8233 + $0x88] sm:$0xff]
      %v8252 = vld [vmem:[%s8233 + $0x90] sm:$0xff]
      %v8253 = vld [vmem:[%s8233 + $0x98] sm:$0xff]
      %v8254 = vld [vmem:[%s8233 + $0xa0] sm:$0xff]
      %v8255 = vld [vmem:[%s8233 + $0xa8] sm:$0xff]
      %v8256 = vld [vmem:[%s8233 + $0xb0] sm:$0xff]
      %v8257 = vld [vmem:[%s8233 + $0xb8] sm:$0xff]
      %v8258 = vld [vmem:[%s8233 + $0xc0] sm:$0xff]
      %v8259 = vld [vmem:[%s8233 + $0xc8] sm:$0xff]
      %v8260 = vld [vmem:[%s8233 + $0xd0] sm:$0xff]
      %v8261 = vld [vmem:[%s8233 + $0xd8] sm:$0xff]
      %v8262 = vld [vmem:[%s8233 + $0xe0] sm:$0xff]
      %v8263 = vld [vmem:[%s8233 + $0xe8] sm:$0xff]
      %v8264 = vld [vmem:[%s8233 + $0xf0] sm:$0xff]
      %v8265 = vld [vmem:[%s8233 + $0xf8] sm:$0xff]
      %v8266 = vunpack.c.l.b16 %v8204
      %v8267 = vunpack.c.h.b16 %v8204
      %v8268 = vunpack.c.l.b16 %v8208
      %v8269 = vunpack.c.h.b16 %v8208
      %v8270 = vunpack.c.l.b16 %v8212
      %v8271 = vunpack.c.h.b16 %v8212
      %v8272 = vunpack.c.l.b16 %v8216
      %v8273 = vunpack.c.h.b16 %v8216
      %v8274 = vunpack.c.l.b16 %v8220
      %v8275 = vunpack.c.h.b16 %v8220
      %v8276 = vunpack.c.l.b16 %v8224
      %v8277 = vunpack.c.h.b16 %v8224
      %v8278 = vunpack.c.l.b16 %v8228
      %v8279 = vunpack.c.h.b16 %v8228
      %v8280 = vunpack.c.l.b16 %v8232
      %v8281 = vunpack.c.h.b16 %v8232
      %v8282 = vpack.c.b16 %v8268, %v8266
      %v8283 = vpack.c.b16 %v8269, %v8267
      %v8284 = vpack.c.b16 %v8272, %v8270
      %v8285 = vpack.c.b16 %v8273, %v8271
      %v8286 = vpack.c.b16 %v8276, %v8274
      %v8287 = vpack.c.b16 %v8277, %v8275
      %v8288 = vpack.c.b16 %v8280, %v8278
      %v8289 = vpack.c.b16 %v8281, %v8279
      %v8330 = vunpack.c.l.b16 %v8234
      %v8331 = vunpack.c.h.b16 %v8234
      %v8332 = vunpack.c.l.b16 %v8235
      %v8333 = vunpack.c.h.b16 %v8235
      %v8334 = vunpack.c.l.b16 %v8236
      %v8335 = vunpack.c.h.b16 %v8236
      %v8336 = vunpack.c.l.b16 %v8237
      %v8337 = vunpack.c.h.b16 %v8237
      %v8338 = vunpack.c.l.b16 %v8238
      %v8339 = vunpack.c.h.b16 %v8238
      %v8340 = vunpack.c.l.b16 %v8239
      %v8341 = vunpack.c.h.b16 %v8239
      %v8342 = vunpack.c.l.b16 %v8240
      %v8343 = vunpack.c.h.b16 %v8240
      %v8344 = vunpack.c.l.b16 %v8241
      %v8345 = vunpack.c.h.b16 %v8241
      %v8346 = vunpack.c.l.b16 %v8242
      %v8347 = vunpack.c.h.b16 %v8242
      %v8348 = vunpack.c.l.b16 %v8243
      %v8349 = vunpack.c.h.b16 %v8243
      %v8350 = vunpack.c.l.b16 %v8244
      %v8351 = vunpack.c.h.b16 %v8244
      %v8352 = vunpack.c.l.b16 %v8245
      %v8353 = vunpack.c.h.b16 %v8245
      %v8354 = vunpack.c.l.b16 %v8246
      %v8355 = vunpack.c.h.b16 %v8246
      %v8356 = vunpack.c.l.b16 %v8247
      %v8357 = vunpack.c.h.b16 %v8247
      %v8358 = vunpack.c.l.b16 %v8248
      %v8359 = vunpack.c.h.b16 %v8248
      %v8360 = vunpack.c.l.b16 %v8249
      %v8361 = vunpack.c.h.b16 %v8249
      %v8362 = vunpack.c.l.b16 %v8250
      %v8363 = vunpack.c.h.b16 %v8250
      %v8364 = vunpack.c.l.b16 %v8251
      %v8365 = vunpack.c.h.b16 %v8251
      %v8366 = vunpack.c.l.b16 %v8252
      %v8367 = vunpack.c.h.b16 %v8252
      %v8368 = vunpack.c.l.b16 %v8253
      %v8369 = vunpack.c.h.b16 %v8253
      %v8370 = vunpack.c.l.b16 %v8254
      %v8371 = vunpack.c.h.b16 %v8254
      %v8372 = vunpack.c.l.b16 %v8255
      %v8373 = vunpack.c.h.b16 %v8255
      %v8374 = vunpack.c.l.b16 %v8256
      %v8375 = vunpack.c.h.b16 %v8256
      %v8376 = vunpack.c.l.b16 %v8257
      %v8377 = vunpack.c.h.b16 %v8257
      %v8378 = vunpack.c.l.b16 %v8258
      %v8379 = vunpack.c.h.b16 %v8258
      %v8380 = vunpack.c.l.b16 %v8259
      %v8381 = vunpack.c.h.b16 %v8259
      %v8382 = vunpack.c.l.b16 %v8260
      %v8383 = vunpack.c.h.b16 %v8260
      %v8384 = vunpack.c.l.b16 %v8261
      %v8385 = vunpack.c.h.b16 %v8261
      %v8386 = vunpack.c.l.b16 %v8262
      %v8387 = vunpack.c.h.b16 %v8262
      %v8388 = vunpack.c.l.b16 %v8263
      %v8389 = vunpack.c.h.b16 %v8263
      %v8390 = vunpack.c.l.b16 %v8264
      %v8391 = vunpack.c.h.b16 %v8264
      %v8392 = vunpack.c.l.b16 %v8265
      %v8393 = vunpack.c.h.b16 %v8265
      %v8394 = vpack.c.b16 %v8332, %v8330
      %v8395 = vpack.c.b16 %v8333, %v8331
      %v8396 = vpack.c.b16 %v8336, %v8334
      %v8397 = vpack.c.b16 %v8337, %v8335
      %v8398 = vpack.c.b16 %v8340, %v8338
      %v8399 = vpack.c.b16 %v8341, %v8339
      %v8400 = vpack.c.b16 %v8344, %v8342
      %v8401 = vpack.c.b16 %v8345, %v8343
      %v8402 = vpack.c.b16 %v8348, %v8346
      %v8403 = vpack.c.b16 %v8349, %v8347
      %v8404 = vpack.c.b16 %v8352, %v8350
      %v8405 = vpack.c.b16 %v8353, %v8351
      %v8406 = vpack.c.b16 %v8356, %v8354
      %v8407 = vpack.c.b16 %v8357, %v8355
      %v8408 = vpack.c.b16 %v8360, %v8358
      %v8409 = vpack.c.b16 %v8361, %v8359
      %v8410 = vpack.c.b16 %v8364, %v8362
      %v8411 = vpack.c.b16 %v8365, %v8363
      %v8412 = vpack.c.b16 %v8368, %v8366
      %v8413 = vpack.c.b16 %v8369, %v8367
      %v8414 = vpack.c.b16 %v8372, %v8370
      %v8415 = vpack.c.b16 %v8373, %v8371
      %v8416 = vpack.c.b16 %v8376, %v8374
      %v8417 = vpack.c.b16 %v8377, %v8375
      %v8418 = vpack.c.b16 %v8380, %v8378
      %v8419 = vpack.c.b16 %v8381, %v8379
      %v8420 = vpack.c.b16 %v8384, %v8382
      %v8421 = vpack.c.b16 %v8385, %v8383
      %v8422 = vpack.c.b16 %v8388, %v8386
      %v8423 = vpack.c.b16 %v8389, %v8387
      %v8424 = vpack.c.b16 %v8392, %v8390
      %v8425 = vpack.c.b16 %v8393, %v8391
      %8458 = vmatprep.subr.bf16.mxu0 %v8409
      %8459 = vmatpush1.bf16.msra.mxu0 %v8408
      %8460 = vmatprep.subr.bf16.mxu0 %v8407
      %8461 = vmatpush1.bf16.msra.mxu0 %v8406
      %8462 = vmatprep.subr.bf16.mxu0 %v8405
      %8463 = vmatpush1.bf16.msra.mxu0 %v8404
      %8464 = vmatprep.subr.bf16.mxu0 %v8403
      %8465 = vmatpush1.bf16.msra.mxu0 %v8402
      %8466 = vmatprep.subr.bf16.mxu0 %v8401
      %8467 = vmatpush1.bf16.msra.mxu0 %v8400
      %8468 = vmatprep.subr.bf16.mxu0 %v8399
      %8469 = vmatpush1.bf16.msra.mxu0 %v8398
      %8470 = vmatprep.subr.bf16.mxu0 %v8397
      %8471 = vmatpush1.bf16.msra.mxu0 %v8396
      %8472 = vmatprep.subr.bf16.mxu0 %v8395
      %8473 = vmatpush1.bf16.msra.mxu0 %v8394
      %8474 = vmatprep.subr.bf16.mxu0 %v8425
      %8475 = vmatpush2.bf16.msra.mxu0 %v8424
      %8476 = vmatprep.subr.bf16.mxu0 %v8423
      %8477 = vmatpush2.bf16.msra.mxu0 %v8422
      %8478 = vmatprep.subr.bf16.mxu0 %v8421
      %8479 = vmatpush2.bf16.msra.mxu0 %v8420
      %8480 = vmatprep.subr.bf16.mxu0 %v8419
      %8481 = vmatpush2.bf16.msra.mxu0 %v8418
      %8482 = vmatprep.subr.bf16.mxu0 %v8417
      %8483 = vmatpush2.bf16.msra.mxu0 %v8416
      %8484 = vmatprep.subr.bf16.mxu0 %v8415
      %8485 = vmatpush2.bf16.msra.mxu0 %v8414
      %8486 = vmatprep.subr.bf16.mxu0 %v8413
      %8487 = vmatpush2.bf16.msra.mxu0 %v8412
      %8488 = vmatprep.subr.bf16.mxu0 %v8411
      %8489 = vmatpush2.bf16.msra.mxu0 %v8410
      %8490 = vmatprep.mubr.bf16.mxu0 %v8283
      %8491 = vmatmul.mubr.bf16.gmra.mxu0 %v8282
      %v8492 = vpop.f32.mrf.mxu0
      %v8493 = vadd.f32 0.0, %v8492
      %v8494 = vpop.f32.mrf.mxu0
      %v8495 = vadd.f32 0.0, %v8494
      %v8496 = vpop.f32.mrf.mxu0
      %v8497 = vadd.f32 0.0, %v8496
      %v8498 = vpop.f32.mrf.mxu0
      %v8499 = vadd.f32 0.0, %v8498
      %8500 = vmatprep.mubr.bf16.mxu0 %v8285
      %8501 = vmatmul.mubr.bf16.gmra.mxu0 %v8284
      %v8502 = vpop.f32.mrf.mxu0
      %v8503 = vadd.f32 0.0, %v8502
      %v8504 = vpop.f32.mrf.mxu0
      %v8505 = vadd.f32 0.0, %v8504
      %v8506 = vpop.f32.mrf.mxu0
      %v8507 = vadd.f32 0.0, %v8506
      %v8508 = vpop.f32.mrf.mxu0
      %v8509 = vadd.f32 0.0, %v8508
      %8510 = vmatprep.mubr.bf16.mxu0 %v8287
      %8511 = vmatmul.mubr.bf16.gmra.mxu0 %v8286
      %v8512 = vpop.f32.mrf.mxu0
      %v8513 = vadd.f32 0.0, %v8512
      %v8514 = vpop.f32.mrf.mxu0
      %v8515 = vadd.f32 0.0, %v8514
      %v8516 = vpop.f32.mrf.mxu0
      %v8517 = vadd.f32 0.0, %v8516
      %v8518 = vpop.f32.mrf.mxu0
      %v8519 = vadd.f32 0.0, %v8518
      %8520 = vmatprep.mubr.bf16.mxu0 %v8289
      %8521 = vmatmul.mubr.bf16.gmra.mxu0 %v8288
      %v8522 = vpop.f32.mrf.mxu0
      %v8523 = vadd.f32 0.0, %v8522
      %v8524 = vpop.f32.mrf.mxu0
      %v8525 = vadd.f32 0.0, %v8524
      %v8526 = vpop.f32.mrf.mxu0
      %v8527 = vadd.f32 0.0, %v8526
      %v8528 = vpop.f32.mrf.mxu0
      %v8529 = vadd.f32 0.0, %v8528
      %8530 = vdwg.mxu0
      %v8531 = vadd.f32 %v8161, %v8493
      %v8532 = vadd.f32 %v8162, %v8495
      %v8533 = vadd.f32 %v8163, %v8497
      %v8534 = vadd.f32 %v8164, %v8499
      %v8535 = vadd.f32 %v8165, %v8503
      %v8536 = vadd.f32 %v8166, %v8505
      %v8537 = vadd.f32 %v8167, %v8507
      %v8538 = vadd.f32 %v8168, %v8509
      %v8539 = vadd.f32 %v8169, %v8513
      %v8540 = vadd.f32 %v8170, %v8515
      %v8541 = vadd.f32 %v8171, %v8517
      %v8542 = vadd.f32 %v8172, %v8519
      %v8543 = vadd.f32 %v8173, %v8523
      %v8544 = vadd.f32 %v8174, %v8525
      %v8545 = vadd.f32 %v8175, %v8527
      %v8546 = vadd.f32 %v8176, %v8529
      %s8547 = scalar_lea.vmem [#allocation2], 32
      %v8548 = vld [vmem:[%s8547] sm:$0xff]
      %v8549 = vld [vmem:[%s8547 + $0x10] sm:$0xff]
      %v8550 = vld [vmem:[%s8547 + $0x20] sm:$0xff]
      %v8551 = vld [vmem:[%s8547 + $0x30] sm:$0xff]
      %v8552 = vld [vmem:[%s8547 + $0x40] sm:$0xff]
      %v8553 = vld [vmem:[%s8547 + $0x50] sm:$0xff]
      %v8554 = vld [vmem:[%s8547 + $0x60] sm:$0xff]
      %v8555 = vld [vmem:[%s8547 + $0x70] sm:$0xff]
      %s8556 = scalar_lea.vmem %s3, 1536
      %v8557 = vld [vmem:[%s8556] sm:$0xff]
      %v8558 = vld [vmem:[%s8556 + $0x8] sm:$0xff]
      %v8559 = vld [vmem:[%s8556 + $0x10] sm:$0xff]
      %v8560 = vld [vmem:[%s8556 + $0x18] sm:$0xff]
      %v8561 = vld [vmem:[%s8556 + $0x20] sm:$0xff]
      %v8562 = vld [vmem:[%s8556 + $0x28] sm:$0xff]
      %v8563 = vld [vmem:[%s8556 + $0x30] sm:$0xff]
      %v8564 = vld [vmem:[%s8556 + $0x38] sm:$0xff]
      %v8565 = vld [vmem:[%s8556 + $0x40] sm:$0xff]
      %v8566 = vld [vmem:[%s8556 + $0x48] sm:$0xff]
      %v8567 = vld [vmem:[%s8556 + $0x50] sm:$0xff]
      %v8568 = vld [vmem:[%s8556 + $0x58] sm:$0xff]
      %v8569 = vld [vmem:[%s8556 + $0x60] sm:$0xff]
      %v8570 = vld [vmem:[%s8556 + $0x68] sm:$0xff]
      %v8571 = vld [vmem:[%s8556 + $0x70] sm:$0xff]
      %v8572 = vld [vmem:[%s8556 + $0x78] sm:$0xff]
      %v8573 = vld [vmem:[%s8556 + $0x80] sm:$0xff]
      %v8574 = vld [vmem:[%s8556 + $0x88] sm:$0xff]
      %v8575 = vld [vmem:[%s8556 + $0x90] sm:$0xff]
      %v8576 = vld [vmem:[%s8556 + $0x98] sm:$0xff]
      %v8577 = vld [vmem:[%s8556 + $0xa0] sm:$0xff]
      %v8578 = vld [vmem:[%s8556 + $0xa8] sm:$0xff]
      %v8579 = vld [vmem:[%s8556 + $0xb0] sm:$0xff]
      %v8580 = vld [vmem:[%s8556 + $0xb8] sm:$0xff]
      %v8581 = vld [vmem:[%s8556 + $0xc0] sm:$0xff]
      %v8582 = vld [vmem:[%s8556 + $0xc8] sm:$0xff]
      %v8583 = vld [vmem:[%s8556 + $0xd0] sm:$0xff]
      %v8584 = vld [vmem:[%s8556 + $0xd8] sm:$0xff]
      %v8585 = vld [vmem:[%s8556 + $0xe0] sm:$0xff]
      %v8586 = vld [vmem:[%s8556 + $0xe8] sm:$0xff]
      %v8587 = vld [vmem:[%s8556 + $0xf0] sm:$0xff]
      %v8588 = vld [vmem:[%s8556 + $0xf8] sm:$0xff]
      %v8597 = vunpack.c.l.b16 %v8548
      %v8598 = vunpack.c.h.b16 %v8548
      %v8599 = vunpack.c.l.b16 %v8549
      %v8600 = vunpack.c.h.b16 %v8549
      %v8601 = vunpack.c.l.b16 %v8550
      %v8602 = vunpack.c.h.b16 %v8550
      %v8603 = vunpack.c.l.b16 %v8551
      %v8604 = vunpack.c.h.b16 %v8551
      %v8605 = vunpack.c.l.b16 %v8552
      %v8606 = vunpack.c.h.b16 %v8552
      %v8607 = vunpack.c.l.b16 %v8553
      %v8608 = vunpack.c.h.b16 %v8553
      %v8609 = vunpack.c.l.b16 %v8554
      %v8610 = vunpack.c.h.b16 %v8554
      %v8611 = vunpack.c.l.b16 %v8555
      %v8612 = vunpack.c.h.b16 %v8555
      %v8613 = vpack.c.b16 %v8599, %v8597
      %v8614 = vpack.c.b16 %v8600, %v8598
      %v8615 = vpack.c.b16 %v8603, %v8601
      %v8616 = vpack.c.b16 %v8604, %v8602
      %v8617 = vpack.c.b16 %v8607, %v8605
      %v8618 = vpack.c.b16 %v8608, %v8606
      %v8619 = vpack.c.b16 %v8611, %v8609
      %v8620 = vpack.c.b16 %v8612, %v8610
      %v8661 = vunpack.c.l.b16 %v8557
      %v8662 = vunpack.c.h.b16 %v8557
      %v8663 = vunpack.c.l.b16 %v8558
      %v8664 = vunpack.c.h.b16 %v8558
      %v8665 = vunpack.c.l.b16 %v8559
      %v8666 = vunpack.c.h.b16 %v8559
      %v8667 = vunpack.c.l.b16 %v8560
      %v8668 = vunpack.c.h.b16 %v8560
      %v8669 = vunpack.c.l.b16 %v8561
      %v8670 = vunpack.c.h.b16 %v8561
      %v8671 = vunpack.c.l.b16 %v8562
      %v8672 = vunpack.c.h.b16 %v8562
      %v8673 = vunpack.c.l.b16 %v8563
      %v8674 = vunpack.c.h.b16 %v8563
      %v8675 = vunpack.c.l.b16 %v8564
      %v8676 = vunpack.c.h.b16 %v8564
      %v8677 = vunpack.c.l.b16 %v8565
      %v8678 = vunpack.c.h.b16 %v8565
      %v8679 = vunpack.c.l.b16 %v8566
      %v8680 = vunpack.c.h.b16 %v8566
      %v8681 = vunpack.c.l.b16 %v8567
      %v8682 = vunpack.c.h.b16 %v8567
      %v8683 = vunpack.c.l.b16 %v8568
      %v8684 = vunpack.c.h.b16 %v8568
      %v8685 = vunpack.c.l.b16 %v8569
      %v8686 = vunpack.c.h.b16 %v8569
      %v8687 = vunpack.c.l.b16 %v8570
      %v8688 = vunpack.c.h.b16 %v8570
      %v8689 = vunpack.c.l.b16 %v8571
      %v8690 = vunpack.c.h.b16 %v8571
      %v8691 = vunpack.c.l.b16 %v8572
      %v8692 = vunpack.c.h.b16 %v8572
      %v8693 = vunpack.c.l.b16 %v8573
      %v8694 = vunpack.c.h.b16 %v8573
      %v8695 = vunpack.c.l.b16 %v8574
      %v8696 = vunpack.c.h.b16 %v8574
      %v8697 = vunpack.c.l.b16 %v8575
      %v8698 = vunpack.c.h.b16 %v8575
      %v8699 = vunpack.c.l.b16 %v8576
      %v8700 = vunpack.c.h.b16 %v8576
      %v8701 = vunpack.c.l.b16 %v8577
      %v8702 = vunpack.c.h.b16 %v8577
      %v8703 = vunpack.c.l.b16 %v8578
      %v8704 = vunpack.c.h.b16 %v8578
      %v8705 = vunpack.c.l.b16 %v8579
      %v8706 = vunpack.c.h.b16 %v8579
      %v8707 = vunpack.c.l.b16 %v8580
      %v8708 = vunpack.c.h.b16 %v8580
      %v8709 = vunpack.c.l.b16 %v8581
      %v8710 = vunpack.c.h.b16 %v8581
      %v8711 = vunpack.c.l.b16 %v8582
      %v8712 = vunpack.c.h.b16 %v8582
      %v8713 = vunpack.c.l.b16 %v8583
      %v8714 = vunpack.c.h.b16 %v8583
      %v8715 = vunpack.c.l.b16 %v8584
      %v8716 = vunpack.c.h.b16 %v8584
      %v8717 = vunpack.c.l.b16 %v8585
      %v8718 = vunpack.c.h.b16 %v8585
      %v8719 = vunpack.c.l.b16 %v8586
      %v8720 = vunpack.c.h.b16 %v8586
      %v8721 = vunpack.c.l.b16 %v8587
      %v8722 = vunpack.c.h.b16 %v8587
      %v8723 = vunpack.c.l.b16 %v8588
      %v8724 = vunpack.c.h.b16 %v8588
      %v8725 = vpack.c.b16 %v8663, %v8661
      %v8726 = vpack.c.b16 %v8664, %v8662
      %v8727 = vpack.c.b16 %v8667, %v8665
      %v8728 = vpack.c.b16 %v8668, %v8666
      %v8729 = vpack.c.b16 %v8671, %v8669
      %v8730 = vpack.c.b16 %v8672, %v8670
      %v8731 = vpack.c.b16 %v8675, %v8673
      %v8732 = vpack.c.b16 %v8676, %v8674
      %v8733 = vpack.c.b16 %v8679, %v8677
      %v8734 = vpack.c.b16 %v8680, %v8678
      %v8735 = vpack.c.b16 %v8683, %v8681
      %v8736 = vpack.c.b16 %v8684, %v8682
      %v8737 = vpack.c.b16 %v8687, %v8685
      %v8738 = vpack.c.b16 %v8688, %v8686
      %v8739 = vpack.c.b16 %v8691, %v8689
      %v8740 = vpack.c.b16 %v8692, %v8690
      %v8741 = vpack.c.b16 %v8695, %v8693
      %v8742 = vpack.c.b16 %v8696, %v8694
      %v8743 = vpack.c.b16 %v8699, %v8697
      %v8744 = vpack.c.b16 %v8700, %v8698
      %v8745 = vpack.c.b16 %v8703, %v8701
      %v8746 = vpack.c.b16 %v8704, %v8702
      %v8747 = vpack.c.b16 %v8707, %v8705
      %v8748 = vpack.c.b16 %v8708, %v8706
      %v8749 = vpack.c.b16 %v8711, %v8709
      %v8750 = vpack.c.b16 %v8712, %v8710
      %v8751 = vpack.c.b16 %v8715, %v8713
      %v8752 = vpack.c.b16 %v8716, %v8714
      %v8753 = vpack.c.b16 %v8719, %v8717
      %v8754 = vpack.c.b16 %v8720, %v8718
      %v8755 = vpack.c.b16 %v8723, %v8721
      %v8756 = vpack.c.b16 %v8724, %v8722
      %8789 = vmatprep.subr.bf16.mxu0 %v8740
      %8790 = vmatpush1.bf16.msra.mxu0 %v8739
      %8791 = vmatprep.subr.bf16.mxu0 %v8738
      %8792 = vmatpush1.bf16.msra.mxu0 %v8737
      %8793 = vmatprep.subr.bf16.mxu0 %v8736
      %8794 = vmatpush1.bf16.msra.mxu0 %v8735
      %8795 = vmatprep.subr.bf16.mxu0 %v8734
      %8796 = vmatpush1.bf16.msra.mxu0 %v8733
      %8797 = vmatprep.subr.bf16.mxu0 %v8732
      %8798 = vmatpush1.bf16.msra.mxu0 %v8731
      %8799 = vmatprep.subr.bf16.mxu0 %v8730
      %8800 = vmatpush1.bf16.msra.mxu0 %v8729
      %8801 = vmatprep.subr.bf16.mxu0 %v8728
      %8802 = vmatpush1.bf16.msra.mxu0 %v8727
      %8803 = vmatprep.subr.bf16.mxu0 %v8726
      %8804 = vmatpush1.bf16.msra.mxu0 %v8725
      %8805 = vmatprep.subr.bf16.mxu0 %v8756
      %8806 = vmatpush2.bf16.msra.mxu0 %v8755
      %8807 = vmatprep.subr.bf16.mxu0 %v8754
      %8808 = vmatpush2.bf16.msra.mxu0 %v8753
      %8809 = vmatprep.subr.bf16.mxu0 %v8752
      %8810 = vmatpush2.bf16.msra.mxu0 %v8751
      %8811 = vmatprep.subr.bf16.mxu0 %v8750
      %8812 = vmatpush2.bf16.msra.mxu0 %v8749
      %8813 = vmatprep.subr.bf16.mxu0 %v8748
      %8814 = vmatpush2.bf16.msra.mxu0 %v8747
      %8815 = vmatprep.subr.bf16.mxu0 %v8746
      %8816 = vmatpush2.bf16.msra.mxu0 %v8745
      %8817 = vmatprep.subr.bf16.mxu0 %v8744
      %8818 = vmatpush2.bf16.msra.mxu0 %v8743
      %8819 = vmatprep.subr.bf16.mxu0 %v8742
      %8820 = vmatpush2.bf16.msra.mxu0 %v8741
      %8821 = vmatprep.mubr.bf16.mxu0 %v8614
      %8822 = vmatmul.mubr.bf16.gmra.mxu0 %v8613
      %v8823 = vpop.f32.mrf.mxu0
      %v8824 = vadd.f32 0.0, %v8823
      %v8825 = vpop.f32.mrf.mxu0
      %v8826 = vadd.f32 0.0, %v8825
      %v8827 = vpop.f32.mrf.mxu0
      %v8828 = vadd.f32 0.0, %v8827
      %v8829 = vpop.f32.mrf.mxu0
      %v8830 = vadd.f32 0.0, %v8829
      %8831 = vmatprep.mubr.bf16.mxu0 %v8616
      %8832 = vmatmul.mubr.bf16.gmra.mxu0 %v8615
      %v8833 = vpop.f32.mrf.mxu0
      %v8834 = vadd.f32 0.0, %v8833
      %v8835 = vpop.f32.mrf.mxu0
      %v8836 = vadd.f32 0.0, %v8835
      %v8837 = vpop.f32.mrf.mxu0
      %v8838 = vadd.f32 0.0, %v8837
      %v8839 = vpop.f32.mrf.mxu0
      %v8840 = vadd.f32 0.0, %v8839
      %8841 = vmatprep.mubr.bf16.mxu0 %v8618
      %8842 = vmatmul.mubr.bf16.gmra.mxu0 %v8617
      %v8843 = vpop.f32.mrf.mxu0
      %v8844 = vadd.f32 0.0, %v8843
      %v8845 = vpop.f32.mrf.mxu0
      %v8846 = vadd.f32 0.0, %v8845
      %v8847 = vpop.f32.mrf.mxu0
      %v8848 = vadd.f32 0.0, %v8847
      %v8849 = vpop.f32.mrf.mxu0
      %v8850 = vadd.f32 0.0, %v8849
      %8851 = vmatprep.mubr.bf16.mxu0 %v8620
      %8852 = vmatmul.mubr.bf16.gmra.mxu0 %v8619
      %v8853 = vpop.f32.mrf.mxu0
      %v8854 = vadd.f32 0.0, %v8853
      %v8855 = vpop.f32.mrf.mxu0
      %v8856 = vadd.f32 0.0, %v8855
      %v8857 = vpop.f32.mrf.mxu0
      %v8858 = vadd.f32 0.0, %v8857
      %v8859 = vpop.f32.mrf.mxu0
      %v8860 = vadd.f32 0.0, %v8859
      %8861 = vdwg.mxu0
      %v8862 = vadd.f32 %v8531, %v8824
      %v8863 = vadd.f32 %v8532, %v8826
      %v8864 = vadd.f32 %v8533, %v8828
      %v8865 = vadd.f32 %v8534, %v8830
      %v8866 = vadd.f32 %v8535, %v8834
      %v8867 = vadd.f32 %v8536, %v8836
      %v8868 = vadd.f32 %v8537, %v8838
      %v8869 = vadd.f32 %v8538, %v8840
      %v8870 = vadd.f32 %v8539, %v8844
      %v8871 = vadd.f32 %v8540, %v8846
      %v8872 = vadd.f32 %v8541, %v8848
      %v8873 = vadd.f32 %v8542, %v8850
      %v8874 = vadd.f32 %v8543, %v8854
      %v8875 = vadd.f32 %v8544, %v8856
      %v8876 = vadd.f32 %v8545, %v8858
      %v8877 = vadd.f32 %v8546, %v8860
      %v8878 = vld [vmem:[%s8547] sm:$0xff]
      %v8879 = vld [vmem:[%s8547 + $0x8] sm:$0x11]
      %v8880 = vld [vmem:[%s8547 + $0x10] sm:$0xff]
      %v8881 = vld [vmem:[%s8547 + $0x18] sm:$0x11]
      %v8882 = vld [vmem:[%s8547 + $0x20] sm:$0xff]
      %v8883 = vld [vmem:[%s8547 + $0x28] sm:$0x11]
      %v8884 = vld [vmem:[%s8547 + $0x30] sm:$0xff]
      %v8885 = vld [vmem:[%s8547 + $0x38] sm:$0x11]
      %v8886 = vld [vmem:[%s8547 + $0x40] sm:$0xff]
      %v8887 = vld [vmem:[%s8547 + $0x48] sm:$0x11]
      %v8888 = vld [vmem:[%s8547 + $0x50] sm:$0xff]
      %v8889 = vld [vmem:[%s8547 + $0x58] sm:$0x11]
      %v8890 = vld [vmem:[%s8547 + $0x60] sm:$0xff]
      %v8891 = vld [vmem:[%s8547 + $0x68] sm:$0x11]
      %v8892 = vld [vmem:[%s8547 + $0x70] sm:$0xff]
      %v8893 = vld [vmem:[%s8547 + $0x78] sm:$0x11]
      %v8895 = vshrl.u32 %v8878, 16
      %v8897 = vrot.slane %v8895, 4
      %v8898 = vshll.u32 %v8878, 16
      %v8900 = vrot.slane %v8898, 5
      %v8901 = vor.u32 %v8897, %v8900
      %v8902 = vrot.slane %v8901, 4
      %v8904 = vshll.u32 %v8879, 16
      %v8906 = vrot.slane %v8904, 5
      %v8907 = vsel %vm6348, %v8902, %v8906
      %v8909 = vshrl.u32 %v8880, 16
      %v8911 = vrot.slane %v8909, 4
      %v8912 = vshll.u32 %v8880, 16
      %v8914 = vrot.slane %v8912, 5
      %v8915 = vor.u32 %v8911, %v8914
      %v8916 = vrot.slane %v8915, 4
      %v8918 = vshll.u32 %v8881, 16
      %v8920 = vrot.slane %v8918, 5
      %v8921 = vsel %vm6348, %v8916, %v8920
      %v8923 = vshrl.u32 %v8882, 16
      %v8925 = vrot.slane %v8923, 4
      %v8926 = vshll.u32 %v8882, 16
      %v8928 = vrot.slane %v8926, 5
      %v8929 = vor.u32 %v8925, %v8928
      %v8930 = vrot.slane %v8929, 4
      %v8932 = vshll.u32 %v8883, 16
      %v8934 = vrot.slane %v8932, 5
      %v8935 = vsel %vm6348, %v8930, %v8934
      %v8937 = vshrl.u32 %v8884, 16
      %v8939 = vrot.slane %v8937, 4
      %v8940 = vshll.u32 %v8884, 16
      %v8942 = vrot.slane %v8940, 5
      %v8943 = vor.u32 %v8939, %v8942
      %v8944 = vrot.slane %v8943, 4
      %v8946 = vshll.u32 %v8885, 16
      %v8948 = vrot.slane %v8946, 5
      %v8949 = vsel %vm6348, %v8944, %v8948
      %v8951 = vshrl.u32 %v8886, 16
      %v8953 = vrot.slane %v8951, 4
      %v8954 = vshll.u32 %v8886, 16
      %v8956 = vrot.slane %v8954, 5
      %v8957 = vor.u32 %v8953, %v8956
      %v8958 = vrot.slane %v8957, 4
      %v8960 = vshll.u32 %v8887, 16
      %v8962 = vrot.slane %v8960, 5
      %v8963 = vsel %vm6348, %v8958, %v8962
      %v8965 = vshrl.u32 %v8888, 16
      %v8967 = vrot.slane %v8965, 4
      %v8968 = vshll.u32 %v8888, 16
      %v8970 = vrot.slane %v8968, 5
      %v8971 = vor.u32 %v8967, %v8970
      %v8972 = vrot.slane %v8971, 4
      %v8974 = vshll.u32 %v8889, 16
      %v8976 = vrot.slane %v8974, 5
      %v8977 = vsel %vm6348, %v8972, %v8976
      %v8979 = vshrl.u32 %v8890, 16
      %v8981 = vrot.slane %v8979, 4
      %v8982 = vshll.u32 %v8890, 16
      %v8984 = vrot.slane %v8982, 5
      %v8985 = vor.u32 %v8981, %v8984
      %v8986 = vrot.slane %v8985, 4
      %v8988 = vshll.u32 %v8891, 16
      %v8990 = vrot.slane %v8988, 5
      %v8991 = vsel %vm6348, %v8986, %v8990
      %v8993 = vshrl.u32 %v8892, 16
      %v8995 = vrot.slane %v8993, 4
      %v8996 = vshll.u32 %v8892, 16
      %v8998 = vrot.slane %v8996, 5
      %v8999 = vor.u32 %v8995, %v8998
      %v9000 = vrot.slane %v8999, 4
      %v9002 = vshll.u32 %v8893, 16
      %v9004 = vrot.slane %v9002, 5
      %v9005 = vsel %vm6348, %v9000, %v9004
      %s9006 = scalar_lea.vmem %s3, 1792
      %v9007 = vld [vmem:[%s9006] sm:$0xff]
      %v9008 = vld [vmem:[%s9006 + $0x8] sm:$0xff]
      %v9009 = vld [vmem:[%s9006 + $0x10] sm:$0xff]
      %v9010 = vld [vmem:[%s9006 + $0x18] sm:$0xff]
      %v9011 = vld [vmem:[%s9006 + $0x20] sm:$0xff]
      %v9012 = vld [vmem:[%s9006 + $0x28] sm:$0xff]
      %v9013 = vld [vmem:[%s9006 + $0x30] sm:$0xff]
      %v9014 = vld [vmem:[%s9006 + $0x38] sm:$0xff]
      %v9015 = vld [vmem:[%s9006 + $0x40] sm:$0xff]
      %v9016 = vld [vmem:[%s9006 + $0x48] sm:$0xff]
      %v9017 = vld [vmem:[%s9006 + $0x50] sm:$0xff]
      %v9018 = vld [vmem:[%s9006 + $0x58] sm:$0xff]
      %v9019 = vld [vmem:[%s9006 + $0x60] sm:$0xff]
      %v9020 = vld [vmem:[%s9006 + $0x68] sm:$0xff]
      %v9021 = vld [vmem:[%s9006 + $0x70] sm:$0xff]
      %v9022 = vld [vmem:[%s9006 + $0x78] sm:$0xff]
      %v9023 = vld [vmem:[%s9006 + $0x80] sm:$0xff]
      %v9024 = vld [vmem:[%s9006 + $0x88] sm:$0xff]
      %v9025 = vld [vmem:[%s9006 + $0x90] sm:$0xff]
      %v9026 = vld [vmem:[%s9006 + $0x98] sm:$0xff]
      %v9027 = vld [vmem:[%s9006 + $0xa0] sm:$0xff]
      %v9028 = vld [vmem:[%s9006 + $0xa8] sm:$0xff]
      %v9029 = vld [vmem:[%s9006 + $0xb0] sm:$0xff]
      %v9030 = vld [vmem:[%s9006 + $0xb8] sm:$0xff]
      %v9031 = vld [vmem:[%s9006 + $0xc0] sm:$0xff]
      %v9032 = vld [vmem:[%s9006 + $0xc8] sm:$0xff]
      %v9033 = vld [vmem:[%s9006 + $0xd0] sm:$0xff]
      %v9034 = vld [vmem:[%s9006 + $0xd8] sm:$0xff]
      %v9035 = vld [vmem:[%s9006 + $0xe0] sm:$0xff]
      %v9036 = vld [vmem:[%s9006 + $0xe8] sm:$0xff]
      %v9037 = vld [vmem:[%s9006 + $0xf0] sm:$0xff]
      %v9038 = vld [vmem:[%s9006 + $0xf8] sm:$0xff]
      %v9039 = vunpack.c.l.b16 %v8907
      %v9040 = vunpack.c.h.b16 %v8907
      %v9041 = vunpack.c.l.b16 %v8921
      %v9042 = vunpack.c.h.b16 %v8921
      %v9043 = vunpack.c.l.b16 %v8935
      %v9044 = vunpack.c.h.b16 %v8935
      %v9045 = vunpack.c.l.b16 %v8949
      %v9046 = vunpack.c.h.b16 %v8949
      %v9047 = vunpack.c.l.b16 %v8963
      %v9048 = vunpack.c.h.b16 %v8963
      %v9049 = vunpack.c.l.b16 %v8977
      %v9050 = vunpack.c.h.b16 %v8977
      %v9051 = vunpack.c.l.b16 %v8991
      %v9052 = vunpack.c.h.b16 %v8991
      %v9053 = vunpack.c.l.b16 %v9005
      %v9054 = vunpack.c.h.b16 %v9005
      %v9055 = vpack.c.b16 %v9041, %v9039
      %v9056 = vpack.c.b16 %v9042, %v9040
      %v9057 = vpack.c.b16 %v9045, %v9043
      %v9058 = vpack.c.b16 %v9046, %v9044
      %v9059 = vpack.c.b16 %v9049, %v9047
      %v9060 = vpack.c.b16 %v9050, %v9048
      %v9061 = vpack.c.b16 %v9053, %v9051
      %v9062 = vpack.c.b16 %v9054, %v9052
      %v9103 = vunpack.c.l.b16 %v9007
      %v9104 = vunpack.c.h.b16 %v9007
      %v9105 = vunpack.c.l.b16 %v9008
      %v9106 = vunpack.c.h.b16 %v9008
      %v9107 = vunpack.c.l.b16 %v9009
      %v9108 = vunpack.c.h.b16 %v9009
      %v9109 = vunpack.c.l.b16 %v9010
      %v9110 = vunpack.c.h.b16 %v9010
      %v9111 = vunpack.c.l.b16 %v9011
      %v9112 = vunpack.c.h.b16 %v9011
      %v9113 = vunpack.c.l.b16 %v9012
      %v9114 = vunpack.c.h.b16 %v9012
      %v9115 = vunpack.c.l.b16 %v9013
      %v9116 = vunpack.c.h.b16 %v9013
      %v9117 = vunpack.c.l.b16 %v9014
      %v9118 = vunpack.c.h.b16 %v9014
      %v9119 = vunpack.c.l.b16 %v9015
      %v9120 = vunpack.c.h.b16 %v9015
      %v9121 = vunpack.c.l.b16 %v9016
      %v9122 = vunpack.c.h.b16 %v9016
      %v9123 = vunpack.c.l.b16 %v9017
      %v9124 = vunpack.c.h.b16 %v9017
      %v9125 = vunpack.c.l.b16 %v9018
      %v9126 = vunpack.c.h.b16 %v9018
      %v9127 = vunpack.c.l.b16 %v9019
      %v9128 = vunpack.c.h.b16 %v9019
      %v9129 = vunpack.c.l.b16 %v9020
      %v9130 = vunpack.c.h.b16 %v9020
      %v9131 = vunpack.c.l.b16 %v9021
      %v9132 = vunpack.c.h.b16 %v9021
      %v9133 = vunpack.c.l.b16 %v9022
      %v9134 = vunpack.c.h.b16 %v9022
      %v9135 = vunpack.c.l.b16 %v9023
      %v9136 = vunpack.c.h.b16 %v9023
      %v9137 = vunpack.c.l.b16 %v9024
      %v9138 = vunpack.c.h.b16 %v9024
      %v9139 = vunpack.c.l.b16 %v9025
      %v9140 = vunpack.c.h.b16 %v9025
      %v9141 = vunpack.c.l.b16 %v9026
      %v9142 = vunpack.c.h.b16 %v9026
      %v9143 = vunpack.c.l.b16 %v9027
      %v9144 = vunpack.c.h.b16 %v9027
      %v9145 = vunpack.c.l.b16 %v9028
      %v9146 = vunpack.c.h.b16 %v9028
      %v9147 = vunpack.c.l.b16 %v9029
      %v9148 = vunpack.c.h.b16 %v9029
      %v9149 = vunpack.c.l.b16 %v9030
      %v9150 = vunpack.c.h.b16 %v9030
      %v9151 = vunpack.c.l.b16 %v9031
      %v9152 = vunpack.c.h.b16 %v9031
      %v9153 = vunpack.c.l.b16 %v9032
      %v9154 = vunpack.c.h.b16 %v9032
      %v9155 = vunpack.c.l.b16 %v9033
      %v9156 = vunpack.c.h.b16 %v9033
      %v9157 = vunpack.c.l.b16 %v9034
      %v9158 = vunpack.c.h.b16 %v9034
      %v9159 = vunpack.c.l.b16 %v9035
      %v9160 = vunpack.c.h.b16 %v9035
      %v9161 = vunpack.c.l.b16 %v9036
      %v9162 = vunpack.c.h.b16 %v9036
      %v9163 = vunpack.c.l.b16 %v9037
      %v9164 = vunpack.c.h.b16 %v9037
      %v9165 = vunpack.c.l.b16 %v9038
      %v9166 = vunpack.c.h.b16 %v9038
      %v9167 = vpack.c.b16 %v9105, %v9103
      %v9168 = vpack.c.b16 %v9106, %v9104
      %v9169 = vpack.c.b16 %v9109, %v9107
      %v9170 = vpack.c.b16 %v9110, %v9108
      %v9171 = vpack.c.b16 %v9113, %v9111
      %v9172 = vpack.c.b16 %v9114, %v9112
      %v9173 = vpack.c.b16 %v9117, %v9115
      %v9174 = vpack.c.b16 %v9118, %v9116
      %v9175 = vpack.c.b16 %v9121, %v9119
      %v9176 = vpack.c.b16 %v9122, %v9120
      %v9177 = vpack.c.b16 %v9125, %v9123
      %v9178 = vpack.c.b16 %v9126, %v9124
      %v9179 = vpack.c.b16 %v9129, %v9127
      %v9180 = vpack.c.b16 %v9130, %v9128
      %v9181 = vpack.c.b16 %v9133, %v9131
      %v9182 = vpack.c.b16 %v9134, %v9132
      %v9183 = vpack.c.b16 %v9137, %v9135
      %v9184 = vpack.c.b16 %v9138, %v9136
      %v9185 = vpack.c.b16 %v9141, %v9139
      %v9186 = vpack.c.b16 %v9142, %v9140
      %v9187 = vpack.c.b16 %v9145, %v9143
      %v9188 = vpack.c.b16 %v9146, %v9144
      %v9189 = vpack.c.b16 %v9149, %v9147
      %v9190 = vpack.c.b16 %v9150, %v9148
      %v9191 = vpack.c.b16 %v9153, %v9151
      %v9192 = vpack.c.b16 %v9154, %v9152
      %v9193 = vpack.c.b16 %v9157, %v9155
      %v9194 = vpack.c.b16 %v9158, %v9156
      %v9195 = vpack.c.b16 %v9161, %v9159
      %v9196 = vpack.c.b16 %v9162, %v9160
      %v9197 = vpack.c.b16 %v9165, %v9163
      %v9198 = vpack.c.b16 %v9166, %v9164
      %9231 = vmatprep.subr.bf16.mxu0 %v9182
      %9232 = vmatpush1.bf16.msra.mxu0 %v9181
      %9233 = vmatprep.subr.bf16.mxu0 %v9180
      %9234 = vmatpush1.bf16.msra.mxu0 %v9179
      %9235 = vmatprep.subr.bf16.mxu0 %v9178
      %9236 = vmatpush1.bf16.msra.mxu0 %v9177
      %9237 = vmatprep.subr.bf16.mxu0 %v9176
      %9238 = vmatpush1.bf16.msra.mxu0 %v9175
      %9239 = vmatprep.subr.bf16.mxu0 %v9174
      %9240 = vmatpush1.bf16.msra.mxu0 %v9173
      %9241 = vmatprep.subr.bf16.mxu0 %v9172
      %9242 = vmatpush1.bf16.msra.mxu0 %v9171
      %9243 = vmatprep.subr.bf16.mxu0 %v9170
      %9244 = vmatpush1.bf16.msra.mxu0 %v9169
      %9245 = vmatprep.subr.bf16.mxu0 %v9168
      %9246 = vmatpush1.bf16.msra.mxu0 %v9167
      %9247 = vmatprep.subr.bf16.mxu0 %v9198
      %9248 = vmatpush2.bf16.msra.mxu0 %v9197
      %9249 = vmatprep.subr.bf16.mxu0 %v9196
      %9250 = vmatpush2.bf16.msra.mxu0 %v9195
      %9251 = vmatprep.subr.bf16.mxu0 %v9194
      %9252 = vmatpush2.bf16.msra.mxu0 %v9193
      %9253 = vmatprep.subr.bf16.mxu0 %v9192
      %9254 = vmatpush2.bf16.msra.mxu0 %v9191
      %9255 = vmatprep.subr.bf16.mxu0 %v9190
      %9256 = vmatpush2.bf16.msra.mxu0 %v9189
      %9257 = vmatprep.subr.bf16.mxu0 %v9188
      %9258 = vmatpush2.bf16.msra.mxu0 %v9187
      %9259 = vmatprep.subr.bf16.mxu0 %v9186
      %9260 = vmatpush2.bf16.msra.mxu0 %v9185
      %9261 = vmatprep.subr.bf16.mxu0 %v9184
      %9262 = vmatpush2.bf16.msra.mxu0 %v9183
      %9263 = vmatprep.mubr.bf16.mxu0 %v9056
      %9264 = vmatmul.mubr.bf16.gmra.mxu0 %v9055
      %v9265 = vpop.f32.mrf.mxu0
      %v9266 = vadd.f32 0.0, %v9265
      %v9267 = vpop.f32.mrf.mxu0
      %v9268 = vadd.f32 0.0, %v9267
      %v9269 = vpop.f32.mrf.mxu0
      %v9270 = vadd.f32 0.0, %v9269
      %v9271 = vpop.f32.mrf.mxu0
      %v9272 = vadd.f32 0.0, %v9271
      %9273 = vmatprep.mubr.bf16.mxu0 %v9058
      %9274 = vmatmul.mubr.bf16.gmra.mxu0 %v9057
      %v9275 = vpop.f32.mrf.mxu0
      %v9276 = vadd.f32 0.0, %v9275
      %v9277 = vpop.f32.mrf.mxu0
      %v9278 = vadd.f32 0.0, %v9277
      %v9279 = vpop.f32.mrf.mxu0
      %v9280 = vadd.f32 0.0, %v9279
      %v9281 = vpop.f32.mrf.mxu0
      %v9282 = vadd.f32 0.0, %v9281
      %9283 = vmatprep.mubr.bf16.mxu0 %v9060
      %9284 = vmatmul.mubr.bf16.gmra.mxu0 %v9059
      %v9285 = vpop.f32.mrf.mxu0
      %v9286 = vadd.f32 0.0, %v9285
      %v9287 = vpop.f32.mrf.mxu0
      %v9288 = vadd.f32 0.0, %v9287
      %v9289 = vpop.f32.mrf.mxu0
      %v9290 = vadd.f32 0.0, %v9289
      %v9291 = vpop.f32.mrf.mxu0
      %v9292 = vadd.f32 0.0, %v9291
      %9293 = vmatprep.mubr.bf16.mxu0 %v9062
      %9294 = vmatmul.mubr.bf16.gmra.mxu0 %v9061
      %v9295 = vpop.f32.mrf.mxu0
      %v9296 = vadd.f32 0.0, %v9295
      %v9297 = vpop.f32.mrf.mxu0
      %v9298 = vadd.f32 0.0, %v9297
      %v9299 = vpop.f32.mrf.mxu0
      %v9300 = vadd.f32 0.0, %v9299
      %v9301 = vpop.f32.mrf.mxu0
      %v9302 = vadd.f32 0.0, %v9301
      %9303 = vdwg.mxu0
      %v9304 = vadd.f32 %v8862, %v9266
      %v9305 = vadd.f32 %v8863, %v9268
      %v9306 = vadd.f32 %v8864, %v9270
      %v9307 = vadd.f32 %v8865, %v9272
      %v9308 = vadd.f32 %v8866, %v9276
      %v9309 = vadd.f32 %v8867, %v9278
      %v9310 = vadd.f32 %v8868, %v9280
      %v9311 = vadd.f32 %v8869, %v9282
      %v9312 = vadd.f32 %v8870, %v9286
      %v9313 = vadd.f32 %v8871, %v9288
      %v9314 = vadd.f32 %v8872, %v9290
      %v9315 = vadd.f32 %v8873, %v9292
      %v9316 = vadd.f32 %v8874, %v9296
      %v9317 = vadd.f32 %v8875, %v9298
      %v9318 = vadd.f32 %v8876, %v9300
      %v9319 = vadd.f32 %v8877, %v9302
      %v9320 = vld [vmem:[%s8547] sm:$0xee]
      %v9321 = vld [vmem:[%s8547 + $0x10] sm:$0xee]
      %v9322 = vld [vmem:[%s8547 + $0x20] sm:$0xee]
      %v9323 = vld [vmem:[%s8547 + $0x30] sm:$0xee]
      %v9324 = vld [vmem:[%s8547 + $0x40] sm:$0xee]
      %v9325 = vld [vmem:[%s8547 + $0x50] sm:$0xee]
      %v9326 = vld [vmem:[%s8547 + $0x60] sm:$0xee]
      %v9327 = vld [vmem:[%s8547 + $0x70] sm:$0xee]
      %v9344 = vrot.slane %v9320, 5
      %v9345 = vrot.slane %v9344, 4
      %v9346 = vrot.slane %v8879, 5
      %v9347 = vsel %vm7058, %v9345, %v9346
      %v9348 = vrot.slane %v9321, 5
      %v9349 = vrot.slane %v9348, 4
      %v9350 = vrot.slane %v8881, 5
      %v9351 = vsel %vm7058, %v9349, %v9350
      %v9352 = vrot.slane %v9322, 5
      %v9353 = vrot.slane %v9352, 4
      %v9354 = vrot.slane %v8883, 5
      %v9355 = vsel %vm7058, %v9353, %v9354
      %v9356 = vrot.slane %v9323, 5
      %v9357 = vrot.slane %v9356, 4
      %v9358 = vrot.slane %v8885, 5
      %v9359 = vsel %vm7058, %v9357, %v9358
      %v9360 = vrot.slane %v9324, 5
      %v9361 = vrot.slane %v9360, 4
      %v9362 = vrot.slane %v8887, 5
      %v9363 = vsel %vm7058, %v9361, %v9362
      %v9364 = vrot.slane %v9325, 5
      %v9365 = vrot.slane %v9364, 4
      %v9366 = vrot.slane %v8889, 5
      %v9367 = vsel %vm7058, %v9365, %v9366
      %v9368 = vrot.slane %v9326, 5
      %v9369 = vrot.slane %v9368, 4
      %v9370 = vrot.slane %v8891, 5
      %v9371 = vsel %vm7058, %v9369, %v9370
      %v9372 = vrot.slane %v9327, 5
      %v9373 = vrot.slane %v9372, 4
      %v9374 = vrot.slane %v8893, 5
      %v9375 = vsel %vm7058, %v9373, %v9374
      %s9376 = scalar_lea.vmem %s3, 2048
      %v9377 = vld [vmem:[%s9376] sm:$0xff]
      %v9378 = vld [vmem:[%s9376 + $0x8] sm:$0xff]
      %v9379 = vld [vmem:[%s9376 + $0x10] sm:$0xff]
      %v9380 = vld [vmem:[%s9376 + $0x18] sm:$0xff]
      %v9381 = vld [vmem:[%s9376 + $0x20] sm:$0xff]
      %v9382 = vld [vmem:[%s9376 + $0x28] sm:$0xff]
      %v9383 = vld [vmem:[%s9376 + $0x30] sm:$0xff]
      %v9384 = vld [vmem:[%s9376 + $0x38] sm:$0xff]
      %v9385 = vld [vmem:[%s9376 + $0x40] sm:$0xff]
      %v9386 = vld [vmem:[%s9376 + $0x48] sm:$0xff]
      %v9387 = vld [vmem:[%s9376 + $0x50] sm:$0xff]
      %v9388 = vld [vmem:[%s9376 + $0x58] sm:$0xff]
      %v9389 = vld [vmem:[%s9376 + $0x60] sm:$0xff]
      %v9390 = vld [vmem:[%s9376 + $0x68] sm:$0xff]
      %v9391 = vld [vmem:[%s9376 + $0x70] sm:$0xff]
      %v9392 = vld [vmem:[%s9376 + $0x78] sm:$0xff]
      %v9393 = vld [vmem:[%s9376 + $0x80] sm:$0xff]
      %v9394 = vld [vmem:[%s9376 + $0x88] sm:$0xff]
      %v9395 = vld [vmem:[%s9376 + $0x90] sm:$0xff]
      %v9396 = vld [vmem:[%s9376 + $0x98] sm:$0xff]
      %v9397 = vld [vmem:[%s9376 + $0xa0] sm:$0xff]
      %v9398 = vld [vmem:[%s9376 + $0xa8] sm:$0xff]
      %v9399 = vld [vmem:[%s9376 + $0xb0] sm:$0xff]
      %v9400 = vld [vmem:[%s9376 + $0xb8] sm:$0xff]
      %v9401 = vld [vmem:[%s9376 + $0xc0] sm:$0xff]
      %v9402 = vld [vmem:[%s9376 + $0xc8] sm:$0xff]
      %v9403 = vld [vmem:[%s9376 + $0xd0] sm:$0xff]
      %v9404 = vld [vmem:[%s9376 + $0xd8] sm:$0xff]
      %v9405 = vld [vmem:[%s9376 + $0xe0] sm:$0xff]
      %v9406 = vld [vmem:[%s9376 + $0xe8] sm:$0xff]
      %v9407 = vld [vmem:[%s9376 + $0xf0] sm:$0xff]
      %v9408 = vld [vmem:[%s9376 + $0xf8] sm:$0xff]
      %v9409 = vunpack.c.l.b16 %v9347
      %v9410 = vunpack.c.h.b16 %v9347
      %v9411 = vunpack.c.l.b16 %v9351
      %v9412 = vunpack.c.h.b16 %v9351
      %v9413 = vunpack.c.l.b16 %v9355
      %v9414 = vunpack.c.h.b16 %v9355
      %v9415 = vunpack.c.l.b16 %v9359
      %v9416 = vunpack.c.h.b16 %v9359
      %v9417 = vunpack.c.l.b16 %v9363
      %v9418 = vunpack.c.h.b16 %v9363
      %v9419 = vunpack.c.l.b16 %v9367
      %v9420 = vunpack.c.h.b16 %v9367
      %v9421 = vunpack.c.l.b16 %v9371
      %v9422 = vunpack.c.h.b16 %v9371
      %v9423 = vunpack.c.l.b16 %v9375
      %v9424 = vunpack.c.h.b16 %v9375
      %v9425 = vpack.c.b16 %v9411, %v9409
      %v9426 = vpack.c.b16 %v9412, %v9410
      %v9427 = vpack.c.b16 %v9415, %v9413
      %v9428 = vpack.c.b16 %v9416, %v9414
      %v9429 = vpack.c.b16 %v9419, %v9417
      %v9430 = vpack.c.b16 %v9420, %v9418
      %v9431 = vpack.c.b16 %v9423, %v9421
      %v9432 = vpack.c.b16 %v9424, %v9422
      %v9473 = vunpack.c.l.b16 %v9377
      %v9474 = vunpack.c.h.b16 %v9377
      %v9475 = vunpack.c.l.b16 %v9378
      %v9476 = vunpack.c.h.b16 %v9378
      %v9477 = vunpack.c.l.b16 %v9379
      %v9478 = vunpack.c.h.b16 %v9379
      %v9479 = vunpack.c.l.b16 %v9380
      %v9480 = vunpack.c.h.b16 %v9380
      %v9481 = vunpack.c.l.b16 %v9381
      %v9482 = vunpack.c.h.b16 %v9381
      %v9483 = vunpack.c.l.b16 %v9382
      %v9484 = vunpack.c.h.b16 %v9382
      %v9485 = vunpack.c.l.b16 %v9383
      %v9486 = vunpack.c.h.b16 %v9383
      %v9487 = vunpack.c.l.b16 %v9384
      %v9488 = vunpack.c.h.b16 %v9384
      %v9489 = vunpack.c.l.b16 %v9385
      %v9490 = vunpack.c.h.b16 %v9385
      %v9491 = vunpack.c.l.b16 %v9386
      %v9492 = vunpack.c.h.b16 %v9386
      %v9493 = vunpack.c.l.b16 %v9387
      %v9494 = vunpack.c.h.b16 %v9387
      %v9495 = vunpack.c.l.b16 %v9388
      %v9496 = vunpack.c.h.b16 %v9388
      %v9497 = vunpack.c.l.b16 %v9389
      %v9498 = vunpack.c.h.b16 %v9389
      %v9499 = vunpack.c.l.b16 %v9390
      %v9500 = vunpack.c.h.b16 %v9390
      %v9501 = vunpack.c.l.b16 %v9391
      %v9502 = vunpack.c.h.b16 %v9391
      %v9503 = vunpack.c.l.b16 %v9392
      %v9504 = vunpack.c.h.b16 %v9392
      %v9505 = vunpack.c.l.b16 %v9393
      %v9506 = vunpack.c.h.b16 %v9393
      %v9507 = vunpack.c.l.b16 %v9394
      %v9508 = vunpack.c.h.b16 %v9394
      %v9509 = vunpack.c.l.b16 %v9395
      %v9510 = vunpack.c.h.b16 %v9395
      %v9511 = vunpack.c.l.b16 %v9396
      %v9512 = vunpack.c.h.b16 %v9396
      %v9513 = vunpack.c.l.b16 %v9397
      %v9514 = vunpack.c.h.b16 %v9397
      %v9515 = vunpack.c.l.b16 %v9398
      %v9516 = vunpack.c.h.b16 %v9398
      %v9517 = vunpack.c.l.b16 %v9399
      %v9518 = vunpack.c.h.b16 %v9399
      %v9519 = vunpack.c.l.b16 %v9400
      %v9520 = vunpack.c.h.b16 %v9400
      %v9521 = vunpack.c.l.b16 %v9401
      %v9522 = vunpack.c.h.b16 %v9401
      %v9523 = vunpack.c.l.b16 %v9402
      %v9524 = vunpack.c.h.b16 %v9402
      %v9525 = vunpack.c.l.b16 %v9403
      %v9526 = vunpack.c.h.b16 %v9403
      %v9527 = vunpack.c.l.b16 %v9404
      %v9528 = vunpack.c.h.b16 %v9404
      %v9529 = vunpack.c.l.b16 %v9405
      %v9530 = vunpack.c.h.b16 %v9405
      %v9531 = vunpack.c.l.b16 %v9406
      %v9532 = vunpack.c.h.b16 %v9406
      %v9533 = vunpack.c.l.b16 %v9407
      %v9534 = vunpack.c.h.b16 %v9407
      %v9535 = vunpack.c.l.b16 %v9408
      %v9536 = vunpack.c.h.b16 %v9408
      %v9537 = vpack.c.b16 %v9475, %v9473
      %v9538 = vpack.c.b16 %v9476, %v9474
      %v9539 = vpack.c.b16 %v9479, %v9477
      %v9540 = vpack.c.b16 %v9480, %v9478
      %v9541 = vpack.c.b16 %v9483, %v9481
      %v9542 = vpack.c.b16 %v9484, %v9482
      %v9543 = vpack.c.b16 %v9487, %v9485
      %v9544 = vpack.c.b16 %v9488, %v9486
      %v9545 = vpack.c.b16 %v9491, %v9489
      %v9546 = vpack.c.b16 %v9492, %v9490
      %v9547 = vpack.c.b16 %v9495, %v9493
      %v9548 = vpack.c.b16 %v9496, %v9494
      %v9549 = vpack.c.b16 %v9499, %v9497
      %v9550 = vpack.c.b16 %v9500, %v9498
      %v9551 = vpack.c.b16 %v9503, %v9501
      %v9552 = vpack.c.b16 %v9504, %v9502
      %v9553 = vpack.c.b16 %v9507, %v9505
      %v9554 = vpack.c.b16 %v9508, %v9506
      %v9555 = vpack.c.b16 %v9511, %v9509
      %v9556 = vpack.c.b16 %v9512, %v9510
      %v9557 = vpack.c.b16 %v9515, %v9513
      %v9558 = vpack.c.b16 %v9516, %v9514
      %v9559 = vpack.c.b16 %v9519, %v9517
      %v9560 = vpack.c.b16 %v9520, %v9518
      %v9561 = vpack.c.b16 %v9523, %v9521
      %v9562 = vpack.c.b16 %v9524, %v9522
      %v9563 = vpack.c.b16 %v9527, %v9525
      %v9564 = vpack.c.b16 %v9528, %v9526
      %v9565 = vpack.c.b16 %v9531, %v9529
      %v9566 = vpack.c.b16 %v9532, %v9530
      %v9567 = vpack.c.b16 %v9535, %v9533
      %v9568 = vpack.c.b16 %v9536, %v9534
      %9601 = vmatprep.subr.bf16.mxu0 %v9552
      %9602 = vmatpush1.bf16.msra.mxu0 %v9551
      %9603 = vmatprep.subr.bf16.mxu0 %v9550
      %9604 = vmatpush1.bf16.msra.mxu0 %v9549
      %9605 = vmatprep.subr.bf16.mxu0 %v9548
      %9606 = vmatpush1.bf16.msra.mxu0 %v9547
      %9607 = vmatprep.subr.bf16.mxu0 %v9546
      %9608 = vmatpush1.bf16.msra.mxu0 %v9545
      %9609 = vmatprep.subr.bf16.mxu0 %v9544
      %9610 = vmatpush1.bf16.msra.mxu0 %v9543
      %9611 = vmatprep.subr.bf16.mxu0 %v9542
      %9612 = vmatpush1.bf16.msra.mxu0 %v9541
      %9613 = vmatprep.subr.bf16.mxu0 %v9540
      %9614 = vmatpush1.bf16.msra.mxu0 %v9539
      %9615 = vmatprep.subr.bf16.mxu0 %v9538
      %9616 = vmatpush1.bf16.msra.mxu0 %v9537
      %9617 = vmatprep.subr.bf16.mxu0 %v9568
      %9618 = vmatpush2.bf16.msra.mxu0 %v9567
      %9619 = vmatprep.subr.bf16.mxu0 %v9566
      %9620 = vmatpush2.bf16.msra.mxu0 %v9565
      %9621 = vmatprep.subr.bf16.mxu0 %v9564
      %9622 = vmatpush2.bf16.msra.mxu0 %v9563
      %9623 = vmatprep.subr.bf16.mxu0 %v9562
      %9624 = vmatpush2.bf16.msra.mxu0 %v9561
      %9625 = vmatprep.subr.bf16.mxu0 %v9560
      %9626 = vmatpush2.bf16.msra.mxu0 %v9559
      %9627 = vmatprep.subr.bf16.mxu0 %v9558
      %9628 = vmatpush2.bf16.msra.mxu0 %v9557
      %9629 = vmatprep.subr.bf16.mxu0 %v9556
      %9630 = vmatpush2.bf16.msra.mxu0 %v9555
      %9631 = vmatprep.subr.bf16.mxu0 %v9554
      %9632 = vmatpush2.bf16.msra.mxu0 %v9553
      %9633 = vmatprep.mubr.bf16.mxu0 %v9426
      %9634 = vmatmul.mubr.bf16.gmra.mxu0 %v9425
      %v9635 = vpop.f32.mrf.mxu0
      %v9636 = vadd.f32 0.0, %v9635
      %v9637 = vpop.f32.mrf.mxu0
      %v9638 = vadd.f32 0.0, %v9637
      %v9639 = vpop.f32.mrf.mxu0
      %v9640 = vadd.f32 0.0, %v9639
      %v9641 = vpop.f32.mrf.mxu0
      %v9642 = vadd.f32 0.0, %v9641
      %9643 = vmatprep.mubr.bf16.mxu0 %v9428
      %9644 = vmatmul.mubr.bf16.gmra.mxu0 %v9427
      %v9645 = vpop.f32.mrf.mxu0
      %v9646 = vadd.f32 0.0, %v9645
      %v9647 = vpop.f32.mrf.mxu0
      %v9648 = vadd.f32 0.0, %v9647
      %v9649 = vpop.f32.mrf.mxu0
      %v9650 = vadd.f32 0.0, %v9649
      %v9651 = vpop.f32.mrf.mxu0
      %v9652 = vadd.f32 0.0, %v9651
      %9653 = vmatprep.mubr.bf16.mxu0 %v9430
      %9654 = vmatmul.mubr.bf16.gmra.mxu0 %v9429
      %v9655 = vpop.f32.mrf.mxu0
      %v9656 = vadd.f32 0.0, %v9655
      %v9657 = vpop.f32.mrf.mxu0
      %v9658 = vadd.f32 0.0, %v9657
      %v9659 = vpop.f32.mrf.mxu0
      %v9660 = vadd.f32 0.0, %v9659
      %v9661 = vpop.f32.mrf.mxu0
      %v9662 = vadd.f32 0.0, %v9661
      %9663 = vmatprep.mubr.bf16.mxu0 %v9432
      %9664 = vmatmul.mubr.bf16.gmra.mxu0 %v9431
      %v9665 = vpop.f32.mrf.mxu0
      %v9666 = vadd.f32 0.0, %v9665
      %v9667 = vpop.f32.mrf.mxu0
      %v9668 = vadd.f32 0.0, %v9667
      %v9669 = vpop.f32.mrf.mxu0
      %v9670 = vadd.f32 0.0, %v9669
      %v9671 = vpop.f32.mrf.mxu0
      %v9672 = vadd.f32 0.0, %v9671
      %9673 = vdwg.mxu0
      %v9674 = vadd.f32 %v9304, %v9636
      %v9675 = vadd.f32 %v9305, %v9638
      %v9676 = vadd.f32 %v9306, %v9640
      %v9677 = vadd.f32 %v9307, %v9642
      %v9678 = vadd.f32 %v9308, %v9646
      %v9679 = vadd.f32 %v9309, %v9648
      %v9680 = vadd.f32 %v9310, %v9650
      %v9681 = vadd.f32 %v9311, %v9652
      %v9682 = vadd.f32 %v9312, %v9656
      %v9683 = vadd.f32 %v9313, %v9658
      %v9684 = vadd.f32 %v9314, %v9660
      %v9685 = vadd.f32 %v9315, %v9662
      %v9686 = vadd.f32 %v9316, %v9666
      %v9687 = vadd.f32 %v9317, %v9668
      %v9688 = vadd.f32 %v9318, %v9670
      %v9689 = vadd.f32 %v9319, %v9672
      %v9690 = vld [vmem:[%s4] sm:$0x3]
      %v9692 = vlaneseq
      %v9693 = vshrl.u32 %v9692, 7
      %v9694 = vsub.s32 0, %v9693
      %v9695 = vrot.slane %v9690, %v9694
      %v9696 = vlaneseq
      %v9697 = vshrl.u32 %v9696, 7
      %v9698 = vsub.s32 1, %v9697
      %v9699 = vrot.slane %v9690, %v9698
      %v9702 = vadd.f32 %v9674, %v9695
      %v9703 = vadd.f32 %v9675, %v9699
      %v9704 = vadd.f32 %v9676, %v9695
      %v9705 = vadd.f32 %v9677, %v9699
      %v9706 = vadd.f32 %v9678, %v9695
      %v9707 = vadd.f32 %v9679, %v9699
      %v9708 = vadd.f32 %v9680, %v9695
      %v9709 = vadd.f32 %v9681, %v9699
      %v9710 = vadd.f32 %v9682, %v9695
      %v9711 = vadd.f32 %v9683, %v9699
      %v9712 = vadd.f32 %v9684, %v9695
      %v9713 = vadd.f32 %v9685, %v9699
      %v9714 = vadd.f32 %v9686, %v9695
      %v9715 = vadd.f32 %v9687, %v9699
      %v9716 = vadd.f32 %v9688, %v9695
      %v9717 = vadd.f32 %v9689, %v9699
      %v9718 = vmax.f32 %v9702, 0.0
      %v9719 = vmax.f32 %v9703, 0.0
      %v9720 = vmax.f32 %v9704, 0.0
      %v9721 = vmax.f32 %v9705, 0.0
      %v9722 = vmax.f32 %v9706, 0.0
      %v9723 = vmax.f32 %v9707, 0.0
      %v9724 = vmax.f32 %v9708, 0.0
      %v9725 = vmax.f32 %v9709, 0.0
      %v9726 = vmax.f32 %v9710, 0.0
      %v9727 = vmax.f32 %v9711, 0.0
      %v9728 = vmax.f32 %v9712, 0.0
      %v9729 = vmax.f32 %v9713, 0.0
      %v9730 = vmax.f32 %v9714, 0.0
      %v9731 = vmax.f32 %v9715, 0.0
      %v9732 = vmax.f32 %v9716, 0.0
      %v9733 = vmax.f32 %v9717, 0.0
      %v9734 = vpack.c.bf16 %v9720, %v9718
      %v9735 = vpack.c.bf16 %v9721, %v9719
      %v9736 = vpack.c.bf16 %v9724, %v9722
      %v9737 = vpack.c.bf16 %v9725, %v9723
      %v9738 = vpack.c.bf16 %v9728, %v9726
      %v9739 = vpack.c.bf16 %v9729, %v9727
      %v9740 = vpack.c.bf16 %v9732, %v9730
      %v9741 = vpack.c.bf16 %v9733, %v9731
      %9742 = vmatprep.subr.bf16.mxu0 %v797
      %9743 = vmatpush1.bf16.msra.mxu0 %v796
      %9744 = vmatprep.subr.bf16.mxu0 %v795
      %9745 = vmatpush1.bf16.msra.mxu0 %v794
      %9746 = vmatprep.subr.bf16.mxu0 %v793
      %9747 = vmatpush1.bf16.msra.mxu0 %v792
      %9748 = vmatprep.subr.bf16.mxu0 %v791
      %9749 = vmatpush1.bf16.msra.mxu0 %v790
      %9750 = vmatprep.subr.bf16.mxu0 %v789
      %9751 = vmatpush1.bf16.msra.mxu0 %v788
      %9752 = vmatprep.subr.bf16.mxu0 %v787
      %9753 = vmatpush1.bf16.msra.mxu0 %v786
      %9754 = vmatprep.subr.bf16.mxu0 %v785
      %9755 = vmatpush1.bf16.msra.mxu0 %v784
      %9756 = vmatprep.subr.bf16.mxu0 %v783
      %9757 = vmatpush1.bf16.msra.mxu0 %v782
      %9758 = vmatprep.subr.bf16.mxu0 %v813
      %9759 = vmatpush2.bf16.msra.mxu0 %v812
      %9760 = vmatprep.subr.bf16.mxu0 %v811
      %9761 = vmatpush2.bf16.msra.mxu0 %v810
      %9762 = vmatprep.subr.bf16.mxu0 %v809
      %9763 = vmatpush2.bf16.msra.mxu0 %v808
      %9764 = vmatprep.subr.bf16.mxu0 %v807
      %9765 = vmatpush2.bf16.msra.mxu0 %v806
      %9766 = vmatprep.subr.bf16.mxu0 %v805
      %9767 = vmatpush2.bf16.msra.mxu0 %v804
      %9768 = vmatprep.subr.bf16.mxu0 %v803
      %9769 = vmatpush2.bf16.msra.mxu0 %v802
      %9770 = vmatprep.subr.bf16.mxu0 %v801
      %9771 = vmatpush2.bf16.msra.mxu0 %v800
      %9772 = vmatprep.subr.bf16.mxu0 %v799
      %9773 = vmatpush2.bf16.msra.mxu0 %v798
      %9774 = vmatprep.mubr.bf16.mxu0 %v9735
      %9775 = vmatmul.mubr.bf16.gmra.mxu0 %v9734
      %v9776 = vpop.f32.mrf.mxu0
      %v9777 = vadd.f32 0.0, %v9776
      %v9778 = vpop.f32.mrf.mxu0
      %v9779 = vadd.f32 0.0, %v9778
      %v9780 = vpop.f32.mrf.mxu0
      %v9781 = vadd.f32 0.0, %v9780
      %v9782 = vpop.f32.mrf.mxu0
      %v9783 = vadd.f32 0.0, %v9782
      %9784 = vmatprep.mubr.bf16.mxu0 %v9737
      %9785 = vmatmul.mubr.bf16.gmra.mxu0 %v9736
      %v9786 = vpop.f32.mrf.mxu0
      %v9787 = vadd.f32 0.0, %v9786
      %v9788 = vpop.f32.mrf.mxu0
      %v9789 = vadd.f32 0.0, %v9788
      %v9790 = vpop.f32.mrf.mxu0
      %v9791 = vadd.f32 0.0, %v9790
      %v9792 = vpop.f32.mrf.mxu0
      %v9793 = vadd.f32 0.0, %v9792
      %9794 = vmatprep.mubr.bf16.mxu0 %v9739
      %9795 = vmatmul.mubr.bf16.gmra.mxu0 %v9738
      %v9796 = vpop.f32.mrf.mxu0
      %v9797 = vadd.f32 0.0, %v9796
      %v9798 = vpop.f32.mrf.mxu0
      %v9799 = vadd.f32 0.0, %v9798
      %v9800 = vpop.f32.mrf.mxu0
      %v9801 = vadd.f32 0.0, %v9800
      %v9802 = vpop.f32.mrf.mxu0
      %v9803 = vadd.f32 0.0, %v9802
      %9804 = vmatprep.mubr.bf16.mxu0 %v9741
      %9805 = vmatmul.mubr.bf16.gmra.mxu0 %v9740
      %v9806 = vpop.f32.mrf.mxu0
      %v9807 = vadd.f32 0.0, %v9806
      %v9808 = vpop.f32.mrf.mxu0
      %v9809 = vadd.f32 0.0, %v9808
      %v9810 = vpop.f32.mrf.mxu0
      %v9811 = vadd.f32 0.0, %v9810
      %v9812 = vpop.f32.mrf.mxu0
      %v9813 = vadd.f32 0.0, %v9812
      %9814 = vdwg.mxu0
      %v9831 = vcombine.low %v9777, %v9779
      %v9832 = vcombine.high %v9777, %v9779
      %v9834 = vunpack.c.l.s4 1983009808
      %v9835 = vunpack.c.0.s8 %v9834
      %v9836 = vlaneseq
      %v9837 = vshrl.u32 %v9836, 7
      %v9838 = vsub.s32 %v9835, %v9837
      %v9839 = vrot.slane %v9831, %v9838
      %v9841 = vunpack.c.l.s4 1983009808
      %v9842 = vunpack.c.0.s8 %v9841
      %v9843 = vlaneseq
      %v9844 = vshrl.u32 %v9843, 7
      %v9845 = vsub.s32 %v9842, %v9844
      %v9846 = vrot.slane %v9832, %v9845
      %v9847 = vcombine.high %v9839, %v9839
      %v9848 = vcombine.high %v9846, %v9846
      %v9849 = vcombine.low %v9781, %v9783
      %v9850 = vcombine.high %v9781, %v9783
      %v9852 = vunpack.c.l.s4 1983009808
      %v9853 = vunpack.c.0.s8 %v9852
      %v9854 = vlaneseq
      %v9855 = vshrl.u32 %v9854, 7
      %v9856 = vsub.s32 %v9853, %v9855
      %v9857 = vrot.slane %v9849, %v9856
      %v9859 = vunpack.c.l.s4 1983009808
      %v9860 = vunpack.c.0.s8 %v9859
      %v9861 = vlaneseq
      %v9862 = vshrl.u32 %v9861, 7
      %v9863 = vsub.s32 %v9860, %v9862
      %v9864 = vrot.slane %v9850, %v9863
      %v9865 = vcombine.high %v9857, %v9857
      %v9866 = vcombine.high %v9864, %v9864
      %v9867 = vcombine.low %v9787, %v9789
      %v9868 = vcombine.high %v9787, %v9789
      %v9870 = vunpack.c.l.s4 1983009808
      %v9871 = vunpack.c.0.s8 %v9870
      %v9872 = vlaneseq
      %v9873 = vshrl.u32 %v9872, 7
      %v9874 = vsub.s32 %v9871, %v9873
      %v9875 = vrot.slane %v9867, %v9874
      %v9877 = vunpack.c.l.s4 1983009808
      %v9878 = vunpack.c.0.s8 %v9877
      %v9879 = vlaneseq
      %v9880 = vshrl.u32 %v9879, 7
      %v9881 = vsub.s32 %v9878, %v9880
      %v9882 = vrot.slane %v9868, %v9881
      %v9883 = vcombine.high %v9875, %v9875
      %v9884 = vcombine.high %v9882, %v9882
      %v9885 = vcombine.low %v9791, %v9793
      %v9886 = vcombine.high %v9791, %v9793
      %v9888 = vunpack.c.l.s4 1983009808
      %v9889 = vunpack.c.0.s8 %v9888
      %v9890 = vlaneseq
      %v9891 = vshrl.u32 %v9890, 7
      %v9892 = vsub.s32 %v9889, %v9891
      %v9893 = vrot.slane %v9885, %v9892
      %v9895 = vunpack.c.l.s4 1983009808
      %v9896 = vunpack.c.0.s8 %v9895
      %v9897 = vlaneseq
      %v9898 = vshrl.u32 %v9897, 7
      %v9899 = vsub.s32 %v9896, %v9898
      %v9900 = vrot.slane %v9886, %v9899
      %v9901 = vcombine.high %v9893, %v9893
      %v9902 = vcombine.high %v9900, %v9900
      %v9903 = vcombine.low %v9797, %v9799
      %v9904 = vcombine.high %v9797, %v9799
      %v9906 = vunpack.c.l.s4 1983009808
      %v9907 = vunpack.c.0.s8 %v9906
      %v9908 = vlaneseq
      %v9909 = vshrl.u32 %v9908, 7
      %v9910 = vsub.s32 %v9907, %v9909
      %v9911 = vrot.slane %v9903, %v9910
      %v9913 = vunpack.c.l.s4 1983009808
      %v9914 = vunpack.c.0.s8 %v9913
      %v9915 = vlaneseq
      %v9916 = vshrl.u32 %v9915, 7
      %v9917 = vsub.s32 %v9914, %v9916
      %v9918 = vrot.slane %v9904, %v9917
      %v9919 = vcombine.high %v9911, %v9911
      %v9920 = vcombine.high %v9918, %v9918
      %v9921 = vcombine.low %v9801, %v9803
      %v9922 = vcombine.high %v9801, %v9803
      %v9924 = vunpack.c.l.s4 1983009808
      %v9925 = vunpack.c.0.s8 %v9924
      %v9926 = vlaneseq
      %v9927 = vshrl.u32 %v9926, 7
      %v9928 = vsub.s32 %v9925, %v9927
      %v9929 = vrot.slane %v9921, %v9928
      %v9931 = vunpack.c.l.s4 1983009808
      %v9932 = vunpack.c.0.s8 %v9931
      %v9933 = vlaneseq
      %v9934 = vshrl.u32 %v9933, 7
      %v9935 = vsub.s32 %v9932, %v9934
      %v9936 = vrot.slane %v9922, %v9935
      %v9937 = vcombine.high %v9929, %v9929
      %v9938 = vcombine.high %v9936, %v9936
      %v9939 = vcombine.low %v9807, %v9809
      %v9940 = vcombine.high %v9807, %v9809
      %v9942 = vunpack.c.l.s4 1983009808
      %v9943 = vunpack.c.0.s8 %v9942
      %v9944 = vlaneseq
      %v9945 = vshrl.u32 %v9944, 7
      %v9946 = vsub.s32 %v9943, %v9945
      %v9947 = vrot.slane %v9939, %v9946
      %v9949 = vunpack.c.l.s4 1983009808
      %v9950 = vunpack.c.0.s8 %v9949
      %v9951 = vlaneseq
      %v9952 = vshrl.u32 %v9951, 7
      %v9953 = vsub.s32 %v9950, %v9952
      %v9954 = vrot.slane %v9940, %v9953
      %v9955 = vcombine.high %v9947, %v9947
      %v9956 = vcombine.high %v9954, %v9954
      %v9957 = vcombine.low %v9811, %v9813
      %v9958 = vcombine.high %v9811, %v9813
      %v9960 = vunpack.c.l.s4 1983009808
      %v9961 = vunpack.c.0.s8 %v9960
      %v9962 = vlaneseq
      %v9963 = vshrl.u32 %v9962, 7
      %v9964 = vsub.s32 %v9961, %v9963
      %v9965 = vrot.slane %v9957, %v9964
      %v9967 = vunpack.c.l.s4 1983009808
      %v9968 = vunpack.c.0.s8 %v9967
      %v9969 = vlaneseq
      %v9970 = vshrl.u32 %v9969, 7
      %v9971 = vsub.s32 %v9968, %v9970
      %v9972 = vrot.slane %v9958, %v9971
      %v9973 = vcombine.high %v9965, %v9965
      %v9974 = vcombine.high %v9972, %v9972
      %v9976 = vunpack.c.l.s4 1983009808
      %v9977 = vunpack.c.0.s8 %v9976
      %v9978 = vlaneseq
      %v9979 = vshrl.u32 %v9978, 7
      %v9980 = vsub.s32 %v9977, %v9979
      %v9981 = vrot.slane %v9839, %v9980
      %v9982 = vcombine.high %v9981, %v9981
      %v9984 = vunpack.c.l.s4 1983009808
      %v9985 = vunpack.c.0.s8 %v9984
      %v9986 = vlaneseq
      %v9987 = vshrl.u32 %v9986, 7
      %v9988 = vsub.s32 %v9985, %v9987
      %v9989 = vrot.slane %v9847, %v9988
      %v9990 = vcombine.high %v9989, %v9989
      %v9992 = vunpack.c.l.s4 1983009808
      %v9993 = vunpack.c.0.s8 %v9992
      %v9994 = vlaneseq
      %v9995 = vshrl.u32 %v9994, 7
      %v9996 = vsub.s32 %v9993, %v9995
      %v9997 = vrot.slane %v9846, %v9996
      %v9998 = vcombine.high %v9997, %v9997
      %v10000 = vunpack.c.l.s4 1983009808
      %v10001 = vunpack.c.0.s8 %v10000
      %v10002 = vlaneseq
      %v10003 = vshrl.u32 %v10002, 7
      %v10004 = vsub.s32 %v10001, %v10003
      %v10005 = vrot.slane %v9848, %v10004
      %v10006 = vcombine.high %v10005, %v10005
      %v10008 = vunpack.c.l.s4 1983009808
      %v10009 = vunpack.c.0.s8 %v10008
      %v10010 = vlaneseq
      %v10011 = vshrl.u32 %v10010, 7
      %v10012 = vsub.s32 %v10009, %v10011
      %v10013 = vrot.slane %v9857, %v10012
      %v10014 = vcombine.high %v10013, %v10013
      %v10016 = vunpack.c.l.s4 1983009808
      %v10017 = vunpack.c.0.s8 %v10016
      %v10018 = vlaneseq
      %v10019 = vshrl.u32 %v10018, 7
      %v10020 = vsub.s32 %v10017, %v10019
      %v10021 = vrot.slane %v9865, %v10020
      %v10022 = vcombine.high %v10021, %v10021
      %v10024 = vunpack.c.l.s4 1983009808
      %v10025 = vunpack.c.0.s8 %v10024
      %v10026 = vlaneseq
      %v10027 = vshrl.u32 %v10026, 7
      %v10028 = vsub.s32 %v10025, %v10027
      %v10029 = vrot.slane %v9864, %v10028
      %v10030 = vcombine.high %v10029, %v10029
      %v10032 = vunpack.c.l.s4 1983009808
      %v10033 = vunpack.c.0.s8 %v10032
      %v10034 = vlaneseq
      %v10035 = vshrl.u32 %v10034, 7
      %v10036 = vsub.s32 %v10033, %v10035
      %v10037 = vrot.slane %v9866, %v10036
      %v10038 = vcombine.high %v10037, %v10037
      %v10040 = vunpack.c.l.s4 1983009808
      %v10041 = vunpack.c.0.s8 %v10040
      %v10042 = vlaneseq
      %v10043 = vshrl.u32 %v10042, 7
      %v10044 = vsub.s32 %v10041, %v10043
      %v10045 = vrot.slane %v9875, %v10044
      %v10046 = vcombine.high %v10045, %v10045
      %v10048 = vunpack.c.l.s4 1983009808
      %v10049 = vunpack.c.0.s8 %v10048
      %v10050 = vlaneseq
      %v10051 = vshrl.u32 %v10050, 7
      %v10052 = vsub.s32 %v10049, %v10051
      %v10053 = vrot.slane %v9883, %v10052
      %v10054 = vcombine.high %v10053, %v10053
      %v10056 = vunpack.c.l.s4 1983009808
      %v10057 = vunpack.c.0.s8 %v10056
      %v10058 = vlaneseq
      %v10059 = vshrl.u32 %v10058, 7
      %v10060 = vsub.s32 %v10057, %v10059
      %v10061 = vrot.slane %v9882, %v10060
      %v10062 = vcombine.high %v10061, %v10061
      %v10064 = vunpack.c.l.s4 1983009808
      %v10065 = vunpack.c.0.s8 %v10064
      %v10066 = vlaneseq
      %v10067 = vshrl.u32 %v10066, 7
      %v10068 = vsub.s32 %v10065, %v10067
      %v10069 = vrot.slane %v9884, %v10068
      %v10070 = vcombine.high %v10069, %v10069
      %v10072 = vunpack.c.l.s4 1983009808
      %v10073 = vunpack.c.0.s8 %v10072
      %v10074 = vlaneseq
      %v10075 = vshrl.u32 %v10074, 7
      %v10076 = vsub.s32 %v10073, %v10075
      %v10077 = vrot.slane %v9893, %v10076
      %v10078 = vcombine.high %v10077, %v10077
      %v10080 = vunpack.c.l.s4 1983009808
      %v10081 = vunpack.c.0.s8 %v10080
      %v10082 = vlaneseq
      %v10083 = vshrl.u32 %v10082, 7
      %v10084 = vsub.s32 %v10081, %v10083
      %v10085 = vrot.slane %v9901, %v10084
      %v10086 = vcombine.high %v10085, %v10085
      %v10088 = vunpack.c.l.s4 1983009808
      %v10089 = vunpack.c.0.s8 %v10088
      %v10090 = vlaneseq
      %v10091 = vshrl.u32 %v10090, 7
      %v10092 = vsub.s32 %v10089, %v10091
      %v10093 = vrot.slane %v9900, %v10092
      %v10094 = vcombine.high %v10093, %v10093
      %v10096 = vunpack.c.l.s4 1983009808
      %v10097 = vunpack.c.0.s8 %v10096
      %v10098 = vlaneseq
      %v10099 = vshrl.u32 %v10098, 7
      %v10100 = vsub.s32 %v10097, %v10099
      %v10101 = vrot.slane %v9902, %v10100
      %v10102 = vcombine.high %v10101, %v10101
      %v10104 = vunpack.c.l.s4 1983009808
      %v10105 = vunpack.c.0.s8 %v10104
      %v10106 = vlaneseq
      %v10107 = vshrl.u32 %v10106, 7
      %v10108 = vsub.s32 %v10105, %v10107
      %v10109 = vrot.slane %v9911, %v10108
      %v10110 = vcombine.high %v10109, %v10109
      %v10112 = vunpack.c.l.s4 1983009808
      %v10113 = vunpack.c.0.s8 %v10112
      %v10114 = vlaneseq
      %v10115 = vshrl.u32 %v10114, 7
      %v10116 = vsub.s32 %v10113, %v10115
      %v10117 = vrot.slane %v9919, %v10116
      %v10118 = vcombine.high %v10117, %v10117
      %v10120 = vunpack.c.l.s4 1983009808
      %v10121 = vunpack.c.0.s8 %v10120
      %v10122 = vlaneseq
      %v10123 = vshrl.u32 %v10122, 7
      %v10124 = vsub.s32 %v10121, %v10123
      %v10125 = vrot.slane %v9918, %v10124
      %v10126 = vcombine.high %v10125, %v10125
      %v10128 = vunpack.c.l.s4 1983009808
      %v10129 = vunpack.c.0.s8 %v10128
      %v10130 = vlaneseq
      %v10131 = vshrl.u32 %v10130, 7
      %v10132 = vsub.s32 %v10129, %v10131
      %v10133 = vrot.slane %v9920, %v10132
      %v10134 = vcombine.high %v10133, %v10133
      %v10136 = vunpack.c.l.s4 1983009808
      %v10137 = vunpack.c.0.s8 %v10136
      %v10138 = vlaneseq
      %v10139 = vshrl.u32 %v10138, 7
      %v10140 = vsub.s32 %v10137, %v10139
      %v10141 = vrot.slane %v9929, %v10140
      %v10142 = vcombine.high %v10141, %v10141
      %v10144 = vunpack.c.l.s4 1983009808
      %v10145 = vunpack.c.0.s8 %v10144
      %v10146 = vlaneseq
      %v10147 = vshrl.u32 %v10146, 7
      %v10148 = vsub.s32 %v10145, %v10147
      %v10149 = vrot.slane %v9937, %v10148
      %v10150 = vcombine.high %v10149, %v10149
      %v10152 = vunpack.c.l.s4 1983009808
      %v10153 = vunpack.c.0.s8 %v10152
      %v10154 = vlaneseq
      %v10155 = vshrl.u32 %v10154, 7
      %v10156 = vsub.s32 %v10153, %v10155
      %v10157 = vrot.slane %v9936, %v10156
      %v10158 = vcombine.high %v10157, %v10157
      %v10160 = vunpack.c.l.s4 1983009808
      %v10161 = vunpack.c.0.s8 %v10160
      %v10162 = vlaneseq
      %v10163 = vshrl.u32 %v10162, 7
      %v10164 = vsub.s32 %v10161, %v10163
      %v10165 = vrot.slane %v9938, %v10164
      %v10166 = vcombine.high %v10165, %v10165
      %v10168 = vunpack.c.l.s4 1983009808
      %v10169 = vunpack.c.0.s8 %v10168
      %v10170 = vlaneseq
      %v10171 = vshrl.u32 %v10170, 7
      %v10172 = vsub.s32 %v10169, %v10171
      %v10173 = vrot.slane %v9947, %v10172
      %v10174 = vcombine.high %v10173, %v10173
      %v10176 = vunpack.c.l.s4 1983009808
      %v10177 = vunpack.c.0.s8 %v10176
      %v10178 = vlaneseq
      %v10179 = vshrl.u32 %v10178, 7
      %v10180 = vsub.s32 %v10177, %v10179
      %v10181 = vrot.slane %v9955, %v10180
      %v10182 = vcombine.high %v10181, %v10181
      %v10184 = vunpack.c.l.s4 1983009808
      %v10185 = vunpack.c.0.s8 %v10184
      %v10186 = vlaneseq
      %v10187 = vshrl.u32 %v10186, 7
      %v10188 = vsub.s32 %v10185, %v10187
      %v10189 = vrot.slane %v9954, %v10188
      %v10190 = vcombine.high %v10189, %v10189
      %v10192 = vunpack.c.l.s4 1983009808
      %v10193 = vunpack.c.0.s8 %v10192
      %v10194 = vlaneseq
      %v10195 = vshrl.u32 %v10194, 7
      %v10196 = vsub.s32 %v10193, %v10195
      %v10197 = vrot.slane %v9956, %v10196
      %v10198 = vcombine.high %v10197, %v10197
      %v10200 = vunpack.c.l.s4 1983009808
      %v10201 = vunpack.c.0.s8 %v10200
      %v10202 = vlaneseq
      %v10203 = vshrl.u32 %v10202, 7
      %v10204 = vsub.s32 %v10201, %v10203
      %v10205 = vrot.slane %v9965, %v10204
      %v10206 = vcombine.high %v10205, %v10205
      %v10208 = vunpack.c.l.s4 1983009808
      %v10209 = vunpack.c.0.s8 %v10208
      %v10210 = vlaneseq
      %v10211 = vshrl.u32 %v10210, 7
      %v10212 = vsub.s32 %v10209, %v10211
      %v10213 = vrot.slane %v9973, %v10212
      %v10214 = vcombine.high %v10213, %v10213
      %v10216 = vunpack.c.l.s4 1983009808
      %v10217 = vunpack.c.0.s8 %v10216
      %v10218 = vlaneseq
      %v10219 = vshrl.u32 %v10218, 7
      %v10220 = vsub.s32 %v10217, %v10219
      %v10221 = vrot.slane %v9972, %v10220
      %v10222 = vcombine.high %v10221, %v10221
      %v10224 = vunpack.c.l.s4 1983009808
      %v10225 = vunpack.c.0.s8 %v10224
      %v10226 = vlaneseq
      %v10227 = vshrl.u32 %v10226, 7
      %v10228 = vsub.s32 %v10225, %v10227
      %v10229 = vrot.slane %v9974, %v10228
      %v10230 = vcombine.high %v10229, %v10229
      %v10295 = vsel %vm518, %v9981, -inf
      %v10296 = vrot.slane %v10295, 4
      %v10297 = vmax.f32 %v10295, %v10296
      %v10298 = vrot.slane %v10297, 2
      %v10299 = vmax.f32 %v10297, %v10298
      %v10300 = vrot.slane %v10299, 1
      %v10301 = vmax.f32 %v10299, %v10300
      %v10302 = vsel %vm518, %v9982, -inf
      %v10303 = vrot.slane %v10302, 4
      %v10304 = vmax.f32 %v10302, %v10303
      %v10305 = vrot.slane %v10304, 2
      %v10306 = vmax.f32 %v10304, %v10305
      %v10307 = vrot.slane %v10306, 1
      %v10308 = vmax.f32 %v10306, %v10307
      %v10309 = vsel %vm518, %v9989, -inf
      %v10310 = vrot.slane %v10309, 4
      %v10311 = vmax.f32 %v10309, %v10310
      %v10312 = vrot.slane %v10311, 2
      %v10313 = vmax.f32 %v10311, %v10312
      %v10314 = vrot.slane %v10313, 1
      %v10315 = vmax.f32 %v10313, %v10314
      %v10316 = vsel %vm518, %v9990, -inf
      %v10317 = vrot.slane %v10316, 4
      %v10318 = vmax.f32 %v10316, %v10317
      %v10319 = vrot.slane %v10318, 2
      %v10320 = vmax.f32 %v10318, %v10319
      %v10321 = vrot.slane %v10320, 1
      %v10322 = vmax.f32 %v10320, %v10321
      %v10323 = vsel %vm518, %v9997, -inf
      %v10324 = vrot.slane %v10323, 4
      %v10325 = vmax.f32 %v10323, %v10324
      %v10326 = vrot.slane %v10325, 2
      %v10327 = vmax.f32 %v10325, %v10326
      %v10328 = vrot.slane %v10327, 1
      %v10329 = vmax.f32 %v10327, %v10328
      %v10330 = vsel %vm518, %v9998, -inf
      %v10331 = vrot.slane %v10330, 4
      %v10332 = vmax.f32 %v10330, %v10331
      %v10333 = vrot.slane %v10332, 2
      %v10334 = vmax.f32 %v10332, %v10333
      %v10335 = vrot.slane %v10334, 1
      %v10336 = vmax.f32 %v10334, %v10335
      %v10337 = vsel %vm518, %v10005, -inf
      %v10338 = vrot.slane %v10337, 4
      %v10339 = vmax.f32 %v10337, %v10338
      %v10340 = vrot.slane %v10339, 2
      %v10341 = vmax.f32 %v10339, %v10340
      %v10342 = vrot.slane %v10341, 1
      %v10343 = vmax.f32 %v10341, %v10342
      %v10344 = vsel %vm518, %v10006, -inf
      %v10345 = vrot.slane %v10344, 4
      %v10346 = vmax.f32 %v10344, %v10345
      %v10347 = vrot.slane %v10346, 2
      %v10348 = vmax.f32 %v10346, %v10347
      %v10349 = vrot.slane %v10348, 1
      %v10350 = vmax.f32 %v10348, %v10349
      %v10351 = vsel %vm518, %v10013, -inf
      %v10352 = vrot.slane %v10351, 4
      %v10353 = vmax.f32 %v10351, %v10352
      %v10354 = vrot.slane %v10353, 2
      %v10355 = vmax.f32 %v10353, %v10354
      %v10356 = vrot.slane %v10355, 1
      %v10357 = vmax.f32 %v10355, %v10356
      %v10358 = vsel %vm518, %v10014, -inf
      %v10359 = vrot.slane %v10358, 4
      %v10360 = vmax.f32 %v10358, %v10359
      %v10361 = vrot.slane %v10360, 2
      %v10362 = vmax.f32 %v10360, %v10361
      %v10363 = vrot.slane %v10362, 1
      %v10364 = vmax.f32 %v10362, %v10363
      %v10365 = vsel %vm518, %v10021, -inf
      %v10366 = vrot.slane %v10365, 4
      %v10367 = vmax.f32 %v10365, %v10366
      %v10368 = vrot.slane %v10367, 2
      %v10369 = vmax.f32 %v10367, %v10368
      %v10370 = vrot.slane %v10369, 1
      %v10371 = vmax.f32 %v10369, %v10370
      %v10372 = vsel %vm518, %v10022, -inf
      %v10373 = vrot.slane %v10372, 4
      %v10374 = vmax.f32 %v10372, %v10373
      %v10375 = vrot.slane %v10374, 2
      %v10376 = vmax.f32 %v10374, %v10375
      %v10377 = vrot.slane %v10376, 1
      %v10378 = vmax.f32 %v10376, %v10377
      %v10379 = vsel %vm518, %v10029, -inf
      %v10380 = vrot.slane %v10379, 4
      %v10381 = vmax.f32 %v10379, %v10380
      %v10382 = vrot.slane %v10381, 2
      %v10383 = vmax.f32 %v10381, %v10382
      %v10384 = vrot.slane %v10383, 1
      %v10385 = vmax.f32 %v10383, %v10384
      %v10386 = vsel %vm518, %v10030, -inf
      %v10387 = vrot.slane %v10386, 4
      %v10388 = vmax.f32 %v10386, %v10387
      %v10389 = vrot.slane %v10388, 2
      %v10390 = vmax.f32 %v10388, %v10389
      %v10391 = vrot.slane %v10390, 1
      %v10392 = vmax.f32 %v10390, %v10391
      %v10393 = vsel %vm518, %v10037, -inf
      %v10394 = vrot.slane %v10393, 4
      %v10395 = vmax.f32 %v10393, %v10394
      %v10396 = vrot.slane %v10395, 2
      %v10397 = vmax.f32 %v10395, %v10396
      %v10398 = vrot.slane %v10397, 1
      %v10399 = vmax.f32 %v10397, %v10398
      %v10400 = vsel %vm518, %v10038, -inf
      %v10401 = vrot.slane %v10400, 4
      %v10402 = vmax.f32 %v10400, %v10401
      %v10403 = vrot.slane %v10402, 2
      %v10404 = vmax.f32 %v10402, %v10403
      %v10405 = vrot.slane %v10404, 1
      %v10406 = vmax.f32 %v10404, %v10405
      %v10407 = vsel %vm518, %v10045, -inf
      %v10408 = vrot.slane %v10407, 4
      %v10409 = vmax.f32 %v10407, %v10408
      %v10410 = vrot.slane %v10409, 2
      %v10411 = vmax.f32 %v10409, %v10410
      %v10412 = vrot.slane %v10411, 1
      %v10413 = vmax.f32 %v10411, %v10412
      %v10414 = vsel %vm518, %v10046, -inf
      %v10415 = vrot.slane %v10414, 4
      %v10416 = vmax.f32 %v10414, %v10415
      %v10417 = vrot.slane %v10416, 2
      %v10418 = vmax.f32 %v10416, %v10417
      %v10419 = vrot.slane %v10418, 1
      %v10420 = vmax.f32 %v10418, %v10419
      %v10421 = vsel %vm518, %v10053, -inf
      %v10422 = vrot.slane %v10421, 4
      %v10423 = vmax.f32 %v10421, %v10422
      %v10424 = vrot.slane %v10423, 2
      %v10425 = vmax.f32 %v10423, %v10424
      %v10426 = vrot.slane %v10425, 1
      %v10427 = vmax.f32 %v10425, %v10426
      %v10428 = vsel %vm518, %v10054, -inf
      %v10429 = vrot.slane %v10428, 4
      %v10430 = vmax.f32 %v10428, %v10429
      %v10431 = vrot.slane %v10430, 2
      %v10432 = vmax.f32 %v10430, %v10431
      %v10433 = vrot.slane %v10432, 1
      %v10434 = vmax.f32 %v10432, %v10433
      %v10435 = vsel %vm518, %v10061, -inf
      %v10436 = vrot.slane %v10435, 4
      %v10437 = vmax.f32 %v10435, %v10436
      %v10438 = vrot.slane %v10437, 2
      %v10439 = vmax.f32 %v10437, %v10438
      %v10440 = vrot.slane %v10439, 1
      %v10441 = vmax.f32 %v10439, %v10440
      %v10442 = vsel %vm518, %v10062, -inf
      %v10443 = vrot.slane %v10442, 4
      %v10444 = vmax.f32 %v10442, %v10443
      %v10445 = vrot.slane %v10444, 2
      %v10446 = vmax.f32 %v10444, %v10445
      %v10447 = vrot.slane %v10446, 1
      %v10448 = vmax.f32 %v10446, %v10447
      %v10449 = vsel %vm518, %v10069, -inf
      %v10450 = vrot.slane %v10449, 4
      %v10451 = vmax.f32 %v10449, %v10450
      %v10452 = vrot.slane %v10451, 2
      %v10453 = vmax.f32 %v10451, %v10452
      %v10454 = vrot.slane %v10453, 1
      %v10455 = vmax.f32 %v10453, %v10454
      %v10456 = vsel %vm518, %v10070, -inf
      %v10457 = vrot.slane %v10456, 4
      %v10458 = vmax.f32 %v10456, %v10457
      %v10459 = vrot.slane %v10458, 2
      %v10460 = vmax.f32 %v10458, %v10459
      %v10461 = vrot.slane %v10460, 1
      %v10462 = vmax.f32 %v10460, %v10461
      %v10463 = vsel %vm518, %v10077, -inf
      %v10464 = vrot.slane %v10463, 4
      %v10465 = vmax.f32 %v10463, %v10464
      %v10466 = vrot.slane %v10465, 2
      %v10467 = vmax.f32 %v10465, %v10466
      %v10468 = vrot.slane %v10467, 1
      %v10469 = vmax.f32 %v10467, %v10468
      %v10470 = vsel %vm518, %v10078, -inf
      %v10471 = vrot.slane %v10470, 4
      %v10472 = vmax.f32 %v10470, %v10471
      %v10473 = vrot.slane %v10472, 2
      %v10474 = vmax.f32 %v10472, %v10473
      %v10475 = vrot.slane %v10474, 1
      %v10476 = vmax.f32 %v10474, %v10475
      %v10477 = vsel %vm518, %v10085, -inf
      %v10478 = vrot.slane %v10477, 4
      %v10479 = vmax.f32 %v10477, %v10478
      %v10480 = vrot.slane %v10479, 2
      %v10481 = vmax.f32 %v10479, %v10480
      %v10482 = vrot.slane %v10481, 1
      %v10483 = vmax.f32 %v10481, %v10482
      %v10484 = vsel %vm518, %v10086, -inf
      %v10485 = vrot.slane %v10484, 4
      %v10486 = vmax.f32 %v10484, %v10485
      %v10487 = vrot.slane %v10486, 2
      %v10488 = vmax.f32 %v10486, %v10487
      %v10489 = vrot.slane %v10488, 1
      %v10490 = vmax.f32 %v10488, %v10489
      %v10491 = vsel %vm518, %v10093, -inf
      %v10492 = vrot.slane %v10491, 4
      %v10493 = vmax.f32 %v10491, %v10492
      %v10494 = vrot.slane %v10493, 2
      %v10495 = vmax.f32 %v10493, %v10494
      %v10496 = vrot.slane %v10495, 1
      %v10497 = vmax.f32 %v10495, %v10496
      %v10498 = vsel %vm518, %v10094, -inf
      %v10499 = vrot.slane %v10498, 4
      %v10500 = vmax.f32 %v10498, %v10499
      %v10501 = vrot.slane %v10500, 2
      %v10502 = vmax.f32 %v10500, %v10501
      %v10503 = vrot.slane %v10502, 1
      %v10504 = vmax.f32 %v10502, %v10503
      %v10505 = vsel %vm518, %v10101, -inf
      %v10506 = vrot.slane %v10505, 4
      %v10507 = vmax.f32 %v10505, %v10506
      %v10508 = vrot.slane %v10507, 2
      %v10509 = vmax.f32 %v10507, %v10508
      %v10510 = vrot.slane %v10509, 1
      %v10511 = vmax.f32 %v10509, %v10510
      %v10512 = vsel %vm518, %v10102, -inf
      %v10513 = vrot.slane %v10512, 4
      %v10514 = vmax.f32 %v10512, %v10513
      %v10515 = vrot.slane %v10514, 2
      %v10516 = vmax.f32 %v10514, %v10515
      %v10517 = vrot.slane %v10516, 1
      %v10518 = vmax.f32 %v10516, %v10517
      %v10519 = vsel %vm518, %v10109, -inf
      %v10520 = vrot.slane %v10519, 4
      %v10521 = vmax.f32 %v10519, %v10520
      %v10522 = vrot.slane %v10521, 2
      %v10523 = vmax.f32 %v10521, %v10522
      %v10524 = vrot.slane %v10523, 1
      %v10525 = vmax.f32 %v10523, %v10524
      %v10526 = vsel %vm518, %v10110, -inf
      %v10527 = vrot.slane %v10526, 4
      %v10528 = vmax.f32 %v10526, %v10527
      %v10529 = vrot.slane %v10528, 2
      %v10530 = vmax.f32 %v10528, %v10529
      %v10531 = vrot.slane %v10530, 1
      %v10532 = vmax.f32 %v10530, %v10531
      %v10533 = vsel %vm518, %v10117, -inf
      %v10534 = vrot.slane %v10533, 4
      %v10535 = vmax.f32 %v10533, %v10534
      %v10536 = vrot.slane %v10535, 2
      %v10537 = vmax.f32 %v10535, %v10536
      %v10538 = vrot.slane %v10537, 1
      %v10539 = vmax.f32 %v10537, %v10538
      %v10540 = vsel %vm518, %v10118, -inf
      %v10541 = vrot.slane %v10540, 4
      %v10542 = vmax.f32 %v10540, %v10541
      %v10543 = vrot.slane %v10542, 2
      %v10544 = vmax.f32 %v10542, %v10543
      %v10545 = vrot.slane %v10544, 1
      %v10546 = vmax.f32 %v10544, %v10545
      %v10547 = vsel %vm518, %v10125, -inf
      %v10548 = vrot.slane %v10547, 4
      %v10549 = vmax.f32 %v10547, %v10548
      %v10550 = vrot.slane %v10549, 2
      %v10551 = vmax.f32 %v10549, %v10550
      %v10552 = vrot.slane %v10551, 1
      %v10553 = vmax.f32 %v10551, %v10552
      %v10554 = vsel %vm518, %v10126, -inf
      %v10555 = vrot.slane %v10554, 4
      %v10556 = vmax.f32 %v10554, %v10555
      %v10557 = vrot.slane %v10556, 2
      %v10558 = vmax.f32 %v10556, %v10557
      %v10559 = vrot.slane %v10558, 1
      %v10560 = vmax.f32 %v10558, %v10559
      %v10561 = vsel %vm518, %v10133, -inf
      %v10562 = vrot.slane %v10561, 4
      %v10563 = vmax.f32 %v10561, %v10562
      %v10564 = vrot.slane %v10563, 2
      %v10565 = vmax.f32 %v10563, %v10564
      %v10566 = vrot.slane %v10565, 1
      %v10567 = vmax.f32 %v10565, %v10566
      %v10568 = vsel %vm518, %v10134, -inf
      %v10569 = vrot.slane %v10568, 4
      %v10570 = vmax.f32 %v10568, %v10569
      %v10571 = vrot.slane %v10570, 2
      %v10572 = vmax.f32 %v10570, %v10571
      %v10573 = vrot.slane %v10572, 1
      %v10574 = vmax.f32 %v10572, %v10573
      %v10575 = vsel %vm518, %v10141, -inf
      %v10576 = vrot.slane %v10575, 4
      %v10577 = vmax.f32 %v10575, %v10576
      %v10578 = vrot.slane %v10577, 2
      %v10579 = vmax.f32 %v10577, %v10578
      %v10580 = vrot.slane %v10579, 1
      %v10581 = vmax.f32 %v10579, %v10580
      %v10582 = vsel %vm518, %v10142, -inf
      %v10583 = vrot.slane %v10582, 4
      %v10584 = vmax.f32 %v10582, %v10583
      %v10585 = vrot.slane %v10584, 2
      %v10586 = vmax.f32 %v10584, %v10585
      %v10587 = vrot.slane %v10586, 1
      %v10588 = vmax.f32 %v10586, %v10587
      %v10589 = vsel %vm518, %v10149, -inf
      %v10590 = vrot.slane %v10589, 4
      %v10591 = vmax.f32 %v10589, %v10590
      %v10592 = vrot.slane %v10591, 2
      %v10593 = vmax.f32 %v10591, %v10592
      %v10594 = vrot.slane %v10593, 1
      %v10595 = vmax.f32 %v10593, %v10594
      %v10596 = vsel %vm518, %v10150, -inf
      %v10597 = vrot.slane %v10596, 4
      %v10598 = vmax.f32 %v10596, %v10597
      %v10599 = vrot.slane %v10598, 2
      %v10600 = vmax.f32 %v10598, %v10599
      %v10601 = vrot.slane %v10600, 1
      %v10602 = vmax.f32 %v10600, %v10601
      %v10603 = vsel %vm518, %v10157, -inf
      %v10604 = vrot.slane %v10603, 4
      %v10605 = vmax.f32 %v10603, %v10604
      %v10606 = vrot.slane %v10605, 2
      %v10607 = vmax.f32 %v10605, %v10606
      %v10608 = vrot.slane %v10607, 1
      %v10609 = vmax.f32 %v10607, %v10608
      %v10610 = vsel %vm518, %v10158, -inf
      %v10611 = vrot.slane %v10610, 4
      %v10612 = vmax.f32 %v10610, %v10611
      %v10613 = vrot.slane %v10612, 2
      %v10614 = vmax.f32 %v10612, %v10613
      %v10615 = vrot.slane %v10614, 1
      %v10616 = vmax.f32 %v10614, %v10615
      %v10617 = vsel %vm518, %v10165, -inf
      %v10618 = vrot.slane %v10617, 4
      %v10619 = vmax.f32 %v10617, %v10618
      %v10620 = vrot.slane %v10619, 2
      %v10621 = vmax.f32 %v10619, %v10620
      %v10622 = vrot.slane %v10621, 1
      %v10623 = vmax.f32 %v10621, %v10622
      %v10624 = vsel %vm518, %v10166, -inf
      %v10625 = vrot.slane %v10624, 4
      %v10626 = vmax.f32 %v10624, %v10625
      %v10627 = vrot.slane %v10626, 2
      %v10628 = vmax.f32 %v10626, %v10627
      %v10629 = vrot.slane %v10628, 1
      %v10630 = vmax.f32 %v10628, %v10629
      %v10631 = vsel %vm518, %v10173, -inf
      %v10632 = vrot.slane %v10631, 4
      %v10633 = vmax.f32 %v10631, %v10632
      %v10634 = vrot.slane %v10633, 2
      %v10635 = vmax.f32 %v10633, %v10634
      %v10636 = vrot.slane %v10635, 1
      %v10637 = vmax.f32 %v10635, %v10636
      %v10638 = vsel %vm518, %v10174, -inf
      %v10639 = vrot.slane %v10638, 4
      %v10640 = vmax.f32 %v10638, %v10639
      %v10641 = vrot.slane %v10640, 2
      %v10642 = vmax.f32 %v10640, %v10641
      %v10643 = vrot.slane %v10642, 1
      %v10644 = vmax.f32 %v10642, %v10643
      %v10645 = vsel %vm518, %v10181, -inf
      %v10646 = vrot.slane %v10645, 4
      %v10647 = vmax.f32 %v10645, %v10646
      %v10648 = vrot.slane %v10647, 2
      %v10649 = vmax.f32 %v10647, %v10648
      %v10650 = vrot.slane %v10649, 1
      %v10651 = vmax.f32 %v10649, %v10650
      %v10652 = vsel %vm518, %v10182, -inf
      %v10653 = vrot.slane %v10652, 4
      %v10654 = vmax.f32 %v10652, %v10653
      %v10655 = vrot.slane %v10654, 2
      %v10656 = vmax.f32 %v10654, %v10655
      %v10657 = vrot.slane %v10656, 1
      %v10658 = vmax.f32 %v10656, %v10657
      %v10659 = vsel %vm518, %v10189, -inf
      %v10660 = vrot.slane %v10659, 4
      %v10661 = vmax.f32 %v10659, %v10660
      %v10662 = vrot.slane %v10661, 2
      %v10663 = vmax.f32 %v10661, %v10662
      %v10664 = vrot.slane %v10663, 1
      %v10665 = vmax.f32 %v10663, %v10664
      %v10666 = vsel %vm518, %v10190, -inf
      %v10667 = vrot.slane %v10666, 4
      %v10668 = vmax.f32 %v10666, %v10667
      %v10669 = vrot.slane %v10668, 2
      %v10670 = vmax.f32 %v10668, %v10669
      %v10671 = vrot.slane %v10670, 1
      %v10672 = vmax.f32 %v10670, %v10671
      %v10673 = vsel %vm518, %v10197, -inf
      %v10674 = vrot.slane %v10673, 4
      %v10675 = vmax.f32 %v10673, %v10674
      %v10676 = vrot.slane %v10675, 2
      %v10677 = vmax.f32 %v10675, %v10676
      %v10678 = vrot.slane %v10677, 1
      %v10679 = vmax.f32 %v10677, %v10678
      %v10680 = vsel %vm518, %v10198, -inf
      %v10681 = vrot.slane %v10680, 4
      %v10682 = vmax.f32 %v10680, %v10681
      %v10683 = vrot.slane %v10682, 2
      %v10684 = vmax.f32 %v10682, %v10683
      %v10685 = vrot.slane %v10684, 1
      %v10686 = vmax.f32 %v10684, %v10685
      %v10687 = vsel %vm518, %v10205, -inf
      %v10688 = vrot.slane %v10687, 4
      %v10689 = vmax.f32 %v10687, %v10688
      %v10690 = vrot.slane %v10689, 2
      %v10691 = vmax.f32 %v10689, %v10690
      %v10692 = vrot.slane %v10691, 1
      %v10693 = vmax.f32 %v10691, %v10692
      %v10694 = vsel %vm518, %v10206, -inf
      %v10695 = vrot.slane %v10694, 4
      %v10696 = vmax.f32 %v10694, %v10695
      %v10697 = vrot.slane %v10696, 2
      %v10698 = vmax.f32 %v10696, %v10697
      %v10699 = vrot.slane %v10698, 1
      %v10700 = vmax.f32 %v10698, %v10699
      %v10701 = vsel %vm518, %v10213, -inf
      %v10702 = vrot.slane %v10701, 4
      %v10703 = vmax.f32 %v10701, %v10702
      %v10704 = vrot.slane %v10703, 2
      %v10705 = vmax.f32 %v10703, %v10704
      %v10706 = vrot.slane %v10705, 1
      %v10707 = vmax.f32 %v10705, %v10706
      %v10708 = vsel %vm518, %v10214, -inf
      %v10709 = vrot.slane %v10708, 4
      %v10710 = vmax.f32 %v10708, %v10709
      %v10711 = vrot.slane %v10710, 2
      %v10712 = vmax.f32 %v10710, %v10711
      %v10713 = vrot.slane %v10712, 1
      %v10714 = vmax.f32 %v10712, %v10713
      %v10715 = vsel %vm518, %v10221, -inf
      %v10716 = vrot.slane %v10715, 4
      %v10717 = vmax.f32 %v10715, %v10716
      %v10718 = vrot.slane %v10717, 2
      %v10719 = vmax.f32 %v10717, %v10718
      %v10720 = vrot.slane %v10719, 1
      %v10721 = vmax.f32 %v10719, %v10720
      %v10722 = vsel %vm518, %v10222, -inf
      %v10723 = vrot.slane %v10722, 4
      %v10724 = vmax.f32 %v10722, %v10723
      %v10725 = vrot.slane %v10724, 2
      %v10726 = vmax.f32 %v10724, %v10725
      %v10727 = vrot.slane %v10726, 1
      %v10728 = vmax.f32 %v10726, %v10727
      %v10729 = vsel %vm518, %v10229, -inf
      %v10730 = vrot.slane %v10729, 4
      %v10731 = vmax.f32 %v10729, %v10730
      %v10732 = vrot.slane %v10731, 2
      %v10733 = vmax.f32 %v10731, %v10732
      %v10734 = vrot.slane %v10733, 1
      %v10735 = vmax.f32 %v10733, %v10734
      %v10736 = vsel %vm518, %v10230, -inf
      %v10737 = vrot.slane %v10736, 4
      %v10738 = vmax.f32 %v10736, %v10737
      %v10739 = vrot.slane %v10738, 2
      %v10740 = vmax.f32 %v10738, %v10739
      %v10741 = vrot.slane %v10740, 1
      %v10742 = vmax.f32 %v10740, %v10741
      %v10743 = vmax.f32 %v10301, %v10357
      %v10744 = vmax.f32 %v10308, %v10364
      %v10745 = vmax.f32 %v10315, %v10371
      %v10746 = vmax.f32 %v10322, %v10378
      %v10747 = vmax.f32 %v10329, %v10385
      %v10748 = vmax.f32 %v10336, %v10392
      %v10749 = vmax.f32 %v10343, %v10399
      %v10750 = vmax.f32 %v10350, %v10406
      %v10751 = vmax.f32 %v10413, %v10469
      %v10752 = vmax.f32 %v10420, %v10476
      %v10753 = vmax.f32 %v10427, %v10483
      %v10754 = vmax.f32 %v10434, %v10490
      %v10755 = vmax.f32 %v10441, %v10497
      %v10756 = vmax.f32 %v10448, %v10504
      %v10757 = vmax.f32 %v10455, %v10511
      %v10758 = vmax.f32 %v10462, %v10518
      %v10759 = vmax.f32 %v10525, %v10581
      %v10760 = vmax.f32 %v10532, %v10588
      %v10761 = vmax.f32 %v10539, %v10595
      %v10762 = vmax.f32 %v10546, %v10602
      %v10763 = vmax.f32 %v10553, %v10609
      %v10764 = vmax.f32 %v10560, %v10616
      %v10765 = vmax.f32 %v10567, %v10623
      %v10766 = vmax.f32 %v10574, %v10630
      %v10767 = vmax.f32 %v10637, %v10693
      %v10768 = vmax.f32 %v10644, %v10700
      %v10769 = vmax.f32 %v10651, %v10707
      %v10770 = vmax.f32 %v10658, %v10714
      %v10771 = vmax.f32 %v10665, %v10721
      %v10772 = vmax.f32 %v10672, %v10728
      %v10773 = vmax.f32 %v10679, %v10735
      %v10774 = vmax.f32 %v10686, %v10742
      %v10775 = vadd.f32 %v10743, %v2883
      %v10776 = vadd.f32 %v10744, %v2887
      %v10777 = vadd.f32 %v10745, %v2883
      %v10778 = vadd.f32 %v10746, %v2887
      %v10779 = vadd.f32 %v10747, %v2883
      %v10780 = vadd.f32 %v10748, %v2887
      %v10781 = vadd.f32 %v10749, %v2883
      %v10782 = vadd.f32 %v10750, %v2887
      %v10783 = vadd.f32 %v10751, %v2883
      %v10784 = vadd.f32 %v10752, %v2887
      %v10785 = vadd.f32 %v10753, %v2883
      %v10786 = vadd.f32 %v10754, %v2887
      %v10787 = vadd.f32 %v10755, %v2883
      %v10788 = vadd.f32 %v10756, %v2887
      %v10789 = vadd.f32 %v10757, %v2883
      %v10790 = vadd.f32 %v10758, %v2887
      %v10791 = vadd.f32 %v10759, %v2883
      %v10792 = vadd.f32 %v10760, %v2887
      %v10793 = vadd.f32 %v10761, %v2883
      %v10794 = vadd.f32 %v10762, %v2887
      %v10795 = vadd.f32 %v10763, %v2883
      %v10796 = vadd.f32 %v10764, %v2887
      %v10797 = vadd.f32 %v10765, %v2883
      %v10798 = vadd.f32 %v10766, %v2887
      %v10799 = vadd.f32 %v10767, %v2883
      %v10800 = vadd.f32 %v10768, %v2887
      %v10801 = vadd.f32 %v10769, %v2883
      %v10802 = vadd.f32 %v10770, %v2887
      %v10803 = vadd.f32 %v10771, %v2883
      %v10804 = vadd.f32 %v10772, %v2887
      %v10805 = vadd.f32 %v10773, %v2883
      %v10806 = vadd.f32 %v10774, %v2887
      %v10807 = vmax.f32 %v10775, 0.0
      %v10808 = vmax.f32 %v10776, 0.0
      %v10809 = vmax.f32 %v10777, 0.0
      %v10810 = vmax.f32 %v10778, 0.0
      %v10811 = vmax.f32 %v10779, 0.0
      %v10812 = vmax.f32 %v10780, 0.0
      %v10813 = vmax.f32 %v10781, 0.0
      %v10814 = vmax.f32 %v10782, 0.0
      %v10815 = vmax.f32 %v10783, 0.0
      %v10816 = vmax.f32 %v10784, 0.0
      %v10817 = vmax.f32 %v10785, 0.0
      %v10818 = vmax.f32 %v10786, 0.0
      %v10819 = vmax.f32 %v10787, 0.0
      %v10820 = vmax.f32 %v10788, 0.0
      %v10821 = vmax.f32 %v10789, 0.0
      %v10822 = vmax.f32 %v10790, 0.0
      %v10823 = vmax.f32 %v10791, 0.0
      %v10824 = vmax.f32 %v10792, 0.0
      %v10825 = vmax.f32 %v10793, 0.0
      %v10826 = vmax.f32 %v10794, 0.0
      %v10827 = vmax.f32 %v10795, 0.0
      %v10828 = vmax.f32 %v10796, 0.0
      %v10829 = vmax.f32 %v10797, 0.0
      %v10830 = vmax.f32 %v10798, 0.0
      %v10831 = vmax.f32 %v10799, 0.0
      %v10832 = vmax.f32 %v10800, 0.0
      %v10833 = vmax.f32 %v10801, 0.0
      %v10834 = vmax.f32 %v10802, 0.0
      %v10835 = vmax.f32 %v10803, 0.0
      %v10836 = vmax.f32 %v10804, 0.0
      %v10837 = vmax.f32 %v10805, 0.0
      %v10838 = vmax.f32 %v10806, 0.0
      %v10871 = vrot.slane %v10809, 7
      %vm10872 = vcmask 1041409
      %v10873 = vsel %vm10872, %v10871, %v10807
      %v10874 = vrot.slane %v10811, 6
      %v10875 = vsel %vm3308, %v10874, %v10873
      %v10876 = vrot.slane %v10813, 5
      %v10877 = vsel %vm3311, %v10876, %v10875
      %v10878 = vrot.slane %v10815, 4
      %v10879 = vsel %vm3314, %v10878, %v10877
      %v10880 = vrot.slane %v10817, 3
      %v10881 = vsel %vm3317, %v10880, %v10879
      %v10882 = vrot.slane %v10819, 2
      %v10883 = vsel %vm3320, %v10882, %v10881
      %v10884 = vrot.slane %v10821, 1
      %v10885 = vsel %vm3323, %v10884, %v10883
      %v10886 = vrot.slane %v10810, 7
      %v10887 = vsel %vm10872, %v10886, %v10808
      %v10888 = vrot.slane %v10812, 6
      %v10889 = vsel %vm3308, %v10888, %v10887
      %v10890 = vrot.slane %v10814, 5
      %v10891 = vsel %vm3311, %v10890, %v10889
      %v10892 = vrot.slane %v10816, 4
      %v10893 = vsel %vm3314, %v10892, %v10891
      %v10894 = vrot.slane %v10818, 3
      %v10895 = vsel %vm3317, %v10894, %v10893
      %v10896 = vrot.slane %v10820, 2
      %v10897 = vsel %vm3320, %v10896, %v10895
      %v10898 = vrot.slane %v10822, 1
      %v10899 = vsel %vm3323, %v10898, %v10897
      %v10900 = vrot.slane %v10825, 7
      %v10901 = vsel %vm10872, %v10900, %v10823
      %v10902 = vrot.slane %v10827, 6
      %v10903 = vsel %vm3308, %v10902, %v10901
      %v10904 = vrot.slane %v10829, 5
      %v10905 = vsel %vm3311, %v10904, %v10903
      %v10906 = vrot.slane %v10831, 4
      %v10907 = vsel %vm3314, %v10906, %v10905
      %v10908 = vrot.slane %v10833, 3
      %v10909 = vsel %vm3317, %v10908, %v10907
      %v10910 = vrot.slane %v10835, 2
      %v10911 = vsel %vm3320, %v10910, %v10909
      %v10912 = vrot.slane %v10837, 1
      %v10913 = vsel %vm3323, %v10912, %v10911
      %v10914 = vrot.slane %v10826, 7
      %v10915 = vsel %vm10872, %v10914, %v10824
      %v10916 = vrot.slane %v10828, 6
      %v10917 = vsel %vm3308, %v10916, %v10915
      %v10918 = vrot.slane %v10830, 5
      %v10919 = vsel %vm3311, %v10918, %v10917
      %v10920 = vrot.slane %v10832, 4
      %v10921 = vsel %vm3314, %v10920, %v10919
      %v10922 = vrot.slane %v10834, 3
      %v10923 = vsel %vm3317, %v10922, %v10921
      %v10924 = vrot.slane %v10836, 2
      %v10925 = vsel %vm3320, %v10924, %v10923
      %v10926 = vrot.slane %v10838, 1
      %v10927 = vsel %vm3323, %v10926, %v10925
      %10932 = vst [vmem:[%s282] sm:$0xff] %v10885
      %10933 = vst [vmem:[%s282 + $0x8] sm:$0xff] %v10899
      %10934 = vst [vmem:[%s282 + $0x10] sm:$0xff] %v10913
      %10935 = vst [vmem:[%s282 + $0x18] sm:$0xff] %v10927
      %s10936 = smul.u32 2, %s18
      %p10937 = scmp.lt.s32.totalorder %s10936, 3
      %s10938 = scalar_select %p10937, %s10936, 3
      %s10939 = smul.addr %s10938, 2
      %s10940 = smul.addr %s10939, 8
      %s10941 = scalar_lea.vmem %s7, %s10940
      // Predicated region
      $region49: #{middle_part_forward.1} parent=47 // pred_check
        %p10942 = pneg %p188
      $region50: #{middle_part_forward.1} parent=47 // pred_check_branch
        %10944 = sbr.rel (%p10942) target = $region52
      $region51: #{middle_part_forward.1} parent=47 // pred_region
        %s10945 = smul.u32 2, %s18
      $region52: #{middle_part_forward.1} parent=47 // pred_fallthru
        _
    $region48: #{middle_part_forward.1} parent=5 // pred_fallthru
      _
    %p10946 = scmp.le.s32.totalorder 2, %s13
    // Predicated region
    $region53: #{middle_part_forward.1} parent=5 // pred_check
      %p10947 = pneg %p10946
    $region54: #{middle_part_forward.1} parent=5 // pred_check_branch
      %10949 = sbr.rel (%p10947) target = $region56
    $region55: #{middle_part_forward.1} parent=5 // pred_region
      %s10950 = ssub.s32 %s13, 2
      // Predicated region
      $region57: #{middle_part_forward.1} parent=55 // pred_check
        %p10951 = pneg %p194
      $region58: #{middle_part_forward.1} parent=55 // pred_check_branch
        %10953 = sbr.rel (%p10951) target = $region60
      $region59: #{middle_part_forward.1} parent=55 // pred_region
        %s10954 = smul.u32 2, %s19
        %p10955 = scmp.lt.s32.totalorder %s10954, 3
        %s10956 = scalar_select %p10955, %s10954, 3
        %s10957 = smul.addr %s10956, 2
        %s10958 = smul.addr %s10957, 8
        %s10959 = scalar_lea.vmem %s7, %s10958
      $region60: #{middle_part_forward.1} parent=55 // pred_fallthru
        _
    $region56: #{middle_part_forward.1} parent=5 // pred_fallthru
      _
  $region6: #{middle_part_forward.1} parent=0 // loop_footer
    %s17 = sadd.s32 1, %s13
  $region7: #{middle_part_forward.1} parent=0 // loop_footer_branch
    %12 = sbr.rel target = $region3
  $region8: #{middle_part_forward.1} parent=0 // loop_exit
    _

</llo_original>
